<compile_context>
chip_gen: v6e
topology: v6e:2x2x1
jax: 0.10.0
libtpu: 0.0.40
codegen_flags: <defaults>
</compile_context>

<pallas_src>
import numpy as np

import jax
import jax.numpy as jnp
from jax.experimental import pallas as pl
from jax.experimental.pallas import tpu as pltpu


# --------------------------------------------------------------------------
# host-side construction of the (small) spatial operator data
# --------------------------------------------------------------------------
def edge_masks_3x3(H, W):
    """(9, H*W) validity masks for the 9 taps of a 3x3 'same' conv (roll path)."""
    P = H * W
    m = np.zeros((9, P), np.float32)
    k = 0
    for dy in (-1, 0, 1):
        for dx in (-1, 0, 1):
            for h in range(H):
                for w in range(W):
                    if 0 <= h + dy < H and 0 <= w + dx < W:
                        m[k, h * W + w] = 1.0
            k += 1
    return m


def avgpool2x2_matrix_T(H, W):
    """(P, P/4) operator of a 2x2 average pool: pooled = x(C, P) @ M."""
    Ho, Wo = H // 2, W // 2
    M = np.zeros((H * W, Ho * Wo), np.float32)
    for ho in range(Ho):
        for wo in range(Wo):
            for dh in range(2):
                for dw in range(2):
                    M[(2 * ho + dh) * W + (2 * wo + dw), ho * Wo + wo] = 0.25
    return M


def upsample2x_matrix_T(H, W):
    """(P, 4P) nearest-neighbor 2x upsample operator: up = x(C, P) @ M."""
    Ho, Wo = 2 * H, 2 * W
    M = np.zeros((H * W, Ho * Wo), np.float32)
    for ho in range(Ho):
        for wo in range(Wo):
            M[(ho // 2) * W + (wo // 2), ho * Wo + wo] = 1.0
    return M


def batch_block_diag(M, B):
    """Replicate a per-sample spatial operator across the B lane-packed samples."""
    return np.kron(np.eye(B, dtype=np.float32), M.astype(np.float32))


# --------------------------------------------------------------------------
# the single fused Pallas kernel (one grid step == full forward for B samples)
# --------------------------------------------------------------------------
def _build_fused_kernel(cfg):
    L = cfg["L"]                # number of contracting / expanding levels
    widths = cfg["widths"]      # image width per conv resolution r = 0..L
    lanes = cfg["lanes"]        # lane extent (B * H*W) per conv resolution
    offsets = [(dy, dx) for dy in (-1, 0, 1) for dx in (-1, 0, 1)]

    def kernel(x_ref, masks_ref, cw_ref, cb_ref, skw_ref, skb_ref, *rest):
        pool_refs = rest[:L]
        up_refs = rest[L:2 * L]
        o_ref = rest[2 * L]

        def conv3x3(x, idx, r, relu):
            """x: (Cmax, lanes[r]) f32 -> (Cmax, lanes[r]) f32, 3x3 'same' conv."""
            Lr = lanes[r]
            Wimg = widths[r]
            masks = masks_ref[r]                                # (9, lanes[0]) f32
            taps = []
            for k, (dy, dx) in enumerate(offsets):
                d = dy * Wimg + dx
                if d == 0:
                    taps.append(x)
                else:
                    shifted = pltpu.roll(x, (-d) % Lr, axis=1)  # XLU lane rotation
                    taps.append(shifted * masks[k:k + 1, :Lr])  # zero wrapped border
            x9 = jnp.concatenate(taps, axis=0).astype(jnp.bfloat16)   # (9*Cmax, Lr)
            y = jnp.dot(cw_ref[idx], x9,
                        preferred_element_type=jnp.float32) + cb_ref[idx]
            return jnp.maximum(y, 0.0) if relu else y

        x = x_ref[0].astype(jnp.float32)                        # (Cmax, lanes[0])

        # ---- contracting path: keep only the *pooled* activations (skip sources) ----
        pooled = []
        for l in range(L):
            c = conv3x3(x, l, l, relu=True)
            x = jnp.dot(c.astype(jnp.bfloat16), pool_refs[l][...],
                        preferred_element_type=jnp.float32)     # (Cmax, lanes[l+1])
            pooled.append(x)

        # ---- bottleneck residual block: relu(conv2(relu(conv1(x))) + x) ----
        h = conv3x3(x, L, L, relu=True)
        h = conv3x3(h, L + 1, L, relu=False)
        x = jnp.maximum(h + x, 0.0)

        # ---- expanding path with fused skip connections ----
        # skip_j = AdaptiveAvgPool(conv1x1(c_j)) == conv1x1(avgpool2x2(c_j))
        #        == conv1x1(pooled[j])   (pool target is exactly half resolution)
        for i in range(L):
            j = L - 1 - i
            s = jnp.dot(skw_ref[j], pooled[j].astype(jnp.bfloat16),
                        preferred_element_type=jnp.float32) + skb_ref[j]
            u = jnp.dot((x + s).astype(jnp.bfloat16), up_refs[i][...],
                        preferred_element_type=jnp.float32)     # 2x nearest upsample
            x = conv3x3(u, L + 2 + i, L - 1 - i, relu=(i < L - 1))

        o_ref[0] = x.astype(o_ref.dtype)

    return kernel


# --------------------------------------------------------------------------
# AdaptiveUNet (Pallas) — concrete instantiation
# --------------------------------------------------------------------------
class AdaptiveUNetPallas:
    def __init__(self, input_shape, output_shape, bottleneck_shape,
                 bottleneck_out_channels=None, seed=42, dtype=jnp.float32):
        if len(input_shape) != 3 or len(output_shape) != 3 or len(bottleneck_shape) != 3:
            raise ValueError("All shapes must be 3D tuples (channels, height, width)")
        cin, H, W = input_shape
        cout, Ho, Wo = output_shape
        cbott, Hb, Wb = bottleneck_shape
        cbo = bottleneck_out_channels or cbott
        if Hb > H or Wb > W or Hb > Ho or Wb > Wo:
            raise ValueError("Bottleneck spatial dimensions must be smaller than "
                             "both input and output dimensions")
        assert cbott == cbo, "identity residual in the bottleneck requires equal in/out channels"
        assert H == Ho and W == Wo, "this instantiation assumes matching in/out spatial dims"
        L = int(round(np.log2(H // Hb)))
        assert L >= 1 and H == Hb * (2 ** L) and W == Wb * (2 ** L), \
            "power-of-two spatial ratios expected"

        self.input_shape = tuple(input_shape)
        self.output_shape = tuple(output_shape)
        self.L = L
        self.dtype = dtype
        self._cache = {}

        # unified (padded) channel width -> all conv weights share one shape
        Cmax = ((max(cin, cbott, cbo, cout) + 7) // 8) * 8
        self.Cmax = Cmax

        # per-conv-resolution geometry: r = 0..L-1 contracting levels, r = L bottleneck
        heights = [H >> r for r in range(L)] + [Hb]
        widths = [W >> r for r in range(L)] + [Wb]
        Ps = [heights[r] * widths[r] for r in range(L + 1)]
        self.P0 = Ps[0]

        # batch-into-lanes factor: make the smallest resolution lane-dense
        Pmin = Ps[L]
        B = 1 if (Pmin % 128) == 0 else -(-128 // Pmin)
        self.B = B
        lanes = [B * p for p in Ps]
        self.lanes = lanes

        # ----- edge masks, tiled per lane-packed sample, stacked & lane-padded -----
        mask_stack = np.zeros((L + 1, 9, lanes[0]), np.float32)
        for r in range(L + 1):
            per = edge_masks_3x3(heights[r], widths[r])          # (9, P_r)
            mask_stack[r, :, :lanes[r]] = np.tile(per, (1, B))   # (9, B*P_r)
        self.masks = jnp.asarray(mask_stack)

        # ----- conv weights: order [contract_0..L-1, bottleneck_1, bottleneck_2, expand_0..L-1]
        conv_io = []
        ch = cin
        for _ in range(L):
            conv_io.append((ch, cbott)); ch = cbott
        conv_io += [(cbott, cbo), (cbo, cbo)]
        for i in range(L):
            conv_io.append((cbo, cbo if i < L - 1 else cout))
        n_conv = len(conv_io)

        key = jax.random.PRNGKey(seed)
        keys = jax.random.split(key, n_conv + L)

        def conv_block(k, cin_a, cout_a):
            kw, kb = jax.random.split(k)
            s = 1.0 / np.sqrt(cin_a * 9)
            w = s * jax.random.normal(kw, (9, Cmax, Cmax), jnp.float32)
            wm = np.zeros((9, Cmax, Cmax), np.float32)
            wm[:, :cin_a, :cout_a] = 1.0                          # zero padded channels
            w = (w * wm).reshape(9 * Cmax, Cmax)
            w = jnp.transpose(w)                                  # (Cmax, 9*Cmax)
            b = s * jax.random.normal(kb, (Cmax, 1), jnp.float32)
            bm = np.zeros((Cmax, 1), np.float32); bm[:cout_a] = 1.0
            return w.astype(jnp.bfloat16), b * bm

        ws, bs = [], []
        for idx, (ci, co) in enumerate(conv_io):
            w, b = conv_block(keys[idx], ci, co)
            ws.append(w); bs.append(b)
        self.conv_w = jnp.stack(ws)                               # (n_conv, Cmax, 9*Cmax) bf16
        self.conv_b = jnp.stack(bs)                               # (n_conv, Cmax, 1) f32

        # ----- skip connections: conv1x1 (pooling is fused into the contracting pool) -----
        skw, skb = [], []
        for j in range(L):
            kw, kb = jax.random.split(keys[n_conv + j])
            src_c, tgt_c = cbott, cbo
            s = 1.0 / np.sqrt(src_c)
            w = s * jax.random.normal(kw, (Cmax, Cmax), jnp.float32)
            wm = np.zeros((Cmax, Cmax), np.float32); wm[:tgt_c, :src_c] = 1.0
            b = s * jax.random.normal(kb, (Cmax, 1), jnp.float32)
            bm = np.zeros((Cmax, 1), np.float32); bm[:tgt_c] = 1.0
            skw.append((w * wm).astype(jnp.bfloat16)); skb.append(b * bm)
        self.skip_w = jnp.stack(skw)                              # (L, Cmax, Cmax) bf16
        self.skip_b = jnp.stack(skb)                              # (L, Cmax, 1) f32

        # ----- spatial operators (batched across the B lane-packed samples), bf16 -----
        self.pool_mats = [
            jnp.asarray(batch_block_diag(avgpool2x2_matrix_T(heights[l], widths[l]), B),
                        jnp.bfloat16)
            for l in range(L)]                                    # (lanes[l], lanes[l+1])
        self.up_mats = [
            jnp.asarray(batch_block_diag(upsample2x_matrix_T(heights[L - i], widths[L - i]), B),
                        jnp.bfloat16)
            for i in range(L)]                                    # (lanes[L-i], lanes[L-1-i])

        self.flat_params = ([self.masks, self.conv_w, self.conv_b,
                             self.skip_w, self.skip_b]
                            + self.pool_mats + self.up_mats)

        self._kernel = _build_fused_kernel(
            dict(L=L, widths=widths, lanes=lanes, Cmax=Cmax))

    @staticmethod
    def _const_spec(a):
        nd = a.ndim
        return pl.BlockSpec(a.shape, lambda g, _nd=nd: (0,) * _nd)

    def _get_forward(self, G):
        if G in self._cache:
            return self._cache[G]
        Lane0 = self.lanes[0]
        in_specs = [pl.BlockSpec((1, self.Cmax, Lane0), lambda g: (g, 0, 0))]
        in_specs += [self._const_spec(a) for a in self.flat_params]
        fn = pl.pallas_call(
            self._kernel,
            out_shape=jax.ShapeDtypeStruct((G, self.Cmax, Lane0), self.dtype),
            grid=(G,),
            in_specs=in_specs,
            out_specs=pl.BlockSpec((1, self.Cmax, Lane0), lambda g: (g, 0, 0)),
            compiler_params=pltpu.CompilerParams(
                dimension_semantics=("parallel",),
                vmem_limit_bytes=32 * 1024 * 1024),
        )
        self._cache[G] = fn
        return fn

    def __call__(self, x_nchw):
        cin, H, W = self.input_shape
        if x_nchw.shape[1:] != (cin, H, W):
            raise ValueError(f"Input shape must be {(cin, H, W)}, got {x_nchw.shape[1:]}")
        N = x_nchw.shape[0]
        B, P0, Cmax = self.B, self.P0, self.Cmax
        G = -(-N // B)
        Npad = G * B

        # NCHW -> lane-packed (G, Cmax, B*P) glue (pad channels to Cmax, batch to G*B)
        x = x_nchw.reshape(N, cin, P0).astype(jnp.float32)
        x = jnp.pad(x, ((0, Npad - N), (0, Cmax - cin), (0, 0)))
        x = x.reshape(G, B, Cmax, P0).transpose(0, 2, 1, 3).reshape(G, Cmax, B * P0)

        y = self._get_forward(G)(x, *self.flat_params)           # (G, Cmax, B*P0)

        cout, Ho, Wo = self.output_shape
        y = y.reshape(G, Cmax, B, P0).transpose(0, 2, 1, 3).reshape(Npad, Cmax, P0)
        return y[:N, :cout].reshape(N, cout, Ho, Wo)


# --------------------------------------------------------------------------
if __name__ == "__main__":
    model = AdaptiveUNetPallas(
        input_shape=(4, 16, 16),
        output_shape=(4, 16, 16),
        bottleneck_shape=(8, 4, 4),
        bottleneck_out_channels=None,
        seed=42,
    )

    key = jax.random.PRNGKey(0)
    x = jax.random.normal(key, (2, 4, 16, 16), jnp.float32)

    y = model(x)
    y = jax.block_until_ready(y)
    assert y.shape == (2, 4, 16, 16), y.shape
    assert bool(jnp.all(jnp.isfinite(y)))
    print("KERNEL_OK")
</pallas_src>

<mosaic_0001>
module attributes {stable_mosaic.version = 11 : i64} {
  func.func @kernel(%arg0: i32, %arg1: memref<1x8x2048xf32, #tpu.memory_space<vmem>>, %arg2: memref<3x9x2048xf32, #tpu.memory_space<vmem>>, %arg3: memref<6x8x72xbf16, #tpu.memory_space<vmem>>, %arg4: memref<6x8x1xf32, #tpu.memory_space<vmem>>, %arg5: memref<2x8x8xbf16, #tpu.memory_space<vmem>>, %arg6: memref<2x8x1xf32, #tpu.memory_space<vmem>>, %arg7: memref<2048x512xbf16, #tpu.memory_space<vmem>>, %arg8: memref<512x128xbf16, #tpu.memory_space<vmem>>, %arg9: memref<128x512xbf16, #tpu.memory_space<vmem>>, %arg10: memref<512x2048xbf16, #tpu.memory_space<vmem>>, %arg11: memref<1x8x2048xf32, #tpu.memory_space<vmem>>) attributes {dimension_semantics = [#tpu.dimension_semantics<parallel>], iteration_bounds = array<i64: 1>, scalar_prefetch = 0 : i64, scratch_operands = 0 : i64, tpu.core_type = #tpu.core_type<tc>, window_params = [{transform_indices = @transform_0, window_bounds = array<i64: 1, 8, 2048>}, {pipeline_mode = #tpu.pipeline_mode<synchronous>, transform_indices = @transform_1, window_bounds = array<i64: 3, 9, 2048>}, {pipeline_mode = #tpu.pipeline_mode<synchronous>, transform_indices = @transform_2, window_bounds = array<i64: 6, 8, 72>}, {pipeline_mode = #tpu.pipeline_mode<synchronous>, transform_indices = @transform_3, window_bounds = array<i64: 6, 8, 1>}, {pipeline_mode = #tpu.pipeline_mode<synchronous>, transform_indices = @transform_4, window_bounds = array<i64: 2, 8, 8>}, {pipeline_mode = #tpu.pipeline_mode<synchronous>, transform_indices = @transform_5, window_bounds = array<i64: 2, 8, 1>}, {pipeline_mode = #tpu.pipeline_mode<synchronous>, transform_indices = @transform_6, window_bounds = array<i64: 2048, 512>}, {pipeline_mode = #tpu.pipeline_mode<synchronous>, transform_indices = @transform_7, window_bounds = array<i64: 512, 128>}, {pipeline_mode = #tpu.pipeline_mode<synchronous>, transform_indices = @transform_8, window_bounds = array<i64: 128, 512>}, {pipeline_mode = #tpu.pipeline_mode<synchronous>, transform_indices = @transform_9, window_bounds = array<i64: 512, 2048>}, {transform_indices = @transform_10, window_bounds = array<i64: 1, 8, 2048>}]} {
    %c0 = arith.constant 0 : index
    %c0_0 = arith.constant 0 : index
    %c0_1 = arith.constant 0 : index
    %0 = vector.load %arg1[%c0, %c0_0, %c0_1] : memref<1x8x2048xf32, #tpu.memory_space<vmem>>, vector<1x8x2048xf32>
    %1 = vector.shape_cast %0 : vector<1x8x2048xf32> to vector<8x2048xf32>
    %c0_2 = arith.constant 0 : index
    %c0_3 = arith.constant 0 : index
    %c0_4 = arith.constant 0 : index
    %2 = vector.load %arg2[%c0_2, %c0_3, %c0_4] : memref<3x9x2048xf32, #tpu.memory_space<vmem>>, vector<1x9x2048xf32>
    %3 = vector.shape_cast %2 : vector<1x9x2048xf32> to vector<9x2048xf32>
    %c17_i32 = arith.constant 17 : i32
    %4 = tpu.dynamic_rotate %1 by %c17_i32 dim 1 : vector<8x2048xf32>, i32 -> vector<8x2048xf32>
    %5 = vector.extract_strided_slice %3 {offsets = [0, 0], sizes = [1, 2048], strides = [1, 1]} : vector<9x2048xf32> to vector<1x2048xf32>
    %6 = vector.broadcast %5 : vector<1x2048xf32> to vector<8x2048xf32>
    %7 = arith.mulf %4, %6 : vector<8x2048xf32>
    %c16_i32 = arith.constant 16 : i32
    %8 = tpu.dynamic_rotate %1 by %c16_i32 dim 1 : vector<8x2048xf32>, i32 -> vector<8x2048xf32>
    %9 = vector.extract_strided_slice %3 {offsets = [1, 0], sizes = [1, 2048], strides = [1, 1]} : vector<9x2048xf32> to vector<1x2048xf32>
    %10 = vector.broadcast %9 : vector<1x2048xf32> to vector<8x2048xf32>
    %11 = arith.mulf %8, %10 : vector<8x2048xf32>
    %c15_i32 = arith.constant 15 : i32
    %12 = tpu.dynamic_rotate %1 by %c15_i32 dim 1 : vector<8x2048xf32>, i32 -> vector<8x2048xf32>
    %13 = vector.extract_strided_slice %3 {offsets = [2, 0], sizes = [1, 2048], strides = [1, 1]} : vector<9x2048xf32> to vector<1x2048xf32>
    %14 = vector.broadcast %13 : vector<1x2048xf32> to vector<8x2048xf32>
    %15 = arith.mulf %12, %14 : vector<8x2048xf32>
    %c1_i32 = arith.constant 1 : i32
    %16 = tpu.dynamic_rotate %1 by %c1_i32 dim 1 : vector<8x2048xf32>, i32 -> vector<8x2048xf32>
    %17 = vector.extract_strided_slice %3 {offsets = [3, 0], sizes = [1, 2048], strides = [1, 1]} : vector<9x2048xf32> to vector<1x2048xf32>
    %18 = vector.broadcast %17 : vector<1x2048xf32> to vector<8x2048xf32>
    %19 = arith.mulf %16, %18 : vector<8x2048xf32>
    %c2047_i32 = arith.constant 2047 : i32
    %20 = tpu.dynamic_rotate %1 by %c2047_i32 dim 1 : vector<8x2048xf32>, i32 -> vector<8x2048xf32>
    %21 = vector.extract_strided_slice %3 {offsets = [5, 0], sizes = [1, 2048], strides = [1, 1]} : vector<9x2048xf32> to vector<1x2048xf32>
    %22 = vector.broadcast %21 : vector<1x2048xf32> to vector<8x2048xf32>
    %23 = arith.mulf %20, %22 : vector<8x2048xf32>
    %c2033_i32 = arith.constant 2033 : i32
    %24 = tpu.dynamic_rotate %1 by %c2033_i32 dim 1 : vector<8x2048xf32>, i32 -> vector<8x2048xf32>
    %25 = vector.extract_strided_slice %3 {offsets = [6, 0], sizes = [1, 2048], strides = [1, 1]} : vector<9x2048xf32> to vector<1x2048xf32>
    %26 = vector.broadcast %25 : vector<1x2048xf32> to vector<8x2048xf32>
    %27 = arith.mulf %24, %26 : vector<8x2048xf32>
    %c2032_i32 = arith.constant 2032 : i32
    %28 = tpu.dynamic_rotate %1 by %c2032_i32 dim 1 : vector<8x2048xf32>, i32 -> vector<8x2048xf32>
    %29 = vector.extract_strided_slice %3 {offsets = [7, 0], sizes = [1, 2048], strides = [1, 1]} : vector<9x2048xf32> to vector<1x2048xf32>
    %30 = vector.broadcast %29 : vector<1x2048xf32> to vector<8x2048xf32>
    %31 = arith.mulf %28, %30 : vector<8x2048xf32>
    %c2031_i32 = arith.constant 2031 : i32
    %32 = tpu.dynamic_rotate %1 by %c2031_i32 dim 1 : vector<8x2048xf32>, i32 -> vector<8x2048xf32>
    %33 = vector.extract_strided_slice %3 {offsets = [8, 0], sizes = [1, 2048], strides = [1, 1]} : vector<9x2048xf32> to vector<1x2048xf32>
    %34 = vector.broadcast %33 : vector<1x2048xf32> to vector<8x2048xf32>
    %35 = arith.mulf %32, %34 : vector<8x2048xf32>
    %36 = tpu.concatenate %7, %11, %15, %19, %1, %23, %27, %31, %35 in 0 : vector<8x2048xf32>, vector<8x2048xf32>, vector<8x2048xf32>, vector<8x2048xf32>, vector<8x2048xf32>, vector<8x2048xf32>, vector<8x2048xf32>, vector<8x2048xf32>, vector<8x2048xf32> -> vector<72x2048xf32>
    %37 = arith.truncf %36 : vector<72x2048xf32> to vector<72x2048xbf16>
    %c0_5 = arith.constant 0 : index
    %c0_6 = arith.constant 0 : index
    %c0_7 = arith.constant 0 : index
    %38 = vector.load %arg3[%c0_5, %c0_6, %c0_7] : memref<6x8x72xbf16, #tpu.memory_space<vmem>>, vector<1x8x72xbf16>
    %39 = vector.shape_cast %38 : vector<1x8x72xbf16> to vector<8x72xbf16>
    %cst = arith.constant dense<0.000000e+00> : vector<8x2048xf32>
    %40 = tpu.matmul %39, %37, %cst {dimension_numbers = #tpu.dot_dimension_numbers<[1], [0], [0], [1], [0, 0, 1, 1], [], []>} : vector<8x72xbf16>, vector<72x2048xbf16>, vector<8x2048xf32> -> vector<8x2048xf32>
    %c0_8 = arith.constant 0 : index
    %c0_9 = arith.constant 0 : index
    %c0_10 = arith.constant 0 : index
    %41 = vector.load %arg4[%c0_8, %c0_9, %c0_10] : memref<6x8x1xf32, #tpu.memory_space<vmem>>, vector<1x8x1xf32>
    %42 = vector.shape_cast %41 : vector<1x8x1xf32> to vector<8x1xf32>
    %43 = vector.broadcast %42 : vector<8x1xf32> to vector<8x2048xf32>
    %44 = arith.addf %40, %43 : vector<8x2048xf32>
    %cst_11 = arith.constant 0.000000e+00 : f32
    %45 = vector.broadcast %cst_11 : f32 to vector<8x2048xf32>
    %46 = arith.maximumf %44, %45 : vector<8x2048xf32>
    %47 = arith.truncf %46 : vector<8x2048xf32> to vector<8x2048xbf16>
    %c0_12 = arith.constant 0 : index
    %c0_13 = arith.constant 0 : index
    %48 = vector.load %arg7[%c0_12, %c0_13] : memref<2048x512xbf16, #tpu.memory_space<vmem>>, vector<2048x512xbf16>
    %cst_14 = arith.constant dense<0.000000e+00> : vector<8x512xf32>
    %49 = tpu.matmul %47, %48, %cst_14 {dimension_numbers = #tpu.dot_dimension_numbers<[1], [0], [0], [1], [0, 0, 1, 1], [], []>} : vector<8x2048xbf16>, vector<2048x512xbf16>, vector<8x512xf32> -> vector<8x512xf32>
    %c1 = arith.constant 1 : index
    %c0_15 = arith.constant 0 : index
    %c0_16 = arith.constant 0 : index
    %50 = vector.load %arg2[%c1, %c0_15, %c0_16] : memref<3x9x2048xf32, #tpu.memory_space<vmem>>, vector<1x9x2048xf32>
    %51 = vector.shape_cast %50 : vector<1x9x2048xf32> to vector<9x2048xf32>
    %c9_i32 = arith.constant 9 : i32
    %52 = tpu.dynamic_rotate %49 by %c9_i32 dim 1 : vector<8x512xf32>, i32 -> vector<8x512xf32>
    %53 = vector.extract_strided_slice %51 {offsets = [0, 0], sizes = [1, 512], strides = [1, 1]} : vector<9x2048xf32> to vector<1x512xf32>
    %54 = vector.broadcast %53 : vector<1x512xf32> to vector<8x512xf32>
    %55 = arith.mulf %52, %54 : vector<8x512xf32>
    %c8_i32 = arith.constant 8 : i32
    %56 = tpu.dynamic_rotate %49 by %c8_i32 dim 1 : vector<8x512xf32>, i32 -> vector<8x512xf32>
    %57 = vector.extract_strided_slice %51 {offsets = [1, 0], sizes = [1, 512], strides = [1, 1]} : vector<9x2048xf32> to vector<1x512xf32>
    %58 = vector.broadcast %57 : vector<1x512xf32> to vector<8x512xf32>
    %59 = arith.mulf %56, %58 : vector<8x512xf32>
    %c7_i32 = arith.constant 7 : i32
    %60 = tpu.dynamic_rotate %49 by %c7_i32 dim 1 : vector<8x512xf32>, i32 -> vector<8x512xf32>
    %61 = vector.extract_strided_slice %51 {offsets = [2, 0], sizes = [1, 512], strides = [1, 1]} : vector<9x2048xf32> to vector<1x512xf32>
    %62 = vector.broadcast %61 : vector<1x512xf32> to vector<8x512xf32>
    %63 = arith.mulf %60, %62 : vector<8x512xf32>
    %c1_i32_17 = arith.constant 1 : i32
    %64 = tpu.dynamic_rotate %49 by %c1_i32_17 dim 1 : vector<8x512xf32>, i32 -> vector<8x512xf32>
    %65 = vector.extract_strided_slice %51 {offsets = [3, 0], sizes = [1, 512], strides = [1, 1]} : vector<9x2048xf32> to vector<1x512xf32>
    %66 = vector.broadcast %65 : vector<1x512xf32> to vector<8x512xf32>
    %67 = arith.mulf %64, %66 : vector<8x512xf32>
    %c511_i32 = arith.constant 511 : i32
    %68 = tpu.dynamic_rotate %49 by %c511_i32 dim 1 : vector<8x512xf32>, i32 -> vector<8x512xf32>
    %69 = vector.extract_strided_slice %51 {offsets = [5, 0], sizes = [1, 512], strides = [1, 1]} : vector<9x2048xf32> to vector<1x512xf32>
    %70 = vector.broadcast %69 : vector<1x512xf32> to vector<8x512xf32>
    %71 = arith.mulf %68, %70 : vector<8x512xf32>
    %c505_i32 = arith.constant 505 : i32
    %72 = tpu.dynamic_rotate %49 by %c505_i32 dim 1 : vector<8x512xf32>, i32 -> vector<8x512xf32>
    %73 = vector.extract_strided_slice %51 {offsets = [6, 0], sizes = [1, 512], strides = [1, 1]} : vector<9x2048xf32> to vector<1x512xf32>
    %74 = vector.broadcast %73 : vector<1x512xf32> to vector<8x512xf32>
    %75 = arith.mulf %72, %74 : vector<8x512xf32>
    %c504_i32 = arith.constant 504 : i32
    %76 = tpu.dynamic_rotate %49 by %c504_i32 dim 1 : vector<8x512xf32>, i32 -> vector<8x512xf32>
    %77 = vector.extract_strided_slice %51 {offsets = [7, 0], sizes = [1, 512], strides = [1, 1]} : vector<9x2048xf32> to vector<1x512xf32>
    %78 = vector.broadcast %77 : vector<1x512xf32> to vector<8x512xf32>
    %79 = arith.mulf %76, %78 : vector<8x512xf32>
    %c503_i32 = arith.constant 503 : i32
    %80 = tpu.dynamic_rotate %49 by %c503_i32 dim 1 : vector<8x512xf32>, i32 -> vector<8x512xf32>
    %81 = vector.extract_strided_slice %51 {offsets = [8, 0], sizes = [1, 512], strides = [1, 1]} : vector<9x2048xf32> to vector<1x512xf32>
    %82 = vector.broadcast %81 : vector<1x512xf32> to vector<8x512xf32>
    %83 = arith.mulf %80, %82 : vector<8x512xf32>
    %84 = tpu.concatenate %55, %59, %63, %67, %49, %71, %75, %79, %83 in 0 : vector<8x512xf32>, vector<8x512xf32>, vector<8x512xf32>, vector<8x512xf32>, vector<8x512xf32>, vector<8x512xf32>, vector<8x512xf32>, vector<8x512xf32>, vector<8x512xf32> -> vector<72x512xf32>
    %85 = arith.truncf %84 : vector<72x512xf32> to vector<72x512xbf16>
    %c1_18 = arith.constant 1 : index
    %c0_19 = arith.constant 0 : index
    %c0_20 = arith.constant 0 : index
    %86 = vector.load %arg3[%c1_18, %c0_19, %c0_20] : memref<6x8x72xbf16, #tpu.memory_space<vmem>>, vector<1x8x72xbf16>
    %87 = vector.shape_cast %86 : vector<1x8x72xbf16> to vector<8x72xbf16>
    %cst_21 = arith.constant dense<0.000000e+00> : vector<8x512xf32>
    %88 = tpu.matmul %87, %85, %cst_21 {dimension_numbers = #tpu.dot_dimension_numbers<[1], [0], [0], [1], [0, 0, 1, 1], [], []>} : vector<8x72xbf16>, vector<72x512xbf16>, vector<8x512xf32> -> vector<8x512xf32>
    %c1_22 = arith.constant 1 : index
    %c0_23 = arith.constant 0 : index
    %c0_24 = arith.constant 0 : index
    %89 = vector.load %arg4[%c1_22, %c0_23, %c0_24] : memref<6x8x1xf32, #tpu.memory_space<vmem>>, vector<1x8x1xf32>
    %90 = vector.shape_cast %89 : vector<1x8x1xf32> to vector<8x1xf32>
    %91 = vector.broadcast %90 : vector<8x1xf32> to vector<8x512xf32>
    %92 = arith.addf %88, %91 : vector<8x512xf32>
    %cst_25 = arith.constant 0.000000e+00 : f32
    %93 = vector.broadcast %cst_25 : f32 to vector<8x512xf32>
    %94 = arith.maximumf %92, %93 : vector<8x512xf32>
    %95 = arith.truncf %94 : vector<8x512xf32> to vector<8x512xbf16>
    %c0_26 = arith.constant 0 : index
    %c0_27 = arith.constant 0 : index
    %96 = vector.load %arg8[%c0_26, %c0_27] : memref<512x128xbf16, #tpu.memory_space<vmem>>, vector<512x128xbf16>
    %cst_28 = arith.constant dense<0.000000e+00> : vector<8x128xf32>
    %97 = tpu.matmul %95, %96, %cst_28 {dimension_numbers = #tpu.dot_dimension_numbers<[1], [0], [0], [1], [0, 0, 1, 1], [], []>} : vector<8x512xbf16>, vector<512x128xbf16>, vector<8x128xf32> -> vector<8x128xf32>
    %c2 = arith.constant 2 : index
    %c0_29 = arith.constant 0 : index
    %c0_30 = arith.constant 0 : index
    %98 = vector.load %arg2[%c2, %c0_29, %c0_30] : memref<3x9x2048xf32, #tpu.memory_space<vmem>>, vector<1x9x2048xf32>
    %99 = vector.shape_cast %98 : vector<1x9x2048xf32> to vector<9x2048xf32>
    %c5_i32 = arith.constant 5 : i32
    %100 = tpu.dynamic_rotate %97 by %c5_i32 dim 1 : vector<8x128xf32>, i32 -> vector<8x128xf32>
    %101 = vector.extract_strided_slice %99 {offsets = [0, 0], sizes = [1, 128], strides = [1, 1]} : vector<9x2048xf32> to vector<1x128xf32>
    %102 = vector.broadcast %101 : vector<1x128xf32> to vector<8x128xf32>
    %103 = arith.mulf %100, %102 : vector<8x128xf32>
    %c4_i32 = arith.constant 4 : i32
    %104 = tpu.dynamic_rotate %97 by %c4_i32 dim 1 : vector<8x128xf32>, i32 -> vector<8x128xf32>
    %105 = vector.extract_strided_slice %99 {offsets = [1, 0], sizes = [1, 128], strides = [1, 1]} : vector<9x2048xf32> to vector<1x128xf32>
    %106 = vector.broadcast %105 : vector<1x128xf32> to vector<8x128xf32>
    %107 = arith.mulf %104, %106 : vector<8x128xf32>
    %c3_i32 = arith.constant 3 : i32
    %108 = tpu.dynamic_rotate %97 by %c3_i32 dim 1 : vector<8x128xf32>, i32 -> vector<8x128xf32>
    %109 = vector.extract_strided_slice %99 {offsets = [2, 0], sizes = [1, 128], strides = [1, 1]} : vector<9x2048xf32> to vector<1x128xf32>
    %110 = vector.broadcast %109 : vector<1x128xf32> to vector<8x128xf32>
    %111 = arith.mulf %108, %110 : vector<8x128xf32>
    %c1_i32_31 = arith.constant 1 : i32
    %112 = tpu.dynamic_rotate %97 by %c1_i32_31 dim 1 : vector<8x128xf32>, i32 -> vector<8x128xf32>
    %113 = vector.extract_strided_slice %99 {offsets = [3, 0], sizes = [1, 128], strides = [1, 1]} : vector<9x2048xf32> to vector<1x128xf32>
    %114 = vector.broadcast %113 : vector<1x128xf32> to vector<8x128xf32>
    %115 = arith.mulf %112, %114 : vector<8x128xf32>
    %c127_i32 = arith.constant 127 : i32
    %116 = tpu.dynamic_rotate %97 by %c127_i32 dim 1 : vector<8x128xf32>, i32 -> vector<8x128xf32>
    %117 = vector.extract_strided_slice %99 {offsets = [5, 0], sizes = [1, 128], strides = [1, 1]} : vector<9x2048xf32> to vector<1x128xf32>
    %118 = vector.broadcast %117 : vector<1x128xf32> to vector<8x128xf32>
    %119 = arith.mulf %116, %118 : vector<8x128xf32>
    %c125_i32 = arith.constant 125 : i32
    %120 = tpu.dynamic_rotate %97 by %c125_i32 dim 1 : vector<8x128xf32>, i32 -> vector<8x128xf32>
    %121 = vector.extract_strided_slice %99 {offsets = [6, 0], sizes = [1, 128], strides = [1, 1]} : vector<9x2048xf32> to vector<1x128xf32>
    %122 = vector.broadcast %121 : vector<1x128xf32> to vector<8x128xf32>
    %123 = arith.mulf %120, %122 : vector<8x128xf32>
    %c124_i32 = arith.constant 124 : i32
    %124 = tpu.dynamic_rotate %97 by %c124_i32 dim 1 : vector<8x128xf32>, i32 -> vector<8x128xf32>
    %125 = vector.extract_strided_slice %99 {offsets = [7, 0], sizes = [1, 128], strides = [1, 1]} : vector<9x2048xf32> to vector<1x128xf32>
    %126 = vector.broadcast %125 : vector<1x128xf32> to vector<8x128xf32>
    %127 = arith.mulf %124, %126 : vector<8x128xf32>
    %c123_i32 = arith.constant 123 : i32
    %128 = tpu.dynamic_rotate %97 by %c123_i32 dim 1 : vector<8x128xf32>, i32 -> vector<8x128xf32>
    %129 = vector.extract_strided_slice %99 {offsets = [8, 0], sizes = [1, 128], strides = [1, 1]} : vector<9x2048xf32> to vector<1x128xf32>
    %130 = vector.broadcast %129 : vector<1x128xf32> to vector<8x128xf32>
    %131 = arith.mulf %128, %130 : vector<8x128xf32>
    %132 = tpu.concatenate %103, %107, %111, %115, %97, %119, %123, %127, %131 in 0 : vector<8x128xf32>, vector<8x128xf32>, vector<8x128xf32>, vector<8x128xf32>, vector<8x128xf32>, vector<8x128xf32>, vector<8x128xf32>, vector<8x128xf32>, vector<8x128xf32> -> vector<72x128xf32>
    %133 = arith.truncf %132 : vector<72x128xf32> to vector<72x128xbf16>
    %c2_32 = arith.constant 2 : index
    %c0_33 = arith.constant 0 : index
    %c0_34 = arith.constant 0 : index
    %134 = vector.load %arg3[%c2_32, %c0_33, %c0_34] : memref<6x8x72xbf16, #tpu.memory_space<vmem>>, vector<1x8x72xbf16>
    %135 = vector.shape_cast %134 : vector<1x8x72xbf16> to vector<8x72xbf16>
    %cst_35 = arith.constant dense<0.000000e+00> : vector<8x128xf32>
    %136 = tpu.matmul %135, %133, %cst_35 {dimension_numbers = #tpu.dot_dimension_numbers<[1], [0], [0], [1], [0, 0, 1, 1], [], []>} : vector<8x72xbf16>, vector<72x128xbf16>, vector<8x128xf32> -> vector<8x128xf32>
    %c2_36 = arith.constant 2 : index
    %c0_37 = arith.constant 0 : index
    %c0_38 = arith.constant 0 : index
    %137 = vector.load %arg4[%c2_36, %c0_37, %c0_38] : memref<6x8x1xf32, #tpu.memory_space<vmem>>, vector<1x8x1xf32>
    %138 = vector.shape_cast %137 : vector<1x8x1xf32> to vector<8x1xf32>
    %139 = vector.broadcast %138 : vector<8x1xf32> to vector<8x128xf32>
    %140 = arith.addf %136, %139 : vector<8x128xf32>
    %cst_39 = arith.constant 0.000000e+00 : f32
    %141 = vector.broadcast %cst_39 : f32 to vector<8x128xf32>
    %142 = arith.maximumf %140, %141 : vector<8x128xf32>
    %c2_40 = arith.constant 2 : index
    %c0_41 = arith.constant 0 : index
    %c0_42 = arith.constant 0 : index
    %143 = vector.load %arg2[%c2_40, %c0_41, %c0_42] : memref<3x9x2048xf32, #tpu.memory_space<vmem>>, vector<1x9x2048xf32>
    %144 = vector.shape_cast %143 : vector<1x9x2048xf32> to vector<9x2048xf32>
    %c5_i32_43 = arith.constant 5 : i32
    %145 = tpu.dynamic_rotate %142 by %c5_i32_43 dim 1 : vector<8x128xf32>, i32 -> vector<8x128xf32>
    %146 = vector.extract_strided_slice %144 {offsets = [0, 0], sizes = [1, 128], strides = [1, 1]} : vector<9x2048xf32> to vector<1x128xf32>
    %147 = vector.broadcast %146 : vector<1x128xf32> to vector<8x128xf32>
    %148 = arith.mulf %145, %147 : vector<8x128xf32>
    %c4_i32_44 = arith.constant 4 : i32
    %149 = tpu.dynamic_rotate %142 by %c4_i32_44 dim 1 : vector<8x128xf32>, i32 -> vector<8x128xf32>
    %150 = vector.extract_strided_slice %144 {offsets = [1, 0], sizes = [1, 128], strides = [1, 1]} : vector<9x2048xf32> to vector<1x128xf32>
    %151 = vector.broadcast %150 : vector<1x128xf32> to vector<8x128xf32>
    %152 = arith.mulf %149, %151 : vector<8x128xf32>
    %c3_i32_45 = arith.constant 3 : i32
    %153 = tpu.dynamic_rotate %142 by %c3_i32_45 dim 1 : vector<8x128xf32>, i32 -> vector<8x128xf32>
    %154 = vector.extract_strided_slice %144 {offsets = [2, 0], sizes = [1, 128], strides = [1, 1]} : vector<9x2048xf32> to vector<1x128xf32>
    %155 = vector.broadcast %154 : vector<1x128xf32> to vector<8x128xf32>
    %156 = arith.mulf %153, %155 : vector<8x128xf32>
    %c1_i32_46 = arith.constant 1 : i32
    %157 = tpu.dynamic_rotate %142 by %c1_i32_46 dim 1 : vector<8x128xf32>, i32 -> vector<8x128xf32>
    %158 = vector.extract_strided_slice %144 {offsets = [3, 0], sizes = [1, 128], strides = [1, 1]} : vector<9x2048xf32> to vector<1x128xf32>
    %159 = vector.broadcast %158 : vector<1x128xf32> to vector<8x128xf32>
    %160 = arith.mulf %157, %159 : vector<8x128xf32>
    %c127_i32_47 = arith.constant 127 : i32
    %161 = tpu.dynamic_rotate %142 by %c127_i32_47 dim 1 : vector<8x128xf32>, i32 -> vector<8x128xf32>
    %162 = vector.extract_strided_slice %144 {offsets = [5, 0], sizes = [1, 128], strides = [1, 1]} : vector<9x2048xf32> to vector<1x128xf32>
    %163 = vector.broadcast %162 : vector<1x128xf32> to vector<8x128xf32>
    %164 = arith.mulf %161, %163 : vector<8x128xf32>
    %c125_i32_48 = arith.constant 125 : i32
    %165 = tpu.dynamic_rotate %142 by %c125_i32_48 dim 1 : vector<8x128xf32>, i32 -> vector<8x128xf32>
    %166 = vector.extract_strided_slice %144 {offsets = [6, 0], sizes = [1, 128], strides = [1, 1]} : vector<9x2048xf32> to vector<1x128xf32>
    %167 = vector.broadcast %166 : vector<1x128xf32> to vector<8x128xf32>
    %168 = arith.mulf %165, %167 : vector<8x128xf32>
    %c124_i32_49 = arith.constant 124 : i32
    %169 = tpu.dynamic_rotate %142 by %c124_i32_49 dim 1 : vector<8x128xf32>, i32 -> vector<8x128xf32>
    %170 = vector.extract_strided_slice %144 {offsets = [7, 0], sizes = [1, 128], strides = [1, 1]} : vector<9x2048xf32> to vector<1x128xf32>
    %171 = vector.broadcast %170 : vector<1x128xf32> to vector<8x128xf32>
    %172 = arith.mulf %169, %171 : vector<8x128xf32>
    %c123_i32_50 = arith.constant 123 : i32
    %173 = tpu.dynamic_rotate %142 by %c123_i32_50 dim 1 : vector<8x128xf32>, i32 -> vector<8x128xf32>
    %174 = vector.extract_strided_slice %144 {offsets = [8, 0], sizes = [1, 128], strides = [1, 1]} : vector<9x2048xf32> to vector<1x128xf32>
    %175 = vector.broadcast %174 : vector<1x128xf32> to vector<8x128xf32>
    %176 = arith.mulf %173, %175 : vector<8x128xf32>
    %177 = tpu.concatenate %148, %152, %156, %160, %142, %164, %168, %172, %176 in 0 : vector<8x128xf32>, vector<8x128xf32>, vector<8x128xf32>, vector<8x128xf32>, vector<8x128xf32>, vector<8x128xf32>, vector<8x128xf32>, vector<8x128xf32>, vector<8x128xf32> -> vector<72x128xf32>
    %178 = arith.truncf %177 : vector<72x128xf32> to vector<72x128xbf16>
    %c3 = arith.constant 3 : index
    %c0_51 = arith.constant 0 : index
    %c0_52 = arith.constant 0 : index
    %179 = vector.load %arg3[%c3, %c0_51, %c0_52] : memref<6x8x72xbf16, #tpu.memory_space<vmem>>, vector<1x8x72xbf16>
    %180 = vector.shape_cast %179 : vector<1x8x72xbf16> to vector<8x72xbf16>
    %cst_53 = arith.constant dense<0.000000e+00> : vector<8x128xf32>
    %181 = tpu.matmul %180, %178, %cst_53 {dimension_numbers = #tpu.dot_dimension_numbers<[1], [0], [0], [1], [0, 0, 1, 1], [], []>} : vector<8x72xbf16>, vector<72x128xbf16>, vector<8x128xf32> -> vector<8x128xf32>
    %c3_54 = arith.constant 3 : index
    %c0_55 = arith.constant 0 : index
    %c0_56 = arith.constant 0 : index
    %182 = vector.load %arg4[%c3_54, %c0_55, %c0_56] : memref<6x8x1xf32, #tpu.memory_space<vmem>>, vector<1x8x1xf32>
    %183 = vector.shape_cast %182 : vector<1x8x1xf32> to vector<8x1xf32>
    %184 = vector.broadcast %183 : vector<8x1xf32> to vector<8x128xf32>
    %185 = arith.addf %181, %184 : vector<8x128xf32>
    %186 = arith.addf %185, %97 : vector<8x128xf32>
    %cst_57 = arith.constant 0.000000e+00 : f32
    %187 = vector.broadcast %cst_57 : f32 to vector<8x128xf32>
    %188 = arith.maximumf %186, %187 : vector<8x128xf32>
    %c1_58 = arith.constant 1 : index
    %c0_59 = arith.constant 0 : index
    %c0_60 = arith.constant 0 : index
    %189 = vector.load %arg5[%c1_58, %c0_59, %c0_60] : memref<2x8x8xbf16, #tpu.memory_space<vmem>>, vector<1x8x8xbf16>
    %190 = vector.shape_cast %189 : vector<1x8x8xbf16> to vector<8x8xbf16>
    %191 = arith.truncf %97 : vector<8x128xf32> to vector<8x128xbf16>
    %cst_61 = arith.constant dense<0.000000e+00> : vector<8x128xf32>
    %192 = tpu.matmul %190, %191, %cst_61 {dimension_numbers = #tpu.dot_dimension_numbers<[1], [0], [0], [1], [0, 0, 1, 1], [], []>} : vector<8x8xbf16>, vector<8x128xbf16>, vector<8x128xf32> -> vector<8x128xf32>
    %c1_62 = arith.constant 1 : index
    %c0_63 = arith.constant 0 : index
    %c0_64 = arith.constant 0 : index
    %193 = vector.load %arg6[%c1_62, %c0_63, %c0_64] : memref<2x8x1xf32, #tpu.memory_space<vmem>>, vector<1x8x1xf32>
    %194 = vector.shape_cast %193 : vector<1x8x1xf32> to vector<8x1xf32>
    %195 = vector.broadcast %194 : vector<8x1xf32> to vector<8x128xf32>
    %196 = arith.addf %192, %195 : vector<8x128xf32>
    %197 = arith.addf %188, %196 : vector<8x128xf32>
    %198 = arith.truncf %197 : vector<8x128xf32> to vector<8x128xbf16>
    %c0_65 = arith.constant 0 : index
    %c0_66 = arith.constant 0 : index
    %199 = vector.load %arg9[%c0_65, %c0_66] : memref<128x512xbf16, #tpu.memory_space<vmem>>, vector<128x512xbf16>
    %cst_67 = arith.constant dense<0.000000e+00> : vector<8x512xf32>
    %200 = tpu.matmul %198, %199, %cst_67 {dimension_numbers = #tpu.dot_dimension_numbers<[1], [0], [0], [1], [0, 0, 1, 1], [], []>} : vector<8x128xbf16>, vector<128x512xbf16>, vector<8x512xf32> -> vector<8x512xf32>
    %c1_68 = arith.constant 1 : index
    %c0_69 = arith.constant 0 : index
    %c0_70 = arith.constant 0 : index
    %201 = vector.load %arg2[%c1_68, %c0_69, %c0_70] : memref<3x9x2048xf32, #tpu.memory_space<vmem>>, vector<1x9x2048xf32>
    %202 = vector.shape_cast %201 : vector<1x9x2048xf32> to vector<9x2048xf32>
    %c9_i32_71 = arith.constant 9 : i32
    %203 = tpu.dynamic_rotate %200 by %c9_i32_71 dim 1 : vector<8x512xf32>, i32 -> vector<8x512xf32>
    %204 = vector.extract_strided_slice %202 {offsets = [0, 0], sizes = [1, 512], strides = [1, 1]} : vector<9x2048xf32> to vector<1x512xf32>
    %205 = vector.broadcast %204 : vector<1x512xf32> to vector<8x512xf32>
    %206 = arith.mulf %203, %205 : vector<8x512xf32>
    %c8_i32_72 = arith.constant 8 : i32
    %207 = tpu.dynamic_rotate %200 by %c8_i32_72 dim 1 : vector<8x512xf32>, i32 -> vector<8x512xf32>
    %208 = vector.extract_strided_slice %202 {offsets = [1, 0], sizes = [1, 512], strides = [1, 1]} : vector<9x2048xf32> to vector<1x512xf32>
    %209 = vector.broadcast %208 : vector<1x512xf32> to vector<8x512xf32>
    %210 = arith.mulf %207, %209 : vector<8x512xf32>
    %c7_i32_73 = arith.constant 7 : i32
    %211 = tpu.dynamic_rotate %200 by %c7_i32_73 dim 1 : vector<8x512xf32>, i32 -> vector<8x512xf32>
    %212 = vector.extract_strided_slice %202 {offsets = [2, 0], sizes = [1, 512], strides = [1, 1]} : vector<9x2048xf32> to vector<1x512xf32>
    %213 = vector.broadcast %212 : vector<1x512xf32> to vector<8x512xf32>
    %214 = arith.mulf %211, %213 : vector<8x512xf32>
    %c1_i32_74 = arith.constant 1 : i32
    %215 = tpu.dynamic_rotate %200 by %c1_i32_74 dim 1 : vector<8x512xf32>, i32 -> vector<8x512xf32>
    %216 = vector.extract_strided_slice %202 {offsets = [3, 0], sizes = [1, 512], strides = [1, 1]} : vector<9x2048xf32> to vector<1x512xf32>
    %217 = vector.broadcast %216 : vector<1x512xf32> to vector<8x512xf32>
    %218 = arith.mulf %215, %217 : vector<8x512xf32>
    %c511_i32_75 = arith.constant 511 : i32
    %219 = tpu.dynamic_rotate %200 by %c511_i32_75 dim 1 : vector<8x512xf32>, i32 -> vector<8x512xf32>
    %220 = vector.extract_strided_slice %202 {offsets = [5, 0], sizes = [1, 512], strides = [1, 1]} : vector<9x2048xf32> to vector<1x512xf32>
    %221 = vector.broadcast %220 : vector<1x512xf32> to vector<8x512xf32>
    %222 = arith.mulf %219, %221 : vector<8x512xf32>
    %c505_i32_76 = arith.constant 505 : i32
    %223 = tpu.dynamic_rotate %200 by %c505_i32_76 dim 1 : vector<8x512xf32>, i32 -> vector<8x512xf32>
    %224 = vector.extract_strided_slice %202 {offsets = [6, 0], sizes = [1, 512], strides = [1, 1]} : vector<9x2048xf32> to vector<1x512xf32>
    %225 = vector.broadcast %224 : vector<1x512xf32> to vector<8x512xf32>
    %226 = arith.mulf %223, %225 : vector<8x512xf32>
    %c504_i32_77 = arith.constant 504 : i32
    %227 = tpu.dynamic_rotate %200 by %c504_i32_77 dim 1 : vector<8x512xf32>, i32 -> vector<8x512xf32>
    %228 = vector.extract_strided_slice %202 {offsets = [7, 0], sizes = [1, 512], strides = [1, 1]} : vector<9x2048xf32> to vector<1x512xf32>
    %229 = vector.broadcast %228 : vector<1x512xf32> to vector<8x512xf32>
    %230 = arith.mulf %227, %229 : vector<8x512xf32>
    %c503_i32_78 = arith.constant 503 : i32
    %231 = tpu.dynamic_rotate %200 by %c503_i32_78 dim 1 : vector<8x512xf32>, i32 -> vector<8x512xf32>
    %232 = vector.extract_strided_slice %202 {offsets = [8, 0], sizes = [1, 512], strides = [1, 1]} : vector<9x2048xf32> to vector<1x512xf32>
    %233 = vector.broadcast %232 : vector<1x512xf32> to vector<8x512xf32>
    %234 = arith.mulf %231, %233 : vector<8x512xf32>
    %235 = tpu.concatenate %206, %210, %214, %218, %200, %222, %226, %230, %234 in 0 : vector<8x512xf32>, vector<8x512xf32>, vector<8x512xf32>, vector<8x512xf32>, vector<8x512xf32>, vector<8x512xf32>, vector<8x512xf32>, vector<8x512xf32>, vector<8x512xf32> -> vector<72x512xf32>
    %236 = arith.truncf %235 : vector<72x512xf32> to vector<72x512xbf16>
    %c4 = arith.constant 4 : index
    %c0_79 = arith.constant 0 : index
    %c0_80 = arith.constant 0 : index
    %237 = vector.load %arg3[%c4, %c0_79, %c0_80] : memref<6x8x72xbf16, #tpu.memory_space<vmem>>, vector<1x8x72xbf16>
    %238 = vector.shape_cast %237 : vector<1x8x72xbf16> to vector<8x72xbf16>
    %cst_81 = arith.constant dense<0.000000e+00> : vector<8x512xf32>
    %239 = tpu.matmul %238, %236, %cst_81 {dimension_numbers = #tpu.dot_dimension_numbers<[1], [0], [0], [1], [0, 0, 1, 1], [], []>} : vector<8x72xbf16>, vector<72x512xbf16>, vector<8x512xf32> -> vector<8x512xf32>
    %c4_82 = arith.constant 4 : index
    %c0_83 = arith.constant 0 : index
    %c0_84 = arith.constant 0 : index
    %240 = vector.load %arg4[%c4_82, %c0_83, %c0_84] : memref<6x8x1xf32, #tpu.memory_space<vmem>>, vector<1x8x1xf32>
    %241 = vector.shape_cast %240 : vector<1x8x1xf32> to vector<8x1xf32>
    %242 = vector.broadcast %241 : vector<8x1xf32> to vector<8x512xf32>
    %243 = arith.addf %239, %242 : vector<8x512xf32>
    %cst_85 = arith.constant 0.000000e+00 : f32
    %244 = vector.broadcast %cst_85 : f32 to vector<8x512xf32>
    %245 = arith.maximumf %243, %244 : vector<8x512xf32>
    %c0_86 = arith.constant 0 : index
    %c0_87 = arith.constant 0 : index
    %c0_88 = arith.constant 0 : index
    %246 = vector.load %arg5[%c0_86, %c0_87, %c0_88] : memref<2x8x8xbf16, #tpu.memory_space<vmem>>, vector<1x8x8xbf16>
    %247 = vector.shape_cast %246 : vector<1x8x8xbf16> to vector<8x8xbf16>
    %248 = arith.truncf %49 : vector<8x512xf32> to vector<8x512xbf16>
    %cst_89 = arith.constant dense<0.000000e+00> : vector<8x512xf32>
    %249 = tpu.matmul %247, %248, %cst_89 {dimension_numbers = #tpu.dot_dimension_numbers<[1], [0], [0], [1], [0, 0, 1, 1], [], []>} : vector<8x8xbf16>, vector<8x512xbf16>, vector<8x512xf32> -> vector<8x512xf32>
    %c0_90 = arith.constant 0 : index
    %c0_91 = arith.constant 0 : index
    %c0_92 = arith.constant 0 : index
    %250 = vector.load %arg6[%c0_90, %c0_91, %c0_92] : memref<2x8x1xf32, #tpu.memory_space<vmem>>, vector<1x8x1xf32>
    %251 = vector.shape_cast %250 : vector<1x8x1xf32> to vector<8x1xf32>
    %252 = vector.broadcast %251 : vector<8x1xf32> to vector<8x512xf32>
    %253 = arith.addf %249, %252 : vector<8x512xf32>
    %254 = arith.addf %245, %253 : vector<8x512xf32>
    %255 = arith.truncf %254 : vector<8x512xf32> to vector<8x512xbf16>
    %c0_93 = arith.constant 0 : index
    %c0_94 = arith.constant 0 : index
    %256 = vector.load %arg10[%c0_93, %c0_94] : memref<512x2048xbf16, #tpu.memory_space<vmem>>, vector<512x2048xbf16>
    %cst_95 = arith.constant dense<0.000000e+00> : vector<8x2048xf32>
    %257 = tpu.matmul %255, %256, %cst_95 {dimension_numbers = #tpu.dot_dimension_numbers<[1], [0], [0], [1], [0, 0, 1, 1], [], []>} : vector<8x512xbf16>, vector<512x2048xbf16>, vector<8x2048xf32> -> vector<8x2048xf32>
    %c0_96 = arith.constant 0 : index
    %c0_97 = arith.constant 0 : index
    %c0_98 = arith.constant 0 : index
    %258 = vector.load %arg2[%c0_96, %c0_97, %c0_98] : memref<3x9x2048xf32, #tpu.memory_space<vmem>>, vector<1x9x2048xf32>
    %259 = vector.shape_cast %258 : vector<1x9x2048xf32> to vector<9x2048xf32>
    %c17_i32_99 = arith.constant 17 : i32
    %260 = tpu.dynamic_rotate %257 by %c17_i32_99 dim 1 : vector<8x2048xf32>, i32 -> vector<8x2048xf32>
    %261 = vector.extract_strided_slice %259 {offsets = [0, 0], sizes = [1, 2048], strides = [1, 1]} : vector<9x2048xf32> to vector<1x2048xf32>
    %262 = vector.broadcast %261 : vector<1x2048xf32> to vector<8x2048xf32>
    %263 = arith.mulf %260, %262 : vector<8x2048xf32>
    %c16_i32_100 = arith.constant 16 : i32
    %264 = tpu.dynamic_rotate %257 by %c16_i32_100 dim 1 : vector<8x2048xf32>, i32 -> vector<8x2048xf32>
    %265 = vector.extract_strided_slice %259 {offsets = [1, 0], sizes = [1, 2048], strides = [1, 1]} : vector<9x2048xf32> to vector<1x2048xf32>
    %266 = vector.broadcast %265 : vector<1x2048xf32> to vector<8x2048xf32>
    %267 = arith.mulf %264, %266 : vector<8x2048xf32>
    %c15_i32_101 = arith.constant 15 : i32
    %268 = tpu.dynamic_rotate %257 by %c15_i32_101 dim 1 : vector<8x2048xf32>, i32 -> vector<8x2048xf32>
    %269 = vector.extract_strided_slice %259 {offsets = [2, 0], sizes = [1, 2048], strides = [1, 1]} : vector<9x2048xf32> to vector<1x2048xf32>
    %270 = vector.broadcast %269 : vector<1x2048xf32> to vector<8x2048xf32>
    %271 = arith.mulf %268, %270 : vector<8x2048xf32>
    %c1_i32_102 = arith.constant 1 : i32
    %272 = tpu.dynamic_rotate %257 by %c1_i32_102 dim 1 : vector<8x2048xf32>, i32 -> vector<8x2048xf32>
    %273 = vector.extract_strided_slice %259 {offsets = [3, 0], sizes = [1, 2048], strides = [1, 1]} : vector<9x2048xf32> to vector<1x2048xf32>
    %274 = vector.broadcast %273 : vector<1x2048xf32> to vector<8x2048xf32>
    %275 = arith.mulf %272, %274 : vector<8x2048xf32>
    %c2047_i32_103 = arith.constant 2047 : i32
    %276 = tpu.dynamic_rotate %257 by %c2047_i32_103 dim 1 : vector<8x2048xf32>, i32 -> vector<8x2048xf32>
    %277 = vector.extract_strided_slice %259 {offsets = [5, 0], sizes = [1, 2048], strides = [1, 1]} : vector<9x2048xf32> to vector<1x2048xf32>
    %278 = vector.broadcast %277 : vector<1x2048xf32> to vector<8x2048xf32>
    %279 = arith.mulf %276, %278 : vector<8x2048xf32>
    %c2033_i32_104 = arith.constant 2033 : i32
    %280 = tpu.dynamic_rotate %257 by %c2033_i32_104 dim 1 : vector<8x2048xf32>, i32 -> vector<8x2048xf32>
    %281 = vector.extract_strided_slice %259 {offsets = [6, 0], sizes = [1, 2048], strides = [1, 1]} : vector<9x2048xf32> to vector<1x2048xf32>
    %282 = vector.broadcast %281 : vector<1x2048xf32> to vector<8x2048xf32>
    %283 = arith.mulf %280, %282 : vector<8x2048xf32>
    %c2032_i32_105 = arith.constant 2032 : i32
    %284 = tpu.dynamic_rotate %257 by %c2032_i32_105 dim 1 : vector<8x2048xf32>, i32 -> vector<8x2048xf32>
    %285 = vector.extract_strided_slice %259 {offsets = [7, 0], sizes = [1, 2048], strides = [1, 1]} : vector<9x2048xf32> to vector<1x2048xf32>
    %286 = vector.broadcast %285 : vector<1x2048xf32> to vector<8x2048xf32>
    %287 = arith.mulf %284, %286 : vector<8x2048xf32>
    %c2031_i32_106 = arith.constant 2031 : i32
    %288 = tpu.dynamic_rotate %257 by %c2031_i32_106 dim 1 : vector<8x2048xf32>, i32 -> vector<8x2048xf32>
    %289 = vector.extract_strided_slice %259 {offsets = [8, 0], sizes = [1, 2048], strides = [1, 1]} : vector<9x2048xf32> to vector<1x2048xf32>
    %290 = vector.broadcast %289 : vector<1x2048xf32> to vector<8x2048xf32>
    %291 = arith.mulf %288, %290 : vector<8x2048xf32>
    %292 = tpu.concatenate %263, %267, %271, %275, %257, %279, %283, %287, %291 in 0 : vector<8x2048xf32>, vector<8x2048xf32>, vector<8x2048xf32>, vector<8x2048xf32>, vector<8x2048xf32>, vector<8x2048xf32>, vector<8x2048xf32>, vector<8x2048xf32>, vector<8x2048xf32> -> vector<72x2048xf32>
    %293 = arith.truncf %292 : vector<72x2048xf32> to vector<72x2048xbf16>
    %c5 = arith.constant 5 : index
    %c0_107 = arith.constant 0 : index
    %c0_108 = arith.constant 0 : index
    %294 = vector.load %arg3[%c5, %c0_107, %c0_108] : memref<6x8x72xbf16, #tpu.memory_space<vmem>>, vector<1x8x72xbf16>
    %295 = vector.shape_cast %294 : vector<1x8x72xbf16> to vector<8x72xbf16>
    %cst_109 = arith.constant dense<0.000000e+00> : vector<8x2048xf32>
    %296 = tpu.matmul %295, %293, %cst_109 {dimension_numbers = #tpu.dot_dimension_numbers<[1], [0], [0], [1], [0, 0, 1, 1], [], []>} : vector<8x72xbf16>, vector<72x2048xbf16>, vector<8x2048xf32> -> vector<8x2048xf32>
    %c5_110 = arith.constant 5 : index
    %c0_111 = arith.constant 0 : index
    %c0_112 = arith.constant 0 : index
    %297 = vector.load %arg4[%c5_110, %c0_111, %c0_112] : memref<6x8x1xf32, #tpu.memory_space<vmem>>, vector<1x8x1xf32>
    %298 = vector.shape_cast %297 : vector<1x8x1xf32> to vector<8x1xf32>
    %299 = vector.broadcast %298 : vector<8x1xf32> to vector<8x2048xf32>
    %300 = arith.addf %296, %299 : vector<8x2048xf32>
    %c0_113 = arith.constant 0 : index
    %c0_114 = arith.constant 0 : index
    %c0_115 = arith.constant 0 : index
    %301 = vector.load %arg11[%c0_113, %c0_114, %c0_115] : memref<1x8x2048xf32, #tpu.memory_space<vmem>>, vector<1x8x2048xf32>
    %302 = vector.shape_cast %301 : vector<1x8x2048xf32> to vector<8x2048xf32>
    %303 = vector.shape_cast %300 : vector<8x2048xf32> to vector<1x8x2048xf32>
    tpu.vector_store %arg11[%c0_113, %c0_114, %c0_115], %303 {strides = array<i32>} : memref<1x8x2048xf32, #tpu.memory_space<vmem>>, vector<1x8x2048xf32>,
    return
  }
  func.func @transform_0(%arg0: i32) -> (i32, i32, i32) {
    %c0_i32 = arith.constant 0 : i32
    %c0_i32_0 = arith.constant 0 : i32
    %c0_i32_1 = arith.constant 0 : i32
    return %arg0, %c0_i32, %c0_i32_0 : i32, i32, i32
  }
  func.func @transform_1(%arg0: i32) -> (i32, i32, i32) {
    %c0_i32 = arith.constant 0 : i32
    %c0_i32_0 = arith.constant 0 : i32
    %c0_i32_1 = arith.constant 0 : i32
    %c0_i32_2 = arith.constant 0 : i32
    return %c0_i32, %c0_i32_0, %c0_i32_1 : i32, i32, i32
  }
  func.func @transform_2(%arg0: i32) -> (i32, i32, i32) {
    %c0_i32 = arith.constant 0 : i32
    %c0_i32_0 = arith.constant 0 : i32
    %c0_i32_1 = arith.constant 0 : i32
    %c0_i32_2 = arith.constant 0 : i32
    return %c0_i32, %c0_i32_0, %c0_i32_1 : i32, i32, i32
  }
  func.func @transform_3(%arg0: i32) -> (i32, i32, i32) {
    %c0_i32 = arith.constant 0 : i32
    %c0_i32_0 = arith.constant 0 : i32
    %c0_i32_1 = arith.constant 0 : i32
    %c0_i32_2 = arith.constant 0 : i32
    return %c0_i32, %c0_i32_0, %c0_i32_1 : i32, i32, i32
  }
  func.func @transform_4(%arg0: i32) -> (i32, i32, i32) {
    %c0_i32 = arith.constant 0 : i32
    %c0_i32_0 = arith.constant 0 : i32
    %c0_i32_1 = arith.constant 0 : i32
    %c0_i32_2 = arith.constant 0 : i32
    return %c0_i32, %c0_i32_0, %c0_i32_1 : i32, i32, i32
  }
  func.func @transform_5(%arg0: i32) -> (i32, i32, i32) {
    %c0_i32 = arith.constant 0 : i32
    %c0_i32_0 = arith.constant 0 : i32
    %c0_i32_1 = arith.constant 0 : i32
    %c0_i32_2 = arith.constant 0 : i32
    return %c0_i32, %c0_i32_0, %c0_i32_1 : i32, i32, i32
  }
  func.func @transform_6(%arg0: i32) -> (i32, i32) {
    %c0_i32 = arith.constant 0 : i32
    %c0_i32_0 = arith.constant 0 : i32
    %c0_i32_1 = arith.constant 0 : i32
    return %c0_i32, %c0_i32_0 : i32, i32
  }
  func.func @transform_7(%arg0: i32) -> (i32, i32) {
    %c0_i32 = arith.constant 0 : i32
    %c0_i32_0 = arith.constant 0 : i32
    %c0_i32_1 = arith.constant 0 : i32
    return %c0_i32, %c0_i32_0 : i32, i32
  }
  func.func @transform_8(%arg0: i32) -> (i32, i32) {
    %c0_i32 = arith.constant 0 : i32
    %c0_i32_0 = arith.constant 0 : i32
    %c0_i32_1 = arith.constant 0 : i32
    return %c0_i32, %c0_i32_0 : i32, i32
  }
  func.func @transform_9(%arg0: i32) -> (i32, i32) {
    %c0_i32 = arith.constant 0 : i32
    %c0_i32_0 = arith.constant 0 : i32
    %c0_i32_1 = arith.constant 0 : i32
    return %c0_i32, %c0_i32_0 : i32, i32
  }
  func.func @transform_10(%arg0: i32) -> (i32, i32, i32) {
    %c0_i32 = arith.constant 0 : i32
    %c0_i32_0 = arith.constant 0 : i32
    %c0_i32_1 = arith.constant 0 : i32
    return %arg0, %c0_i32, %c0_i32_0 : i32, i32, i32
  }
}

</mosaic_0001>

<llo_original>
// kernel: tpu_custom_call.1
$region0: #{tpu_custom_call.1}
  #allocation0 [shape = 'u32[]', space=smem, size = 0x4, offset = 0x4, fixed_abs, tag = 'smem constant byte address 0x4 - core index']
  #allocation1 [shape = 'u32[144,128]{1,0:T(1,128)}', space=vmem, size = 0x12000, scoped, tag = 'internal scratch']
  %s0 = inlined_call_operand.hbm [shape: f32[1,8,2048], index: 0, kind: input, shape index: {}]
  %s1 = inlined_call_operand.vmem [shape: f32[3,9,2048], index: 1, kind: input, shape index: {}]
  %s2 = inlined_call_operand.hbm [shape: bf16[6,8,72], index: 2, kind: input, shape index: {}]
  %s3 = inlined_call_operand.vmem [shape: f32[6,8,1], index: 3, kind: input, shape index: {}]
  %s4 = inlined_call_operand.hbm [shape: bf16[2,8,8], index: 4, kind: input, shape index: {}]
  %s5 = inlined_call_operand.vmem [shape: f32[2,8,1], index: 5, kind: input, shape index: {}]
  %s6 = inlined_call_operand.hbm [shape: bf16[2048,512], index: 6, kind: input, shape index: {}]
  %s7 = inlined_call_operand.hbm [shape: bf16[512,128], index: 7, kind: input, shape index: {}]
  %s8 = inlined_call_operand.hbm [shape: bf16[128,512], index: 8, kind: input, shape index: {}]
  %s9 = inlined_call_operand.hbm [shape: bf16[512,2048], index: 9, kind: input, shape index: {}]
  %s10 = inlined_call_operand.hbm [shape: f32[1,8,2048], index: 10, kind: output, shape index: {}]
  %s11 = sld [smem:[#allocation0]]
  $region78: #{tpu_custom_call.1} parent=0
    _
  %s13 = ssub.s32 1, %s11
  %s14 = scalar_select 0, %s13, %s11
  $region1: #{tpu_custom_call.1} parent=0
    #allocation2 [shape = 'u8[65536]{0}', space=vmem, size = 0x10000, scoped, tag = 'input window, operand 0, single buffered']
    #allocation3 [shape = 's32[1]{0}', space=sflag, size = 0x4, scoped, tag = 'scoped memory for tpu_custom_call.1']
    #allocation4 [shape = 's32[1]{0}', space=sflag, size = 0x4, scoped, tag = 'scoped memory for tpu_custom_call.1']
    #allocation5 [shape = 'u8[12288]{0}', space=vmem, size = 0x3000, scoped, tag = 'input window, operand 2, single buffered']
    #allocation6 [shape = 's32[1]{0}', space=sflag, size = 0x4, scoped, tag = 'scoped memory for tpu_custom_call.1']
    #allocation7 [shape = 'u8[4096]{0}', space=vmem, size = 0x1000, scoped, tag = 'input window, operand 4, single buffered']
    #allocation8 [shape = 'u8[2097152]{0}', space=vmem, size = 0x200000, scoped, tag = 'input window, operand 6, single buffered']
    #allocation9 [shape = 's32[1]{0}', space=sflag, size = 0x4, scoped, tag = 'scoped memory for tpu_custom_call.1']
    #allocation10 [shape = 'u8[131072]{0}', space=vmem, size = 0x20000, scoped, tag = 'input window, operand 7, single buffered']
    #allocation11 [shape = 'u8[131072]{0}', space=vmem, size = 0x20000, scoped, tag = 'input window, operand 8, single buffered']
    #allocation12 [shape = 's32[1]{0}', space=sflag, size = 0x4, scoped, tag = 'scoped memory for tpu_custom_call.1']
    #allocation13 [shape = 'u8[2097152]{0}', space=vmem, size = 0x200000, scoped, tag = 'input window, operand 9, single buffered']
    #allocation14 [shape = 'u8[65536]{0}', space=vmem, size = 0x10000, scoped, tag = 'output window, operand 0, single buffered']
    %15 = vsyncpa [#allocation3], 0
    %16 = vsyncpa [#allocation6], 0
    %17 = vsyncpa [#allocation9], 0
    %18 = vsyncpa [#allocation12], 0
    %19 = vsyncpa [#allocation4], 0
    // Predicated region
    $region2: #{tpu_custom_call.1} parent=1 // pred_check
      _
    $region3: #{tpu_custom_call.1} parent=1 // pred_check_branch
      %21 = sbr.rel (0) target = $region5
    $region4: #{tpu_custom_call.1} parent=1 // pred_region
      %s23 = ssub.s32 2048, 2048
      %24 = vsyncadd [#allocation3], %s23
      %s26 = sshll.u32 [#allocation2], 4
      %s27 = int_to_ptr.vmem [resolvable:$true] %s26
      %29 = dma.hbm_to_vmem [thread:$0]  %s0, 2048, %s27, [#allocation3]
    $region5: #{tpu_custom_call.1} parent=1 // pred_fallthru
      _
    // Predicated region
    $region6: #{tpu_custom_call.1} parent=1 // pred_check
      _
    $region7: #{tpu_custom_call.1} parent=1 // pred_check_branch
      %31 = sbr.rel (0) target = $region9
    $region8: #{tpu_custom_call.1} parent=1 // pred_region
      _
    $region9: #{tpu_custom_call.1} parent=1 // pred_fallthru
      _
    // Predicated region
    $region10: #{tpu_custom_call.1} parent=1 // pred_check
      _
    $region11: #{tpu_custom_call.1} parent=1 // pred_check_branch
      %33 = sbr.rel (0) target = $region13
    $region12: #{tpu_custom_call.1} parent=1 // pred_region
      %s35 = ssub.s32 384, 384
      %36 = vsyncadd [#allocation6], %s35
      %s37 = sshll.u32 [#allocation5], 4
      %s38 = int_to_ptr.vmem [resolvable:$true] %s37
      %43 = dma.hbm_to_vmem [thread:$0]  %s2, 384, %s38, [#allocation6], 64, 64, 4
    $region13: #{tpu_custom_call.1} parent=1 // pred_fallthru
      _
    // Predicated region
    $region14: #{tpu_custom_call.1} parent=1 // pred_check
      _
    $region15: #{tpu_custom_call.1} parent=1 // pred_check_branch
      %45 = sbr.rel (0) target = $region17
    $region16: #{tpu_custom_call.1} parent=1 // pred_region
      _
    $region17: #{tpu_custom_call.1} parent=1 // pred_fallthru
      _
    // Predicated region
    $region18: #{tpu_custom_call.1} parent=1 // pred_check
      _
    $region19: #{tpu_custom_call.1} parent=1 // pred_check_branch
      %47 = sbr.rel (0) target = $region21
    $region20: #{tpu_custom_call.1} parent=1 // pred_region
      %s49 = ssub.s32 128, 128
      %50 = vsyncadd [#allocation6], %s49
      %s51 = sshll.u32 [#allocation7], 4
      %s52 = int_to_ptr.vmem [resolvable:$true] %s51
      %57 = dma.hbm_to_vmem [thread:$0]  %s4, 128, %s52, [#allocation6], 64, 64, 4
    $region21: #{tpu_custom_call.1} parent=1 // pred_fallthru
      _
    // Predicated region
    $region22: #{tpu_custom_call.1} parent=1 // pred_check
      _
    $region23: #{tpu_custom_call.1} parent=1 // pred_check_branch
      %59 = sbr.rel (0) target = $region25
    $region24: #{tpu_custom_call.1} parent=1 // pred_region
      _
    $region25: #{tpu_custom_call.1} parent=1 // pred_fallthru
      _
    // Predicated region
    $region26: #{tpu_custom_call.1} parent=1 // pred_check
      _
    $region27: #{tpu_custom_call.1} parent=1 // pred_check_branch
      %61 = sbr.rel (0) target = $region29
    $region28: #{tpu_custom_call.1} parent=1 // pred_region
      %s63 = ssub.s32 65536, 65536
      %64 = vsyncadd [#allocation9], %s63
      %s65 = sshll.u32 [#allocation8], 4
      %s66 = int_to_ptr.vmem [resolvable:$true] %s65
      %71 = dma.hbm_to_vmem [thread:$0]  %s6, 65536, %s66, [#allocation9], 256, 256, 16
    $region29: #{tpu_custom_call.1} parent=1 // pred_fallthru
      _
    // Predicated region
    $region30: #{tpu_custom_call.1} parent=1 // pred_check
      _
    $region31: #{tpu_custom_call.1} parent=1 // pred_check_branch
      %73 = sbr.rel (0) target = $region33
    $region32: #{tpu_custom_call.1} parent=1 // pred_region
      %s75 = ssub.s32 4096, 4096
      %76 = vsyncadd [#allocation9], %s75
      %s77 = sshll.u32 [#allocation10], 4
      %s78 = int_to_ptr.vmem [resolvable:$true] %s77
      %83 = dma.hbm_to_vmem [thread:$0]  %s7, 4096, %s78, [#allocation9], 64, 64, 4
    $region33: #{tpu_custom_call.1} parent=1 // pred_fallthru
      _
    // Predicated region
    $region34: #{tpu_custom_call.1} parent=1 // pred_check
      _
    $region35: #{tpu_custom_call.1} parent=1 // pred_check_branch
      %85 = sbr.rel (0) target = $region37
    $region36: #{tpu_custom_call.1} parent=1 // pred_region
      %s87 = ssub.s32 4096, 4096
      %88 = vsyncadd [#allocation12], %s87
      %s89 = sshll.u32 [#allocation11], 4
      %s90 = int_to_ptr.vmem [resolvable:$true] %s89
      %95 = dma.hbm_to_vmem [thread:$0]  %s8, 4096, %s90, [#allocation12], 256, 256, 16
    $region37: #{tpu_custom_call.1} parent=1 // pred_fallthru
      _
    // Predicated region
    $region38: #{tpu_custom_call.1} parent=1 // pred_check
      _
    $region39: #{tpu_custom_call.1} parent=1 // pred_check_branch
      %97 = sbr.rel (0) target = $region41
    $region40: #{tpu_custom_call.1} parent=1 // pred_region
      %s99 = ssub.s32 65536, 65536
      %100 = vsyncadd [#allocation12], %s99
      %s101 = sshll.u32 [#allocation13], 4
      %s102 = int_to_ptr.vmem [resolvable:$true] %s101
      %107 = dma.hbm_to_vmem [thread:$0]  %s9, 65536, %s102, [#allocation12], 1024, 1024, 64
    $region41: #{tpu_custom_call.1} parent=1 // pred_fallthru
      _
    // Predicated region
    $region42: #{tpu_custom_call.1} parent=1 // pred_check
      _
    $region43: #{tpu_custom_call.1} parent=1 // pred_check_branch
      %109 = sbr.rel (0) target = $region45
    $region44: #{tpu_custom_call.1} parent=1 // pred_region
      %110 = dma.done [#allocation3], 2048
    $region45: #{tpu_custom_call.1} parent=1 // pred_fallthru
      _
    // Predicated region
    $region46: #{tpu_custom_call.1} parent=1 // pred_check
      _
    $region47: #{tpu_custom_call.1} parent=1 // pred_check_branch
      %112 = sbr.rel (0) target = $region49
    $region48: #{tpu_custom_call.1} parent=1 // pred_region
      %113 = dma.done [#allocation6], 384
    $region49: #{tpu_custom_call.1} parent=1 // pred_fallthru
      _
    // Predicated region
    $region50: #{tpu_custom_call.1} parent=1 // pred_check
      _
    $region51: #{tpu_custom_call.1} parent=1 // pred_check_branch
      %115 = sbr.rel (0) target = $region53
    $region52: #{tpu_custom_call.1} parent=1 // pred_region
      %116 = dma.done [#allocation6], 128
    $region53: #{tpu_custom_call.1} parent=1 // pred_fallthru
      _
    // Predicated region
    $region54: #{tpu_custom_call.1} parent=1 // pred_check
      _
    $region55: #{tpu_custom_call.1} parent=1 // pred_check_branch
      %118 = sbr.rel (0) target = $region57
    $region56: #{tpu_custom_call.1} parent=1 // pred_region
      %119 = dma.done [#allocation9], 65536
    $region57: #{tpu_custom_call.1} parent=1 // pred_fallthru
      _
    // Predicated region
    $region58: #{tpu_custom_call.1} parent=1 // pred_check
      _
    $region59: #{tpu_custom_call.1} parent=1 // pred_check_branch
      %121 = sbr.rel (0) target = $region61
    $region60: #{tpu_custom_call.1} parent=1 // pred_region
      %122 = dma.done [#allocation9], 4096
    $region61: #{tpu_custom_call.1} parent=1 // pred_fallthru
      _
    // Predicated region
    $region62: #{tpu_custom_call.1} parent=1 // pred_check
      _
    $region63: #{tpu_custom_call.1} parent=1 // pred_check_branch
      %124 = sbr.rel (0) target = $region65
    $region64: #{tpu_custom_call.1} parent=1 // pred_region
      %125 = dma.done [#allocation12], 4096
    $region65: #{tpu_custom_call.1} parent=1 // pred_fallthru
      _
    // Predicated region
    $region66: #{tpu_custom_call.1} parent=1 // pred_check
      _
    $region67: #{tpu_custom_call.1} parent=1 // pred_check_branch
      %127 = sbr.rel (0) target = $region69
    $region68: #{tpu_custom_call.1} parent=1 // pred_region
      %128 = dma.done [#allocation12], 65536
    $region69: #{tpu_custom_call.1} parent=1 // pred_fallthru
      _
    %v130 = vld [vmem:[#allocation2] sm:$0xff]
    %v131 = vld [vmem:[#allocation2 + $0x8] sm:$0xff]
    %v132 = vld [vmem:[#allocation2 + $0x10] sm:$0xff]
    %v133 = vld [vmem:[#allocation2 + $0x18] sm:$0xff]
    %v134 = vld [vmem:[#allocation2 + $0x20] sm:$0xff]
    %v135 = vld [vmem:[#allocation2 + $0x28] sm:$0xff]
    %v136 = vld [vmem:[#allocation2 + $0x30] sm:$0xff]
    %v137 = vld [vmem:[#allocation2 + $0x38] sm:$0xff]
    %v138 = vld [vmem:[#allocation2 + $0x40] sm:$0xff]
    %v139 = vld [vmem:[#allocation2 + $0x48] sm:$0xff]
    %v140 = vld [vmem:[#allocation2 + $0x50] sm:$0xff]
    %v141 = vld [vmem:[#allocation2 + $0x58] sm:$0xff]
    %v142 = vld [vmem:[#allocation2 + $0x60] sm:$0xff]
    %v143 = vld [vmem:[#allocation2 + $0x68] sm:$0xff]
    %v144 = vld [vmem:[#allocation2 + $0x70] sm:$0xff]
    %v145 = vld [vmem:[#allocation2 + $0x78] sm:$0xff]
    %v146 = vld [vmem:[%s1] sm:$0xff]
    %v147 = vld [vmem:[%s1 + $0x8] sm:$0xff]
    %v148 = vld [vmem:[%s1 + $0x10] sm:$0xff]
    %v149 = vld [vmem:[%s1 + $0x18] sm:$0xff]
    %v150 = vld [vmem:[%s1 + $0x20] sm:$0xff]
    %v151 = vld [vmem:[%s1 + $0x28] sm:$0xff]
    %v152 = vld [vmem:[%s1 + $0x30] sm:$0xff]
    %v153 = vld [vmem:[%s1 + $0x38] sm:$0xff]
    %v154 = vld [vmem:[%s1 + $0x40] sm:$0xff]
    %v155 = vld [vmem:[%s1 + $0x48] sm:$0xff]
    %v156 = vld [vmem:[%s1 + $0x50] sm:$0xff]
    %v157 = vld [vmem:[%s1 + $0x58] sm:$0xff]
    %v158 = vld [vmem:[%s1 + $0x60] sm:$0xff]
    %v159 = vld [vmem:[%s1 + $0x68] sm:$0xff]
    %v160 = vld [vmem:[%s1 + $0x70] sm:$0xff]
    %v161 = vld [vmem:[%s1 + $0x78] sm:$0xff]
    %v162 = vld [vmem:[%s1 + $0x80] sm:$0x1]
    %v163 = vld [vmem:[%s1 + $0x88] sm:$0x1]
    %v164 = vld [vmem:[%s1 + $0x90] sm:$0x1]
    %v165 = vld [vmem:[%s1 + $0x98] sm:$0x1]
    %v166 = vld [vmem:[%s1 + $0xa0] sm:$0x1]
    %v167 = vld [vmem:[%s1 + $0xa8] sm:$0x1]
    %v168 = vld [vmem:[%s1 + $0xb0] sm:$0x1]
    %v169 = vld [vmem:[%s1 + $0xb8] sm:$0x1]
    %v170 = vld [vmem:[%s1 + $0xc0] sm:$0x1]
    %v171 = vld [vmem:[%s1 + $0xc8] sm:$0x1]
    %v172 = vld [vmem:[%s1 + $0xd0] sm:$0x1]
    %v173 = vld [vmem:[%s1 + $0xd8] sm:$0x1]
    %v174 = vld [vmem:[%s1 + $0xe0] sm:$0x1]
    %v175 = vld [vmem:[%s1 + $0xe8] sm:$0x1]
    %v176 = vld [vmem:[%s1 + $0xf0] sm:$0x1]
    %v177 = vld [vmem:[%s1 + $0xf8] sm:$0x1]
    %178 = vrot.lane.b32.xlu0 %v130, 17
    %v179 = vpop.permute.xlu0 %178
    %180 = vrot.lane.b32.xlu0 %v131, 17
    %v181 = vpop.permute.xlu0 %180
    %182 = vrot.lane.b32.xlu0 %v132, 17
    %v183 = vpop.permute.xlu0 %182
    %184 = vrot.lane.b32.xlu0 %v133, 17
    %v185 = vpop.permute.xlu0 %184
    %186 = vrot.lane.b32.xlu0 %v134, 17
    %v187 = vpop.permute.xlu0 %186
    %188 = vrot.lane.b32.xlu0 %v135, 17
    %v189 = vpop.permute.xlu0 %188
    %190 = vrot.lane.b32.xlu0 %v136, 17
    %v191 = vpop.permute.xlu0 %190
    %192 = vrot.lane.b32.xlu0 %v137, 17
    %v193 = vpop.permute.xlu0 %192
    %194 = vrot.lane.b32.xlu0 %v138, 17
    %v195 = vpop.permute.xlu0 %194
    %196 = vrot.lane.b32.xlu0 %v139, 17
    %v197 = vpop.permute.xlu0 %196
    %198 = vrot.lane.b32.xlu0 %v140, 17
    %v199 = vpop.permute.xlu0 %198
    %200 = vrot.lane.b32.xlu0 %v141, 17
    %v201 = vpop.permute.xlu0 %200
    %202 = vrot.lane.b32.xlu0 %v142, 17
    %v203 = vpop.permute.xlu0 %202
    %204 = vrot.lane.b32.xlu0 %v143, 17
    %v205 = vpop.permute.xlu0 %204
    %206 = vrot.lane.b32.xlu0 %v144, 17
    %v207 = vpop.permute.xlu0 %206
    %208 = vrot.lane.b32.xlu0 %v145, 17
    %v209 = vpop.permute.xlu0 %208
    %v210 = vlaneseq
    %v211 = vand.u32 %v210, 127
    %vm212 = vcmp.lt.s32.totalorder %v211, 17
    %v213 = vsel %vm212, %v207, %v209
    %v214 = vsel %vm212, %v205, %v207
    %v215 = vsel %vm212, %v203, %v205
    %v216 = vsel %vm212, %v201, %v203
    %v217 = vsel %vm212, %v199, %v201
    %v218 = vsel %vm212, %v197, %v199
    %v219 = vsel %vm212, %v195, %v197
    %v220 = vsel %vm212, %v193, %v195
    %v221 = vsel %vm212, %v191, %v193
    %v222 = vsel %vm212, %v189, %v191
    %v223 = vsel %vm212, %v187, %v189
    %v224 = vsel %vm212, %v185, %v187
    %v225 = vsel %vm212, %v183, %v185
    %v226 = vsel %vm212, %v181, %v183
    %v227 = vsel %vm212, %v179, %v181
    %v228 = vsel %vm212, %v209, %v179
    %v229 = vlaneseq
    %v230 = vshrl.u32 %v229, 7
    %v231 = vsub.s32 0, %v230
    %v232 = vrot.slane %v146, %v231
    %v233 = vlaneseq
    %v234 = vshrl.u32 %v233, 7
    %v235 = vsub.s32 0, %v234
    %v236 = vrot.slane %v147, %v235
    %v237 = vlaneseq
    %v238 = vshrl.u32 %v237, 7
    %v239 = vsub.s32 0, %v238
    %v240 = vrot.slane %v148, %v239
    %v241 = vlaneseq
    %v242 = vshrl.u32 %v241, 7
    %v243 = vsub.s32 0, %v242
    %v244 = vrot.slane %v149, %v243
    %v245 = vlaneseq
    %v246 = vshrl.u32 %v245, 7
    %v247 = vsub.s32 0, %v246
    %v248 = vrot.slane %v150, %v247
    %v249 = vlaneseq
    %v250 = vshrl.u32 %v249, 7
    %v251 = vsub.s32 0, %v250
    %v252 = vrot.slane %v151, %v251
    %v253 = vlaneseq
    %v254 = vshrl.u32 %v253, 7
    %v255 = vsub.s32 0, %v254
    %v256 = vrot.slane %v152, %v255
    %v257 = vlaneseq
    %v258 = vshrl.u32 %v257, 7
    %v259 = vsub.s32 0, %v258
    %v260 = vrot.slane %v153, %v259
    %v261 = vlaneseq
    %v262 = vshrl.u32 %v261, 7
    %v263 = vsub.s32 0, %v262
    %v264 = vrot.slane %v154, %v263
    %v265 = vlaneseq
    %v266 = vshrl.u32 %v265, 7
    %v267 = vsub.s32 0, %v266
    %v268 = vrot.slane %v155, %v267
    %v269 = vlaneseq
    %v270 = vshrl.u32 %v269, 7
    %v271 = vsub.s32 0, %v270
    %v272 = vrot.slane %v156, %v271
    %v273 = vlaneseq
    %v274 = vshrl.u32 %v273, 7
    %v275 = vsub.s32 0, %v274
    %v276 = vrot.slane %v157, %v275
    %v277 = vlaneseq
    %v278 = vshrl.u32 %v277, 7
    %v279 = vsub.s32 0, %v278
    %v280 = vrot.slane %v158, %v279
    %v281 = vlaneseq
    %v282 = vshrl.u32 %v281, 7
    %v283 = vsub.s32 0, %v282
    %v284 = vrot.slane %v159, %v283
    %v285 = vlaneseq
    %v286 = vshrl.u32 %v285, 7
    %v287 = vsub.s32 0, %v286
    %v288 = vrot.slane %v160, %v287
    %v289 = vlaneseq
    %v290 = vshrl.u32 %v289, 7
    %v291 = vsub.s32 0, %v290
    %v292 = vrot.slane %v161, %v291
    %v293 = vmul.f32 %v228, %v232
    %v294 = vmul.f32 %v227, %v236
    %v295 = vmul.f32 %v226, %v240
    %v296 = vmul.f32 %v225, %v244
    %v297 = vmul.f32 %v224, %v248
    %v298 = vmul.f32 %v223, %v252
    %v299 = vmul.f32 %v222, %v256
    %v300 = vmul.f32 %v221, %v260
    %v301 = vmul.f32 %v220, %v264
    %v302 = vmul.f32 %v219, %v268
    %v303 = vmul.f32 %v218, %v272
    %v304 = vmul.f32 %v217, %v276
    %v305 = vmul.f32 %v216, %v280
    %v306 = vmul.f32 %v215, %v284
    %v307 = vmul.f32 %v214, %v288
    %v308 = vmul.f32 %v213, %v292
    %309 = vrot.lane.b32.xlu0 %v130, 16
    %v310 = vpop.permute.xlu0 %309
    %311 = vrot.lane.b32.xlu0 %v131, 16
    %v312 = vpop.permute.xlu0 %311
    %313 = vrot.lane.b32.xlu0 %v132, 16
    %v314 = vpop.permute.xlu0 %313
    %315 = vrot.lane.b32.xlu0 %v133, 16
    %v316 = vpop.permute.xlu0 %315
    %317 = vrot.lane.b32.xlu0 %v134, 16
    %v318 = vpop.permute.xlu0 %317
    %319 = vrot.lane.b32.xlu0 %v135, 16
    %v320 = vpop.permute.xlu0 %319
    %321 = vrot.lane.b32.xlu0 %v136, 16
    %v322 = vpop.permute.xlu0 %321
    %323 = vrot.lane.b32.xlu0 %v137, 16
    %v324 = vpop.permute.xlu0 %323
    %325 = vrot.lane.b32.xlu0 %v138, 16
    %v326 = vpop.permute.xlu0 %325
    %327 = vrot.lane.b32.xlu0 %v139, 16
    %v328 = vpop.permute.xlu0 %327
    %329 = vrot.lane.b32.xlu0 %v140, 16
    %v330 = vpop.permute.xlu0 %329
    %331 = vrot.lane.b32.xlu0 %v141, 16
    %v332 = vpop.permute.xlu0 %331
    %333 = vrot.lane.b32.xlu0 %v142, 16
    %v334 = vpop.permute.xlu0 %333
    %335 = vrot.lane.b32.xlu0 %v143, 16
    %v336 = vpop.permute.xlu0 %335
    %337 = vrot.lane.b32.xlu0 %v144, 16
    %v338 = vpop.permute.xlu0 %337
    %339 = vrot.lane.b32.xlu0 %v145, 16
    %v340 = vpop.permute.xlu0 %339
    %vm341 = vcmp.lt.s32.totalorder %v211, 16
    %v342 = vsel %vm341, %v338, %v340
    %v343 = vsel %vm341, %v336, %v338
    %v344 = vsel %vm341, %v334, %v336
    %v345 = vsel %vm341, %v332, %v334
    %v346 = vsel %vm341, %v330, %v332
    %v347 = vsel %vm341, %v328, %v330
    %v348 = vsel %vm341, %v326, %v328
    %v349 = vsel %vm341, %v324, %v326
    %v350 = vsel %vm341, %v322, %v324
    %v351 = vsel %vm341, %v320, %v322
    %v352 = vsel %vm341, %v318, %v320
    %v353 = vsel %vm341, %v316, %v318
    %v354 = vsel %vm341, %v314, %v316
    %v355 = vsel %vm341, %v312, %v314
    %v356 = vsel %vm341, %v310, %v312
    %v357 = vsel %vm341, %v340, %v310
    %v358 = vlaneseq
    %v359 = vshrl.u32 %v358, 7
    %v360 = vsub.s32 1, %v359
    %v361 = vrot.slane %v146, %v360
    %v362 = vlaneseq
    %v363 = vshrl.u32 %v362, 7
    %v364 = vsub.s32 1, %v363
    %v365 = vrot.slane %v147, %v364
    %v366 = vlaneseq
    %v367 = vshrl.u32 %v366, 7
    %v368 = vsub.s32 1, %v367
    %v369 = vrot.slane %v148, %v368
    %v370 = vlaneseq
    %v371 = vshrl.u32 %v370, 7
    %v372 = vsub.s32 1, %v371
    %v373 = vrot.slane %v149, %v372
    %v374 = vlaneseq
    %v375 = vshrl.u32 %v374, 7
    %v376 = vsub.s32 1, %v375
    %v377 = vrot.slane %v150, %v376
    %v378 = vlaneseq
    %v379 = vshrl.u32 %v378, 7
    %v380 = vsub.s32 1, %v379
    %v381 = vrot.slane %v151, %v380
    %v382 = vlaneseq
    %v383 = vshrl.u32 %v382, 7
    %v384 = vsub.s32 1, %v383
    %v385 = vrot.slane %v152, %v384
    %v386 = vlaneseq
    %v387 = vshrl.u32 %v386, 7
    %v388 = vsub.s32 1, %v387
    %v389 = vrot.slane %v153, %v388
    %v390 = vlaneseq
    %v391 = vshrl.u32 %v390, 7
    %v392 = vsub.s32 1, %v391
    %v393 = vrot.slane %v154, %v392
    %v394 = vlaneseq
    %v395 = vshrl.u32 %v394, 7
    %v396 = vsub.s32 1, %v395
    %v397 = vrot.slane %v155, %v396
    %v398 = vlaneseq
    %v399 = vshrl.u32 %v398, 7
    %v400 = vsub.s32 1, %v399
    %v401 = vrot.slane %v156, %v400
    %v402 = vlaneseq
    %v403 = vshrl.u32 %v402, 7
    %v404 = vsub.s32 1, %v403
    %v405 = vrot.slane %v157, %v404
    %v406 = vlaneseq
    %v407 = vshrl.u32 %v406, 7
    %v408 = vsub.s32 1, %v407
    %v409 = vrot.slane %v158, %v408
    %v410 = vlaneseq
    %v411 = vshrl.u32 %v410, 7
    %v412 = vsub.s32 1, %v411
    %v413 = vrot.slane %v159, %v412
    %v414 = vlaneseq
    %v415 = vshrl.u32 %v414, 7
    %v416 = vsub.s32 1, %v415
    %v417 = vrot.slane %v160, %v416
    %v418 = vlaneseq
    %v419 = vshrl.u32 %v418, 7
    %v420 = vsub.s32 1, %v419
    %v421 = vrot.slane %v161, %v420
    %v422 = vmul.f32 %v357, %v361
    %v423 = vmul.f32 %v356, %v365
    %v424 = vmul.f32 %v355, %v369
    %v425 = vmul.f32 %v354, %v373
    %v426 = vmul.f32 %v353, %v377
    %v427 = vmul.f32 %v352, %v381
    %v428 = vmul.f32 %v351, %v385
    %v429 = vmul.f32 %v350, %v389
    %v430 = vmul.f32 %v349, %v393
    %v431 = vmul.f32 %v348, %v397
    %v432 = vmul.f32 %v347, %v401
    %v433 = vmul.f32 %v346, %v405
    %v434 = vmul.f32 %v345, %v409
    %v435 = vmul.f32 %v344, %v413
    %v436 = vmul.f32 %v343, %v417
    %v437 = vmul.f32 %v342, %v421
    %438 = vrot.lane.b32.xlu0 %v130, 15
    %v439 = vpop.permute.xlu0 %438
    %440 = vrot.lane.b32.xlu0 %v131, 15
    %v441 = vpop.permute.xlu0 %440
    %442 = vrot.lane.b32.xlu0 %v132, 15
    %v443 = vpop.permute.xlu0 %442
    %444 = vrot.lane.b32.xlu0 %v133, 15
    %v445 = vpop.permute.xlu0 %444
    %446 = vrot.lane.b32.xlu0 %v134, 15
    %v447 = vpop.permute.xlu0 %446
    %448 = vrot.lane.b32.xlu0 %v135, 15
    %v449 = vpop.permute.xlu0 %448
    %450 = vrot.lane.b32.xlu0 %v136, 15
    %v451 = vpop.permute.xlu0 %450
    %452 = vrot.lane.b32.xlu0 %v137, 15
    %v453 = vpop.permute.xlu0 %452
    %454 = vrot.lane.b32.xlu0 %v138, 15
    %v455 = vpop.permute.xlu0 %454
    %456 = vrot.lane.b32.xlu0 %v139, 15
    %v457 = vpop.permute.xlu0 %456
    %458 = vrot.lane.b32.xlu0 %v140, 15
    %v459 = vpop.permute.xlu0 %458
    %460 = vrot.lane.b32.xlu0 %v141, 15
    %v461 = vpop.permute.xlu0 %460
    %462 = vrot.lane.b32.xlu0 %v142, 15
    %v463 = vpop.permute.xlu0 %462
    %464 = vrot.lane.b32.xlu0 %v143, 15
    %v465 = vpop.permute.xlu0 %464
    %466 = vrot.lane.b32.xlu0 %v144, 15
    %v467 = vpop.permute.xlu0 %466
    %468 = vrot.lane.b32.xlu0 %v145, 15
    %v469 = vpop.permute.xlu0 %468
    %vm470 = vcmp.lt.s32.totalorder %v211, 15
    %v471 = vsel %vm470, %v467, %v469
    %v472 = vsel %vm470, %v465, %v467
    %v473 = vsel %vm470, %v463, %v465
    %v474 = vsel %vm470, %v461, %v463
    %v475 = vsel %vm470, %v459, %v461
    %v476 = vsel %vm470, %v457, %v459
    %v477 = vsel %vm470, %v455, %v457
    %v478 = vsel %vm470, %v453, %v455
    %v479 = vsel %vm470, %v451, %v453
    %v480 = vsel %vm470, %v449, %v451
    %v481 = vsel %vm470, %v447, %v449
    %v482 = vsel %vm470, %v445, %v447
    %v483 = vsel %vm470, %v443, %v445
    %v484 = vsel %vm470, %v441, %v443
    %v485 = vsel %vm470, %v439, %v441
    %v486 = vsel %vm470, %v469, %v439
    %v487 = vlaneseq
    %v488 = vshrl.u32 %v487, 7
    %v489 = vsub.s32 2, %v488
    %v490 = vrot.slane %v146, %v489
    %v491 = vlaneseq
    %v492 = vshrl.u32 %v491, 7
    %v493 = vsub.s32 2, %v492
    %v494 = vrot.slane %v147, %v493
    %v495 = vlaneseq
    %v496 = vshrl.u32 %v495, 7
    %v497 = vsub.s32 2, %v496
    %v498 = vrot.slane %v148, %v497
    %v499 = vlaneseq
    %v500 = vshrl.u32 %v499, 7
    %v501 = vsub.s32 2, %v500
    %v502 = vrot.slane %v149, %v501
    %v503 = vlaneseq
    %v504 = vshrl.u32 %v503, 7
    %v505 = vsub.s32 2, %v504
    %v506 = vrot.slane %v150, %v505
    %v507 = vlaneseq
    %v508 = vshrl.u32 %v507, 7
    %v509 = vsub.s32 2, %v508
    %v510 = vrot.slane %v151, %v509
    %v511 = vlaneseq
    %v512 = vshrl.u32 %v511, 7
    %v513 = vsub.s32 2, %v512
    %v514 = vrot.slane %v152, %v513
    %v515 = vlaneseq
    %v516 = vshrl.u32 %v515, 7
    %v517 = vsub.s32 2, %v516
    %v518 = vrot.slane %v153, %v517
    %v519 = vlaneseq
    %v520 = vshrl.u32 %v519, 7
    %v521 = vsub.s32 2, %v520
    %v522 = vrot.slane %v154, %v521
    %v523 = vlaneseq
    %v524 = vshrl.u32 %v523, 7
    %v525 = vsub.s32 2, %v524
    %v526 = vrot.slane %v155, %v525
    %v527 = vlaneseq
    %v528 = vshrl.u32 %v527, 7
    %v529 = vsub.s32 2, %v528
    %v530 = vrot.slane %v156, %v529
    %v531 = vlaneseq
    %v532 = vshrl.u32 %v531, 7
    %v533 = vsub.s32 2, %v532
    %v534 = vrot.slane %v157, %v533
    %v535 = vlaneseq
    %v536 = vshrl.u32 %v535, 7
    %v537 = vsub.s32 2, %v536
    %v538 = vrot.slane %v158, %v537
    %v539 = vlaneseq
    %v540 = vshrl.u32 %v539, 7
    %v541 = vsub.s32 2, %v540
    %v542 = vrot.slane %v159, %v541
    %v543 = vlaneseq
    %v544 = vshrl.u32 %v543, 7
    %v545 = vsub.s32 2, %v544
    %v546 = vrot.slane %v160, %v545
    %v547 = vlaneseq
    %v548 = vshrl.u32 %v547, 7
    %v549 = vsub.s32 2, %v548
    %v550 = vrot.slane %v161, %v549
    %v551 = vmul.f32 %v486, %v490
    %v552 = vmul.f32 %v485, %v494
    %v553 = vmul.f32 %v484, %v498
    %v554 = vmul.f32 %v483, %v502
    %v555 = vmul.f32 %v482, %v506
    %v556 = vmul.f32 %v481, %v510
    %v557 = vmul.f32 %v480, %v514
    %v558 = vmul.f32 %v479, %v518
    %v559 = vmul.f32 %v478, %v522
    %v560 = vmul.f32 %v477, %v526
    %v561 = vmul.f32 %v476, %v530
    %v562 = vmul.f32 %v475, %v534
    %v563 = vmul.f32 %v474, %v538
    %v564 = vmul.f32 %v473, %v542
    %v565 = vmul.f32 %v472, %v546
    %v566 = vmul.f32 %v471, %v550
    %567 = vrot.lane.b32.xlu0 %v130, 1
    %v568 = vpop.permute.xlu0 %567
    %569 = vrot.lane.b32.xlu0 %v131, 1
    %v570 = vpop.permute.xlu0 %569
    %571 = vrot.lane.b32.xlu0 %v132, 1
    %v572 = vpop.permute.xlu0 %571
    %573 = vrot.lane.b32.xlu0 %v133, 1
    %v574 = vpop.permute.xlu0 %573
    %575 = vrot.lane.b32.xlu0 %v134, 1
    %v576 = vpop.permute.xlu0 %575
    %577 = vrot.lane.b32.xlu0 %v135, 1
    %v578 = vpop.permute.xlu0 %577
    %579 = vrot.lane.b32.xlu0 %v136, 1
    %v580 = vpop.permute.xlu0 %579
    %581 = vrot.lane.b32.xlu0 %v137, 1
    %v582 = vpop.permute.xlu0 %581
    %583 = vrot.lane.b32.xlu0 %v138, 1
    %v584 = vpop.permute.xlu0 %583
    %585 = vrot.lane.b32.xlu0 %v139, 1
    %v586 = vpop.permute.xlu0 %585
    %587 = vrot.lane.b32.xlu0 %v140, 1
    %v588 = vpop.permute.xlu0 %587
    %589 = vrot.lane.b32.xlu0 %v141, 1
    %v590 = vpop.permute.xlu0 %589
    %591 = vrot.lane.b32.xlu0 %v142, 1
    %v592 = vpop.permute.xlu0 %591
    %593 = vrot.lane.b32.xlu0 %v143, 1
    %v594 = vpop.permute.xlu0 %593
    %595 = vrot.lane.b32.xlu0 %v144, 1
    %v596 = vpop.permute.xlu0 %595
    %597 = vrot.lane.b32.xlu0 %v145, 1
    %v598 = vpop.permute.xlu0 %597
    %vm599 = vcmp.lt.s32.totalorder %v211, 1
    %v600 = vsel %vm599, %v596, %v598
    %v601 = vsel %vm599, %v594, %v596
    %v602 = vsel %vm599, %v592, %v594
    %v603 = vsel %vm599, %v590, %v592
    %v604 = vsel %vm599, %v588, %v590
    %v605 = vsel %vm599, %v586, %v588
    %v606 = vsel %vm599, %v584, %v586
    %v607 = vsel %vm599, %v582, %v584
    %v608 = vsel %vm599, %v580, %v582
    %v609 = vsel %vm599, %v578, %v580
    %v610 = vsel %vm599, %v576, %v578
    %v611 = vsel %vm599, %v574, %v576
    %v612 = vsel %vm599, %v572, %v574
    %v613 = vsel %vm599, %v570, %v572
    %v614 = vsel %vm599, %v568, %v570
    %v615 = vsel %vm599, %v598, %v568
    %v616 = vlaneseq
    %v617 = vshrl.u32 %v616, 7
    %v618 = vsub.s32 3, %v617
    %v619 = vrot.slane %v146, %v618
    %v620 = vlaneseq
    %v621 = vshrl.u32 %v620, 7
    %v622 = vsub.s32 3, %v621
    %v623 = vrot.slane %v147, %v622
    %v624 = vlaneseq
    %v625 = vshrl.u32 %v624, 7
    %v626 = vsub.s32 3, %v625
    %v627 = vrot.slane %v148, %v626
    %v628 = vlaneseq
    %v629 = vshrl.u32 %v628, 7
    %v630 = vsub.s32 3, %v629
    %v631 = vrot.slane %v149, %v630
    %v632 = vlaneseq
    %v633 = vshrl.u32 %v632, 7
    %v634 = vsub.s32 3, %v633
    %v635 = vrot.slane %v150, %v634
    %v636 = vlaneseq
    %v637 = vshrl.u32 %v636, 7
    %v638 = vsub.s32 3, %v637
    %v639 = vrot.slane %v151, %v638
    %v640 = vlaneseq
    %v641 = vshrl.u32 %v640, 7
    %v642 = vsub.s32 3, %v641
    %v643 = vrot.slane %v152, %v642
    %v644 = vlaneseq
    %v645 = vshrl.u32 %v644, 7
    %v646 = vsub.s32 3, %v645
    %v647 = vrot.slane %v153, %v646
    %v648 = vlaneseq
    %v649 = vshrl.u32 %v648, 7
    %v650 = vsub.s32 3, %v649
    %v651 = vrot.slane %v154, %v650
    %v652 = vlaneseq
    %v653 = vshrl.u32 %v652, 7
    %v654 = vsub.s32 3, %v653
    %v655 = vrot.slane %v155, %v654
    %v656 = vlaneseq
    %v657 = vshrl.u32 %v656, 7
    %v658 = vsub.s32 3, %v657
    %v659 = vrot.slane %v156, %v658
    %v660 = vlaneseq
    %v661 = vshrl.u32 %v660, 7
    %v662 = vsub.s32 3, %v661
    %v663 = vrot.slane %v157, %v662
    %v664 = vlaneseq
    %v665 = vshrl.u32 %v664, 7
    %v666 = vsub.s32 3, %v665
    %v667 = vrot.slane %v158, %v666
    %v668 = vlaneseq
    %v669 = vshrl.u32 %v668, 7
    %v670 = vsub.s32 3, %v669
    %v671 = vrot.slane %v159, %v670
    %v672 = vlaneseq
    %v673 = vshrl.u32 %v672, 7
    %v674 = vsub.s32 3, %v673
    %v675 = vrot.slane %v160, %v674
    %v676 = vlaneseq
    %v677 = vshrl.u32 %v676, 7
    %v678 = vsub.s32 3, %v677
    %v679 = vrot.slane %v161, %v678
    %v680 = vmul.f32 %v615, %v619
    %v681 = vmul.f32 %v614, %v623
    %v682 = vmul.f32 %v613, %v627
    %v683 = vmul.f32 %v612, %v631
    %v684 = vmul.f32 %v611, %v635
    %v685 = vmul.f32 %v610, %v639
    %v686 = vmul.f32 %v609, %v643
    %v687 = vmul.f32 %v608, %v647
    %v688 = vmul.f32 %v607, %v651
    %v689 = vmul.f32 %v606, %v655
    %v690 = vmul.f32 %v605, %v659
    %v691 = vmul.f32 %v604, %v663
    %v692 = vmul.f32 %v603, %v667
    %v693 = vmul.f32 %v602, %v671
    %v694 = vmul.f32 %v601, %v675
    %v695 = vmul.f32 %v600, %v679
    %696 = vrot.lane.b32.xlu0 %v130, 127
    %v697 = vpop.permute.xlu0 %696
    %698 = vrot.lane.b32.xlu0 %v131, 127
    %v699 = vpop.permute.xlu0 %698
    %700 = vrot.lane.b32.xlu0 %v132, 127
    %v701 = vpop.permute.xlu0 %700
    %702 = vrot.lane.b32.xlu0 %v133, 127
    %v703 = vpop.permute.xlu0 %702
    %704 = vrot.lane.b32.xlu0 %v134, 127
    %v705 = vpop.permute.xlu0 %704
    %706 = vrot.lane.b32.xlu0 %v135, 127
    %v707 = vpop.permute.xlu0 %706
    %708 = vrot.lane.b32.xlu0 %v136, 127
    %v709 = vpop.permute.xlu0 %708
    %710 = vrot.lane.b32.xlu0 %v137, 127
    %v711 = vpop.permute.xlu0 %710
    %712 = vrot.lane.b32.xlu0 %v138, 127
    %v713 = vpop.permute.xlu0 %712
    %714 = vrot.lane.b32.xlu0 %v139, 127
    %v715 = vpop.permute.xlu0 %714
    %716 = vrot.lane.b32.xlu0 %v140, 127
    %v717 = vpop.permute.xlu0 %716
    %718 = vrot.lane.b32.xlu0 %v141, 127
    %v719 = vpop.permute.xlu0 %718
    %720 = vrot.lane.b32.xlu0 %v142, 127
    %v721 = vpop.permute.xlu0 %720
    %722 = vrot.lane.b32.xlu0 %v143, 127
    %v723 = vpop.permute.xlu0 %722
    %724 = vrot.lane.b32.xlu0 %v144, 127
    %v725 = vpop.permute.xlu0 %724
    %726 = vrot.lane.b32.xlu0 %v145, 127
    %v727 = vpop.permute.xlu0 %726
    %vm728 = vcmp.lt.s32.totalorder %v211, 127
    %v729 = vsel %vm728, %v725, %v727
    %v730 = vsel %vm728, %v723, %v725
    %v731 = vsel %vm728, %v721, %v723
    %v732 = vsel %vm728, %v719, %v721
    %v733 = vsel %vm728, %v717, %v719
    %v734 = vsel %vm728, %v715, %v717
    %v735 = vsel %vm728, %v713, %v715
    %v736 = vsel %vm728, %v711, %v713
    %v737 = vsel %vm728, %v709, %v711
    %v738 = vsel %vm728, %v707, %v709
    %v739 = vsel %vm728, %v705, %v707
    %v740 = vsel %vm728, %v703, %v705
    %v741 = vsel %vm728, %v701, %v703
    %v742 = vsel %vm728, %v699, %v701
    %v743 = vsel %vm728, %v697, %v699
    %v744 = vsel %vm728, %v727, %v697
    %v745 = vlaneseq
    %v746 = vshrl.u32 %v745, 7
    %v747 = vsub.s32 5, %v746
    %v748 = vrot.slane %v146, %v747
    %v749 = vlaneseq
    %v750 = vshrl.u32 %v749, 7
    %v751 = vsub.s32 5, %v750
    %v752 = vrot.slane %v147, %v751
    %v753 = vlaneseq
    %v754 = vshrl.u32 %v753, 7
    %v755 = vsub.s32 5, %v754
    %v756 = vrot.slane %v148, %v755
    %v757 = vlaneseq
    %v758 = vshrl.u32 %v757, 7
    %v759 = vsub.s32 5, %v758
    %v760 = vrot.slane %v149, %v759
    %v761 = vlaneseq
    %v762 = vshrl.u32 %v761, 7
    %v763 = vsub.s32 5, %v762
    %v764 = vrot.slane %v150, %v763
    %v765 = vlaneseq
    %v766 = vshrl.u32 %v765, 7
    %v767 = vsub.s32 5, %v766
    %v768 = vrot.slane %v151, %v767
    %v769 = vlaneseq
    %v770 = vshrl.u32 %v769, 7
    %v771 = vsub.s32 5, %v770
    %v772 = vrot.slane %v152, %v771
    %v773 = vlaneseq
    %v774 = vshrl.u32 %v773, 7
    %v775 = vsub.s32 5, %v774
    %v776 = vrot.slane %v153, %v775
    %v777 = vlaneseq
    %v778 = vshrl.u32 %v777, 7
    %v779 = vsub.s32 5, %v778
    %v780 = vrot.slane %v154, %v779
    %v781 = vlaneseq
    %v782 = vshrl.u32 %v781, 7
    %v783 = vsub.s32 5, %v782
    %v784 = vrot.slane %v155, %v783
    %v785 = vlaneseq
    %v786 = vshrl.u32 %v785, 7
    %v787 = vsub.s32 5, %v786
    %v788 = vrot.slane %v156, %v787
    %v789 = vlaneseq
    %v790 = vshrl.u32 %v789, 7
    %v791 = vsub.s32 5, %v790
    %v792 = vrot.slane %v157, %v791
    %v793 = vlaneseq
    %v794 = vshrl.u32 %v793, 7
    %v795 = vsub.s32 5, %v794
    %v796 = vrot.slane %v158, %v795
    %v797 = vlaneseq
    %v798 = vshrl.u32 %v797, 7
    %v799 = vsub.s32 5, %v798
    %v800 = vrot.slane %v159, %v799
    %v801 = vlaneseq
    %v802 = vshrl.u32 %v801, 7
    %v803 = vsub.s32 5, %v802
    %v804 = vrot.slane %v160, %v803
    %v805 = vlaneseq
    %v806 = vshrl.u32 %v805, 7
    %v807 = vsub.s32 5, %v806
    %v808 = vrot.slane %v161, %v807
    %v809 = vmul.f32 %v743, %v748
    %v810 = vmul.f32 %v742, %v752
    %v811 = vmul.f32 %v741, %v756
    %v812 = vmul.f32 %v740, %v760
    %v813 = vmul.f32 %v739, %v764
    %v814 = vmul.f32 %v738, %v768
    %v815 = vmul.f32 %v737, %v772
    %v816 = vmul.f32 %v736, %v776
    %v817 = vmul.f32 %v735, %v780
    %v818 = vmul.f32 %v734, %v784
    %v819 = vmul.f32 %v733, %v788
    %v820 = vmul.f32 %v732, %v792
    %v821 = vmul.f32 %v731, %v796
    %v822 = vmul.f32 %v730, %v800
    %v823 = vmul.f32 %v729, %v804
    %v824 = vmul.f32 %v744, %v808
    %825 = vrot.lane.b32.xlu0 %v130, 113
    %v826 = vpop.permute.xlu0 %825
    %827 = vrot.lane.b32.xlu0 %v131, 113
    %v828 = vpop.permute.xlu0 %827
    %829 = vrot.lane.b32.xlu0 %v132, 113
    %v830 = vpop.permute.xlu0 %829
    %831 = vrot.lane.b32.xlu0 %v133, 113
    %v832 = vpop.permute.xlu0 %831
    %833 = vrot.lane.b32.xlu0 %v134, 113
    %v834 = vpop.permute.xlu0 %833
    %835 = vrot.lane.b32.xlu0 %v135, 113
    %v836 = vpop.permute.xlu0 %835
    %837 = vrot.lane.b32.xlu0 %v136, 113
    %v838 = vpop.permute.xlu0 %837
    %839 = vrot.lane.b32.xlu0 %v137, 113
    %v840 = vpop.permute.xlu0 %839
    %841 = vrot.lane.b32.xlu0 %v138, 113
    %v842 = vpop.permute.xlu0 %841
    %843 = vrot.lane.b32.xlu0 %v139, 113
    %v844 = vpop.permute.xlu0 %843
    %845 = vrot.lane.b32.xlu0 %v140, 113
    %v846 = vpop.permute.xlu0 %845
    %847 = vrot.lane.b32.xlu0 %v141, 113
    %v848 = vpop.permute.xlu0 %847
    %849 = vrot.lane.b32.xlu0 %v142, 113
    %v850 = vpop.permute.xlu0 %849
    %851 = vrot.lane.b32.xlu0 %v143, 113
    %v852 = vpop.permute.xlu0 %851
    %853 = vrot.lane.b32.xlu0 %v144, 113
    %v854 = vpop.permute.xlu0 %853
    %855 = vrot.lane.b32.xlu0 %v145, 113
    %v856 = vpop.permute.xlu0 %855
    %vm857 = vcmp.lt.s32.totalorder %v211, 113
    %v858 = vsel %vm857, %v854, %v856
    %v859 = vsel %vm857, %v852, %v854
    %v860 = vsel %vm857, %v850, %v852
    %v861 = vsel %vm857, %v848, %v850
    %v862 = vsel %vm857, %v846, %v848
    %v863 = vsel %vm857, %v844, %v846
    %v864 = vsel %vm857, %v842, %v844
    %v865 = vsel %vm857, %v840, %v842
    %v866 = vsel %vm857, %v838, %v840
    %v867 = vsel %vm857, %v836, %v838
    %v868 = vsel %vm857, %v834, %v836
    %v869 = vsel %vm857, %v832, %v834
    %v870 = vsel %vm857, %v830, %v832
    %v871 = vsel %vm857, %v828, %v830
    %v872 = vsel %vm857, %v826, %v828
    %v873 = vsel %vm857, %v856, %v826
    %v874 = vlaneseq
    %v875 = vshrl.u32 %v874, 7
    %v876 = vsub.s32 6, %v875
    %v877 = vrot.slane %v146, %v876
    %v878 = vlaneseq
    %v879 = vshrl.u32 %v878, 7
    %v880 = vsub.s32 6, %v879
    %v881 = vrot.slane %v147, %v880
    %v882 = vlaneseq
    %v883 = vshrl.u32 %v882, 7
    %v884 = vsub.s32 6, %v883
    %v885 = vrot.slane %v148, %v884
    %v886 = vlaneseq
    %v887 = vshrl.u32 %v886, 7
    %v888 = vsub.s32 6, %v887
    %v889 = vrot.slane %v149, %v888
    %v890 = vlaneseq
    %v891 = vshrl.u32 %v890, 7
    %v892 = vsub.s32 6, %v891
    %v893 = vrot.slane %v150, %v892
    %v894 = vlaneseq
    %v895 = vshrl.u32 %v894, 7
    %v896 = vsub.s32 6, %v895
    %v897 = vrot.slane %v151, %v896
    %v898 = vlaneseq
    %v899 = vshrl.u32 %v898, 7
    %v900 = vsub.s32 6, %v899
    %v901 = vrot.slane %v152, %v900
    %v902 = vlaneseq
    %v903 = vshrl.u32 %v902, 7
    %v904 = vsub.s32 6, %v903
    %v905 = vrot.slane %v153, %v904
    %v906 = vlaneseq
    %v907 = vshrl.u32 %v906, 7
    %v908 = vsub.s32 6, %v907
    %v909 = vrot.slane %v154, %v908
    %v910 = vlaneseq
    %v911 = vshrl.u32 %v910, 7
    %v912 = vsub.s32 6, %v911
    %v913 = vrot.slane %v155, %v912
    %v914 = vlaneseq
    %v915 = vshrl.u32 %v914, 7
    %v916 = vsub.s32 6, %v915
    %v917 = vrot.slane %v156, %v916
    %v918 = vlaneseq
    %v919 = vshrl.u32 %v918, 7
    %v920 = vsub.s32 6, %v919
    %v921 = vrot.slane %v157, %v920
    %v922 = vlaneseq
    %v923 = vshrl.u32 %v922, 7
    %v924 = vsub.s32 6, %v923
    %v925 = vrot.slane %v158, %v924
    %v926 = vlaneseq
    %v927 = vshrl.u32 %v926, 7
    %v928 = vsub.s32 6, %v927
    %v929 = vrot.slane %v159, %v928
    %v930 = vlaneseq
    %v931 = vshrl.u32 %v930, 7
    %v932 = vsub.s32 6, %v931
    %v933 = vrot.slane %v160, %v932
    %v934 = vlaneseq
    %v935 = vshrl.u32 %v934, 7
    %v936 = vsub.s32 6, %v935
    %v937 = vrot.slane %v161, %v936
    %v938 = vmul.f32 %v872, %v877
    %v939 = vmul.f32 %v871, %v881
    %v940 = vmul.f32 %v870, %v885
    %v941 = vmul.f32 %v869, %v889
    %v942 = vmul.f32 %v868, %v893
    %v943 = vmul.f32 %v867, %v897
    %v944 = vmul.f32 %v866, %v901
    %v945 = vmul.f32 %v865, %v905
    %v946 = vmul.f32 %v864, %v909
    %v947 = vmul.f32 %v863, %v913
    %v948 = vmul.f32 %v862, %v917
    %v949 = vmul.f32 %v861, %v921
    %v950 = vmul.f32 %v860, %v925
    %v951 = vmul.f32 %v859, %v929
    %v952 = vmul.f32 %v858, %v933
    %v953 = vmul.f32 %v873, %v937
    %954 = vrot.lane.b32.xlu0 %v130, 112
    %v955 = vpop.permute.xlu0 %954
    %956 = vrot.lane.b32.xlu0 %v131, 112
    %v957 = vpop.permute.xlu0 %956
    %958 = vrot.lane.b32.xlu0 %v132, 112
    %v959 = vpop.permute.xlu0 %958
    %960 = vrot.lane.b32.xlu0 %v133, 112
    %v961 = vpop.permute.xlu0 %960
    %962 = vrot.lane.b32.xlu0 %v134, 112
    %v963 = vpop.permute.xlu0 %962
    %964 = vrot.lane.b32.xlu0 %v135, 112
    %v965 = vpop.permute.xlu0 %964
    %966 = vrot.lane.b32.xlu0 %v136, 112
    %v967 = vpop.permute.xlu0 %966
    %968 = vrot.lane.b32.xlu0 %v137, 112
    %v969 = vpop.permute.xlu0 %968
    %970 = vrot.lane.b32.xlu0 %v138, 112
    %v971 = vpop.permute.xlu0 %970
    %972 = vrot.lane.b32.xlu0 %v139, 112
    %v973 = vpop.permute.xlu0 %972
    %974 = vrot.lane.b32.xlu0 %v140, 112
    %v975 = vpop.permute.xlu0 %974
    %976 = vrot.lane.b32.xlu0 %v141, 112
    %v977 = vpop.permute.xlu0 %976
    %978 = vrot.lane.b32.xlu0 %v142, 112
    %v979 = vpop.permute.xlu0 %978
    %980 = vrot.lane.b32.xlu0 %v143, 112
    %v981 = vpop.permute.xlu0 %980
    %982 = vrot.lane.b32.xlu0 %v144, 112
    %v983 = vpop.permute.xlu0 %982
    %984 = vrot.lane.b32.xlu0 %v145, 112
    %v985 = vpop.permute.xlu0 %984
    %vm986 = vcmp.lt.s32.totalorder %v211, 112
    %v987 = vsel %vm986, %v983, %v985
    %v988 = vsel %vm986, %v981, %v983
    %v989 = vsel %vm986, %v979, %v981
    %v990 = vsel %vm986, %v977, %v979
    %v991 = vsel %vm986, %v975, %v977
    %v992 = vsel %vm986, %v973, %v975
    %v993 = vsel %vm986, %v971, %v973
    %v994 = vsel %vm986, %v969, %v971
    %v995 = vsel %vm986, %v967, %v969
    %v996 = vsel %vm986, %v965, %v967
    %v997 = vsel %vm986, %v963, %v965
    %v998 = vsel %vm986, %v961, %v963
    %v999 = vsel %vm986, %v959, %v961
    %v1000 = vsel %vm986, %v957, %v959
    %v1001 = vsel %vm986, %v955, %v957
    %v1002 = vsel %vm986, %v985, %v955
    %v1003 = vlaneseq
    %v1004 = vshrl.u32 %v1003, 7
    %v1005 = vsub.s32 7, %v1004
    %v1006 = vrot.slane %v146, %v1005
    %v1007 = vlaneseq
    %v1008 = vshrl.u32 %v1007, 7
    %v1009 = vsub.s32 7, %v1008
    %v1010 = vrot.slane %v147, %v1009
    %v1011 = vlaneseq
    %v1012 = vshrl.u32 %v1011, 7
    %v1013 = vsub.s32 7, %v1012
    %v1014 = vrot.slane %v148, %v1013
    %v1015 = vlaneseq
    %v1016 = vshrl.u32 %v1015, 7
    %v1017 = vsub.s32 7, %v1016
    %v1018 = vrot.slane %v149, %v1017
    %v1019 = vlaneseq
    %v1020 = vshrl.u32 %v1019, 7
    %v1021 = vsub.s32 7, %v1020
    %v1022 = vrot.slane %v150, %v1021
    %v1023 = vlaneseq
    %v1024 = vshrl.u32 %v1023, 7
    %v1025 = vsub.s32 7, %v1024
    %v1026 = vrot.slane %v151, %v1025
    %v1027 = vlaneseq
    %v1028 = vshrl.u32 %v1027, 7
    %v1029 = vsub.s32 7, %v1028
    %v1030 = vrot.slane %v152, %v1029
    %v1031 = vlaneseq
    %v1032 = vshrl.u32 %v1031, 7
    %v1033 = vsub.s32 7, %v1032
    %v1034 = vrot.slane %v153, %v1033
    %v1035 = vlaneseq
    %v1036 = vshrl.u32 %v1035, 7
    %v1037 = vsub.s32 7, %v1036
    %v1038 = vrot.slane %v154, %v1037
    %v1039 = vlaneseq
    %v1040 = vshrl.u32 %v1039, 7
    %v1041 = vsub.s32 7, %v1040
    %v1042 = vrot.slane %v155, %v1041
    %v1043 = vlaneseq
    %v1044 = vshrl.u32 %v1043, 7
    %v1045 = vsub.s32 7, %v1044
    %v1046 = vrot.slane %v156, %v1045
    %v1047 = vlaneseq
    %v1048 = vshrl.u32 %v1047, 7
    %v1049 = vsub.s32 7, %v1048
    %v1050 = vrot.slane %v157, %v1049
    %v1051 = vlaneseq
    %v1052 = vshrl.u32 %v1051, 7
    %v1053 = vsub.s32 7, %v1052
    %v1054 = vrot.slane %v158, %v1053
    %v1055 = vlaneseq
    %v1056 = vshrl.u32 %v1055, 7
    %v1057 = vsub.s32 7, %v1056
    %v1058 = vrot.slane %v159, %v1057
    %v1059 = vlaneseq
    %v1060 = vshrl.u32 %v1059, 7
    %v1061 = vsub.s32 7, %v1060
    %v1062 = vrot.slane %v160, %v1061
    %v1063 = vlaneseq
    %v1064 = vshrl.u32 %v1063, 7
    %v1065 = vsub.s32 7, %v1064
    %v1066 = vrot.slane %v161, %v1065
    %v1067 = vmul.f32 %v1001, %v1006
    %v1068 = vmul.f32 %v1000, %v1010
    %v1069 = vmul.f32 %v999, %v1014
    %v1070 = vmul.f32 %v998, %v1018
    %v1071 = vmul.f32 %v997, %v1022
    %v1072 = vmul.f32 %v996, %v1026
    %v1073 = vmul.f32 %v995, %v1030
    %v1074 = vmul.f32 %v994, %v1034
    %v1075 = vmul.f32 %v993, %v1038
    %v1076 = vmul.f32 %v992, %v1042
    %v1077 = vmul.f32 %v991, %v1046
    %v1078 = vmul.f32 %v990, %v1050
    %v1079 = vmul.f32 %v989, %v1054
    %v1080 = vmul.f32 %v988, %v1058
    %v1081 = vmul.f32 %v987, %v1062
    %v1082 = vmul.f32 %v1002, %v1066
    %1083 = vrot.lane.b32.xlu0 %v130, 111
    %v1084 = vpop.permute.xlu0 %1083
    %1085 = vrot.lane.b32.xlu0 %v131, 111
    %v1086 = vpop.permute.xlu0 %1085
    %1087 = vrot.lane.b32.xlu0 %v132, 111
    %v1088 = vpop.permute.xlu0 %1087
    %1089 = vrot.lane.b32.xlu0 %v133, 111
    %v1090 = vpop.permute.xlu0 %1089
    %1091 = vrot.lane.b32.xlu0 %v134, 111
    %v1092 = vpop.permute.xlu0 %1091
    %1093 = vrot.lane.b32.xlu0 %v135, 111
    %v1094 = vpop.permute.xlu0 %1093
    %1095 = vrot.lane.b32.xlu0 %v136, 111
    %v1096 = vpop.permute.xlu0 %1095
    %1097 = vrot.lane.b32.xlu0 %v137, 111
    %v1098 = vpop.permute.xlu0 %1097
    %1099 = vrot.lane.b32.xlu0 %v138, 111
    %v1100 = vpop.permute.xlu0 %1099
    %1101 = vrot.lane.b32.xlu0 %v139, 111
    %v1102 = vpop.permute.xlu0 %1101
    %1103 = vrot.lane.b32.xlu0 %v140, 111
    %v1104 = vpop.permute.xlu0 %1103
    %1105 = vrot.lane.b32.xlu0 %v141, 111
    %v1106 = vpop.permute.xlu0 %1105
    %1107 = vrot.lane.b32.xlu0 %v142, 111
    %v1108 = vpop.permute.xlu0 %1107
    %1109 = vrot.lane.b32.xlu0 %v143, 111
    %v1110 = vpop.permute.xlu0 %1109
    %1111 = vrot.lane.b32.xlu0 %v144, 111
    %v1112 = vpop.permute.xlu0 %1111
    %1113 = vrot.lane.b32.xlu0 %v145, 111
    %v1114 = vpop.permute.xlu0 %1113
    %vm1115 = vcmp.lt.s32.totalorder %v211, 111
    %v1116 = vsel %vm1115, %v1112, %v1114
    %v1117 = vsel %vm1115, %v1110, %v1112
    %v1118 = vsel %vm1115, %v1108, %v1110
    %v1119 = vsel %vm1115, %v1106, %v1108
    %v1120 = vsel %vm1115, %v1104, %v1106
    %v1121 = vsel %vm1115, %v1102, %v1104
    %v1122 = vsel %vm1115, %v1100, %v1102
    %v1123 = vsel %vm1115, %v1098, %v1100
    %v1124 = vsel %vm1115, %v1096, %v1098
    %v1125 = vsel %vm1115, %v1094, %v1096
    %v1126 = vsel %vm1115, %v1092, %v1094
    %v1127 = vsel %vm1115, %v1090, %v1092
    %v1128 = vsel %vm1115, %v1088, %v1090
    %v1129 = vsel %vm1115, %v1086, %v1088
    %v1130 = vsel %vm1115, %v1084, %v1086
    %v1131 = vsel %vm1115, %v1114, %v1084
    %v1132 = vlaneseq
    %v1133 = vshrl.u32 %v1132, 7
    %v1134 = vsub.s32 0, %v1133
    %v1135 = vrot.slane %v162, %v1134
    %v1136 = vlaneseq
    %v1137 = vshrl.u32 %v1136, 7
    %v1138 = vsub.s32 0, %v1137
    %v1139 = vrot.slane %v163, %v1138
    %v1140 = vlaneseq
    %v1141 = vshrl.u32 %v1140, 7
    %v1142 = vsub.s32 0, %v1141
    %v1143 = vrot.slane %v164, %v1142
    %v1144 = vlaneseq
    %v1145 = vshrl.u32 %v1144, 7
    %v1146 = vsub.s32 0, %v1145
    %v1147 = vrot.slane %v165, %v1146
    %v1148 = vlaneseq
    %v1149 = vshrl.u32 %v1148, 7
    %v1150 = vsub.s32 0, %v1149
    %v1151 = vrot.slane %v166, %v1150
    %v1152 = vlaneseq
    %v1153 = vshrl.u32 %v1152, 7
    %v1154 = vsub.s32 0, %v1153
    %v1155 = vrot.slane %v167, %v1154
    %v1156 = vlaneseq
    %v1157 = vshrl.u32 %v1156, 7
    %v1158 = vsub.s32 0, %v1157
    %v1159 = vrot.slane %v168, %v1158
    %v1160 = vlaneseq
    %v1161 = vshrl.u32 %v1160, 7
    %v1162 = vsub.s32 0, %v1161
    %v1163 = vrot.slane %v169, %v1162
    %v1164 = vlaneseq
    %v1165 = vshrl.u32 %v1164, 7
    %v1166 = vsub.s32 0, %v1165
    %v1167 = vrot.slane %v170, %v1166
    %v1168 = vlaneseq
    %v1169 = vshrl.u32 %v1168, 7
    %v1170 = vsub.s32 0, %v1169
    %v1171 = vrot.slane %v171, %v1170
    %v1172 = vlaneseq
    %v1173 = vshrl.u32 %v1172, 7
    %v1174 = vsub.s32 0, %v1173
    %v1175 = vrot.slane %v172, %v1174
    %v1176 = vlaneseq
    %v1177 = vshrl.u32 %v1176, 7
    %v1178 = vsub.s32 0, %v1177
    %v1179 = vrot.slane %v173, %v1178
    %v1180 = vlaneseq
    %v1181 = vshrl.u32 %v1180, 7
    %v1182 = vsub.s32 0, %v1181
    %v1183 = vrot.slane %v174, %v1182
    %v1184 = vlaneseq
    %v1185 = vshrl.u32 %v1184, 7
    %v1186 = vsub.s32 0, %v1185
    %v1187 = vrot.slane %v175, %v1186
    %v1188 = vlaneseq
    %v1189 = vshrl.u32 %v1188, 7
    %v1190 = vsub.s32 0, %v1189
    %v1191 = vrot.slane %v176, %v1190
    %v1192 = vlaneseq
    %v1193 = vshrl.u32 %v1192, 7
    %v1194 = vsub.s32 0, %v1193
    %v1195 = vrot.slane %v177, %v1194
    %v1196 = vmul.f32 %v1130, %v1135
    %v1197 = vmul.f32 %v1129, %v1139
    %v1198 = vmul.f32 %v1128, %v1143
    %v1199 = vmul.f32 %v1127, %v1147
    %v1200 = vmul.f32 %v1126, %v1151
    %v1201 = vmul.f32 %v1125, %v1155
    %v1202 = vmul.f32 %v1124, %v1159
    %v1203 = vmul.f32 %v1123, %v1163
    %v1204 = vmul.f32 %v1122, %v1167
    %v1205 = vmul.f32 %v1121, %v1171
    %v1206 = vmul.f32 %v1120, %v1175
    %v1207 = vmul.f32 %v1119, %v1179
    %v1208 = vmul.f32 %v1118, %v1183
    %v1209 = vmul.f32 %v1117, %v1187
    %v1210 = vmul.f32 %v1116, %v1191
    %v1211 = vmul.f32 %v1131, %v1195
    %v1212 = vpack.c.bf16 %v422, %v293
    %v1213 = vpack.c.bf16 %v423, %v294
    %v1214 = vpack.c.bf16 %v424, %v295
    %v1215 = vpack.c.bf16 %v425, %v296
    %v1216 = vpack.c.bf16 %v426, %v297
    %v1217 = vpack.c.bf16 %v427, %v298
    %v1218 = vpack.c.bf16 %v428, %v299
    %v1219 = vpack.c.bf16 %v429, %v300
    %v1220 = vpack.c.bf16 %v430, %v301
    %v1221 = vpack.c.bf16 %v431, %v302
    %v1222 = vpack.c.bf16 %v432, %v303
    %v1223 = vpack.c.bf16 %v433, %v304
    %v1224 = vpack.c.bf16 %v434, %v305
    %v1225 = vpack.c.bf16 %v435, %v306
    %v1226 = vpack.c.bf16 %v436, %v307
    %v1227 = vpack.c.bf16 %v437, %v308
    %v1228 = vpack.c.bf16 %v680, %v551
    %v1229 = vpack.c.bf16 %v681, %v552
    %v1230 = vpack.c.bf16 %v682, %v553
    %v1231 = vpack.c.bf16 %v683, %v554
    %v1232 = vpack.c.bf16 %v684, %v555
    %v1233 = vpack.c.bf16 %v685, %v556
    %v1234 = vpack.c.bf16 %v686, %v557
    %v1235 = vpack.c.bf16 %v687, %v558
    %v1236 = vpack.c.bf16 %v688, %v559
    %v1237 = vpack.c.bf16 %v689, %v560
    %v1238 = vpack.c.bf16 %v690, %v561
    %v1239 = vpack.c.bf16 %v691, %v562
    %v1240 = vpack.c.bf16 %v692, %v563
    %v1241 = vpack.c.bf16 %v693, %v564
    %v1242 = vpack.c.bf16 %v694, %v565
    %v1243 = vpack.c.bf16 %v695, %v566
    %v1244 = vpack.c.bf16 %v809, %v130
    %v1245 = vpack.c.bf16 %v810, %v131
    %v1246 = vpack.c.bf16 %v811, %v132
    %v1247 = vpack.c.bf16 %v812, %v133
    %v1248 = vpack.c.bf16 %v813, %v134
    %v1249 = vpack.c.bf16 %v814, %v135
    %v1250 = vpack.c.bf16 %v815, %v136
    %v1251 = vpack.c.bf16 %v816, %v137
    %v1252 = vpack.c.bf16 %v817, %v138
    %v1253 = vpack.c.bf16 %v818, %v139
    %v1254 = vpack.c.bf16 %v819, %v140
    %v1255 = vpack.c.bf16 %v820, %v141
    %v1256 = vpack.c.bf16 %v821, %v142
    %v1257 = vpack.c.bf16 %v822, %v143
    %v1258 = vpack.c.bf16 %v823, %v144
    %v1259 = vpack.c.bf16 %v824, %v145
    %v1260 = vpack.c.bf16 %v1067, %v938
    %v1261 = vpack.c.bf16 %v1068, %v939
    %v1262 = vpack.c.bf16 %v1069, %v940
    %v1263 = vpack.c.bf16 %v1070, %v941
    %v1264 = vpack.c.bf16 %v1071, %v942
    %v1265 = vpack.c.bf16 %v1072, %v943
    %v1266 = vpack.c.bf16 %v1073, %v944
    %v1267 = vpack.c.bf16 %v1074, %v945
    %v1268 = vpack.c.bf16 %v1075, %v946
    %v1269 = vpack.c.bf16 %v1076, %v947
    %v1270 = vpack.c.bf16 %v1077, %v948
    %v1271 = vpack.c.bf16 %v1078, %v949
    %v1272 = vpack.c.bf16 %v1079, %v950
    %v1273 = vpack.c.bf16 %v1080, %v951
    %v1274 = vpack.c.bf16 %v1081, %v952
    %v1275 = vpack.c.bf16 %v1082, %v953
    %v1276 = vpack.c.bf16 %v1196, %v1196
    %v1277 = vpack.c.bf16 %v1197, %v1197
    %v1278 = vpack.c.bf16 %v1198, %v1198
    %v1279 = vpack.c.bf16 %v1199, %v1199
    %v1280 = vpack.c.bf16 %v1200, %v1200
    %v1281 = vpack.c.bf16 %v1201, %v1201
    %v1282 = vpack.c.bf16 %v1202, %v1202
    %v1283 = vpack.c.bf16 %v1203, %v1203
    %v1284 = vpack.c.bf16 %v1204, %v1204
    %v1285 = vpack.c.bf16 %v1205, %v1205
    %v1286 = vpack.c.bf16 %v1206, %v1206
    %v1287 = vpack.c.bf16 %v1207, %v1207
    %v1288 = vpack.c.bf16 %v1208, %v1208
    %v1289 = vpack.c.bf16 %v1209, %v1209
    %v1290 = vpack.c.bf16 %v1210, %v1210
    %v1291 = vpack.c.bf16 %v1211, %v1211
    %v1292 = vld [vmem:[#allocation5] sm:$0xf]
    %v1293 = vld [vmem:[%s3] sm:$0xff]
    %1295 = vset.pattern.permute.xlu0 0
    %1296 = vperm.xlu0 %1295, %v1293
    %v1297 = vpop.permute.xlu0 %1296
    %vm1299 = vcmask 588800
    %v1301 = vsel %vm1299, %v1292, 0
    %vm1303 = vcmask 1043456
    %v1305 = vsel %vm1303, %v1276, 0
    %v1308 = vsel %vm1303, %v1277, 0
    %v1311 = vsel %vm1303, %v1278, 0
    %v1314 = vsel %vm1303, %v1279, 0
    %v1317 = vsel %vm1303, %v1280, 0
    %v1320 = vsel %vm1303, %v1281, 0
    %v1323 = vsel %vm1303, %v1282, 0
    %v1326 = vsel %vm1303, %v1283, 0
    %v1329 = vsel %vm1303, %v1284, 0
    %v1332 = vsel %vm1303, %v1285, 0
    %v1335 = vsel %vm1303, %v1286, 0
    %v1338 = vsel %vm1303, %v1287, 0
    %v1341 = vsel %vm1303, %v1288, 0
    %v1344 = vsel %vm1303, %v1289, 0
    %v1347 = vsel %vm1303, %v1290, 0
    %v1350 = vsel %vm1303, %v1291, 0
    %1352 = vmatprep.subr.bf16.mxu0 0
    %1353 = vmatpush1.bf16.msra.mxu0 0
    %1354 = vmatprep.subr.bf16.mxu0 0
    %1355 = vmatpush1.bf16.msra.mxu0 0
    %1356 = vmatprep.subr.bf16.mxu0 0
    %1357 = vmatpush1.bf16.msra.mxu0 0
    %1358 = vmatprep.subr.bf16.mxu0 %v1308
    %1359 = vmatpush1.bf16.msra.mxu0 %v1305
    %1360 = vmatprep.subr.bf16.mxu0 %v1261
    %1361 = vmatpush1.bf16.msra.mxu0 %v1260
    %1362 = vmatprep.subr.bf16.mxu0 %v1245
    %1363 = vmatpush1.bf16.msra.mxu0 %v1244
    %1364 = vmatprep.subr.bf16.mxu0 %v1229
    %1365 = vmatpush1.bf16.msra.mxu0 %v1228
    %1366 = vmatprep.subr.bf16.mxu0 %v1213
    %1367 = vmatpush1.bf16.msra.mxu0 %v1212
    %1368 = vmatprep.subr.bf16.mxu0 0
    %1369 = vmatpush2.bf16.msra.mxu0 0
    %1370 = vmatprep.subr.bf16.mxu0 0
    %1371 = vmatpush2.bf16.msra.mxu0 0
    %1372 = vmatprep.subr.bf16.mxu0 0
    %1373 = vmatpush2.bf16.msra.mxu0 0
    %1374 = vmatprep.subr.bf16.mxu0 0
    %1375 = vmatpush2.bf16.msra.mxu0 0
    %1376 = vmatprep.subr.bf16.mxu0 0
    %1377 = vmatpush2.bf16.msra.mxu0 0
    %1378 = vmatprep.subr.bf16.mxu0 0
    %1379 = vmatpush2.bf16.msra.mxu0 0
    %1380 = vmatprep.subr.bf16.mxu0 0
    %1381 = vmatpush2.bf16.msra.mxu0 0
    %1382 = vmatprep.subr.bf16.mxu0 0
    %1383 = vmatpush2.bf16.msra.mxu0 0
    %1384 = vmatprep.mubr.bf16.mxu0 0
    %1385 = vmatmul.mubr.bf16.gmra.mxu0 %v1301
    %v1386 = vpop.f32.mrf.mxu0
    %v1387 = vadd.f32 %v1297, %v1386
    %v1388 = vpop.f32.mrf.mxu0
    %v1389 = vadd.f32 %v1297, %v1388
    %v1390 = vpop.f32.mrf.mxu0
    %v1391 = vpop.f32.mrf.mxu0
    %1392 = vdwg.mxu0
    %1393 = vmatprep.subr.bf16.mxu0 0
    %1394 = vmatpush1.bf16.msra.mxu0 0
    %1395 = vmatprep.subr.bf16.mxu0 0
    %1396 = vmatpush1.bf16.msra.mxu0 0
    %1397 = vmatprep.subr.bf16.mxu0 0
    %1398 = vmatpush1.bf16.msra.mxu0 0
    %1399 = vmatprep.subr.bf16.mxu0 %v1314
    %1400 = vmatpush1.bf16.msra.mxu0 %v1311
    %1401 = vmatprep.subr.bf16.mxu0 %v1263
    %1402 = vmatpush1.bf16.msra.mxu0 %v1262
    %1403 = vmatprep.subr.bf16.mxu0 %v1247
    %1404 = vmatpush1.bf16.msra.mxu0 %v1246
    %1405 = vmatprep.subr.bf16.mxu0 %v1231
    %1406 = vmatpush1.bf16.msra.mxu0 %v1230
    %1407 = vmatprep.subr.bf16.mxu0 %v1215
    %1408 = vmatpush1.bf16.msra.mxu0 %v1214
    %1409 = vmatprep.subr.bf16.mxu0 0
    %1410 = vmatpush2.bf16.msra.mxu0 0
    %1411 = vmatprep.subr.bf16.mxu0 0
    %1412 = vmatpush2.bf16.msra.mxu0 0
    %1413 = vmatprep.subr.bf16.mxu0 0
    %1414 = vmatpush2.bf16.msra.mxu0 0
    %1415 = vmatprep.subr.bf16.mxu0 0
    %1416 = vmatpush2.bf16.msra.mxu0 0
    %1417 = vmatprep.subr.bf16.mxu0 0
    %1418 = vmatpush2.bf16.msra.mxu0 0
    %1419 = vmatprep.subr.bf16.mxu0 0
    %1420 = vmatpush2.bf16.msra.mxu0 0
    %1421 = vmatprep.subr.bf16.mxu0 0
    %1422 = vmatpush2.bf16.msra.mxu0 0
    %1423 = vmatprep.subr.bf16.mxu0 0
    %1424 = vmatpush2.bf16.msra.mxu0 0
    %1425 = vmatprep.mubr.bf16.mxu0 0
    %1426 = vmatmul.mubr.bf16.gmra.mxu0 %v1301
    %v1427 = vpop.f32.mrf.mxu0
    %v1428 = vadd.f32 %v1297, %v1427
    %v1429 = vpop.f32.mrf.mxu0
    %v1430 = vadd.f32 %v1297, %v1429
    %v1431 = vpop.f32.mrf.mxu0
    %v1432 = vpop.f32.mrf.mxu0
    %1433 = vdwg.mxu0
    %1434 = vmatprep.subr.bf16.mxu0 0
    %1435 = vmatpush1.bf16.msra.mxu0 0
    %1436 = vmatprep.subr.bf16.mxu0 0
    %1437 = vmatpush1.bf16.msra.mxu0 0
    %1438 = vmatprep.subr.bf16.mxu0 0
    %1439 = vmatpush1.bf16.msra.mxu0 0
    %1440 = vmatprep.subr.bf16.mxu0 %v1320
    %1441 = vmatpush1.bf16.msra.mxu0 %v1317
    %1442 = vmatprep.subr.bf16.mxu0 %v1265
    %1443 = vmatpush1.bf16.msra.mxu0 %v1264
    %1444 = vmatprep.subr.bf16.mxu0 %v1249
    %1445 = vmatpush1.bf16.msra.mxu0 %v1248
    %1446 = vmatprep.subr.bf16.mxu0 %v1233
    %1447 = vmatpush1.bf16.msra.mxu0 %v1232
    %1448 = vmatprep.subr.bf16.mxu0 %v1217
    %1449 = vmatpush1.bf16.msra.mxu0 %v1216
    %1450 = vmatprep.subr.bf16.mxu0 0
    %1451 = vmatpush2.bf16.msra.mxu0 0
    %1452 = vmatprep.subr.bf16.mxu0 0
    %1453 = vmatpush2.bf16.msra.mxu0 0
    %1454 = vmatprep.subr.bf16.mxu0 0
    %1455 = vmatpush2.bf16.msra.mxu0 0
    %1456 = vmatprep.subr.bf16.mxu0 0
    %1457 = vmatpush2.bf16.msra.mxu0 0
    %1458 = vmatprep.subr.bf16.mxu0 0
    %1459 = vmatpush2.bf16.msra.mxu0 0
    %1460 = vmatprep.subr.bf16.mxu0 0
    %1461 = vmatpush2.bf16.msra.mxu0 0
    %1462 = vmatprep.subr.bf16.mxu0 0
    %1463 = vmatpush2.bf16.msra.mxu0 0
    %1464 = vmatprep.subr.bf16.mxu0 0
    %1465 = vmatpush2.bf16.msra.mxu0 0
    %1466 = vmatprep.mubr.bf16.mxu0 0
    %1467 = vmatmul.mubr.bf16.gmra.mxu0 %v1301
    %v1468 = vpop.f32.mrf.mxu0
    %v1469 = vadd.f32 %v1297, %v1468
    %v1470 = vpop.f32.mrf.mxu0
    %v1471 = vadd.f32 %v1297, %v1470
    %v1472 = vpop.f32.mrf.mxu0
    %v1473 = vpop.f32.mrf.mxu0
    %1474 = vdwg.mxu0
    %1475 = vmatprep.subr.bf16.mxu0 0
    %1476 = vmatpush1.bf16.msra.mxu0 0
    %1477 = vmatprep.subr.bf16.mxu0 0
    %1478 = vmatpush1.bf16.msra.mxu0 0
    %1479 = vmatprep.subr.bf16.mxu0 0
    %1480 = vmatpush1.bf16.msra.mxu0 0
    %1481 = vmatprep.subr.bf16.mxu0 %v1326
    %1482 = vmatpush1.bf16.msra.mxu0 %v1323
    %1483 = vmatprep.subr.bf16.mxu0 %v1267
    %1484 = vmatpush1.bf16.msra.mxu0 %v1266
    %1485 = vmatprep.subr.bf16.mxu0 %v1251
    %1486 = vmatpush1.bf16.msra.mxu0 %v1250
    %1487 = vmatprep.subr.bf16.mxu0 %v1235
    %1488 = vmatpush1.bf16.msra.mxu0 %v1234
    %1489 = vmatprep.subr.bf16.mxu0 %v1219
    %1490 = vmatpush1.bf16.msra.mxu0 %v1218
    %1491 = vmatprep.subr.bf16.mxu0 0
    %1492 = vmatpush2.bf16.msra.mxu0 0
    %1493 = vmatprep.subr.bf16.mxu0 0
    %1494 = vmatpush2.bf16.msra.mxu0 0
    %1495 = vmatprep.subr.bf16.mxu0 0
    %1496 = vmatpush2.bf16.msra.mxu0 0
    %1497 = vmatprep.subr.bf16.mxu0 0
    %1498 = vmatpush2.bf16.msra.mxu0 0
    %1499 = vmatprep.subr.bf16.mxu0 0
    %1500 = vmatpush2.bf16.msra.mxu0 0
    %1501 = vmatprep.subr.bf16.mxu0 0
    %1502 = vmatpush2.bf16.msra.mxu0 0
    %1503 = vmatprep.subr.bf16.mxu0 0
    %1504 = vmatpush2.bf16.msra.mxu0 0
    %1505 = vmatprep.subr.bf16.mxu0 0
    %1506 = vmatpush2.bf16.msra.mxu0 0
    %1507 = vmatprep.mubr.bf16.mxu0 0
    %1508 = vmatmul.mubr.bf16.gmra.mxu0 %v1301
    %v1509 = vpop.f32.mrf.mxu0
    %v1510 = vadd.f32 %v1297, %v1509
    %v1511 = vpop.f32.mrf.mxu0
    %v1512 = vadd.f32 %v1297, %v1511
    %v1513 = vpop.f32.mrf.mxu0
    %v1514 = vpop.f32.mrf.mxu0
    %1515 = vdwg.mxu0
    %1516 = vmatprep.subr.bf16.mxu0 0
    %1517 = vmatpush1.bf16.msra.mxu0 0
    %1518 = vmatprep.subr.bf16.mxu0 0
    %1519 = vmatpush1.bf16.msra.mxu0 0
    %1520 = vmatprep.subr.bf16.mxu0 0
    %1521 = vmatpush1.bf16.msra.mxu0 0
    %1522 = vmatprep.subr.bf16.mxu0 %v1332
    %1523 = vmatpush1.bf16.msra.mxu0 %v1329
    %1524 = vmatprep.subr.bf16.mxu0 %v1269
    %1525 = vmatpush1.bf16.msra.mxu0 %v1268
    %1526 = vmatprep.subr.bf16.mxu0 %v1253
    %1527 = vmatpush1.bf16.msra.mxu0 %v1252
    %1528 = vmatprep.subr.bf16.mxu0 %v1237
    %1529 = vmatpush1.bf16.msra.mxu0 %v1236
    %1530 = vmatprep.subr.bf16.mxu0 %v1221
    %1531 = vmatpush1.bf16.msra.mxu0 %v1220
    %1532 = vmatprep.subr.bf16.mxu0 0
    %1533 = vmatpush2.bf16.msra.mxu0 0
    %1534 = vmatprep.subr.bf16.mxu0 0
    %1535 = vmatpush2.bf16.msra.mxu0 0
    %1536 = vmatprep.subr.bf16.mxu0 0
    %1537 = vmatpush2.bf16.msra.mxu0 0
    %1538 = vmatprep.subr.bf16.mxu0 0
    %1539 = vmatpush2.bf16.msra.mxu0 0
    %1540 = vmatprep.subr.bf16.mxu0 0
    %1541 = vmatpush2.bf16.msra.mxu0 0
    %1542 = vmatprep.subr.bf16.mxu0 0
    %1543 = vmatpush2.bf16.msra.mxu0 0
    %1544 = vmatprep.subr.bf16.mxu0 0
    %1545 = vmatpush2.bf16.msra.mxu0 0
    %1546 = vmatprep.subr.bf16.mxu0 0
    %1547 = vmatpush2.bf16.msra.mxu0 0
    %1548 = vmatprep.mubr.bf16.mxu0 0
    %1549 = vmatmul.mubr.bf16.gmra.mxu0 %v1301
    %v1550 = vpop.f32.mrf.mxu0
    %v1551 = vadd.f32 %v1297, %v1550
    %v1552 = vpop.f32.mrf.mxu0
    %v1553 = vadd.f32 %v1297, %v1552
    %v1554 = vpop.f32.mrf.mxu0
    %v1555 = vpop.f32.mrf.mxu0
    %1556 = vdwg.mxu0
    %1557 = vmatprep.subr.bf16.mxu0 0
    %1558 = vmatpush1.bf16.msra.mxu0 0
    %1559 = vmatprep.subr.bf16.mxu0 0
    %1560 = vmatpush1.bf16.msra.mxu0 0
    %1561 = vmatprep.subr.bf16.mxu0 0
    %1562 = vmatpush1.bf16.msra.mxu0 0
    %1563 = vmatprep.subr.bf16.mxu0 %v1338
    %1564 = vmatpush1.bf16.msra.mxu0 %v1335
    %1565 = vmatprep.subr.bf16.mxu0 %v1271
    %1566 = vmatpush1.bf16.msra.mxu0 %v1270
    %1567 = vmatprep.subr.bf16.mxu0 %v1255
    %1568 = vmatpush1.bf16.msra.mxu0 %v1254
    %1569 = vmatprep.subr.bf16.mxu0 %v1239
    %1570 = vmatpush1.bf16.msra.mxu0 %v1238
    %1571 = vmatprep.subr.bf16.mxu0 %v1223
    %1572 = vmatpush1.bf16.msra.mxu0 %v1222
    %1573 = vmatprep.subr.bf16.mxu0 0
    %1574 = vmatpush2.bf16.msra.mxu0 0
    %1575 = vmatprep.subr.bf16.mxu0 0
    %1576 = vmatpush2.bf16.msra.mxu0 0
    %1577 = vmatprep.subr.bf16.mxu0 0
    %1578 = vmatpush2.bf16.msra.mxu0 0
    %1579 = vmatprep.subr.bf16.mxu0 0
    %1580 = vmatpush2.bf16.msra.mxu0 0
    %1581 = vmatprep.subr.bf16.mxu0 0
    %1582 = vmatpush2.bf16.msra.mxu0 0
    %1583 = vmatprep.subr.bf16.mxu0 0
    %1584 = vmatpush2.bf16.msra.mxu0 0
    %1585 = vmatprep.subr.bf16.mxu0 0
    %1586 = vmatpush2.bf16.msra.mxu0 0
    %1587 = vmatprep.subr.bf16.mxu0 0
    %1588 = vmatpush2.bf16.msra.mxu0 0
    %1589 = vmatprep.mubr.bf16.mxu0 0
    %1590 = vmatmul.mubr.bf16.gmra.mxu0 %v1301
    %v1591 = vpop.f32.mrf.mxu0
    %v1592 = vadd.f32 %v1297, %v1591
    %v1593 = vpop.f32.mrf.mxu0
    %v1594 = vadd.f32 %v1297, %v1593
    %v1595 = vpop.f32.mrf.mxu0
    %v1596 = vpop.f32.mrf.mxu0
    %1597 = vdwg.mxu0
    %1598 = vmatprep.subr.bf16.mxu0 0
    %1599 = vmatpush1.bf16.msra.mxu0 0
    %1600 = vmatprep.subr.bf16.mxu0 0
    %1601 = vmatpush1.bf16.msra.mxu0 0
    %1602 = vmatprep.subr.bf16.mxu0 0
    %1603 = vmatpush1.bf16.msra.mxu0 0
    %1604 = vmatprep.subr.bf16.mxu0 %v1344
    %1605 = vmatpush1.bf16.msra.mxu0 %v1341
    %1606 = vmatprep.subr.bf16.mxu0 %v1273
    %1607 = vmatpush1.bf16.msra.mxu0 %v1272
    %1608 = vmatprep.subr.bf16.mxu0 %v1257
    %1609 = vmatpush1.bf16.msra.mxu0 %v1256
    %1610 = vmatprep.subr.bf16.mxu0 %v1241
    %1611 = vmatpush1.bf16.msra.mxu0 %v1240
    %1612 = vmatprep.subr.bf16.mxu0 %v1225
    %1613 = vmatpush1.bf16.msra.mxu0 %v1224
    %1614 = vmatprep.subr.bf16.mxu0 0
    %1615 = vmatpush2.bf16.msra.mxu0 0
    %1616 = vmatprep.subr.bf16.mxu0 0
    %1617 = vmatpush2.bf16.msra.mxu0 0
    %1618 = vmatprep.subr.bf16.mxu0 0
    %1619 = vmatpush2.bf16.msra.mxu0 0
    %1620 = vmatprep.subr.bf16.mxu0 0
    %1621 = vmatpush2.bf16.msra.mxu0 0
    %1622 = vmatprep.subr.bf16.mxu0 0
    %1623 = vmatpush2.bf16.msra.mxu0 0
    %1624 = vmatprep.subr.bf16.mxu0 0
    %1625 = vmatpush2.bf16.msra.mxu0 0
    %1626 = vmatprep.subr.bf16.mxu0 0
    %1627 = vmatpush2.bf16.msra.mxu0 0
    %1628 = vmatprep.subr.bf16.mxu0 0
    %1629 = vmatpush2.bf16.msra.mxu0 0
    %1630 = vmatprep.mubr.bf16.mxu0 0
    %1631 = vmatmul.mubr.bf16.gmra.mxu0 %v1301
    %v1632 = vpop.f32.mrf.mxu0
    %v1633 = vadd.f32 %v1297, %v1632
    %v1634 = vpop.f32.mrf.mxu0
    %v1635 = vadd.f32 %v1297, %v1634
    %v1636 = vpop.f32.mrf.mxu0
    %v1637 = vpop.f32.mrf.mxu0
    %1638 = vdwg.mxu0
    %1639 = vmatprep.subr.bf16.mxu0 0
    %1640 = vmatpush1.bf16.msra.mxu0 0
    %1641 = vmatprep.subr.bf16.mxu0 0
    %1642 = vmatpush1.bf16.msra.mxu0 0
    %1643 = vmatprep.subr.bf16.mxu0 0
    %1644 = vmatpush1.bf16.msra.mxu0 0
    %1645 = vmatprep.subr.bf16.mxu0 %v1350
    %1646 = vmatpush1.bf16.msra.mxu0 %v1347
    %1647 = vmatprep.subr.bf16.mxu0 %v1275
    %1648 = vmatpush1.bf16.msra.mxu0 %v1274
    %1649 = vmatprep.subr.bf16.mxu0 %v1259
    %1650 = vmatpush1.bf16.msra.mxu0 %v1258
    %1651 = vmatprep.subr.bf16.mxu0 %v1243
    %1652 = vmatpush1.bf16.msra.mxu0 %v1242
    %1653 = vmatprep.subr.bf16.mxu0 %v1227
    %1654 = vmatpush1.bf16.msra.mxu0 %v1226
    %1655 = vmatprep.subr.bf16.mxu0 0
    %1656 = vmatpush2.bf16.msra.mxu0 0
    %1657 = vmatprep.subr.bf16.mxu0 0
    %1658 = vmatpush2.bf16.msra.mxu0 0
    %1659 = vmatprep.subr.bf16.mxu0 0
    %1660 = vmatpush2.bf16.msra.mxu0 0
    %1661 = vmatprep.subr.bf16.mxu0 0
    %1662 = vmatpush2.bf16.msra.mxu0 0
    %1663 = vmatprep.subr.bf16.mxu0 0
    %1664 = vmatpush2.bf16.msra.mxu0 0
    %1665 = vmatprep.subr.bf16.mxu0 0
    %1666 = vmatpush2.bf16.msra.mxu0 0
    %1667 = vmatprep.subr.bf16.mxu0 0
    %1668 = vmatpush2.bf16.msra.mxu0 0
    %1669 = vmatprep.subr.bf16.mxu0 0
    %1670 = vmatpush2.bf16.msra.mxu0 0
    %1671 = vmatprep.mubr.bf16.mxu0 0
    %1672 = vmatmul.mubr.bf16.gmra.mxu0 %v1301
    %v1673 = vpop.f32.mrf.mxu0
    %v1674 = vadd.f32 %v1297, %v1673
    %v1675 = vpop.f32.mrf.mxu0
    %v1676 = vadd.f32 %v1297, %v1675
    %v1677 = vpop.f32.mrf.mxu0
    %v1678 = vpop.f32.mrf.mxu0
    %1679 = vdwg.mxu0
    %v1680 = vmax.f32 %v1387, 0.0
    %v1681 = vmax.f32 %v1389, 0.0
    %v1682 = vmax.f32 %v1428, 0.0
    %v1683 = vmax.f32 %v1430, 0.0
    %v1684 = vmax.f32 %v1469, 0.0
    %v1685 = vmax.f32 %v1471, 0.0
    %v1686 = vmax.f32 %v1510, 0.0
    %v1687 = vmax.f32 %v1512, 0.0
    %v1688 = vmax.f32 %v1551, 0.0
    %v1689 = vmax.f32 %v1553, 0.0
    %v1690 = vmax.f32 %v1592, 0.0
    %v1691 = vmax.f32 %v1594, 0.0
    %v1692 = vmax.f32 %v1633, 0.0
    %v1693 = vmax.f32 %v1635, 0.0
    %v1694 = vmax.f32 %v1674, 0.0
    %v1695 = vmax.f32 %v1676, 0.0
    %v1696 = vpack.c.bf16 %v1680, %v1680
    %v1697 = vpack.c.bf16 %v1681, %v1681
    %v1698 = vpack.c.bf16 %v1682, %v1682
    %v1699 = vpack.c.bf16 %v1683, %v1683
    %v1700 = vpack.c.bf16 %v1684, %v1684
    %v1701 = vpack.c.bf16 %v1685, %v1685
    %v1702 = vpack.c.bf16 %v1686, %v1686
    %v1703 = vpack.c.bf16 %v1687, %v1687
    %v1704 = vpack.c.bf16 %v1688, %v1688
    %v1705 = vpack.c.bf16 %v1689, %v1689
    %v1706 = vpack.c.bf16 %v1690, %v1690
    %v1707 = vpack.c.bf16 %v1691, %v1691
    %v1708 = vpack.c.bf16 %v1692, %v1692
    %v1709 = vpack.c.bf16 %v1693, %v1693
    %v1710 = vpack.c.bf16 %v1694, %v1694
    %v1711 = vpack.c.bf16 %v1695, %v1695
    %v1712 = vld [vmem:[#allocation8] sm:$0xff]
    %v1713 = vld [vmem:[#allocation8 + $0x8] sm:$0xff]
    %v1714 = vld [vmem:[#allocation8 + $0x10] sm:$0xff]
    %v1715 = vld [vmem:[#allocation8 + $0x18] sm:$0xff]
    %v1716 = vld [vmem:[#allocation8 + $0x20] sm:$0xff]
    %v1717 = vld [vmem:[#allocation8 + $0x28] sm:$0xff]
    %v1718 = vld [vmem:[#allocation8 + $0x30] sm:$0xff]
    %v1719 = vld [vmem:[#allocation8 + $0x38] sm:$0xff]
    %v1720 = vld [vmem:[#allocation8 + $0x40] sm:$0xff]
    %v1721 = vld [vmem:[#allocation8 + $0x48] sm:$0xff]
    %v1722 = vld [vmem:[#allocation8 + $0x50] sm:$0xff]
    %v1723 = vld [vmem:[#allocation8 + $0x58] sm:$0xff]
    %v1724 = vld [vmem:[#allocation8 + $0x60] sm:$0xff]
    %v1725 = vld [vmem:[#allocation8 + $0x68] sm:$0xff]
    %v1726 = vld [vmem:[#allocation8 + $0x70] sm:$0xff]
    %v1727 = vld [vmem:[#allocation8 + $0x78] sm:$0xff]
    %v1728 = vld [vmem:[#allocation8 + $0x80] sm:$0xff]
    %v1729 = vld [vmem:[#allocation8 + $0x88] sm:$0xff]
    %v1730 = vld [vmem:[#allocation8 + $0x90] sm:$0xff]
    %v1731 = vld [vmem:[#allocation8 + $0x98] sm:$0xff]
    %v1732 = vld [vmem:[#allocation8 + $0xa0] sm:$0xff]
    %v1733 = vld [vmem:[#allocation8 + $0xa8] sm:$0xff]
    %v1734 = vld [vmem:[#allocation8 + $0xb0] sm:$0xff]
    %v1735 = vld [vmem:[#allocation8 + $0xb8] sm:$0xff]
    %v1736 = vld [vmem:[#allocation8 + $0xc0] sm:$0xff]
    %v1737 = vld [vmem:[#allocation8 + $0xc8] sm:$0xff]
    %v1738 = vld [vmem:[#allocation8 + $0xd0] sm:$0xff]
    %v1739 = vld [vmem:[#allocation8 + $0xd8] sm:$0xff]
    %v1740 = vld [vmem:[#allocation8 + $0xe0] sm:$0xff]
    %v1741 = vld [vmem:[#allocation8 + $0xe8] sm:$0xff]
    %v1742 = vld [vmem:[#allocation8 + $0xf0] sm:$0xff]
    %v1743 = vld [vmem:[#allocation8 + $0xf8] sm:$0xff]
    %v1744 = vld [vmem:[#allocation8 + $0x100] sm:$0xff]
    %v1745 = vld [vmem:[#allocation8 + $0x108] sm:$0xff]
    %v1746 = vld [vmem:[#allocation8 + $0x110] sm:$0xff]
    %v1747 = vld [vmem:[#allocation8 + $0x118] sm:$0xff]
    %v1748 = vld [vmem:[#allocation8 + $0x120] sm:$0xff]
    %v1749 = vld [vmem:[#allocation8 + $0x128] sm:$0xff]
    %v1750 = vld [vmem:[#allocation8 + $0x130] sm:$0xff]
    %v1751 = vld [vmem:[#allocation8 + $0x138] sm:$0xff]
    %v1752 = vld [vmem:[#allocation8 + $0x140] sm:$0xff]
    %v1753 = vld [vmem:[#allocation8 + $0x148] sm:$0xff]
    %v1754 = vld [vmem:[#allocation8 + $0x150] sm:$0xff]
    %v1755 = vld [vmem:[#allocation8 + $0x158] sm:$0xff]
    %v1756 = vld [vmem:[#allocation8 + $0x160] sm:$0xff]
    %v1757 = vld [vmem:[#allocation8 + $0x168] sm:$0xff]
    %v1758 = vld [vmem:[#allocation8 + $0x170] sm:$0xff]
    %v1759 = vld [vmem:[#allocation8 + $0x178] sm:$0xff]
    %v1760 = vld [vmem:[#allocation8 + $0x180] sm:$0xff]
    %v1761 = vld [vmem:[#allocation8 + $0x188] sm:$0xff]
    %v1762 = vld [vmem:[#allocation8 + $0x190] sm:$0xff]
    %v1763 = vld [vmem:[#allocation8 + $0x198] sm:$0xff]
    %v1764 = vld [vmem:[#allocation8 + $0x1a0] sm:$0xff]
    %v1765 = vld [vmem:[#allocation8 + $0x1a8] sm:$0xff]
    %v1766 = vld [vmem:[#allocation8 + $0x1b0] sm:$0xff]
    %v1767 = vld [vmem:[#allocation8 + $0x1b8] sm:$0xff]
    %v1768 = vld [vmem:[#allocation8 + $0x1c0] sm:$0xff]
    %v1769 = vld [vmem:[#allocation8 + $0x1c8] sm:$0xff]
    %v1770 = vld [vmem:[#allocation8 + $0x1d0] sm:$0xff]
    %v1771 = vld [vmem:[#allocation8 + $0x1d8] sm:$0xff]
    %v1772 = vld [vmem:[#allocation8 + $0x1e0] sm:$0xff]
    %v1773 = vld [vmem:[#allocation8 + $0x1e8] sm:$0xff]
    %v1774 = vld [vmem:[#allocation8 + $0x1f0] sm:$0xff]
    %v1775 = vld [vmem:[#allocation8 + $0x1f8] sm:$0xff]
    %v1776 = vld [vmem:[#allocation8 + $0x200] sm:$0xff]
    %v1777 = vld [vmem:[#allocation8 + $0x208] sm:$0xff]
    %v1778 = vld [vmem:[#allocation8 + $0x210] sm:$0xff]
    %v1779 = vld [vmem:[#allocation8 + $0x218] sm:$0xff]
    %v1780 = vld [vmem:[#allocation8 + $0x220] sm:$0xff]
    %v1781 = vld [vmem:[#allocation8 + $0x228] sm:$0xff]
    %v1782 = vld [vmem:[#allocation8 + $0x230] sm:$0xff]
    %v1783 = vld [vmem:[#allocation8 + $0x238] sm:$0xff]
    %v1784 = vld [vmem:[#allocation8 + $0x240] sm:$0xff]
    %v1785 = vld [vmem:[#allocation8 + $0x248] sm:$0xff]
    %v1786 = vld [vmem:[#allocation8 + $0x250] sm:$0xff]
    %v1787 = vld [vmem:[#allocation8 + $0x258] sm:$0xff]
    %v1788 = vld [vmem:[#allocation8 + $0x260] sm:$0xff]
    %v1789 = vld [vmem:[#allocation8 + $0x268] sm:$0xff]
    %v1790 = vld [vmem:[#allocation8 + $0x270] sm:$0xff]
    %v1791 = vld [vmem:[#allocation8 + $0x278] sm:$0xff]
    %v1792 = vld [vmem:[#allocation8 + $0x280] sm:$0xff]
    %v1793 = vld [vmem:[#allocation8 + $0x288] sm:$0xff]
    %v1794 = vld [vmem:[#allocation8 + $0x290] sm:$0xff]
    %v1795 = vld [vmem:[#allocation8 + $0x298] sm:$0xff]
    %v1796 = vld [vmem:[#allocation8 + $0x2a0] sm:$0xff]
    %v1797 = vld [vmem:[#allocation8 + $0x2a8] sm:$0xff]
    %v1798 = vld [vmem:[#allocation8 + $0x2b0] sm:$0xff]
    %v1799 = vld [vmem:[#allocation8 + $0x2b8] sm:$0xff]
    %v1800 = vld [vmem:[#allocation8 + $0x2c0] sm:$0xff]
    %v1801 = vld [vmem:[#allocation8 + $0x2c8] sm:$0xff]
    %v1802 = vld [vmem:[#allocation8 + $0x2d0] sm:$0xff]
    %v1803 = vld [vmem:[#allocation8 + $0x2d8] sm:$0xff]
    %v1804 = vld [vmem:[#allocation8 + $0x2e0] sm:$0xff]
    %v1805 = vld [vmem:[#allocation8 + $0x2e8] sm:$0xff]
    %v1806 = vld [vmem:[#allocation8 + $0x2f0] sm:$0xff]
    %v1807 = vld [vmem:[#allocation8 + $0x2f8] sm:$0xff]
    %v1808 = vld [vmem:[#allocation8 + $0x300] sm:$0xff]
    %v1809 = vld [vmem:[#allocation8 + $0x308] sm:$0xff]
    %v1810 = vld [vmem:[#allocation8 + $0x310] sm:$0xff]
    %v1811 = vld [vmem:[#allocation8 + $0x318] sm:$0xff]
    %v1812 = vld [vmem:[#allocation8 + $0x320] sm:$0xff]
    %v1813 = vld [vmem:[#allocation8 + $0x328] sm:$0xff]
    %v1814 = vld [vmem:[#allocation8 + $0x330] sm:$0xff]
    %v1815 = vld [vmem:[#allocation8 + $0x338] sm:$0xff]
    %v1816 = vld [vmem:[#allocation8 + $0x340] sm:$0xff]
    %v1817 = vld [vmem:[#allocation8 + $0x348] sm:$0xff]
    %v1818 = vld [vmem:[#allocation8 + $0x350] sm:$0xff]
    %v1819 = vld [vmem:[#allocation8 + $0x358] sm:$0xff]
    %v1820 = vld [vmem:[#allocation8 + $0x360] sm:$0xff]
    %v1821 = vld [vmem:[#allocation8 + $0x368] sm:$0xff]
    %v1822 = vld [vmem:[#allocation8 + $0x370] sm:$0xff]
    %v1823 = vld [vmem:[#allocation8 + $0x378] sm:$0xff]
    %v1824 = vld [vmem:[#allocation8 + $0x380] sm:$0xff]
    %v1825 = vld [vmem:[#allocation8 + $0x388] sm:$0xff]
    %v1826 = vld [vmem:[#allocation8 + $0x390] sm:$0xff]
    %v1827 = vld [vmem:[#allocation8 + $0x398] sm:$0xff]
    %v1828 = vld [vmem:[#allocation8 + $0x3a0] sm:$0xff]
    %v1829 = vld [vmem:[#allocation8 + $0x3a8] sm:$0xff]
    %v1830 = vld [vmem:[#allocation8 + $0x3b0] sm:$0xff]
    %v1831 = vld [vmem:[#allocation8 + $0x3b8] sm:$0xff]
    %v1832 = vld [vmem:[#allocation8 + $0x3c0] sm:$0xff]
    %v1833 = vld [vmem:[#allocation8 + $0x3c8] sm:$0xff]
    %v1834 = vld [vmem:[#allocation8 + $0x3d0] sm:$0xff]
    %v1835 = vld [vmem:[#allocation8 + $0x3d8] sm:$0xff]
    %v1836 = vld [vmem:[#allocation8 + $0x3e0] sm:$0xff]
    %v1837 = vld [vmem:[#allocation8 + $0x3e8] sm:$0xff]
    %v1838 = vld [vmem:[#allocation8 + $0x3f0] sm:$0xff]
    %v1839 = vld [vmem:[#allocation8 + $0x3f8] sm:$0xff]
    %v1840 = vld [vmem:[#allocation8 + $0x400] sm:$0xff]
    %v1841 = vld [vmem:[#allocation8 + $0x408] sm:$0xff]
    %v1842 = vld [vmem:[#allocation8 + $0x410] sm:$0xff]
    %v1843 = vld [vmem:[#allocation8 + $0x418] sm:$0xff]
    %v1844 = vld [vmem:[#allocation8 + $0x420] sm:$0xff]
    %v1845 = vld [vmem:[#allocation8 + $0x428] sm:$0xff]
    %v1846 = vld [vmem:[#allocation8 + $0x430] sm:$0xff]
    %v1847 = vld [vmem:[#allocation8 + $0x438] sm:$0xff]
    %v1848 = vld [vmem:[#allocation8 + $0x440] sm:$0xff]
    %v1849 = vld [vmem:[#allocation8 + $0x448] sm:$0xff]
    %v1850 = vld [vmem:[#allocation8 + $0x450] sm:$0xff]
    %v1851 = vld [vmem:[#allocation8 + $0x458] sm:$0xff]
    %v1852 = vld [vmem:[#allocation8 + $0x460] sm:$0xff]
    %v1853 = vld [vmem:[#allocation8 + $0x468] sm:$0xff]
    %v1854 = vld [vmem:[#allocation8 + $0x470] sm:$0xff]
    %v1855 = vld [vmem:[#allocation8 + $0x478] sm:$0xff]
    %v1856 = vld [vmem:[#allocation8 + $0x480] sm:$0xff]
    %v1857 = vld [vmem:[#allocation8 + $0x488] sm:$0xff]
    %v1858 = vld [vmem:[#allocation8 + $0x490] sm:$0xff]
    %v1859 = vld [vmem:[#allocation8 + $0x498] sm:$0xff]
    %v1860 = vld [vmem:[#allocation8 + $0x4a0] sm:$0xff]
    %v1861 = vld [vmem:[#allocation8 + $0x4a8] sm:$0xff]
    %v1862 = vld [vmem:[#allocation8 + $0x4b0] sm:$0xff]
    %v1863 = vld [vmem:[#allocation8 + $0x4b8] sm:$0xff]
    %v1864 = vld [vmem:[#allocation8 + $0x4c0] sm:$0xff]
    %v1865 = vld [vmem:[#allocation8 + $0x4c8] sm:$0xff]
    %v1866 = vld [vmem:[#allocation8 + $0x4d0] sm:$0xff]
    %v1867 = vld [vmem:[#allocation8 + $0x4d8] sm:$0xff]
    %v1868 = vld [vmem:[#allocation8 + $0x4e0] sm:$0xff]
    %v1869 = vld [vmem:[#allocation8 + $0x4e8] sm:$0xff]
    %v1870 = vld [vmem:[#allocation8 + $0x4f0] sm:$0xff]
    %v1871 = vld [vmem:[#allocation8 + $0x4f8] sm:$0xff]
    %v1872 = vld [vmem:[#allocation8 + $0x500] sm:$0xff]
    %v1873 = vld [vmem:[#allocation8 + $0x508] sm:$0xff]
    %v1874 = vld [vmem:[#allocation8 + $0x510] sm:$0xff]
    %v1875 = vld [vmem:[#allocation8 + $0x518] sm:$0xff]
    %v1876 = vld [vmem:[#allocation8 + $0x520] sm:$0xff]
    %v1877 = vld [vmem:[#allocation8 + $0x528] sm:$0xff]
    %v1878 = vld [vmem:[#allocation8 + $0x530] sm:$0xff]
    %v1879 = vld [vmem:[#allocation8 + $0x538] sm:$0xff]
    %v1880 = vld [vmem:[#allocation8 + $0x540] sm:$0xff]
    %v1881 = vld [vmem:[#allocation8 + $0x548] sm:$0xff]
    %v1882 = vld [vmem:[#allocation8 + $0x550] sm:$0xff]
    %v1883 = vld [vmem:[#allocation8 + $0x558] sm:$0xff]
    %v1884 = vld [vmem:[#allocation8 + $0x560] sm:$0xff]
    %v1885 = vld [vmem:[#allocation8 + $0x568] sm:$0xff]
    %v1886 = vld [vmem:[#allocation8 + $0x570] sm:$0xff]
    %v1887 = vld [vmem:[#allocation8 + $0x578] sm:$0xff]
    %v1888 = vld [vmem:[#allocation8 + $0x580] sm:$0xff]
    %v1889 = vld [vmem:[#allocation8 + $0x588] sm:$0xff]
    %v1890 = vld [vmem:[#allocation8 + $0x590] sm:$0xff]
    %v1891 = vld [vmem:[#allocation8 + $0x598] sm:$0xff]
    %v1892 = vld [vmem:[#allocation8 + $0x5a0] sm:$0xff]
    %v1893 = vld [vmem:[#allocation8 + $0x5a8] sm:$0xff]
    %v1894 = vld [vmem:[#allocation8 + $0x5b0] sm:$0xff]
    %v1895 = vld [vmem:[#allocation8 + $0x5b8] sm:$0xff]
    %v1896 = vld [vmem:[#allocation8 + $0x5c0] sm:$0xff]
    %v1897 = vld [vmem:[#allocation8 + $0x5c8] sm:$0xff]
    %v1898 = vld [vmem:[#allocation8 + $0x5d0] sm:$0xff]
    %v1899 = vld [vmem:[#allocation8 + $0x5d8] sm:$0xff]
    %v1900 = vld [vmem:[#allocation8 + $0x5e0] sm:$0xff]
    %v1901 = vld [vmem:[#allocation8 + $0x5e8] sm:$0xff]
    %v1902 = vld [vmem:[#allocation8 + $0x5f0] sm:$0xff]
    %v1903 = vld [vmem:[#allocation8 + $0x5f8] sm:$0xff]
    %v1904 = vld [vmem:[#allocation8 + $0x600] sm:$0xff]
    %v1905 = vld [vmem:[#allocation8 + $0x608] sm:$0xff]
    %v1906 = vld [vmem:[#allocation8 + $0x610] sm:$0xff]
    %v1907 = vld [vmem:[#allocation8 + $0x618] sm:$0xff]
    %v1908 = vld [vmem:[#allocation8 + $0x620] sm:$0xff]
    %v1909 = vld [vmem:[#allocation8 + $0x628] sm:$0xff]
    %v1910 = vld [vmem:[#allocation8 + $0x630] sm:$0xff]
    %v1911 = vld [vmem:[#allocation8 + $0x638] sm:$0xff]
    %v1912 = vld [vmem:[#allocation8 + $0x640] sm:$0xff]
    %v1913 = vld [vmem:[#allocation8 + $0x648] sm:$0xff]
    %v1914 = vld [vmem:[#allocation8 + $0x650] sm:$0xff]
    %v1915 = vld [vmem:[#allocation8 + $0x658] sm:$0xff]
    %v1916 = vld [vmem:[#allocation8 + $0x660] sm:$0xff]
    %v1917 = vld [vmem:[#allocation8 + $0x668] sm:$0xff]
    %v1918 = vld [vmem:[#allocation8 + $0x670] sm:$0xff]
    %v1919 = vld [vmem:[#allocation8 + $0x678] sm:$0xff]
    %v1920 = vld [vmem:[#allocation8 + $0x680] sm:$0xff]
    %v1921 = vld [vmem:[#allocation8 + $0x688] sm:$0xff]
    %v1922 = vld [vmem:[#allocation8 + $0x690] sm:$0xff]
    %v1923 = vld [vmem:[#allocation8 + $0x698] sm:$0xff]
    %v1924 = vld [vmem:[#allocation8 + $0x6a0] sm:$0xff]
    %v1925 = vld [vmem:[#allocation8 + $0x6a8] sm:$0xff]
    %v1926 = vld [vmem:[#allocation8 + $0x6b0] sm:$0xff]
    %v1927 = vld [vmem:[#allocation8 + $0x6b8] sm:$0xff]
    %v1928 = vld [vmem:[#allocation8 + $0x6c0] sm:$0xff]
    %v1929 = vld [vmem:[#allocation8 + $0x6c8] sm:$0xff]
    %v1930 = vld [vmem:[#allocation8 + $0x6d0] sm:$0xff]
    %v1931 = vld [vmem:[#allocation8 + $0x6d8] sm:$0xff]
    %v1932 = vld [vmem:[#allocation8 + $0x6e0] sm:$0xff]
    %v1933 = vld [vmem:[#allocation8 + $0x6e8] sm:$0xff]
    %v1934 = vld [vmem:[#allocation8 + $0x6f0] sm:$0xff]
    %v1935 = vld [vmem:[#allocation8 + $0x6f8] sm:$0xff]
    %v1936 = vld [vmem:[#allocation8 + $0x700] sm:$0xff]
    %v1937 = vld [vmem:[#allocation8 + $0x708] sm:$0xff]
    %v1938 = vld [vmem:[#allocation8 + $0x710] sm:$0xff]
    %v1939 = vld [vmem:[#allocation8 + $0x718] sm:$0xff]
    %v1940 = vld [vmem:[#allocation8 + $0x720] sm:$0xff]
    %v1941 = vld [vmem:[#allocation8 + $0x728] sm:$0xff]
    %v1942 = vld [vmem:[#allocation8 + $0x730] sm:$0xff]
    %v1943 = vld [vmem:[#allocation8 + $0x738] sm:$0xff]
    %v1944 = vld [vmem:[#allocation8 + $0x740] sm:$0xff]
    %v1945 = vld [vmem:[#allocation8 + $0x748] sm:$0xff]
    %v1946 = vld [vmem:[#allocation8 + $0x750] sm:$0xff]
    %v1947 = vld [vmem:[#allocation8 + $0x758] sm:$0xff]
    %v1948 = vld [vmem:[#allocation8 + $0x760] sm:$0xff]
    %v1949 = vld [vmem:[#allocation8 + $0x768] sm:$0xff]
    %v1950 = vld [vmem:[#allocation8 + $0x770] sm:$0xff]
    %v1951 = vld [vmem:[#allocation8 + $0x778] sm:$0xff]
    %v1952 = vld [vmem:[#allocation8 + $0x780] sm:$0xff]
    %v1953 = vld [vmem:[#allocation8 + $0x788] sm:$0xff]
    %v1954 = vld [vmem:[#allocation8 + $0x790] sm:$0xff]
    %v1955 = vld [vmem:[#allocation8 + $0x798] sm:$0xff]
    %v1956 = vld [vmem:[#allocation8 + $0x7a0] sm:$0xff]
    %v1957 = vld [vmem:[#allocation8 + $0x7a8] sm:$0xff]
    %v1958 = vld [vmem:[#allocation8 + $0x7b0] sm:$0xff]
    %v1959 = vld [vmem:[#allocation8 + $0x7b8] sm:$0xff]
    %v1960 = vld [vmem:[#allocation8 + $0x7c0] sm:$0xff]
    %v1961 = vld [vmem:[#allocation8 + $0x7c8] sm:$0xff]
    %v1962 = vld [vmem:[#allocation8 + $0x7d0] sm:$0xff]
    %v1963 = vld [vmem:[#allocation8 + $0x7d8] sm:$0xff]
    %v1964 = vld [vmem:[#allocation8 + $0x7e0] sm:$0xff]
    %v1965 = vld [vmem:[#allocation8 + $0x7e8] sm:$0xff]
    %v1966 = vld [vmem:[#allocation8 + $0x7f0] sm:$0xff]
    %v1967 = vld [vmem:[#allocation8 + $0x7f8] sm:$0xff]
    %v1968 = vld [vmem:[#allocation8 + $0x800] sm:$0xff]
    %v1969 = vld [vmem:[#allocation8 + $0x808] sm:$0xff]
    %v1970 = vld [vmem:[#allocation8 + $0x810] sm:$0xff]
    %v1971 = vld [vmem:[#allocation8 + $0x818] sm:$0xff]
    %v1972 = vld [vmem:[#allocation8 + $0x820] sm:$0xff]
    %v1973 = vld [vmem:[#allocation8 + $0x828] sm:$0xff]
    %v1974 = vld [vmem:[#allocation8 + $0x830] sm:$0xff]
    %v1975 = vld [vmem:[#allocation8 + $0x838] sm:$0xff]
    %v1976 = vld [vmem:[#allocation8 + $0x840] sm:$0xff]
    %v1977 = vld [vmem:[#allocation8 + $0x848] sm:$0xff]
    %v1978 = vld [vmem:[#allocation8 + $0x850] sm:$0xff]
    %v1979 = vld [vmem:[#allocation8 + $0x858] sm:$0xff]
    %v1980 = vld [vmem:[#allocation8 + $0x860] sm:$0xff]
    %v1981 = vld [vmem:[#allocation8 + $0x868] sm:$0xff]
    %v1982 = vld [vmem:[#allocation8 + $0x870] sm:$0xff]
    %v1983 = vld [vmem:[#allocation8 + $0x878] sm:$0xff]
    %v1984 = vld [vmem:[#allocation8 + $0x880] sm:$0xff]
    %v1985 = vld [vmem:[#allocation8 + $0x888] sm:$0xff]
    %v1986 = vld [vmem:[#allocation8 + $0x890] sm:$0xff]
    %v1987 = vld [vmem:[#allocation8 + $0x898] sm:$0xff]
    %v1988 = vld [vmem:[#allocation8 + $0x8a0] sm:$0xff]
    %v1989 = vld [vmem:[#allocation8 + $0x8a8] sm:$0xff]
    %v1990 = vld [vmem:[#allocation8 + $0x8b0] sm:$0xff]
    %v1991 = vld [vmem:[#allocation8 + $0x8b8] sm:$0xff]
    %v1992 = vld [vmem:[#allocation8 + $0x8c0] sm:$0xff]
    %v1993 = vld [vmem:[#allocation8 + $0x8c8] sm:$0xff]
    %v1994 = vld [vmem:[#allocation8 + $0x8d0] sm:$0xff]
    %v1995 = vld [vmem:[#allocation8 + $0x8d8] sm:$0xff]
    %v1996 = vld [vmem:[#allocation8 + $0x8e0] sm:$0xff]
    %v1997 = vld [vmem:[#allocation8 + $0x8e8] sm:$0xff]
    %v1998 = vld [vmem:[#allocation8 + $0x8f0] sm:$0xff]
    %v1999 = vld [vmem:[#allocation8 + $0x8f8] sm:$0xff]
    %v2000 = vld [vmem:[#allocation8 + $0x900] sm:$0xff]
    %v2001 = vld [vmem:[#allocation8 + $0x908] sm:$0xff]
    %v2002 = vld [vmem:[#allocation8 + $0x910] sm:$0xff]
    %v2003 = vld [vmem:[#allocation8 + $0x918] sm:$0xff]
    %v2004 = vld [vmem:[#allocation8 + $0x920] sm:$0xff]
    %v2005 = vld [vmem:[#allocation8 + $0x928] sm:$0xff]
    %v2006 = vld [vmem:[#allocation8 + $0x930] sm:$0xff]
    %v2007 = vld [vmem:[#allocation8 + $0x938] sm:$0xff]
    %v2008 = vld [vmem:[#allocation8 + $0x940] sm:$0xff]
    %v2009 = vld [vmem:[#allocation8 + $0x948] sm:$0xff]
    %v2010 = vld [vmem:[#allocation8 + $0x950] sm:$0xff]
    %v2011 = vld [vmem:[#allocation8 + $0x958] sm:$0xff]
    %v2012 = vld [vmem:[#allocation8 + $0x960] sm:$0xff]
    %v2013 = vld [vmem:[#allocation8 + $0x968] sm:$0xff]
    %v2014 = vld [vmem:[#allocation8 + $0x970] sm:$0xff]
    %v2015 = vld [vmem:[#allocation8 + $0x978] sm:$0xff]
    %v2016 = vld [vmem:[#allocation8 + $0x980] sm:$0xff]
    %v2017 = vld [vmem:[#allocation8 + $0x988] sm:$0xff]
    %v2018 = vld [vmem:[#allocation8 + $0x990] sm:$0xff]
    %v2019 = vld [vmem:[#allocation8 + $0x998] sm:$0xff]
    %v2020 = vld [vmem:[#allocation8 + $0x9a0] sm:$0xff]
    %v2021 = vld [vmem:[#allocation8 + $0x9a8] sm:$0xff]
    %v2022 = vld [vmem:[#allocation8 + $0x9b0] sm:$0xff]
    %v2023 = vld [vmem:[#allocation8 + $0x9b8] sm:$0xff]
    %v2024 = vld [vmem:[#allocation8 + $0x9c0] sm:$0xff]
    %v2025 = vld [vmem:[#allocation8 + $0x9c8] sm:$0xff]
    %v2026 = vld [vmem:[#allocation8 + $0x9d0] sm:$0xff]
    %v2027 = vld [vmem:[#allocation8 + $0x9d8] sm:$0xff]
    %v2028 = vld [vmem:[#allocation8 + $0x9e0] sm:$0xff]
    %v2029 = vld [vmem:[#allocation8 + $0x9e8] sm:$0xff]
    %v2030 = vld [vmem:[#allocation8 + $0x9f0] sm:$0xff]
    %v2031 = vld [vmem:[#allocation8 + $0x9f8] sm:$0xff]
    %v2032 = vld [vmem:[#allocation8 + $0xa00] sm:$0xff]
    %v2033 = vld [vmem:[#allocation8 + $0xa08] sm:$0xff]
    %v2034 = vld [vmem:[#allocation8 + $0xa10] sm:$0xff]
    %v2035 = vld [vmem:[#allocation8 + $0xa18] sm:$0xff]
    %v2036 = vld [vmem:[#allocation8 + $0xa20] sm:$0xff]
    %v2037 = vld [vmem:[#allocation8 + $0xa28] sm:$0xff]
    %v2038 = vld [vmem:[#allocation8 + $0xa30] sm:$0xff]
    %v2039 = vld [vmem:[#allocation8 + $0xa38] sm:$0xff]
    %v2040 = vld [vmem:[#allocation8 + $0xa40] sm:$0xff]
    %v2041 = vld [vmem:[#allocation8 + $0xa48] sm:$0xff]
    %v2042 = vld [vmem:[#allocation8 + $0xa50] sm:$0xff]
    %v2043 = vld [vmem:[#allocation8 + $0xa58] sm:$0xff]
    %v2044 = vld [vmem:[#allocation8 + $0xa60] sm:$0xff]
    %v2045 = vld [vmem:[#allocation8 + $0xa68] sm:$0xff]
    %v2046 = vld [vmem:[#allocation8 + $0xa70] sm:$0xff]
    %v2047 = vld [vmem:[#allocation8 + $0xa78] sm:$0xff]
    %v2048 = vld [vmem:[#allocation8 + $0xa80] sm:$0xff]
    %v2049 = vld [vmem:[#allocation8 + $0xa88] sm:$0xff]
    %v2050 = vld [vmem:[#allocation8 + $0xa90] sm:$0xff]
    %v2051 = vld [vmem:[#allocation8 + $0xa98] sm:$0xff]
    %v2052 = vld [vmem:[#allocation8 + $0xaa0] sm:$0xff]
    %v2053 = vld [vmem:[#allocation8 + $0xaa8] sm:$0xff]
    %v2054 = vld [vmem:[#allocation8 + $0xab0] sm:$0xff]
    %v2055 = vld [vmem:[#allocation8 + $0xab8] sm:$0xff]
    %v2056 = vld [vmem:[#allocation8 + $0xac0] sm:$0xff]
    %v2057 = vld [vmem:[#allocation8 + $0xac8] sm:$0xff]
    %v2058 = vld [vmem:[#allocation8 + $0xad0] sm:$0xff]
    %v2059 = vld [vmem:[#allocation8 + $0xad8] sm:$0xff]
    %v2060 = vld [vmem:[#allocation8 + $0xae0] sm:$0xff]
    %v2061 = vld [vmem:[#allocation8 + $0xae8] sm:$0xff]
    %v2062 = vld [vmem:[#allocation8 + $0xaf0] sm:$0xff]
    %v2063 = vld [vmem:[#allocation8 + $0xaf8] sm:$0xff]
    %v2064 = vld [vmem:[#allocation8 + $0xb00] sm:$0xff]
    %v2065 = vld [vmem:[#allocation8 + $0xb08] sm:$0xff]
    %v2066 = vld [vmem:[#allocation8 + $0xb10] sm:$0xff]
    %v2067 = vld [vmem:[#allocation8 + $0xb18] sm:$0xff]
    %v2068 = vld [vmem:[#allocation8 + $0xb20] sm:$0xff]
    %v2069 = vld [vmem:[#allocation8 + $0xb28] sm:$0xff]
    %v2070 = vld [vmem:[#allocation8 + $0xb30] sm:$0xff]
    %v2071 = vld [vmem:[#allocation8 + $0xb38] sm:$0xff]
    %v2072 = vld [vmem:[#allocation8 + $0xb40] sm:$0xff]
    %v2073 = vld [vmem:[#allocation8 + $0xb48] sm:$0xff]
    %v2074 = vld [vmem:[#allocation8 + $0xb50] sm:$0xff]
    %v2075 = vld [vmem:[#allocation8 + $0xb58] sm:$0xff]
    %v2076 = vld [vmem:[#allocation8 + $0xb60] sm:$0xff]
    %v2077 = vld [vmem:[#allocation8 + $0xb68] sm:$0xff]
    %v2078 = vld [vmem:[#allocation8 + $0xb70] sm:$0xff]
    %v2079 = vld [vmem:[#allocation8 + $0xb78] sm:$0xff]
    %v2080 = vld [vmem:[#allocation8 + $0xb80] sm:$0xff]
    %v2081 = vld [vmem:[#allocation8 + $0xb88] sm:$0xff]
    %v2082 = vld [vmem:[#allocation8 + $0xb90] sm:$0xff]
    %v2083 = vld [vmem:[#allocation8 + $0xb98] sm:$0xff]
    %v2084 = vld [vmem:[#allocation8 + $0xba0] sm:$0xff]
    %v2085 = vld [vmem:[#allocation8 + $0xba8] sm:$0xff]
    %v2086 = vld [vmem:[#allocation8 + $0xbb0] sm:$0xff]
    %v2087 = vld [vmem:[#allocation8 + $0xbb8] sm:$0xff]
    %v2088 = vld [vmem:[#allocation8 + $0xbc0] sm:$0xff]
    %v2089 = vld [vmem:[#allocation8 + $0xbc8] sm:$0xff]
    %v2090 = vld [vmem:[#allocation8 + $0xbd0] sm:$0xff]
    %v2091 = vld [vmem:[#allocation8 + $0xbd8] sm:$0xff]
    %v2092 = vld [vmem:[#allocation8 + $0xbe0] sm:$0xff]
    %v2093 = vld [vmem:[#allocation8 + $0xbe8] sm:$0xff]
    %v2094 = vld [vmem:[#allocation8 + $0xbf0] sm:$0xff]
    %v2095 = vld [vmem:[#allocation8 + $0xbf8] sm:$0xff]
    %v2096 = vld [vmem:[#allocation8 + $0xc00] sm:$0xff]
    %v2097 = vld [vmem:[#allocation8 + $0xc08] sm:$0xff]
    %v2098 = vld [vmem:[#allocation8 + $0xc10] sm:$0xff]
    %v2099 = vld [vmem:[#allocation8 + $0xc18] sm:$0xff]
    %v2100 = vld [vmem:[#allocation8 + $0xc20] sm:$0xff]
    %v2101 = vld [vmem:[#allocation8 + $0xc28] sm:$0xff]
    %v2102 = vld [vmem:[#allocation8 + $0xc30] sm:$0xff]
    %v2103 = vld [vmem:[#allocation8 + $0xc38] sm:$0xff]
    %v2104 = vld [vmem:[#allocation8 + $0xc40] sm:$0xff]
    %v2105 = vld [vmem:[#allocation8 + $0xc48] sm:$0xff]
    %v2106 = vld [vmem:[#allocation8 + $0xc50] sm:$0xff]
    %v2107 = vld [vmem:[#allocation8 + $0xc58] sm:$0xff]
    %v2108 = vld [vmem:[#allocation8 + $0xc60] sm:$0xff]
    %v2109 = vld [vmem:[#allocation8 + $0xc68] sm:$0xff]
    %v2110 = vld [vmem:[#allocation8 + $0xc70] sm:$0xff]
    %v2111 = vld [vmem:[#allocation8 + $0xc78] sm:$0xff]
    %v2112 = vld [vmem:[#allocation8 + $0xc80] sm:$0xff]
    %v2113 = vld [vmem:[#allocation8 + $0xc88] sm:$0xff]
    %v2114 = vld [vmem:[#allocation8 + $0xc90] sm:$0xff]
    %v2115 = vld [vmem:[#allocation8 + $0xc98] sm:$0xff]
    %v2116 = vld [vmem:[#allocation8 + $0xca0] sm:$0xff]
    %v2117 = vld [vmem:[#allocation8 + $0xca8] sm:$0xff]
    %v2118 = vld [vmem:[#allocation8 + $0xcb0] sm:$0xff]
    %v2119 = vld [vmem:[#allocation8 + $0xcb8] sm:$0xff]
    %v2120 = vld [vmem:[#allocation8 + $0xcc0] sm:$0xff]
    %v2121 = vld [vmem:[#allocation8 + $0xcc8] sm:$0xff]
    %v2122 = vld [vmem:[#allocation8 + $0xcd0] sm:$0xff]
    %v2123 = vld [vmem:[#allocation8 + $0xcd8] sm:$0xff]
    %v2124 = vld [vmem:[#allocation8 + $0xce0] sm:$0xff]
    %v2125 = vld [vmem:[#allocation8 + $0xce8] sm:$0xff]
    %v2126 = vld [vmem:[#allocation8 + $0xcf0] sm:$0xff]
    %v2127 = vld [vmem:[#allocation8 + $0xcf8] sm:$0xff]
    %v2128 = vld [vmem:[#allocation8 + $0xd00] sm:$0xff]
    %v2129 = vld [vmem:[#allocation8 + $0xd08] sm:$0xff]
    %v2130 = vld [vmem:[#allocation8 + $0xd10] sm:$0xff]
    %v2131 = vld [vmem:[#allocation8 + $0xd18] sm:$0xff]
    %v2132 = vld [vmem:[#allocation8 + $0xd20] sm:$0xff]
    %v2133 = vld [vmem:[#allocation8 + $0xd28] sm:$0xff]
    %v2134 = vld [vmem:[#allocation8 + $0xd30] sm:$0xff]
    %v2135 = vld [vmem:[#allocation8 + $0xd38] sm:$0xff]
    %v2136 = vld [vmem:[#allocation8 + $0xd40] sm:$0xff]
    %v2137 = vld [vmem:[#allocation8 + $0xd48] sm:$0xff]
    %v2138 = vld [vmem:[#allocation8 + $0xd50] sm:$0xff]
    %v2139 = vld [vmem:[#allocation8 + $0xd58] sm:$0xff]
    %v2140 = vld [vmem:[#allocation8 + $0xd60] sm:$0xff]
    %v2141 = vld [vmem:[#allocation8 + $0xd68] sm:$0xff]
    %v2142 = vld [vmem:[#allocation8 + $0xd70] sm:$0xff]
    %v2143 = vld [vmem:[#allocation8 + $0xd78] sm:$0xff]
    %v2144 = vld [vmem:[#allocation8 + $0xd80] sm:$0xff]
    %v2145 = vld [vmem:[#allocation8 + $0xd88] sm:$0xff]
    %v2146 = vld [vmem:[#allocation8 + $0xd90] sm:$0xff]
    %v2147 = vld [vmem:[#allocation8 + $0xd98] sm:$0xff]
    %v2148 = vld [vmem:[#allocation8 + $0xda0] sm:$0xff]
    %v2149 = vld [vmem:[#allocation8 + $0xda8] sm:$0xff]
    %v2150 = vld [vmem:[#allocation8 + $0xdb0] sm:$0xff]
    %v2151 = vld [vmem:[#allocation8 + $0xdb8] sm:$0xff]
    %v2152 = vld [vmem:[#allocation8 + $0xdc0] sm:$0xff]
    %v2153 = vld [vmem:[#allocation8 + $0xdc8] sm:$0xff]
    %v2154 = vld [vmem:[#allocation8 + $0xdd0] sm:$0xff]
    %v2155 = vld [vmem:[#allocation8 + $0xdd8] sm:$0xff]
    %v2156 = vld [vmem:[#allocation8 + $0xde0] sm:$0xff]
    %v2157 = vld [vmem:[#allocation8 + $0xde8] sm:$0xff]
    %v2158 = vld [vmem:[#allocation8 + $0xdf0] sm:$0xff]
    %v2159 = vld [vmem:[#allocation8 + $0xdf8] sm:$0xff]
    %v2160 = vld [vmem:[#allocation8 + $0xe00] sm:$0xff]
    %v2161 = vld [vmem:[#allocation8 + $0xe08] sm:$0xff]
    %v2162 = vld [vmem:[#allocation8 + $0xe10] sm:$0xff]
    %v2163 = vld [vmem:[#allocation8 + $0xe18] sm:$0xff]
    %v2164 = vld [vmem:[#allocation8 + $0xe20] sm:$0xff]
    %v2165 = vld [vmem:[#allocation8 + $0xe28] sm:$0xff]
    %v2166 = vld [vmem:[#allocation8 + $0xe30] sm:$0xff]
    %v2167 = vld [vmem:[#allocation8 + $0xe38] sm:$0xff]
    %v2168 = vld [vmem:[#allocation8 + $0xe40] sm:$0xff]
    %v2169 = vld [vmem:[#allocation8 + $0xe48] sm:$0xff]
    %v2170 = vld [vmem:[#allocation8 + $0xe50] sm:$0xff]
    %v2171 = vld [vmem:[#allocation8 + $0xe58] sm:$0xff]
    %v2172 = vld [vmem:[#allocation8 + $0xe60] sm:$0xff]
    %v2173 = vld [vmem:[#allocation8 + $0xe68] sm:$0xff]
    %v2174 = vld [vmem:[#allocation8 + $0xe70] sm:$0xff]
    %v2175 = vld [vmem:[#allocation8 + $0xe78] sm:$0xff]
    %v2176 = vld [vmem:[#allocation8 + $0xe80] sm:$0xff]
    %v2177 = vld [vmem:[#allocation8 + $0xe88] sm:$0xff]
    %v2178 = vld [vmem:[#allocation8 + $0xe90] sm:$0xff]
    %v2179 = vld [vmem:[#allocation8 + $0xe98] sm:$0xff]
    %v2180 = vld [vmem:[#allocation8 + $0xea0] sm:$0xff]
    %v2181 = vld [vmem:[#allocation8 + $0xea8] sm:$0xff]
    %v2182 = vld [vmem:[#allocation8 + $0xeb0] sm:$0xff]
    %v2183 = vld [vmem:[#allocation8 + $0xeb8] sm:$0xff]
    %v2184 = vld [vmem:[#allocation8 + $0xec0] sm:$0xff]
    %v2185 = vld [vmem:[#allocation8 + $0xec8] sm:$0xff]
    %v2186 = vld [vmem:[#allocation8 + $0xed0] sm:$0xff]
    %v2187 = vld [vmem:[#allocation8 + $0xed8] sm:$0xff]
    %v2188 = vld [vmem:[#allocation8 + $0xee0] sm:$0xff]
    %v2189 = vld [vmem:[#allocation8 + $0xee8] sm:$0xff]
    %v2190 = vld [vmem:[#allocation8 + $0xef0] sm:$0xff]
    %v2191 = vld [vmem:[#allocation8 + $0xef8] sm:$0xff]
    %v2192 = vld [vmem:[#allocation8 + $0xf00] sm:$0xff]
    %v2193 = vld [vmem:[#allocation8 + $0xf08] sm:$0xff]
    %v2194 = vld [vmem:[#allocation8 + $0xf10] sm:$0xff]
    %v2195 = vld [vmem:[#allocation8 + $0xf18] sm:$0xff]
    %v2196 = vld [vmem:[#allocation8 + $0xf20] sm:$0xff]
    %v2197 = vld [vmem:[#allocation8 + $0xf28] sm:$0xff]
    %v2198 = vld [vmem:[#allocation8 + $0xf30] sm:$0xff]
    %v2199 = vld [vmem:[#allocation8 + $0xf38] sm:$0xff]
    %v2200 = vld [vmem:[#allocation8 + $0xf40] sm:$0xff]
    %v2201 = vld [vmem:[#allocation8 + $0xf48] sm:$0xff]
    %v2202 = vld [vmem:[#allocation8 + $0xf50] sm:$0xff]
    %v2203 = vld [vmem:[#allocation8 + $0xf58] sm:$0xff]
    %v2204 = vld [vmem:[#allocation8 + $0xf60] sm:$0xff]
    %v2205 = vld [vmem:[#allocation8 + $0xf68] sm:$0xff]
    %v2206 = vld [vmem:[#allocation8 + $0xf70] sm:$0xff]
    %v2207 = vld [vmem:[#allocation8 + $0xf78] sm:$0xff]
    %v2208 = vld [vmem:[#allocation8 + $0xf80] sm:$0xff]
    %v2209 = vld [vmem:[#allocation8 + $0xf88] sm:$0xff]
    %v2210 = vld [vmem:[#allocation8 + $0xf90] sm:$0xff]
    %v2211 = vld [vmem:[#allocation8 + $0xf98] sm:$0xff]
    %v2212 = vld [vmem:[#allocation8 + $0xfa0] sm:$0xff]
    %v2213 = vld [vmem:[#allocation8 + $0xfa8] sm:$0xff]
    %v2214 = vld [vmem:[#allocation8 + $0xfb0] sm:$0xff]
    %v2215 = vld [vmem:[#allocation8 + $0xfb8] sm:$0xff]
    %v2216 = vld [vmem:[#allocation8 + $0xfc0] sm:$0xff]
    %v2217 = vld [vmem:[#allocation8 + $0xfc8] sm:$0xff]
    %v2218 = vld [vmem:[#allocation8 + $0xfd0] sm:$0xff]
    %v2219 = vld [vmem:[#allocation8 + $0xfd8] sm:$0xff]
    %v2220 = vld [vmem:[#allocation8 + $0xfe0] sm:$0xff]
    %v2221 = vld [vmem:[#allocation8 + $0xfe8] sm:$0xff]
    %v2222 = vld [vmem:[#allocation8 + $0xff0] sm:$0xff]
    %v2223 = vld [vmem:[#allocation8 + $0xff8] sm:$0xff]
    %v2736 = vunpack.c.l.b16 %v1712
    %v2737 = vunpack.c.h.b16 %v1712
    %v2738 = vunpack.c.l.b16 %v1713
    %v2739 = vunpack.c.h.b16 %v1713
    %v2740 = vunpack.c.l.b16 %v1714
    %v2741 = vunpack.c.h.b16 %v1714
    %v2742 = vunpack.c.l.b16 %v1715
    %v2743 = vunpack.c.h.b16 %v1715
    %v2744 = vunpack.c.l.b16 %v1716
    %v2745 = vunpack.c.h.b16 %v1716
    %v2746 = vunpack.c.l.b16 %v1717
    %v2747 = vunpack.c.h.b16 %v1717
    %v2748 = vunpack.c.l.b16 %v1718
    %v2749 = vunpack.c.h.b16 %v1718
    %v2750 = vunpack.c.l.b16 %v1719
    %v2751 = vunpack.c.h.b16 %v1719
    %v2752 = vunpack.c.l.b16 %v1720
    %v2753 = vunpack.c.h.b16 %v1720
    %v2754 = vunpack.c.l.b16 %v1721
    %v2755 = vunpack.c.h.b16 %v1721
    %v2756 = vunpack.c.l.b16 %v1722
    %v2757 = vunpack.c.h.b16 %v1722
    %v2758 = vunpack.c.l.b16 %v1723
    %v2759 = vunpack.c.h.b16 %v1723
    %v2760 = vunpack.c.l.b16 %v1724
    %v2761 = vunpack.c.h.b16 %v1724
    %v2762 = vunpack.c.l.b16 %v1725
    %v2763 = vunpack.c.h.b16 %v1725
    %v2764 = vunpack.c.l.b16 %v1726
    %v2765 = vunpack.c.h.b16 %v1726
    %v2766 = vunpack.c.l.b16 %v1727
    %v2767 = vunpack.c.h.b16 %v1727
    %v2768 = vunpack.c.l.b16 %v1728
    %v2769 = vunpack.c.h.b16 %v1728
    %v2770 = vunpack.c.l.b16 %v1729
    %v2771 = vunpack.c.h.b16 %v1729
    %v2772 = vunpack.c.l.b16 %v1730
    %v2773 = vunpack.c.h.b16 %v1730
    %v2774 = vunpack.c.l.b16 %v1731
    %v2775 = vunpack.c.h.b16 %v1731
    %v2776 = vunpack.c.l.b16 %v1732
    %v2777 = vunpack.c.h.b16 %v1732
    %v2778 = vunpack.c.l.b16 %v1733
    %v2779 = vunpack.c.h.b16 %v1733
    %v2780 = vunpack.c.l.b16 %v1734
    %v2781 = vunpack.c.h.b16 %v1734
    %v2782 = vunpack.c.l.b16 %v1735
    %v2783 = vunpack.c.h.b16 %v1735
    %v2784 = vunpack.c.l.b16 %v1736
    %v2785 = vunpack.c.h.b16 %v1736
    %v2786 = vunpack.c.l.b16 %v1737
    %v2787 = vunpack.c.h.b16 %v1737
    %v2788 = vunpack.c.l.b16 %v1738
    %v2789 = vunpack.c.h.b16 %v1738
    %v2790 = vunpack.c.l.b16 %v1739
    %v2791 = vunpack.c.h.b16 %v1739
    %v2792 = vunpack.c.l.b16 %v1740
    %v2793 = vunpack.c.h.b16 %v1740
    %v2794 = vunpack.c.l.b16 %v1741
    %v2795 = vunpack.c.h.b16 %v1741
    %v2796 = vunpack.c.l.b16 %v1742
    %v2797 = vunpack.c.h.b16 %v1742
    %v2798 = vunpack.c.l.b16 %v1743
    %v2799 = vunpack.c.h.b16 %v1743
    %v2800 = vunpack.c.l.b16 %v1744
    %v2801 = vunpack.c.h.b16 %v1744
    %v2802 = vunpack.c.l.b16 %v1745
    %v2803 = vunpack.c.h.b16 %v1745
    %v2804 = vunpack.c.l.b16 %v1746
    %v2805 = vunpack.c.h.b16 %v1746
    %v2806 = vunpack.c.l.b16 %v1747
    %v2807 = vunpack.c.h.b16 %v1747
    %v2808 = vunpack.c.l.b16 %v1748
    %v2809 = vunpack.c.h.b16 %v1748
    %v2810 = vunpack.c.l.b16 %v1749
    %v2811 = vunpack.c.h.b16 %v1749
    %v2812 = vunpack.c.l.b16 %v1750
    %v2813 = vunpack.c.h.b16 %v1750
    %v2814 = vunpack.c.l.b16 %v1751
    %v2815 = vunpack.c.h.b16 %v1751
    %v2816 = vunpack.c.l.b16 %v1752
    %v2817 = vunpack.c.h.b16 %v1752
    %v2818 = vunpack.c.l.b16 %v1753
    %v2819 = vunpack.c.h.b16 %v1753
    %v2820 = vunpack.c.l.b16 %v1754
    %v2821 = vunpack.c.h.b16 %v1754
    %v2822 = vunpack.c.l.b16 %v1755
    %v2823 = vunpack.c.h.b16 %v1755
    %v2824 = vunpack.c.l.b16 %v1756
    %v2825 = vunpack.c.h.b16 %v1756
    %v2826 = vunpack.c.l.b16 %v1757
    %v2827 = vunpack.c.h.b16 %v1757
    %v2828 = vunpack.c.l.b16 %v1758
    %v2829 = vunpack.c.h.b16 %v1758
    %v2830 = vunpack.c.l.b16 %v1759
    %v2831 = vunpack.c.h.b16 %v1759
    %v2832 = vunpack.c.l.b16 %v1760
    %v2833 = vunpack.c.h.b16 %v1760
    %v2834 = vunpack.c.l.b16 %v1761
    %v2835 = vunpack.c.h.b16 %v1761
    %v2836 = vunpack.c.l.b16 %v1762
    %v2837 = vunpack.c.h.b16 %v1762
    %v2838 = vunpack.c.l.b16 %v1763
    %v2839 = vunpack.c.h.b16 %v1763
    %v2840 = vunpack.c.l.b16 %v1764
    %v2841 = vunpack.c.h.b16 %v1764
    %v2842 = vunpack.c.l.b16 %v1765
    %v2843 = vunpack.c.h.b16 %v1765
    %v2844 = vunpack.c.l.b16 %v1766
    %v2845 = vunpack.c.h.b16 %v1766
    %v2846 = vunpack.c.l.b16 %v1767
    %v2847 = vunpack.c.h.b16 %v1767
    %v2848 = vunpack.c.l.b16 %v1768
    %v2849 = vunpack.c.h.b16 %v1768
    %v2850 = vunpack.c.l.b16 %v1769
    %v2851 = vunpack.c.h.b16 %v1769
    %v2852 = vunpack.c.l.b16 %v1770
    %v2853 = vunpack.c.h.b16 %v1770
    %v2854 = vunpack.c.l.b16 %v1771
    %v2855 = vunpack.c.h.b16 %v1771
    %v2856 = vunpack.c.l.b16 %v1772
    %v2857 = vunpack.c.h.b16 %v1772
    %v2858 = vunpack.c.l.b16 %v1773
    %v2859 = vunpack.c.h.b16 %v1773
    %v2860 = vunpack.c.l.b16 %v1774
    %v2861 = vunpack.c.h.b16 %v1774
    %v2862 = vunpack.c.l.b16 %v1775
    %v2863 = vunpack.c.h.b16 %v1775
    %v2864 = vunpack.c.l.b16 %v1776
    %v2865 = vunpack.c.h.b16 %v1776
    %v2866 = vunpack.c.l.b16 %v1777
    %v2867 = vunpack.c.h.b16 %v1777
    %v2868 = vunpack.c.l.b16 %v1778
    %v2869 = vunpack.c.h.b16 %v1778
    %v2870 = vunpack.c.l.b16 %v1779
    %v2871 = vunpack.c.h.b16 %v1779
    %v2872 = vunpack.c.l.b16 %v1780
    %v2873 = vunpack.c.h.b16 %v1780
    %v2874 = vunpack.c.l.b16 %v1781
    %v2875 = vunpack.c.h.b16 %v1781
    %v2876 = vunpack.c.l.b16 %v1782
    %v2877 = vunpack.c.h.b16 %v1782
    %v2878 = vunpack.c.l.b16 %v1783
    %v2879 = vunpack.c.h.b16 %v1783
    %v2880 = vunpack.c.l.b16 %v1784
    %v2881 = vunpack.c.h.b16 %v1784
    %v2882 = vunpack.c.l.b16 %v1785
    %v2883 = vunpack.c.h.b16 %v1785
    %v2884 = vunpack.c.l.b16 %v1786
    %v2885 = vunpack.c.h.b16 %v1786
    %v2886 = vunpack.c.l.b16 %v1787
    %v2887 = vunpack.c.h.b16 %v1787
    %v2888 = vunpack.c.l.b16 %v1788
    %v2889 = vunpack.c.h.b16 %v1788
    %v2890 = vunpack.c.l.b16 %v1789
    %v2891 = vunpack.c.h.b16 %v1789
    %v2892 = vunpack.c.l.b16 %v1790
    %v2893 = vunpack.c.h.b16 %v1790
    %v2894 = vunpack.c.l.b16 %v1791
    %v2895 = vunpack.c.h.b16 %v1791
    %v2896 = vunpack.c.l.b16 %v1792
    %v2897 = vunpack.c.h.b16 %v1792
    %v2898 = vunpack.c.l.b16 %v1793
    %v2899 = vunpack.c.h.b16 %v1793
    %v2900 = vunpack.c.l.b16 %v1794
    %v2901 = vunpack.c.h.b16 %v1794
    %v2902 = vunpack.c.l.b16 %v1795
    %v2903 = vunpack.c.h.b16 %v1795
    %v2904 = vunpack.c.l.b16 %v1796
    %v2905 = vunpack.c.h.b16 %v1796
    %v2906 = vunpack.c.l.b16 %v1797
    %v2907 = vunpack.c.h.b16 %v1797
    %v2908 = vunpack.c.l.b16 %v1798
    %v2909 = vunpack.c.h.b16 %v1798
    %v2910 = vunpack.c.l.b16 %v1799
    %v2911 = vunpack.c.h.b16 %v1799
    %v2912 = vunpack.c.l.b16 %v1800
    %v2913 = vunpack.c.h.b16 %v1800
    %v2914 = vunpack.c.l.b16 %v1801
    %v2915 = vunpack.c.h.b16 %v1801
    %v2916 = vunpack.c.l.b16 %v1802
    %v2917 = vunpack.c.h.b16 %v1802
    %v2918 = vunpack.c.l.b16 %v1803
    %v2919 = vunpack.c.h.b16 %v1803
    %v2920 = vunpack.c.l.b16 %v1804
    %v2921 = vunpack.c.h.b16 %v1804
    %v2922 = vunpack.c.l.b16 %v1805
    %v2923 = vunpack.c.h.b16 %v1805
    %v2924 = vunpack.c.l.b16 %v1806
    %v2925 = vunpack.c.h.b16 %v1806
    %v2926 = vunpack.c.l.b16 %v1807
    %v2927 = vunpack.c.h.b16 %v1807
    %v2928 = vunpack.c.l.b16 %v1808
    %v2929 = vunpack.c.h.b16 %v1808
    %v2930 = vunpack.c.l.b16 %v1809
    %v2931 = vunpack.c.h.b16 %v1809
    %v2932 = vunpack.c.l.b16 %v1810
    %v2933 = vunpack.c.h.b16 %v1810
    %v2934 = vunpack.c.l.b16 %v1811
    %v2935 = vunpack.c.h.b16 %v1811
    %v2936 = vunpack.c.l.b16 %v1812
    %v2937 = vunpack.c.h.b16 %v1812
    %v2938 = vunpack.c.l.b16 %v1813
    %v2939 = vunpack.c.h.b16 %v1813
    %v2940 = vunpack.c.l.b16 %v1814
    %v2941 = vunpack.c.h.b16 %v1814
    %v2942 = vunpack.c.l.b16 %v1815
    %v2943 = vunpack.c.h.b16 %v1815
    %v2944 = vunpack.c.l.b16 %v1816
    %v2945 = vunpack.c.h.b16 %v1816
    %v2946 = vunpack.c.l.b16 %v1817
    %v2947 = vunpack.c.h.b16 %v1817
    %v2948 = vunpack.c.l.b16 %v1818
    %v2949 = vunpack.c.h.b16 %v1818
    %v2950 = vunpack.c.l.b16 %v1819
    %v2951 = vunpack.c.h.b16 %v1819
    %v2952 = vunpack.c.l.b16 %v1820
    %v2953 = vunpack.c.h.b16 %v1820
    %v2954 = vunpack.c.l.b16 %v1821
    %v2955 = vunpack.c.h.b16 %v1821
    %v2956 = vunpack.c.l.b16 %v1822
    %v2957 = vunpack.c.h.b16 %v1822
    %v2958 = vunpack.c.l.b16 %v1823
    %v2959 = vunpack.c.h.b16 %v1823
    %v2960 = vunpack.c.l.b16 %v1824
    %v2961 = vunpack.c.h.b16 %v1824
    %v2962 = vunpack.c.l.b16 %v1825
    %v2963 = vunpack.c.h.b16 %v1825
    %v2964 = vunpack.c.l.b16 %v1826
    %v2965 = vunpack.c.h.b16 %v1826
    %v2966 = vunpack.c.l.b16 %v1827
    %v2967 = vunpack.c.h.b16 %v1827
    %v2968 = vunpack.c.l.b16 %v1828
    %v2969 = vunpack.c.h.b16 %v1828
    %v2970 = vunpack.c.l.b16 %v1829
    %v2971 = vunpack.c.h.b16 %v1829
    %v2972 = vunpack.c.l.b16 %v1830
    %v2973 = vunpack.c.h.b16 %v1830
    %v2974 = vunpack.c.l.b16 %v1831
    %v2975 = vunpack.c.h.b16 %v1831
    %v2976 = vunpack.c.l.b16 %v1832
    %v2977 = vunpack.c.h.b16 %v1832
    %v2978 = vunpack.c.l.b16 %v1833
    %v2979 = vunpack.c.h.b16 %v1833
    %v2980 = vunpack.c.l.b16 %v1834
    %v2981 = vunpack.c.h.b16 %v1834
    %v2982 = vunpack.c.l.b16 %v1835
    %v2983 = vunpack.c.h.b16 %v1835
    %v2984 = vunpack.c.l.b16 %v1836
    %v2985 = vunpack.c.h.b16 %v1836
    %v2986 = vunpack.c.l.b16 %v1837
    %v2987 = vunpack.c.h.b16 %v1837
    %v2988 = vunpack.c.l.b16 %v1838
    %v2989 = vunpack.c.h.b16 %v1838
    %v2990 = vunpack.c.l.b16 %v1839
    %v2991 = vunpack.c.h.b16 %v1839
    %v2992 = vunpack.c.l.b16 %v1840
    %v2993 = vunpack.c.h.b16 %v1840
    %v2994 = vunpack.c.l.b16 %v1841
    %v2995 = vunpack.c.h.b16 %v1841
    %v2996 = vunpack.c.l.b16 %v1842
    %v2997 = vunpack.c.h.b16 %v1842
    %v2998 = vunpack.c.l.b16 %v1843
    %v2999 = vunpack.c.h.b16 %v1843
    %v3000 = vunpack.c.l.b16 %v1844
    %v3001 = vunpack.c.h.b16 %v1844
    %v3002 = vunpack.c.l.b16 %v1845
    %v3003 = vunpack.c.h.b16 %v1845
    %v3004 = vunpack.c.l.b16 %v1846
    %v3005 = vunpack.c.h.b16 %v1846
    %v3006 = vunpack.c.l.b16 %v1847
    %v3007 = vunpack.c.h.b16 %v1847
    %v3008 = vunpack.c.l.b16 %v1848
    %v3009 = vunpack.c.h.b16 %v1848
    %v3010 = vunpack.c.l.b16 %v1849
    %v3011 = vunpack.c.h.b16 %v1849
    %v3012 = vunpack.c.l.b16 %v1850
    %v3013 = vunpack.c.h.b16 %v1850
    %v3014 = vunpack.c.l.b16 %v1851
    %v3015 = vunpack.c.h.b16 %v1851
    %v3016 = vunpack.c.l.b16 %v1852
    %v3017 = vunpack.c.h.b16 %v1852
    %v3018 = vunpack.c.l.b16 %v1853
    %v3019 = vunpack.c.h.b16 %v1853
    %v3020 = vunpack.c.l.b16 %v1854
    %v3021 = vunpack.c.h.b16 %v1854
    %v3022 = vunpack.c.l.b16 %v1855
    %v3023 = vunpack.c.h.b16 %v1855
    %v3024 = vunpack.c.l.b16 %v1856
    %v3025 = vunpack.c.h.b16 %v1856
    %v3026 = vunpack.c.l.b16 %v1857
    %v3027 = vunpack.c.h.b16 %v1857
    %v3028 = vunpack.c.l.b16 %v1858
    %v3029 = vunpack.c.h.b16 %v1858
    %v3030 = vunpack.c.l.b16 %v1859
    %v3031 = vunpack.c.h.b16 %v1859
    %v3032 = vunpack.c.l.b16 %v1860
    %v3033 = vunpack.c.h.b16 %v1860
    %v3034 = vunpack.c.l.b16 %v1861
    %v3035 = vunpack.c.h.b16 %v1861
    %v3036 = vunpack.c.l.b16 %v1862
    %v3037 = vunpack.c.h.b16 %v1862
    %v3038 = vunpack.c.l.b16 %v1863
    %v3039 = vunpack.c.h.b16 %v1863
    %v3040 = vunpack.c.l.b16 %v1864
    %v3041 = vunpack.c.h.b16 %v1864
    %v3042 = vunpack.c.l.b16 %v1865
    %v3043 = vunpack.c.h.b16 %v1865
    %v3044 = vunpack.c.l.b16 %v1866
    %v3045 = vunpack.c.h.b16 %v1866
    %v3046 = vunpack.c.l.b16 %v1867
    %v3047 = vunpack.c.h.b16 %v1867
    %v3048 = vunpack.c.l.b16 %v1868
    %v3049 = vunpack.c.h.b16 %v1868
    %v3050 = vunpack.c.l.b16 %v1869
    %v3051 = vunpack.c.h.b16 %v1869
    %v3052 = vunpack.c.l.b16 %v1870
    %v3053 = vunpack.c.h.b16 %v1870
    %v3054 = vunpack.c.l.b16 %v1871
    %v3055 = vunpack.c.h.b16 %v1871
    %v3056 = vunpack.c.l.b16 %v1872
    %v3057 = vunpack.c.h.b16 %v1872
    %v3058 = vunpack.c.l.b16 %v1873
    %v3059 = vunpack.c.h.b16 %v1873
    %v3060 = vunpack.c.l.b16 %v1874
    %v3061 = vunpack.c.h.b16 %v1874
    %v3062 = vunpack.c.l.b16 %v1875
    %v3063 = vunpack.c.h.b16 %v1875
    %v3064 = vunpack.c.l.b16 %v1876
    %v3065 = vunpack.c.h.b16 %v1876
    %v3066 = vunpack.c.l.b16 %v1877
    %v3067 = vunpack.c.h.b16 %v1877
    %v3068 = vunpack.c.l.b16 %v1878
    %v3069 = vunpack.c.h.b16 %v1878
    %v3070 = vunpack.c.l.b16 %v1879
    %v3071 = vunpack.c.h.b16 %v1879
    %v3072 = vunpack.c.l.b16 %v1880
    %v3073 = vunpack.c.h.b16 %v1880
    %v3074 = vunpack.c.l.b16 %v1881
    %v3075 = vunpack.c.h.b16 %v1881
    %v3076 = vunpack.c.l.b16 %v1882
    %v3077 = vunpack.c.h.b16 %v1882
    %v3078 = vunpack.c.l.b16 %v1883
    %v3079 = vunpack.c.h.b16 %v1883
    %v3080 = vunpack.c.l.b16 %v1884
    %v3081 = vunpack.c.h.b16 %v1884
    %v3082 = vunpack.c.l.b16 %v1885
    %v3083 = vunpack.c.h.b16 %v1885
    %v3084 = vunpack.c.l.b16 %v1886
    %v3085 = vunpack.c.h.b16 %v1886
    %v3086 = vunpack.c.l.b16 %v1887
    %v3087 = vunpack.c.h.b16 %v1887
    %v3088 = vunpack.c.l.b16 %v1888
    %v3089 = vunpack.c.h.b16 %v1888
    %v3090 = vunpack.c.l.b16 %v1889
    %v3091 = vunpack.c.h.b16 %v1889
    %v3092 = vunpack.c.l.b16 %v1890
    %v3093 = vunpack.c.h.b16 %v1890
    %v3094 = vunpack.c.l.b16 %v1891
    %v3095 = vunpack.c.h.b16 %v1891
    %v3096 = vunpack.c.l.b16 %v1892
    %v3097 = vunpack.c.h.b16 %v1892
    %v3098 = vunpack.c.l.b16 %v1893
    %v3099 = vunpack.c.h.b16 %v1893
    %v3100 = vunpack.c.l.b16 %v1894
    %v3101 = vunpack.c.h.b16 %v1894
    %v3102 = vunpack.c.l.b16 %v1895
    %v3103 = vunpack.c.h.b16 %v1895
    %v3104 = vunpack.c.l.b16 %v1896
    %v3105 = vunpack.c.h.b16 %v1896
    %v3106 = vunpack.c.l.b16 %v1897
    %v3107 = vunpack.c.h.b16 %v1897
    %v3108 = vunpack.c.l.b16 %v1898
    %v3109 = vunpack.c.h.b16 %v1898
    %v3110 = vunpack.c.l.b16 %v1899
    %v3111 = vunpack.c.h.b16 %v1899
    %v3112 = vunpack.c.l.b16 %v1900
    %v3113 = vunpack.c.h.b16 %v1900
    %v3114 = vunpack.c.l.b16 %v1901
    %v3115 = vunpack.c.h.b16 %v1901
    %v3116 = vunpack.c.l.b16 %v1902
    %v3117 = vunpack.c.h.b16 %v1902
    %v3118 = vunpack.c.l.b16 %v1903
    %v3119 = vunpack.c.h.b16 %v1903
    %v3120 = vunpack.c.l.b16 %v1904
    %v3121 = vunpack.c.h.b16 %v1904
    %v3122 = vunpack.c.l.b16 %v1905
    %v3123 = vunpack.c.h.b16 %v1905
    %v3124 = vunpack.c.l.b16 %v1906
    %v3125 = vunpack.c.h.b16 %v1906
    %v3126 = vunpack.c.l.b16 %v1907
    %v3127 = vunpack.c.h.b16 %v1907
    %v3128 = vunpack.c.l.b16 %v1908
    %v3129 = vunpack.c.h.b16 %v1908
    %v3130 = vunpack.c.l.b16 %v1909
    %v3131 = vunpack.c.h.b16 %v1909
    %v3132 = vunpack.c.l.b16 %v1910
    %v3133 = vunpack.c.h.b16 %v1910
    %v3134 = vunpack.c.l.b16 %v1911
    %v3135 = vunpack.c.h.b16 %v1911
    %v3136 = vunpack.c.l.b16 %v1912
    %v3137 = vunpack.c.h.b16 %v1912
    %v3138 = vunpack.c.l.b16 %v1913
    %v3139 = vunpack.c.h.b16 %v1913
    %v3140 = vunpack.c.l.b16 %v1914
    %v3141 = vunpack.c.h.b16 %v1914
    %v3142 = vunpack.c.l.b16 %v1915
    %v3143 = vunpack.c.h.b16 %v1915
    %v3144 = vunpack.c.l.b16 %v1916
    %v3145 = vunpack.c.h.b16 %v1916
    %v3146 = vunpack.c.l.b16 %v1917
    %v3147 = vunpack.c.h.b16 %v1917
    %v3148 = vunpack.c.l.b16 %v1918
    %v3149 = vunpack.c.h.b16 %v1918
    %v3150 = vunpack.c.l.b16 %v1919
    %v3151 = vunpack.c.h.b16 %v1919
    %v3152 = vunpack.c.l.b16 %v1920
    %v3153 = vunpack.c.h.b16 %v1920
    %v3154 = vunpack.c.l.b16 %v1921
    %v3155 = vunpack.c.h.b16 %v1921
    %v3156 = vunpack.c.l.b16 %v1922
    %v3157 = vunpack.c.h.b16 %v1922
    %v3158 = vunpack.c.l.b16 %v1923
    %v3159 = vunpack.c.h.b16 %v1923
    %v3160 = vunpack.c.l.b16 %v1924
    %v3161 = vunpack.c.h.b16 %v1924
    %v3162 = vunpack.c.l.b16 %v1925
    %v3163 = vunpack.c.h.b16 %v1925
    %v3164 = vunpack.c.l.b16 %v1926
    %v3165 = vunpack.c.h.b16 %v1926
    %v3166 = vunpack.c.l.b16 %v1927
    %v3167 = vunpack.c.h.b16 %v1927
    %v3168 = vunpack.c.l.b16 %v1928
    %v3169 = vunpack.c.h.b16 %v1928
    %v3170 = vunpack.c.l.b16 %v1929
    %v3171 = vunpack.c.h.b16 %v1929
    %v3172 = vunpack.c.l.b16 %v1930
    %v3173 = vunpack.c.h.b16 %v1930
    %v3174 = vunpack.c.l.b16 %v1931
    %v3175 = vunpack.c.h.b16 %v1931
    %v3176 = vunpack.c.l.b16 %v1932
    %v3177 = vunpack.c.h.b16 %v1932
    %v3178 = vunpack.c.l.b16 %v1933
    %v3179 = vunpack.c.h.b16 %v1933
    %v3180 = vunpack.c.l.b16 %v1934
    %v3181 = vunpack.c.h.b16 %v1934
    %v3182 = vunpack.c.l.b16 %v1935
    %v3183 = vunpack.c.h.b16 %v1935
    %v3184 = vunpack.c.l.b16 %v1936
    %v3185 = vunpack.c.h.b16 %v1936
    %v3186 = vunpack.c.l.b16 %v1937
    %v3187 = vunpack.c.h.b16 %v1937
    %v3188 = vunpack.c.l.b16 %v1938
    %v3189 = vunpack.c.h.b16 %v1938
    %v3190 = vunpack.c.l.b16 %v1939
    %v3191 = vunpack.c.h.b16 %v1939
    %v3192 = vunpack.c.l.b16 %v1940
    %v3193 = vunpack.c.h.b16 %v1940
    %v3194 = vunpack.c.l.b16 %v1941
    %v3195 = vunpack.c.h.b16 %v1941
    %v3196 = vunpack.c.l.b16 %v1942
    %v3197 = vunpack.c.h.b16 %v1942
    %v3198 = vunpack.c.l.b16 %v1943
    %v3199 = vunpack.c.h.b16 %v1943
    %v3200 = vunpack.c.l.b16 %v1944
    %v3201 = vunpack.c.h.b16 %v1944
    %v3202 = vunpack.c.l.b16 %v1945
    %v3203 = vunpack.c.h.b16 %v1945
    %v3204 = vunpack.c.l.b16 %v1946
    %v3205 = vunpack.c.h.b16 %v1946
    %v3206 = vunpack.c.l.b16 %v1947
    %v3207 = vunpack.c.h.b16 %v1947
    %v3208 = vunpack.c.l.b16 %v1948
    %v3209 = vunpack.c.h.b16 %v1948
    %v3210 = vunpack.c.l.b16 %v1949
    %v3211 = vunpack.c.h.b16 %v1949
    %v3212 = vunpack.c.l.b16 %v1950
    %v3213 = vunpack.c.h.b16 %v1950
    %v3214 = vunpack.c.l.b16 %v1951
    %v3215 = vunpack.c.h.b16 %v1951
    %v3216 = vunpack.c.l.b16 %v1952
    %v3217 = vunpack.c.h.b16 %v1952
    %v3218 = vunpack.c.l.b16 %v1953
    %v3219 = vunpack.c.h.b16 %v1953
    %v3220 = vunpack.c.l.b16 %v1954
    %v3221 = vunpack.c.h.b16 %v1954
    %v3222 = vunpack.c.l.b16 %v1955
    %v3223 = vunpack.c.h.b16 %v1955
    %v3224 = vunpack.c.l.b16 %v1956
    %v3225 = vunpack.c.h.b16 %v1956
    %v3226 = vunpack.c.l.b16 %v1957
    %v3227 = vunpack.c.h.b16 %v1957
    %v3228 = vunpack.c.l.b16 %v1958
    %v3229 = vunpack.c.h.b16 %v1958
    %v3230 = vunpack.c.l.b16 %v1959
    %v3231 = vunpack.c.h.b16 %v1959
    %v3232 = vunpack.c.l.b16 %v1960
    %v3233 = vunpack.c.h.b16 %v1960
    %v3234 = vunpack.c.l.b16 %v1961
    %v3235 = vunpack.c.h.b16 %v1961
    %v3236 = vunpack.c.l.b16 %v1962
    %v3237 = vunpack.c.h.b16 %v1962
    %v3238 = vunpack.c.l.b16 %v1963
    %v3239 = vunpack.c.h.b16 %v1963
    %v3240 = vunpack.c.l.b16 %v1964
    %v3241 = vunpack.c.h.b16 %v1964
    %v3242 = vunpack.c.l.b16 %v1965
    %v3243 = vunpack.c.h.b16 %v1965
    %v3244 = vunpack.c.l.b16 %v1966
    %v3245 = vunpack.c.h.b16 %v1966
    %v3246 = vunpack.c.l.b16 %v1967
    %v3247 = vunpack.c.h.b16 %v1967
    %v3248 = vunpack.c.l.b16 %v1968
    %v3249 = vunpack.c.h.b16 %v1968
    %v3250 = vunpack.c.l.b16 %v1969
    %v3251 = vunpack.c.h.b16 %v1969
    %v3252 = vunpack.c.l.b16 %v1970
    %v3253 = vunpack.c.h.b16 %v1970
    %v3254 = vunpack.c.l.b16 %v1971
    %v3255 = vunpack.c.h.b16 %v1971
    %v3256 = vunpack.c.l.b16 %v1972
    %v3257 = vunpack.c.h.b16 %v1972
    %v3258 = vunpack.c.l.b16 %v1973
    %v3259 = vunpack.c.h.b16 %v1973
    %v3260 = vunpack.c.l.b16 %v1974
    %v3261 = vunpack.c.h.b16 %v1974
    %v3262 = vunpack.c.l.b16 %v1975
    %v3263 = vunpack.c.h.b16 %v1975
    %v3264 = vunpack.c.l.b16 %v1976
    %v3265 = vunpack.c.h.b16 %v1976
    %v3266 = vunpack.c.l.b16 %v1977
    %v3267 = vunpack.c.h.b16 %v1977
    %v3268 = vunpack.c.l.b16 %v1978
    %v3269 = vunpack.c.h.b16 %v1978
    %v3270 = vunpack.c.l.b16 %v1979
    %v3271 = vunpack.c.h.b16 %v1979
    %v3272 = vunpack.c.l.b16 %v1980
    %v3273 = vunpack.c.h.b16 %v1980
    %v3274 = vunpack.c.l.b16 %v1981
    %v3275 = vunpack.c.h.b16 %v1981
    %v3276 = vunpack.c.l.b16 %v1982
    %v3277 = vunpack.c.h.b16 %v1982
    %v3278 = vunpack.c.l.b16 %v1983
    %v3279 = vunpack.c.h.b16 %v1983
    %v3280 = vunpack.c.l.b16 %v1984
    %v3281 = vunpack.c.h.b16 %v1984
    %v3282 = vunpack.c.l.b16 %v1985
    %v3283 = vunpack.c.h.b16 %v1985
    %v3284 = vunpack.c.l.b16 %v1986
    %v3285 = vunpack.c.h.b16 %v1986
    %v3286 = vunpack.c.l.b16 %v1987
    %v3287 = vunpack.c.h.b16 %v1987
    %v3288 = vunpack.c.l.b16 %v1988
    %v3289 = vunpack.c.h.b16 %v1988
    %v3290 = vunpack.c.l.b16 %v1989
    %v3291 = vunpack.c.h.b16 %v1989
    %v3292 = vunpack.c.l.b16 %v1990
    %v3293 = vunpack.c.h.b16 %v1990
    %v3294 = vunpack.c.l.b16 %v1991
    %v3295 = vunpack.c.h.b16 %v1991
    %v3296 = vunpack.c.l.b16 %v1992
    %v3297 = vunpack.c.h.b16 %v1992
    %v3298 = vunpack.c.l.b16 %v1993
    %v3299 = vunpack.c.h.b16 %v1993
    %v3300 = vunpack.c.l.b16 %v1994
    %v3301 = vunpack.c.h.b16 %v1994
    %v3302 = vunpack.c.l.b16 %v1995
    %v3303 = vunpack.c.h.b16 %v1995
    %v3304 = vunpack.c.l.b16 %v1996
    %v3305 = vunpack.c.h.b16 %v1996
    %v3306 = vunpack.c.l.b16 %v1997
    %v3307 = vunpack.c.h.b16 %v1997
    %v3308 = vunpack.c.l.b16 %v1998
    %v3309 = vunpack.c.h.b16 %v1998
    %v3310 = vunpack.c.l.b16 %v1999
    %v3311 = vunpack.c.h.b16 %v1999
    %v3312 = vunpack.c.l.b16 %v2000
    %v3313 = vunpack.c.h.b16 %v2000
    %v3314 = vunpack.c.l.b16 %v2001
    %v3315 = vunpack.c.h.b16 %v2001
    %v3316 = vunpack.c.l.b16 %v2002
    %v3317 = vunpack.c.h.b16 %v2002
    %v3318 = vunpack.c.l.b16 %v2003
    %v3319 = vunpack.c.h.b16 %v2003
    %v3320 = vunpack.c.l.b16 %v2004
    %v3321 = vunpack.c.h.b16 %v2004
    %v3322 = vunpack.c.l.b16 %v2005
    %v3323 = vunpack.c.h.b16 %v2005
    %v3324 = vunpack.c.l.b16 %v2006
    %v3325 = vunpack.c.h.b16 %v2006
    %v3326 = vunpack.c.l.b16 %v2007
    %v3327 = vunpack.c.h.b16 %v2007
    %v3328 = vunpack.c.l.b16 %v2008
    %v3329 = vunpack.c.h.b16 %v2008
    %v3330 = vunpack.c.l.b16 %v2009
    %v3331 = vunpack.c.h.b16 %v2009
    %v3332 = vunpack.c.l.b16 %v2010
    %v3333 = vunpack.c.h.b16 %v2010
    %v3334 = vunpack.c.l.b16 %v2011
    %v3335 = vunpack.c.h.b16 %v2011
    %v3336 = vunpack.c.l.b16 %v2012
    %v3337 = vunpack.c.h.b16 %v2012
    %v3338 = vunpack.c.l.b16 %v2013
    %v3339 = vunpack.c.h.b16 %v2013
    %v3340 = vunpack.c.l.b16 %v2014
    %v3341 = vunpack.c.h.b16 %v2014
    %v3342 = vunpack.c.l.b16 %v2015
    %v3343 = vunpack.c.h.b16 %v2015
    %v3344 = vunpack.c.l.b16 %v2016
    %v3345 = vunpack.c.h.b16 %v2016
    %v3346 = vunpack.c.l.b16 %v2017
    %v3347 = vunpack.c.h.b16 %v2017
    %v3348 = vunpack.c.l.b16 %v2018
    %v3349 = vunpack.c.h.b16 %v2018
    %v3350 = vunpack.c.l.b16 %v2019
    %v3351 = vunpack.c.h.b16 %v2019
    %v3352 = vunpack.c.l.b16 %v2020
    %v3353 = vunpack.c.h.b16 %v2020
    %v3354 = vunpack.c.l.b16 %v2021
    %v3355 = vunpack.c.h.b16 %v2021
    %v3356 = vunpack.c.l.b16 %v2022
    %v3357 = vunpack.c.h.b16 %v2022
    %v3358 = vunpack.c.l.b16 %v2023
    %v3359 = vunpack.c.h.b16 %v2023
    %v3360 = vunpack.c.l.b16 %v2024
    %v3361 = vunpack.c.h.b16 %v2024
    %v3362 = vunpack.c.l.b16 %v2025
    %v3363 = vunpack.c.h.b16 %v2025
    %v3364 = vunpack.c.l.b16 %v2026
    %v3365 = vunpack.c.h.b16 %v2026
    %v3366 = vunpack.c.l.b16 %v2027
    %v3367 = vunpack.c.h.b16 %v2027
    %v3368 = vunpack.c.l.b16 %v2028
    %v3369 = vunpack.c.h.b16 %v2028
    %v3370 = vunpack.c.l.b16 %v2029
    %v3371 = vunpack.c.h.b16 %v2029
    %v3372 = vunpack.c.l.b16 %v2030
    %v3373 = vunpack.c.h.b16 %v2030
    %v3374 = vunpack.c.l.b16 %v2031
    %v3375 = vunpack.c.h.b16 %v2031
    %v3376 = vunpack.c.l.b16 %v2032
    %v3377 = vunpack.c.h.b16 %v2032
    %v3378 = vunpack.c.l.b16 %v2033
    %v3379 = vunpack.c.h.b16 %v2033
    %v3380 = vunpack.c.l.b16 %v2034
    %v3381 = vunpack.c.h.b16 %v2034
    %v3382 = vunpack.c.l.b16 %v2035
    %v3383 = vunpack.c.h.b16 %v2035
    %v3384 = vunpack.c.l.b16 %v2036
    %v3385 = vunpack.c.h.b16 %v2036
    %v3386 = vunpack.c.l.b16 %v2037
    %v3387 = vunpack.c.h.b16 %v2037
    %v3388 = vunpack.c.l.b16 %v2038
    %v3389 = vunpack.c.h.b16 %v2038
    %v3390 = vunpack.c.l.b16 %v2039
    %v3391 = vunpack.c.h.b16 %v2039
    %v3392 = vunpack.c.l.b16 %v2040
    %v3393 = vunpack.c.h.b16 %v2040
    %v3394 = vunpack.c.l.b16 %v2041
    %v3395 = vunpack.c.h.b16 %v2041
    %v3396 = vunpack.c.l.b16 %v2042
    %v3397 = vunpack.c.h.b16 %v2042
    %v3398 = vunpack.c.l.b16 %v2043
    %v3399 = vunpack.c.h.b16 %v2043
    %v3400 = vunpack.c.l.b16 %v2044
    %v3401 = vunpack.c.h.b16 %v2044
    %v3402 = vunpack.c.l.b16 %v2045
    %v3403 = vunpack.c.h.b16 %v2045
    %v3404 = vunpack.c.l.b16 %v2046
    %v3405 = vunpack.c.h.b16 %v2046
    %v3406 = vunpack.c.l.b16 %v2047
    %v3407 = vunpack.c.h.b16 %v2047
    %v3408 = vunpack.c.l.b16 %v2048
    %v3409 = vunpack.c.h.b16 %v2048
    %v3410 = vunpack.c.l.b16 %v2049
    %v3411 = vunpack.c.h.b16 %v2049
    %v3412 = vunpack.c.l.b16 %v2050
    %v3413 = vunpack.c.h.b16 %v2050
    %v3414 = vunpack.c.l.b16 %v2051
    %v3415 = vunpack.c.h.b16 %v2051
    %v3416 = vunpack.c.l.b16 %v2052
    %v3417 = vunpack.c.h.b16 %v2052
    %v3418 = vunpack.c.l.b16 %v2053
    %v3419 = vunpack.c.h.b16 %v2053
    %v3420 = vunpack.c.l.b16 %v2054
    %v3421 = vunpack.c.h.b16 %v2054
    %v3422 = vunpack.c.l.b16 %v2055
    %v3423 = vunpack.c.h.b16 %v2055
    %v3424 = vunpack.c.l.b16 %v2056
    %v3425 = vunpack.c.h.b16 %v2056
    %v3426 = vunpack.c.l.b16 %v2057
    %v3427 = vunpack.c.h.b16 %v2057
    %v3428 = vunpack.c.l.b16 %v2058
    %v3429 = vunpack.c.h.b16 %v2058
    %v3430 = vunpack.c.l.b16 %v2059
    %v3431 = vunpack.c.h.b16 %v2059
    %v3432 = vunpack.c.l.b16 %v2060
    %v3433 = vunpack.c.h.b16 %v2060
    %v3434 = vunpack.c.l.b16 %v2061
    %v3435 = vunpack.c.h.b16 %v2061
    %v3436 = vunpack.c.l.b16 %v2062
    %v3437 = vunpack.c.h.b16 %v2062
    %v3438 = vunpack.c.l.b16 %v2063
    %v3439 = vunpack.c.h.b16 %v2063
    %v3440 = vunpack.c.l.b16 %v2064
    %v3441 = vunpack.c.h.b16 %v2064
    %v3442 = vunpack.c.l.b16 %v2065
    %v3443 = vunpack.c.h.b16 %v2065
    %v3444 = vunpack.c.l.b16 %v2066
    %v3445 = vunpack.c.h.b16 %v2066
    %v3446 = vunpack.c.l.b16 %v2067
    %v3447 = vunpack.c.h.b16 %v2067
    %v3448 = vunpack.c.l.b16 %v2068
    %v3449 = vunpack.c.h.b16 %v2068
    %v3450 = vunpack.c.l.b16 %v2069
    %v3451 = vunpack.c.h.b16 %v2069
    %v3452 = vunpack.c.l.b16 %v2070
    %v3453 = vunpack.c.h.b16 %v2070
    %v3454 = vunpack.c.l.b16 %v2071
    %v3455 = vunpack.c.h.b16 %v2071
    %v3456 = vunpack.c.l.b16 %v2072
    %v3457 = vunpack.c.h.b16 %v2072
    %v3458 = vunpack.c.l.b16 %v2073
    %v3459 = vunpack.c.h.b16 %v2073
    %v3460 = vunpack.c.l.b16 %v2074
    %v3461 = vunpack.c.h.b16 %v2074
    %v3462 = vunpack.c.l.b16 %v2075
    %v3463 = vunpack.c.h.b16 %v2075
    %v3464 = vunpack.c.l.b16 %v2076
    %v3465 = vunpack.c.h.b16 %v2076
    %v3466 = vunpack.c.l.b16 %v2077
    %v3467 = vunpack.c.h.b16 %v2077
    %v3468 = vunpack.c.l.b16 %v2078
    %v3469 = vunpack.c.h.b16 %v2078
    %v3470 = vunpack.c.l.b16 %v2079
    %v3471 = vunpack.c.h.b16 %v2079
    %v3472 = vunpack.c.l.b16 %v2080
    %v3473 = vunpack.c.h.b16 %v2080
    %v3474 = vunpack.c.l.b16 %v2081
    %v3475 = vunpack.c.h.b16 %v2081
    %v3476 = vunpack.c.l.b16 %v2082
    %v3477 = vunpack.c.h.b16 %v2082
    %v3478 = vunpack.c.l.b16 %v2083
    %v3479 = vunpack.c.h.b16 %v2083
    %v3480 = vunpack.c.l.b16 %v2084
    %v3481 = vunpack.c.h.b16 %v2084
    %v3482 = vunpack.c.l.b16 %v2085
    %v3483 = vunpack.c.h.b16 %v2085
    %v3484 = vunpack.c.l.b16 %v2086
    %v3485 = vunpack.c.h.b16 %v2086
    %v3486 = vunpack.c.l.b16 %v2087
    %v3487 = vunpack.c.h.b16 %v2087
    %v3488 = vunpack.c.l.b16 %v2088
    %v3489 = vunpack.c.h.b16 %v2088
    %v3490 = vunpack.c.l.b16 %v2089
    %v3491 = vunpack.c.h.b16 %v2089
    %v3492 = vunpack.c.l.b16 %v2090
    %v3493 = vunpack.c.h.b16 %v2090
    %v3494 = vunpack.c.l.b16 %v2091
    %v3495 = vunpack.c.h.b16 %v2091
    %v3496 = vunpack.c.l.b16 %v2092
    %v3497 = vunpack.c.h.b16 %v2092
    %v3498 = vunpack.c.l.b16 %v2093
    %v3499 = vunpack.c.h.b16 %v2093
    %v3500 = vunpack.c.l.b16 %v2094
    %v3501 = vunpack.c.h.b16 %v2094
    %v3502 = vunpack.c.l.b16 %v2095
    %v3503 = vunpack.c.h.b16 %v2095
    %v3504 = vunpack.c.l.b16 %v2096
    %v3505 = vunpack.c.h.b16 %v2096
    %v3506 = vunpack.c.l.b16 %v2097
    %v3507 = vunpack.c.h.b16 %v2097
    %v3508 = vunpack.c.l.b16 %v2098
    %v3509 = vunpack.c.h.b16 %v2098
    %v3510 = vunpack.c.l.b16 %v2099
    %v3511 = vunpack.c.h.b16 %v2099
    %v3512 = vunpack.c.l.b16 %v2100
    %v3513 = vunpack.c.h.b16 %v2100
    %v3514 = vunpack.c.l.b16 %v2101
    %v3515 = vunpack.c.h.b16 %v2101
    %v3516 = vunpack.c.l.b16 %v2102
    %v3517 = vunpack.c.h.b16 %v2102
    %v3518 = vunpack.c.l.b16 %v2103
    %v3519 = vunpack.c.h.b16 %v2103
    %v3520 = vunpack.c.l.b16 %v2104
    %v3521 = vunpack.c.h.b16 %v2104
    %v3522 = vunpack.c.l.b16 %v2105
    %v3523 = vunpack.c.h.b16 %v2105
    %v3524 = vunpack.c.l.b16 %v2106
    %v3525 = vunpack.c.h.b16 %v2106
    %v3526 = vunpack.c.l.b16 %v2107
    %v3527 = vunpack.c.h.b16 %v2107
    %v3528 = vunpack.c.l.b16 %v2108
    %v3529 = vunpack.c.h.b16 %v2108
    %v3530 = vunpack.c.l.b16 %v2109
    %v3531 = vunpack.c.h.b16 %v2109
    %v3532 = vunpack.c.l.b16 %v2110
    %v3533 = vunpack.c.h.b16 %v2110
    %v3534 = vunpack.c.l.b16 %v2111
    %v3535 = vunpack.c.h.b16 %v2111
    %v3536 = vunpack.c.l.b16 %v2112
    %v3537 = vunpack.c.h.b16 %v2112
    %v3538 = vunpack.c.l.b16 %v2113
    %v3539 = vunpack.c.h.b16 %v2113
    %v3540 = vunpack.c.l.b16 %v2114
    %v3541 = vunpack.c.h.b16 %v2114
    %v3542 = vunpack.c.l.b16 %v2115
    %v3543 = vunpack.c.h.b16 %v2115
    %v3544 = vunpack.c.l.b16 %v2116
    %v3545 = vunpack.c.h.b16 %v2116
    %v3546 = vunpack.c.l.b16 %v2117
    %v3547 = vunpack.c.h.b16 %v2117
    %v3548 = vunpack.c.l.b16 %v2118
    %v3549 = vunpack.c.h.b16 %v2118
    %v3550 = vunpack.c.l.b16 %v2119
    %v3551 = vunpack.c.h.b16 %v2119
    %v3552 = vunpack.c.l.b16 %v2120
    %v3553 = vunpack.c.h.b16 %v2120
    %v3554 = vunpack.c.l.b16 %v2121
    %v3555 = vunpack.c.h.b16 %v2121
    %v3556 = vunpack.c.l.b16 %v2122
    %v3557 = vunpack.c.h.b16 %v2122
    %v3558 = vunpack.c.l.b16 %v2123
    %v3559 = vunpack.c.h.b16 %v2123
    %v3560 = vunpack.c.l.b16 %v2124
    %v3561 = vunpack.c.h.b16 %v2124
    %v3562 = vunpack.c.l.b16 %v2125
    %v3563 = vunpack.c.h.b16 %v2125
    %v3564 = vunpack.c.l.b16 %v2126
    %v3565 = vunpack.c.h.b16 %v2126
    %v3566 = vunpack.c.l.b16 %v2127
    %v3567 = vunpack.c.h.b16 %v2127
    %v3568 = vunpack.c.l.b16 %v2128
    %v3569 = vunpack.c.h.b16 %v2128
    %v3570 = vunpack.c.l.b16 %v2129
    %v3571 = vunpack.c.h.b16 %v2129
    %v3572 = vunpack.c.l.b16 %v2130
    %v3573 = vunpack.c.h.b16 %v2130
    %v3574 = vunpack.c.l.b16 %v2131
    %v3575 = vunpack.c.h.b16 %v2131
    %v3576 = vunpack.c.l.b16 %v2132
    %v3577 = vunpack.c.h.b16 %v2132
    %v3578 = vunpack.c.l.b16 %v2133
    %v3579 = vunpack.c.h.b16 %v2133
    %v3580 = vunpack.c.l.b16 %v2134
    %v3581 = vunpack.c.h.b16 %v2134
    %v3582 = vunpack.c.l.b16 %v2135
    %v3583 = vunpack.c.h.b16 %v2135
    %v3584 = vunpack.c.l.b16 %v2136
    %v3585 = vunpack.c.h.b16 %v2136
    %v3586 = vunpack.c.l.b16 %v2137
    %v3587 = vunpack.c.h.b16 %v2137
    %v3588 = vunpack.c.l.b16 %v2138
    %v3589 = vunpack.c.h.b16 %v2138
    %v3590 = vunpack.c.l.b16 %v2139
    %v3591 = vunpack.c.h.b16 %v2139
    %v3592 = vunpack.c.l.b16 %v2140
    %v3593 = vunpack.c.h.b16 %v2140
    %v3594 = vunpack.c.l.b16 %v2141
    %v3595 = vunpack.c.h.b16 %v2141
    %v3596 = vunpack.c.l.b16 %v2142
    %v3597 = vunpack.c.h.b16 %v2142
    %v3598 = vunpack.c.l.b16 %v2143
    %v3599 = vunpack.c.h.b16 %v2143
    %v3600 = vunpack.c.l.b16 %v2144
    %v3601 = vunpack.c.h.b16 %v2144
    %v3602 = vunpack.c.l.b16 %v2145
    %v3603 = vunpack.c.h.b16 %v2145
    %v3604 = vunpack.c.l.b16 %v2146
    %v3605 = vunpack.c.h.b16 %v2146
    %v3606 = vunpack.c.l.b16 %v2147
    %v3607 = vunpack.c.h.b16 %v2147
    %v3608 = vunpack.c.l.b16 %v2148
    %v3609 = vunpack.c.h.b16 %v2148
    %v3610 = vunpack.c.l.b16 %v2149
    %v3611 = vunpack.c.h.b16 %v2149
    %v3612 = vunpack.c.l.b16 %v2150
    %v3613 = vunpack.c.h.b16 %v2150
    %v3614 = vunpack.c.l.b16 %v2151
    %v3615 = vunpack.c.h.b16 %v2151
    %v3616 = vunpack.c.l.b16 %v2152
    %v3617 = vunpack.c.h.b16 %v2152
    %v3618 = vunpack.c.l.b16 %v2153
    %v3619 = vunpack.c.h.b16 %v2153
    %v3620 = vunpack.c.l.b16 %v2154
    %v3621 = vunpack.c.h.b16 %v2154
    %v3622 = vunpack.c.l.b16 %v2155
    %v3623 = vunpack.c.h.b16 %v2155
    %v3624 = vunpack.c.l.b16 %v2156
    %v3625 = vunpack.c.h.b16 %v2156
    %v3626 = vunpack.c.l.b16 %v2157
    %v3627 = vunpack.c.h.b16 %v2157
    %v3628 = vunpack.c.l.b16 %v2158
    %v3629 = vunpack.c.h.b16 %v2158
    %v3630 = vunpack.c.l.b16 %v2159
    %v3631 = vunpack.c.h.b16 %v2159
    %v3632 = vunpack.c.l.b16 %v2160
    %v3633 = vunpack.c.h.b16 %v2160
    %v3634 = vunpack.c.l.b16 %v2161
    %v3635 = vunpack.c.h.b16 %v2161
    %v3636 = vunpack.c.l.b16 %v2162
    %v3637 = vunpack.c.h.b16 %v2162
    %v3638 = vunpack.c.l.b16 %v2163
    %v3639 = vunpack.c.h.b16 %v2163
    %v3640 = vunpack.c.l.b16 %v2164
    %v3641 = vunpack.c.h.b16 %v2164
    %v3642 = vunpack.c.l.b16 %v2165
    %v3643 = vunpack.c.h.b16 %v2165
    %v3644 = vunpack.c.l.b16 %v2166
    %v3645 = vunpack.c.h.b16 %v2166
    %v3646 = vunpack.c.l.b16 %v2167
    %v3647 = vunpack.c.h.b16 %v2167
    %v3648 = vunpack.c.l.b16 %v2168
    %v3649 = vunpack.c.h.b16 %v2168
    %v3650 = vunpack.c.l.b16 %v2169
    %v3651 = vunpack.c.h.b16 %v2169
    %v3652 = vunpack.c.l.b16 %v2170
    %v3653 = vunpack.c.h.b16 %v2170
    %v3654 = vunpack.c.l.b16 %v2171
    %v3655 = vunpack.c.h.b16 %v2171
    %v3656 = vunpack.c.l.b16 %v2172
    %v3657 = vunpack.c.h.b16 %v2172
    %v3658 = vunpack.c.l.b16 %v2173
    %v3659 = vunpack.c.h.b16 %v2173
    %v3660 = vunpack.c.l.b16 %v2174
    %v3661 = vunpack.c.h.b16 %v2174
    %v3662 = vunpack.c.l.b16 %v2175
    %v3663 = vunpack.c.h.b16 %v2175
    %v3664 = vunpack.c.l.b16 %v2176
    %v3665 = vunpack.c.h.b16 %v2176
    %v3666 = vunpack.c.l.b16 %v2177
    %v3667 = vunpack.c.h.b16 %v2177
    %v3668 = vunpack.c.l.b16 %v2178
    %v3669 = vunpack.c.h.b16 %v2178
    %v3670 = vunpack.c.l.b16 %v2179
    %v3671 = vunpack.c.h.b16 %v2179
    %v3672 = vunpack.c.l.b16 %v2180
    %v3673 = vunpack.c.h.b16 %v2180
    %v3674 = vunpack.c.l.b16 %v2181
    %v3675 = vunpack.c.h.b16 %v2181
    %v3676 = vunpack.c.l.b16 %v2182
    %v3677 = vunpack.c.h.b16 %v2182
    %v3678 = vunpack.c.l.b16 %v2183
    %v3679 = vunpack.c.h.b16 %v2183
    %v3680 = vunpack.c.l.b16 %v2184
    %v3681 = vunpack.c.h.b16 %v2184
    %v3682 = vunpack.c.l.b16 %v2185
    %v3683 = vunpack.c.h.b16 %v2185
    %v3684 = vunpack.c.l.b16 %v2186
    %v3685 = vunpack.c.h.b16 %v2186
    %v3686 = vunpack.c.l.b16 %v2187
    %v3687 = vunpack.c.h.b16 %v2187
    %v3688 = vunpack.c.l.b16 %v2188
    %v3689 = vunpack.c.h.b16 %v2188
    %v3690 = vunpack.c.l.b16 %v2189
    %v3691 = vunpack.c.h.b16 %v2189
    %v3692 = vunpack.c.l.b16 %v2190
    %v3693 = vunpack.c.h.b16 %v2190
    %v3694 = vunpack.c.l.b16 %v2191
    %v3695 = vunpack.c.h.b16 %v2191
    %v3696 = vunpack.c.l.b16 %v2192
    %v3697 = vunpack.c.h.b16 %v2192
    %v3698 = vunpack.c.l.b16 %v2193
    %v3699 = vunpack.c.h.b16 %v2193
    %v3700 = vunpack.c.l.b16 %v2194
    %v3701 = vunpack.c.h.b16 %v2194
    %v3702 = vunpack.c.l.b16 %v2195
    %v3703 = vunpack.c.h.b16 %v2195
    %v3704 = vunpack.c.l.b16 %v2196
    %v3705 = vunpack.c.h.b16 %v2196
    %v3706 = vunpack.c.l.b16 %v2197
    %v3707 = vunpack.c.h.b16 %v2197
    %v3708 = vunpack.c.l.b16 %v2198
    %v3709 = vunpack.c.h.b16 %v2198
    %v3710 = vunpack.c.l.b16 %v2199
    %v3711 = vunpack.c.h.b16 %v2199
    %v3712 = vunpack.c.l.b16 %v2200
    %v3713 = vunpack.c.h.b16 %v2200
    %v3714 = vunpack.c.l.b16 %v2201
    %v3715 = vunpack.c.h.b16 %v2201
    %v3716 = vunpack.c.l.b16 %v2202
    %v3717 = vunpack.c.h.b16 %v2202
    %v3718 = vunpack.c.l.b16 %v2203
    %v3719 = vunpack.c.h.b16 %v2203
    %v3720 = vunpack.c.l.b16 %v2204
    %v3721 = vunpack.c.h.b16 %v2204
    %v3722 = vunpack.c.l.b16 %v2205
    %v3723 = vunpack.c.h.b16 %v2205
    %v3724 = vunpack.c.l.b16 %v2206
    %v3725 = vunpack.c.h.b16 %v2206
    %v3726 = vunpack.c.l.b16 %v2207
    %v3727 = vunpack.c.h.b16 %v2207
    %v3728 = vunpack.c.l.b16 %v2208
    %v3729 = vunpack.c.h.b16 %v2208
    %v3730 = vunpack.c.l.b16 %v2209
    %v3731 = vunpack.c.h.b16 %v2209
    %v3732 = vunpack.c.l.b16 %v2210
    %v3733 = vunpack.c.h.b16 %v2210
    %v3734 = vunpack.c.l.b16 %v2211
    %v3735 = vunpack.c.h.b16 %v2211
    %v3736 = vunpack.c.l.b16 %v2212
    %v3737 = vunpack.c.h.b16 %v2212
    %v3738 = vunpack.c.l.b16 %v2213
    %v3739 = vunpack.c.h.b16 %v2213
    %v3740 = vunpack.c.l.b16 %v2214
    %v3741 = vunpack.c.h.b16 %v2214
    %v3742 = vunpack.c.l.b16 %v2215
    %v3743 = vunpack.c.h.b16 %v2215
    %v3744 = vunpack.c.l.b16 %v2216
    %v3745 = vunpack.c.h.b16 %v2216
    %v3746 = vunpack.c.l.b16 %v2217
    %v3747 = vunpack.c.h.b16 %v2217
    %v3748 = vunpack.c.l.b16 %v2218
    %v3749 = vunpack.c.h.b16 %v2218
    %v3750 = vunpack.c.l.b16 %v2219
    %v3751 = vunpack.c.h.b16 %v2219
    %v3752 = vunpack.c.l.b16 %v2220
    %v3753 = vunpack.c.h.b16 %v2220
    %v3754 = vunpack.c.l.b16 %v2221
    %v3755 = vunpack.c.h.b16 %v2221
    %v3756 = vunpack.c.l.b16 %v2222
    %v3757 = vunpack.c.h.b16 %v2222
    %v3758 = vunpack.c.l.b16 %v2223
    %v3759 = vunpack.c.h.b16 %v2223
    %v3760 = vpack.c.b16 %v2740, %v2736
    %v3761 = vpack.c.b16 %v2741, %v2737
    %v3762 = vpack.c.b16 %v2742, %v2738
    %v3763 = vpack.c.b16 %v2743, %v2739
    %v3764 = vpack.c.b16 %v2748, %v2744
    %v3765 = vpack.c.b16 %v2749, %v2745
    %v3766 = vpack.c.b16 %v2750, %v2746
    %v3767 = vpack.c.b16 %v2751, %v2747
    %v3768 = vpack.c.b16 %v2756, %v2752
    %v3769 = vpack.c.b16 %v2757, %v2753
    %v3770 = vpack.c.b16 %v2758, %v2754
    %v3771 = vpack.c.b16 %v2759, %v2755
    %v3772 = vpack.c.b16 %v2764, %v2760
    %v3773 = vpack.c.b16 %v2765, %v2761
    %v3774 = vpack.c.b16 %v2766, %v2762
    %v3775 = vpack.c.b16 %v2767, %v2763
    %v3776 = vpack.c.b16 %v2772, %v2768
    %v3777 = vpack.c.b16 %v2773, %v2769
    %v3778 = vpack.c.b16 %v2774, %v2770
    %v3779 = vpack.c.b16 %v2775, %v2771
    %v3780 = vpack.c.b16 %v2780, %v2776
    %v3781 = vpack.c.b16 %v2781, %v2777
    %v3782 = vpack.c.b16 %v2782, %v2778
    %v3783 = vpack.c.b16 %v2783, %v2779
    %v3784 = vpack.c.b16 %v2788, %v2784
    %v3785 = vpack.c.b16 %v2789, %v2785
    %v3786 = vpack.c.b16 %v2790, %v2786
    %v3787 = vpack.c.b16 %v2791, %v2787
    %v3788 = vpack.c.b16 %v2796, %v2792
    %v3789 = vpack.c.b16 %v2797, %v2793
    %v3790 = vpack.c.b16 %v2798, %v2794
    %v3791 = vpack.c.b16 %v2799, %v2795
    %v3792 = vpack.c.b16 %v2804, %v2800
    %v3793 = vpack.c.b16 %v2805, %v2801
    %v3794 = vpack.c.b16 %v2806, %v2802
    %v3795 = vpack.c.b16 %v2807, %v2803
    %v3796 = vpack.c.b16 %v2812, %v2808
    %v3797 = vpack.c.b16 %v2813, %v2809
    %v3798 = vpack.c.b16 %v2814, %v2810
    %v3799 = vpack.c.b16 %v2815, %v2811
    %v3800 = vpack.c.b16 %v2820, %v2816
    %v3801 = vpack.c.b16 %v2821, %v2817
    %v3802 = vpack.c.b16 %v2822, %v2818
    %v3803 = vpack.c.b16 %v2823, %v2819
    %v3804 = vpack.c.b16 %v2828, %v2824
    %v3805 = vpack.c.b16 %v2829, %v2825
    %v3806 = vpack.c.b16 %v2830, %v2826
    %v3807 = vpack.c.b16 %v2831, %v2827
    %v3808 = vpack.c.b16 %v2836, %v2832
    %v3809 = vpack.c.b16 %v2837, %v2833
    %v3810 = vpack.c.b16 %v2838, %v2834
    %v3811 = vpack.c.b16 %v2839, %v2835
    %v3812 = vpack.c.b16 %v2844, %v2840
    %v3813 = vpack.c.b16 %v2845, %v2841
    %v3814 = vpack.c.b16 %v2846, %v2842
    %v3815 = vpack.c.b16 %v2847, %v2843
    %v3816 = vpack.c.b16 %v2852, %v2848
    %v3817 = vpack.c.b16 %v2853, %v2849
    %v3818 = vpack.c.b16 %v2854, %v2850
    %v3819 = vpack.c.b16 %v2855, %v2851
    %v3820 = vpack.c.b16 %v2860, %v2856
    %v3821 = vpack.c.b16 %v2861, %v2857
    %v3822 = vpack.c.b16 %v2862, %v2858
    %v3823 = vpack.c.b16 %v2863, %v2859
    %v3824 = vpack.c.b16 %v2868, %v2864
    %v3825 = vpack.c.b16 %v2869, %v2865
    %v3826 = vpack.c.b16 %v2870, %v2866
    %v3827 = vpack.c.b16 %v2871, %v2867
    %v3828 = vpack.c.b16 %v2876, %v2872
    %v3829 = vpack.c.b16 %v2877, %v2873
    %v3830 = vpack.c.b16 %v2878, %v2874
    %v3831 = vpack.c.b16 %v2879, %v2875
    %v3832 = vpack.c.b16 %v2884, %v2880
    %v3833 = vpack.c.b16 %v2885, %v2881
    %v3834 = vpack.c.b16 %v2886, %v2882
    %v3835 = vpack.c.b16 %v2887, %v2883
    %v3836 = vpack.c.b16 %v2892, %v2888
    %v3837 = vpack.c.b16 %v2893, %v2889
    %v3838 = vpack.c.b16 %v2894, %v2890
    %v3839 = vpack.c.b16 %v2895, %v2891
    %v3840 = vpack.c.b16 %v2900, %v2896
    %v3841 = vpack.c.b16 %v2901, %v2897
    %v3842 = vpack.c.b16 %v2902, %v2898
    %v3843 = vpack.c.b16 %v2903, %v2899
    %v3844 = vpack.c.b16 %v2908, %v2904
    %v3845 = vpack.c.b16 %v2909, %v2905
    %v3846 = vpack.c.b16 %v2910, %v2906
    %v3847 = vpack.c.b16 %v2911, %v2907
    %v3848 = vpack.c.b16 %v2916, %v2912
    %v3849 = vpack.c.b16 %v2917, %v2913
    %v3850 = vpack.c.b16 %v2918, %v2914
    %v3851 = vpack.c.b16 %v2919, %v2915
    %v3852 = vpack.c.b16 %v2924, %v2920
    %v3853 = vpack.c.b16 %v2925, %v2921
    %v3854 = vpack.c.b16 %v2926, %v2922
    %v3855 = vpack.c.b16 %v2927, %v2923
    %v3856 = vpack.c.b16 %v2932, %v2928
    %v3857 = vpack.c.b16 %v2933, %v2929
    %v3858 = vpack.c.b16 %v2934, %v2930
    %v3859 = vpack.c.b16 %v2935, %v2931
    %v3860 = vpack.c.b16 %v2940, %v2936
    %v3861 = vpack.c.b16 %v2941, %v2937
    %v3862 = vpack.c.b16 %v2942, %v2938
    %v3863 = vpack.c.b16 %v2943, %v2939
    %v3864 = vpack.c.b16 %v2948, %v2944
    %v3865 = vpack.c.b16 %v2949, %v2945
    %v3866 = vpack.c.b16 %v2950, %v2946
    %v3867 = vpack.c.b16 %v2951, %v2947
    %v3868 = vpack.c.b16 %v2956, %v2952
    %v3869 = vpack.c.b16 %v2957, %v2953
    %v3870 = vpack.c.b16 %v2958, %v2954
    %v3871 = vpack.c.b16 %v2959, %v2955
    %v3872 = vpack.c.b16 %v2964, %v2960
    %v3873 = vpack.c.b16 %v2965, %v2961
    %v3874 = vpack.c.b16 %v2966, %v2962
    %v3875 = vpack.c.b16 %v2967, %v2963
    %v3876 = vpack.c.b16 %v2972, %v2968
    %v3877 = vpack.c.b16 %v2973, %v2969
    %v3878 = vpack.c.b16 %v2974, %v2970
    %v3879 = vpack.c.b16 %v2975, %v2971
    %v3880 = vpack.c.b16 %v2980, %v2976
    %v3881 = vpack.c.b16 %v2981, %v2977
    %v3882 = vpack.c.b16 %v2982, %v2978
    %v3883 = vpack.c.b16 %v2983, %v2979
    %v3884 = vpack.c.b16 %v2988, %v2984
    %v3885 = vpack.c.b16 %v2989, %v2985
    %v3886 = vpack.c.b16 %v2990, %v2986
    %v3887 = vpack.c.b16 %v2991, %v2987
    %v3888 = vpack.c.b16 %v2996, %v2992
    %v3889 = vpack.c.b16 %v2997, %v2993
    %v3890 = vpack.c.b16 %v2998, %v2994
    %v3891 = vpack.c.b16 %v2999, %v2995
    %v3892 = vpack.c.b16 %v3004, %v3000
    %v3893 = vpack.c.b16 %v3005, %v3001
    %v3894 = vpack.c.b16 %v3006, %v3002
    %v3895 = vpack.c.b16 %v3007, %v3003
    %v3896 = vpack.c.b16 %v3012, %v3008
    %v3897 = vpack.c.b16 %v3013, %v3009
    %v3898 = vpack.c.b16 %v3014, %v3010
    %v3899 = vpack.c.b16 %v3015, %v3011
    %v3900 = vpack.c.b16 %v3020, %v3016
    %v3901 = vpack.c.b16 %v3021, %v3017
    %v3902 = vpack.c.b16 %v3022, %v3018
    %v3903 = vpack.c.b16 %v3023, %v3019
    %v3904 = vpack.c.b16 %v3028, %v3024
    %v3905 = vpack.c.b16 %v3029, %v3025
    %v3906 = vpack.c.b16 %v3030, %v3026
    %v3907 = vpack.c.b16 %v3031, %v3027
    %v3908 = vpack.c.b16 %v3036, %v3032
    %v3909 = vpack.c.b16 %v3037, %v3033
    %v3910 = vpack.c.b16 %v3038, %v3034
    %v3911 = vpack.c.b16 %v3039, %v3035
    %v3912 = vpack.c.b16 %v3044, %v3040
    %v3913 = vpack.c.b16 %v3045, %v3041
    %v3914 = vpack.c.b16 %v3046, %v3042
    %v3915 = vpack.c.b16 %v3047, %v3043
    %v3916 = vpack.c.b16 %v3052, %v3048
    %v3917 = vpack.c.b16 %v3053, %v3049
    %v3918 = vpack.c.b16 %v3054, %v3050
    %v3919 = vpack.c.b16 %v3055, %v3051
    %v3920 = vpack.c.b16 %v3060, %v3056
    %v3921 = vpack.c.b16 %v3061, %v3057
    %v3922 = vpack.c.b16 %v3062, %v3058
    %v3923 = vpack.c.b16 %v3063, %v3059
    %v3924 = vpack.c.b16 %v3068, %v3064
    %v3925 = vpack.c.b16 %v3069, %v3065
    %v3926 = vpack.c.b16 %v3070, %v3066
    %v3927 = vpack.c.b16 %v3071, %v3067
    %v3928 = vpack.c.b16 %v3076, %v3072
    %v3929 = vpack.c.b16 %v3077, %v3073
    %v3930 = vpack.c.b16 %v3078, %v3074
    %v3931 = vpack.c.b16 %v3079, %v3075
    %v3932 = vpack.c.b16 %v3084, %v3080
    %v3933 = vpack.c.b16 %v3085, %v3081
    %v3934 = vpack.c.b16 %v3086, %v3082
    %v3935 = vpack.c.b16 %v3087, %v3083
    %v3936 = vpack.c.b16 %v3092, %v3088
    %v3937 = vpack.c.b16 %v3093, %v3089
    %v3938 = vpack.c.b16 %v3094, %v3090
    %v3939 = vpack.c.b16 %v3095, %v3091
    %v3940 = vpack.c.b16 %v3100, %v3096
    %v3941 = vpack.c.b16 %v3101, %v3097
    %v3942 = vpack.c.b16 %v3102, %v3098
    %v3943 = vpack.c.b16 %v3103, %v3099
    %v3944 = vpack.c.b16 %v3108, %v3104
    %v3945 = vpack.c.b16 %v3109, %v3105
    %v3946 = vpack.c.b16 %v3110, %v3106
    %v3947 = vpack.c.b16 %v3111, %v3107
    %v3948 = vpack.c.b16 %v3116, %v3112
    %v3949 = vpack.c.b16 %v3117, %v3113
    %v3950 = vpack.c.b16 %v3118, %v3114
    %v3951 = vpack.c.b16 %v3119, %v3115
    %v3952 = vpack.c.b16 %v3124, %v3120
    %v3953 = vpack.c.b16 %v3125, %v3121
    %v3954 = vpack.c.b16 %v3126, %v3122
    %v3955 = vpack.c.b16 %v3127, %v3123
    %v3956 = vpack.c.b16 %v3132, %v3128
    %v3957 = vpack.c.b16 %v3133, %v3129
    %v3958 = vpack.c.b16 %v3134, %v3130
    %v3959 = vpack.c.b16 %v3135, %v3131
    %v3960 = vpack.c.b16 %v3140, %v3136
    %v3961 = vpack.c.b16 %v3141, %v3137
    %v3962 = vpack.c.b16 %v3142, %v3138
    %v3963 = vpack.c.b16 %v3143, %v3139
    %v3964 = vpack.c.b16 %v3148, %v3144
    %v3965 = vpack.c.b16 %v3149, %v3145
    %v3966 = vpack.c.b16 %v3150, %v3146
    %v3967 = vpack.c.b16 %v3151, %v3147
    %v3968 = vpack.c.b16 %v3156, %v3152
    %v3969 = vpack.c.b16 %v3157, %v3153
    %v3970 = vpack.c.b16 %v3158, %v3154
    %v3971 = vpack.c.b16 %v3159, %v3155
    %v3972 = vpack.c.b16 %v3164, %v3160
    %v3973 = vpack.c.b16 %v3165, %v3161
    %v3974 = vpack.c.b16 %v3166, %v3162
    %v3975 = vpack.c.b16 %v3167, %v3163
    %v3976 = vpack.c.b16 %v3172, %v3168
    %v3977 = vpack.c.b16 %v3173, %v3169
    %v3978 = vpack.c.b16 %v3174, %v3170
    %v3979 = vpack.c.b16 %v3175, %v3171
    %v3980 = vpack.c.b16 %v3180, %v3176
    %v3981 = vpack.c.b16 %v3181, %v3177
    %v3982 = vpack.c.b16 %v3182, %v3178
    %v3983 = vpack.c.b16 %v3183, %v3179
    %v3984 = vpack.c.b16 %v3188, %v3184
    %v3985 = vpack.c.b16 %v3189, %v3185
    %v3986 = vpack.c.b16 %v3190, %v3186
    %v3987 = vpack.c.b16 %v3191, %v3187
    %v3988 = vpack.c.b16 %v3196, %v3192
    %v3989 = vpack.c.b16 %v3197, %v3193
    %v3990 = vpack.c.b16 %v3198, %v3194
    %v3991 = vpack.c.b16 %v3199, %v3195
    %v3992 = vpack.c.b16 %v3204, %v3200
    %v3993 = vpack.c.b16 %v3205, %v3201
    %v3994 = vpack.c.b16 %v3206, %v3202
    %v3995 = vpack.c.b16 %v3207, %v3203
    %v3996 = vpack.c.b16 %v3212, %v3208
    %v3997 = vpack.c.b16 %v3213, %v3209
    %v3998 = vpack.c.b16 %v3214, %v3210
    %v3999 = vpack.c.b16 %v3215, %v3211
    %v4000 = vpack.c.b16 %v3220, %v3216
    %v4001 = vpack.c.b16 %v3221, %v3217
    %v4002 = vpack.c.b16 %v3222, %v3218
    %v4003 = vpack.c.b16 %v3223, %v3219
    %v4004 = vpack.c.b16 %v3228, %v3224
    %v4005 = vpack.c.b16 %v3229, %v3225
    %v4006 = vpack.c.b16 %v3230, %v3226
    %v4007 = vpack.c.b16 %v3231, %v3227
    %v4008 = vpack.c.b16 %v3236, %v3232
    %v4009 = vpack.c.b16 %v3237, %v3233
    %v4010 = vpack.c.b16 %v3238, %v3234
    %v4011 = vpack.c.b16 %v3239, %v3235
    %v4012 = vpack.c.b16 %v3244, %v3240
    %v4013 = vpack.c.b16 %v3245, %v3241
    %v4014 = vpack.c.b16 %v3246, %v3242
    %v4015 = vpack.c.b16 %v3247, %v3243
    %v4016 = vpack.c.b16 %v3252, %v3248
    %v4017 = vpack.c.b16 %v3253, %v3249
    %v4018 = vpack.c.b16 %v3254, %v3250
    %v4019 = vpack.c.b16 %v3255, %v3251
    %v4020 = vpack.c.b16 %v3260, %v3256
    %v4021 = vpack.c.b16 %v3261, %v3257
    %v4022 = vpack.c.b16 %v3262, %v3258
    %v4023 = vpack.c.b16 %v3263, %v3259
    %v4024 = vpack.c.b16 %v3268, %v3264
    %v4025 = vpack.c.b16 %v3269, %v3265
    %v4026 = vpack.c.b16 %v3270, %v3266
    %v4027 = vpack.c.b16 %v3271, %v3267
    %v4028 = vpack.c.b16 %v3276, %v3272
    %v4029 = vpack.c.b16 %v3277, %v3273
    %v4030 = vpack.c.b16 %v3278, %v3274
    %v4031 = vpack.c.b16 %v3279, %v3275
    %v4032 = vpack.c.b16 %v3284, %v3280
    %v4033 = vpack.c.b16 %v3285, %v3281
    %v4034 = vpack.c.b16 %v3286, %v3282
    %v4035 = vpack.c.b16 %v3287, %v3283
    %v4036 = vpack.c.b16 %v3292, %v3288
    %v4037 = vpack.c.b16 %v3293, %v3289
    %v4038 = vpack.c.b16 %v3294, %v3290
    %v4039 = vpack.c.b16 %v3295, %v3291
    %v4040 = vpack.c.b16 %v3300, %v3296
    %v4041 = vpack.c.b16 %v3301, %v3297
    %v4042 = vpack.c.b16 %v3302, %v3298
    %v4043 = vpack.c.b16 %v3303, %v3299
    %v4044 = vpack.c.b16 %v3308, %v3304
    %v4045 = vpack.c.b16 %v3309, %v3305
    %v4046 = vpack.c.b16 %v3310, %v3306
    %v4047 = vpack.c.b16 %v3311, %v3307
    %v4048 = vpack.c.b16 %v3316, %v3312
    %v4049 = vpack.c.b16 %v3317, %v3313
    %v4050 = vpack.c.b16 %v3318, %v3314
    %v4051 = vpack.c.b16 %v3319, %v3315
    %v4052 = vpack.c.b16 %v3324, %v3320
    %v4053 = vpack.c.b16 %v3325, %v3321
    %v4054 = vpack.c.b16 %v3326, %v3322
    %v4055 = vpack.c.b16 %v3327, %v3323
    %v4056 = vpack.c.b16 %v3332, %v3328
    %v4057 = vpack.c.b16 %v3333, %v3329
    %v4058 = vpack.c.b16 %v3334, %v3330
    %v4059 = vpack.c.b16 %v3335, %v3331
    %v4060 = vpack.c.b16 %v3340, %v3336
    %v4061 = vpack.c.b16 %v3341, %v3337
    %v4062 = vpack.c.b16 %v3342, %v3338
    %v4063 = vpack.c.b16 %v3343, %v3339
    %v4064 = vpack.c.b16 %v3348, %v3344
    %v4065 = vpack.c.b16 %v3349, %v3345
    %v4066 = vpack.c.b16 %v3350, %v3346
    %v4067 = vpack.c.b16 %v3351, %v3347
    %v4068 = vpack.c.b16 %v3356, %v3352
    %v4069 = vpack.c.b16 %v3357, %v3353
    %v4070 = vpack.c.b16 %v3358, %v3354
    %v4071 = vpack.c.b16 %v3359, %v3355
    %v4072 = vpack.c.b16 %v3364, %v3360
    %v4073 = vpack.c.b16 %v3365, %v3361
    %v4074 = vpack.c.b16 %v3366, %v3362
    %v4075 = vpack.c.b16 %v3367, %v3363
    %v4076 = vpack.c.b16 %v3372, %v3368
    %v4077 = vpack.c.b16 %v3373, %v3369
    %v4078 = vpack.c.b16 %v3374, %v3370
    %v4079 = vpack.c.b16 %v3375, %v3371
    %v4080 = vpack.c.b16 %v3380, %v3376
    %v4081 = vpack.c.b16 %v3381, %v3377
    %v4082 = vpack.c.b16 %v3382, %v3378
    %v4083 = vpack.c.b16 %v3383, %v3379
    %v4084 = vpack.c.b16 %v3388, %v3384
    %v4085 = vpack.c.b16 %v3389, %v3385
    %v4086 = vpack.c.b16 %v3390, %v3386
    %v4087 = vpack.c.b16 %v3391, %v3387
    %v4088 = vpack.c.b16 %v3396, %v3392
    %v4089 = vpack.c.b16 %v3397, %v3393
    %v4090 = vpack.c.b16 %v3398, %v3394
    %v4091 = vpack.c.b16 %v3399, %v3395
    %v4092 = vpack.c.b16 %v3404, %v3400
    %v4093 = vpack.c.b16 %v3405, %v3401
    %v4094 = vpack.c.b16 %v3406, %v3402
    %v4095 = vpack.c.b16 %v3407, %v3403
    %v4096 = vpack.c.b16 %v3412, %v3408
    %v4097 = vpack.c.b16 %v3413, %v3409
    %v4098 = vpack.c.b16 %v3414, %v3410
    %v4099 = vpack.c.b16 %v3415, %v3411
    %v4100 = vpack.c.b16 %v3420, %v3416
    %v4101 = vpack.c.b16 %v3421, %v3417
    %v4102 = vpack.c.b16 %v3422, %v3418
    %v4103 = vpack.c.b16 %v3423, %v3419
    %v4104 = vpack.c.b16 %v3428, %v3424
    %v4105 = vpack.c.b16 %v3429, %v3425
    %v4106 = vpack.c.b16 %v3430, %v3426
    %v4107 = vpack.c.b16 %v3431, %v3427
    %v4108 = vpack.c.b16 %v3436, %v3432
    %v4109 = vpack.c.b16 %v3437, %v3433
    %v4110 = vpack.c.b16 %v3438, %v3434
    %v4111 = vpack.c.b16 %v3439, %v3435
    %v4112 = vpack.c.b16 %v3444, %v3440
    %v4113 = vpack.c.b16 %v3445, %v3441
    %v4114 = vpack.c.b16 %v3446, %v3442
    %v4115 = vpack.c.b16 %v3447, %v3443
    %v4116 = vpack.c.b16 %v3452, %v3448
    %v4117 = vpack.c.b16 %v3453, %v3449
    %v4118 = vpack.c.b16 %v3454, %v3450
    %v4119 = vpack.c.b16 %v3455, %v3451
    %v4120 = vpack.c.b16 %v3460, %v3456
    %v4121 = vpack.c.b16 %v3461, %v3457
    %v4122 = vpack.c.b16 %v3462, %v3458
    %v4123 = vpack.c.b16 %v3463, %v3459
    %v4124 = vpack.c.b16 %v3468, %v3464
    %v4125 = vpack.c.b16 %v3469, %v3465
    %v4126 = vpack.c.b16 %v3470, %v3466
    %v4127 = vpack.c.b16 %v3471, %v3467
    %v4128 = vpack.c.b16 %v3476, %v3472
    %v4129 = vpack.c.b16 %v3477, %v3473
    %v4130 = vpack.c.b16 %v3478, %v3474
    %v4131 = vpack.c.b16 %v3479, %v3475
    %v4132 = vpack.c.b16 %v3484, %v3480
    %v4133 = vpack.c.b16 %v3485, %v3481
    %v4134 = vpack.c.b16 %v3486, %v3482
    %v4135 = vpack.c.b16 %v3487, %v3483
    %v4136 = vpack.c.b16 %v3492, %v3488
    %v4137 = vpack.c.b16 %v3493, %v3489
    %v4138 = vpack.c.b16 %v3494, %v3490
    %v4139 = vpack.c.b16 %v3495, %v3491
    %v4140 = vpack.c.b16 %v3500, %v3496
    %v4141 = vpack.c.b16 %v3501, %v3497
    %v4142 = vpack.c.b16 %v3502, %v3498
    %v4143 = vpack.c.b16 %v3503, %v3499
    %v4144 = vpack.c.b16 %v3508, %v3504
    %v4145 = vpack.c.b16 %v3509, %v3505
    %v4146 = vpack.c.b16 %v3510, %v3506
    %v4147 = vpack.c.b16 %v3511, %v3507
    %v4148 = vpack.c.b16 %v3516, %v3512
    %v4149 = vpack.c.b16 %v3517, %v3513
    %v4150 = vpack.c.b16 %v3518, %v3514
    %v4151 = vpack.c.b16 %v3519, %v3515
    %v4152 = vpack.c.b16 %v3524, %v3520
    %v4153 = vpack.c.b16 %v3525, %v3521
    %v4154 = vpack.c.b16 %v3526, %v3522
    %v4155 = vpack.c.b16 %v3527, %v3523
    %v4156 = vpack.c.b16 %v3532, %v3528
    %v4157 = vpack.c.b16 %v3533, %v3529
    %v4158 = vpack.c.b16 %v3534, %v3530
    %v4159 = vpack.c.b16 %v3535, %v3531
    %v4160 = vpack.c.b16 %v3540, %v3536
    %v4161 = vpack.c.b16 %v3541, %v3537
    %v4162 = vpack.c.b16 %v3542, %v3538
    %v4163 = vpack.c.b16 %v3543, %v3539
    %v4164 = vpack.c.b16 %v3548, %v3544
    %v4165 = vpack.c.b16 %v3549, %v3545
    %v4166 = vpack.c.b16 %v3550, %v3546
    %v4167 = vpack.c.b16 %v3551, %v3547
    %v4168 = vpack.c.b16 %v3556, %v3552
    %v4169 = vpack.c.b16 %v3557, %v3553
    %v4170 = vpack.c.b16 %v3558, %v3554
    %v4171 = vpack.c.b16 %v3559, %v3555
    %v4172 = vpack.c.b16 %v3564, %v3560
    %v4173 = vpack.c.b16 %v3565, %v3561
    %v4174 = vpack.c.b16 %v3566, %v3562
    %v4175 = vpack.c.b16 %v3567, %v3563
    %v4176 = vpack.c.b16 %v3572, %v3568
    %v4177 = vpack.c.b16 %v3573, %v3569
    %v4178 = vpack.c.b16 %v3574, %v3570
    %v4179 = vpack.c.b16 %v3575, %v3571
    %v4180 = vpack.c.b16 %v3580, %v3576
    %v4181 = vpack.c.b16 %v3581, %v3577
    %v4182 = vpack.c.b16 %v3582, %v3578
    %v4183 = vpack.c.b16 %v3583, %v3579
    %v4184 = vpack.c.b16 %v3588, %v3584
    %v4185 = vpack.c.b16 %v3589, %v3585
    %v4186 = vpack.c.b16 %v3590, %v3586
    %v4187 = vpack.c.b16 %v3591, %v3587
    %v4188 = vpack.c.b16 %v3596, %v3592
    %v4189 = vpack.c.b16 %v3597, %v3593
    %v4190 = vpack.c.b16 %v3598, %v3594
    %v4191 = vpack.c.b16 %v3599, %v3595
    %v4192 = vpack.c.b16 %v3604, %v3600
    %v4193 = vpack.c.b16 %v3605, %v3601
    %v4194 = vpack.c.b16 %v3606, %v3602
    %v4195 = vpack.c.b16 %v3607, %v3603
    %v4196 = vpack.c.b16 %v3612, %v3608
    %v4197 = vpack.c.b16 %v3613, %v3609
    %v4198 = vpack.c.b16 %v3614, %v3610
    %v4199 = vpack.c.b16 %v3615, %v3611
    %v4200 = vpack.c.b16 %v3620, %v3616
    %v4201 = vpack.c.b16 %v3621, %v3617
    %v4202 = vpack.c.b16 %v3622, %v3618
    %v4203 = vpack.c.b16 %v3623, %v3619
    %v4204 = vpack.c.b16 %v3628, %v3624
    %v4205 = vpack.c.b16 %v3629, %v3625
    %v4206 = vpack.c.b16 %v3630, %v3626
    %v4207 = vpack.c.b16 %v3631, %v3627
    %v4208 = vpack.c.b16 %v3636, %v3632
    %v4209 = vpack.c.b16 %v3637, %v3633
    %v4210 = vpack.c.b16 %v3638, %v3634
    %v4211 = vpack.c.b16 %v3639, %v3635
    %v4212 = vpack.c.b16 %v3644, %v3640
    %v4213 = vpack.c.b16 %v3645, %v3641
    %v4214 = vpack.c.b16 %v3646, %v3642
    %v4215 = vpack.c.b16 %v3647, %v3643
    %v4216 = vpack.c.b16 %v3652, %v3648
    %v4217 = vpack.c.b16 %v3653, %v3649
    %v4218 = vpack.c.b16 %v3654, %v3650
    %v4219 = vpack.c.b16 %v3655, %v3651
    %v4220 = vpack.c.b16 %v3660, %v3656
    %v4221 = vpack.c.b16 %v3661, %v3657
    %v4222 = vpack.c.b16 %v3662, %v3658
    %v4223 = vpack.c.b16 %v3663, %v3659
    %v4224 = vpack.c.b16 %v3668, %v3664
    %v4225 = vpack.c.b16 %v3669, %v3665
    %v4226 = vpack.c.b16 %v3670, %v3666
    %v4227 = vpack.c.b16 %v3671, %v3667
    %v4228 = vpack.c.b16 %v3676, %v3672
    %v4229 = vpack.c.b16 %v3677, %v3673
    %v4230 = vpack.c.b16 %v3678, %v3674
    %v4231 = vpack.c.b16 %v3679, %v3675
    %v4232 = vpack.c.b16 %v3684, %v3680
    %v4233 = vpack.c.b16 %v3685, %v3681
    %v4234 = vpack.c.b16 %v3686, %v3682
    %v4235 = vpack.c.b16 %v3687, %v3683
    %v4236 = vpack.c.b16 %v3692, %v3688
    %v4237 = vpack.c.b16 %v3693, %v3689
    %v4238 = vpack.c.b16 %v3694, %v3690
    %v4239 = vpack.c.b16 %v3695, %v3691
    %v4240 = vpack.c.b16 %v3700, %v3696
    %v4241 = vpack.c.b16 %v3701, %v3697
    %v4242 = vpack.c.b16 %v3702, %v3698
    %v4243 = vpack.c.b16 %v3703, %v3699
    %v4244 = vpack.c.b16 %v3708, %v3704
    %v4245 = vpack.c.b16 %v3709, %v3705
    %v4246 = vpack.c.b16 %v3710, %v3706
    %v4247 = vpack.c.b16 %v3711, %v3707
    %v4248 = vpack.c.b16 %v3716, %v3712
    %v4249 = vpack.c.b16 %v3717, %v3713
    %v4250 = vpack.c.b16 %v3718, %v3714
    %v4251 = vpack.c.b16 %v3719, %v3715
    %v4252 = vpack.c.b16 %v3724, %v3720
    %v4253 = vpack.c.b16 %v3725, %v3721
    %v4254 = vpack.c.b16 %v3726, %v3722
    %v4255 = vpack.c.b16 %v3727, %v3723
    %v4256 = vpack.c.b16 %v3732, %v3728
    %v4257 = vpack.c.b16 %v3733, %v3729
    %v4258 = vpack.c.b16 %v3734, %v3730
    %v4259 = vpack.c.b16 %v3735, %v3731
    %v4260 = vpack.c.b16 %v3740, %v3736
    %v4261 = vpack.c.b16 %v3741, %v3737
    %v4262 = vpack.c.b16 %v3742, %v3738
    %v4263 = vpack.c.b16 %v3743, %v3739
    %v4264 = vpack.c.b16 %v3748, %v3744
    %v4265 = vpack.c.b16 %v3749, %v3745
    %v4266 = vpack.c.b16 %v3750, %v3746
    %v4267 = vpack.c.b16 %v3751, %v3747
    %v4268 = vpack.c.b16 %v3756, %v3752
    %v4269 = vpack.c.b16 %v3757, %v3753
    %v4270 = vpack.c.b16 %v3758, %v3754
    %v4271 = vpack.c.b16 %v3759, %v3755
    %4784 = vmatprep.subr.bf16.mxu0 %v3789
    %4785 = vmatpush1.bf16.msra.mxu0 %v3788
    %4786 = vmatprep.subr.bf16.mxu0 %v3785
    %4787 = vmatpush1.bf16.msra.mxu0 %v3784
    %4788 = vmatprep.subr.bf16.mxu0 %v3781
    %4789 = vmatpush1.bf16.msra.mxu0 %v3780
    %4790 = vmatprep.subr.bf16.mxu0 %v3777
    %4791 = vmatpush1.bf16.msra.mxu0 %v3776
    %4792 = vmatprep.subr.bf16.mxu0 %v3773
    %4793 = vmatpush1.bf16.msra.mxu0 %v3772
    %4794 = vmatprep.subr.bf16.mxu0 %v3769
    %4795 = vmatpush1.bf16.msra.mxu0 %v3768
    %4796 = vmatprep.subr.bf16.mxu0 %v3765
    %4797 = vmatpush1.bf16.msra.mxu0 %v3764
    %4798 = vmatprep.subr.bf16.mxu0 %v3761
    %4799 = vmatpush1.bf16.msra.mxu0 %v3760
    %4800 = vmatprep.subr.bf16.mxu0 %v3821
    %4801 = vmatpush2.bf16.msra.mxu0 %v3820
    %4802 = vmatprep.subr.bf16.mxu0 %v3817
    %4803 = vmatpush2.bf16.msra.mxu0 %v3816
    %4804 = vmatprep.subr.bf16.mxu0 %v3813
    %4805 = vmatpush2.bf16.msra.mxu0 %v3812
    %4806 = vmatprep.subr.bf16.mxu0 %v3809
    %4807 = vmatpush2.bf16.msra.mxu0 %v3808
    %4808 = vmatprep.subr.bf16.mxu0 %v3805
    %4809 = vmatpush2.bf16.msra.mxu0 %v3804
    %4810 = vmatprep.subr.bf16.mxu0 %v3801
    %4811 = vmatpush2.bf16.msra.mxu0 %v3800
    %4812 = vmatprep.subr.bf16.mxu0 %v3797
    %4813 = vmatpush2.bf16.msra.mxu0 %v3796
    %4814 = vmatprep.subr.bf16.mxu0 %v3793
    %4815 = vmatpush2.bf16.msra.mxu0 %v3792
    %4816 = vmatprep.mubr.bf16.mxu0 %v1697
    %4817 = vmatmul.mubr.bf16.gmra.mxu0 %v1696
    %v4818 = vpop.f32.mrf.mxu0
    %v4819 = vadd.f32 0.0, %v4818
    %v4820 = vpop.f32.mrf.mxu0
    %v4821 = vadd.f32 0.0, %v4820
    %v4822 = vpop.f32.mrf.mxu0
    %v4823 = vpop.f32.mrf.mxu0
    %4824 = vdwg.mxu0
    %4825 = vmatprep.subr.bf16.mxu0 %v3853
    %4826 = vmatpush1.bf16.msra.mxu0 %v3852
    %4827 = vmatprep.subr.bf16.mxu0 %v3849
    %4828 = vmatpush1.bf16.msra.mxu0 %v3848
    %4829 = vmatprep.subr.bf16.mxu0 %v3845
    %4830 = vmatpush1.bf16.msra.mxu0 %v3844
    %4831 = vmatprep.subr.bf16.mxu0 %v3841
    %4832 = vmatpush1.bf16.msra.mxu0 %v3840
    %4833 = vmatprep.subr.bf16.mxu0 %v3837
    %4834 = vmatpush1.bf16.msra.mxu0 %v3836
    %4835 = vmatprep.subr.bf16.mxu0 %v3833
    %4836 = vmatpush1.bf16.msra.mxu0 %v3832
    %4837 = vmatprep.subr.bf16.mxu0 %v3829
    %4838 = vmatpush1.bf16.msra.mxu0 %v3828
    %4839 = vmatprep.subr.bf16.mxu0 %v3825
    %4840 = vmatpush1.bf16.msra.mxu0 %v3824
    %4841 = vmatprep.subr.bf16.mxu0 %v3885
    %4842 = vmatpush2.bf16.msra.mxu0 %v3884
    %4843 = vmatprep.subr.bf16.mxu0 %v3881
    %4844 = vmatpush2.bf16.msra.mxu0 %v3880
    %4845 = vmatprep.subr.bf16.mxu0 %v3877
    %4846 = vmatpush2.bf16.msra.mxu0 %v3876
    %4847 = vmatprep.subr.bf16.mxu0 %v3873
    %4848 = vmatpush2.bf16.msra.mxu0 %v3872
    %4849 = vmatprep.subr.bf16.mxu0 %v3869
    %4850 = vmatpush2.bf16.msra.mxu0 %v3868
    %4851 = vmatprep.subr.bf16.mxu0 %v3865
    %4852 = vmatpush2.bf16.msra.mxu0 %v3864
    %4853 = vmatprep.subr.bf16.mxu0 %v3861
    %4854 = vmatpush2.bf16.msra.mxu0 %v3860
    %4855 = vmatprep.subr.bf16.mxu0 %v3857
    %4856 = vmatpush2.bf16.msra.mxu0 %v3856
    %4857 = vmatprep.mubr.bf16.mxu0 %v1699
    %4858 = vmatmul.mubr.bf16.gmra.mxu0 %v1698
    %v4859 = vpop.f32.mrf.mxu0
    %v4860 = vadd.f32 %v4819, %v4859
    %v4861 = vpop.f32.mrf.mxu0
    %v4862 = vadd.f32 %v4821, %v4861
    %v4863 = vpop.f32.mrf.mxu0
    %v4864 = vpop.f32.mrf.mxu0
    %4865 = vdwg.mxu0
    %4866 = vmatprep.subr.bf16.mxu0 %v3917
    %4867 = vmatpush1.bf16.msra.mxu0 %v3916
    %4868 = vmatprep.subr.bf16.mxu0 %v3913
    %4869 = vmatpush1.bf16.msra.mxu0 %v3912
    %4870 = vmatprep.subr.bf16.mxu0 %v3909
    %4871 = vmatpush1.bf16.msra.mxu0 %v3908
    %4872 = vmatprep.subr.bf16.mxu0 %v3905
    %4873 = vmatpush1.bf16.msra.mxu0 %v3904
    %4874 = vmatprep.subr.bf16.mxu0 %v3901
    %4875 = vmatpush1.bf16.msra.mxu0 %v3900
    %4876 = vmatprep.subr.bf16.mxu0 %v3897
    %4877 = vmatpush1.bf16.msra.mxu0 %v3896
    %4878 = vmatprep.subr.bf16.mxu0 %v3893
    %4879 = vmatpush1.bf16.msra.mxu0 %v3892
    %4880 = vmatprep.subr.bf16.mxu0 %v3889
    %4881 = vmatpush1.bf16.msra.mxu0 %v3888
    %4882 = vmatprep.subr.bf16.mxu0 %v3949
    %4883 = vmatpush2.bf16.msra.mxu0 %v3948
    %4884 = vmatprep.subr.bf16.mxu0 %v3945
    %4885 = vmatpush2.bf16.msra.mxu0 %v3944
    %4886 = vmatprep.subr.bf16.mxu0 %v3941
    %4887 = vmatpush2.bf16.msra.mxu0 %v3940
    %4888 = vmatprep.subr.bf16.mxu0 %v3937
    %4889 = vmatpush2.bf16.msra.mxu0 %v3936
    %4890 = vmatprep.subr.bf16.mxu0 %v3933
    %4891 = vmatpush2.bf16.msra.mxu0 %v3932
    %4892 = vmatprep.subr.bf16.mxu0 %v3929
    %4893 = vmatpush2.bf16.msra.mxu0 %v3928
    %4894 = vmatprep.subr.bf16.mxu0 %v3925
    %4895 = vmatpush2.bf16.msra.mxu0 %v3924
    %4896 = vmatprep.subr.bf16.mxu0 %v3921
    %4897 = vmatpush2.bf16.msra.mxu0 %v3920
    %4898 = vmatprep.mubr.bf16.mxu0 %v1701
    %4899 = vmatmul.mubr.bf16.gmra.mxu0 %v1700
    %v4900 = vpop.f32.mrf.mxu0
    %v4901 = vadd.f32 %v4860, %v4900
    %v4902 = vpop.f32.mrf.mxu0
    %v4903 = vadd.f32 %v4862, %v4902
    %v4904 = vpop.f32.mrf.mxu0
    %v4905 = vpop.f32.mrf.mxu0
    %4906 = vdwg.mxu0
    %4907 = vmatprep.subr.bf16.mxu0 %v3981
    %4908 = vmatpush1.bf16.msra.mxu0 %v3980
    %4909 = vmatprep.subr.bf16.mxu0 %v3977
    %4910 = vmatpush1.bf16.msra.mxu0 %v3976
    %4911 = vmatprep.subr.bf16.mxu0 %v3973
    %4912 = vmatpush1.bf16.msra.mxu0 %v3972
    %4913 = vmatprep.subr.bf16.mxu0 %v3969
    %4914 = vmatpush1.bf16.msra.mxu0 %v3968
    %4915 = vmatprep.subr.bf16.mxu0 %v3965
    %4916 = vmatpush1.bf16.msra.mxu0 %v3964
    %4917 = vmatprep.subr.bf16.mxu0 %v3961
    %4918 = vmatpush1.bf16.msra.mxu0 %v3960
    %4919 = vmatprep.subr.bf16.mxu0 %v3957
    %4920 = vmatpush1.bf16.msra.mxu0 %v3956
    %4921 = vmatprep.subr.bf16.mxu0 %v3953
    %4922 = vmatpush1.bf16.msra.mxu0 %v3952
    %4923 = vmatprep.subr.bf16.mxu0 %v4013
    %4924 = vmatpush2.bf16.msra.mxu0 %v4012
    %4925 = vmatprep.subr.bf16.mxu0 %v4009
    %4926 = vmatpush2.bf16.msra.mxu0 %v4008
    %4927 = vmatprep.subr.bf16.mxu0 %v4005
    %4928 = vmatpush2.bf16.msra.mxu0 %v4004
    %4929 = vmatprep.subr.bf16.mxu0 %v4001
    %4930 = vmatpush2.bf16.msra.mxu0 %v4000
    %4931 = vmatprep.subr.bf16.mxu0 %v3997
    %4932 = vmatpush2.bf16.msra.mxu0 %v3996
    %4933 = vmatprep.subr.bf16.mxu0 %v3993
    %4934 = vmatpush2.bf16.msra.mxu0 %v3992
    %4935 = vmatprep.subr.bf16.mxu0 %v3989
    %4936 = vmatpush2.bf16.msra.mxu0 %v3988
    %4937 = vmatprep.subr.bf16.mxu0 %v3985
    %4938 = vmatpush2.bf16.msra.mxu0 %v3984
    %4939 = vmatprep.mubr.bf16.mxu0 %v1703
    %4940 = vmatmul.mubr.bf16.gmra.mxu0 %v1702
    %v4941 = vpop.f32.mrf.mxu0
    %v4942 = vadd.f32 %v4901, %v4941
    %v4943 = vpop.f32.mrf.mxu0
    %v4944 = vadd.f32 %v4903, %v4943
    %v4945 = vpop.f32.mrf.mxu0
    %v4946 = vpop.f32.mrf.mxu0
    %4947 = vdwg.mxu0
    %4948 = vmatprep.subr.bf16.mxu0 %v4045
    %4949 = vmatpush1.bf16.msra.mxu0 %v4044
    %4950 = vmatprep.subr.bf16.mxu0 %v4041
    %4951 = vmatpush1.bf16.msra.mxu0 %v4040
    %4952 = vmatprep.subr.bf16.mxu0 %v4037
    %4953 = vmatpush1.bf16.msra.mxu0 %v4036
    %4954 = vmatprep.subr.bf16.mxu0 %v4033
    %4955 = vmatpush1.bf16.msra.mxu0 %v4032
    %4956 = vmatprep.subr.bf16.mxu0 %v4029
    %4957 = vmatpush1.bf16.msra.mxu0 %v4028
    %4958 = vmatprep.subr.bf16.mxu0 %v4025
    %4959 = vmatpush1.bf16.msra.mxu0 %v4024
    %4960 = vmatprep.subr.bf16.mxu0 %v4021
    %4961 = vmatpush1.bf16.msra.mxu0 %v4020
    %4962 = vmatprep.subr.bf16.mxu0 %v4017
    %4963 = vmatpush1.bf16.msra.mxu0 %v4016
    %4964 = vmatprep.subr.bf16.mxu0 %v4077
    %4965 = vmatpush2.bf16.msra.mxu0 %v4076
    %4966 = vmatprep.subr.bf16.mxu0 %v4073
    %4967 = vmatpush2.bf16.msra.mxu0 %v4072
    %4968 = vmatprep.subr.bf16.mxu0 %v4069
    %4969 = vmatpush2.bf16.msra.mxu0 %v4068
    %4970 = vmatprep.subr.bf16.mxu0 %v4065
    %4971 = vmatpush2.bf16.msra.mxu0 %v4064
    %4972 = vmatprep.subr.bf16.mxu0 %v4061
    %4973 = vmatpush2.bf16.msra.mxu0 %v4060
    %4974 = vmatprep.subr.bf16.mxu0 %v4057
    %4975 = vmatpush2.bf16.msra.mxu0 %v4056
    %4976 = vmatprep.subr.bf16.mxu0 %v4053
    %4977 = vmatpush2.bf16.msra.mxu0 %v4052
    %4978 = vmatprep.subr.bf16.mxu0 %v4049
    %4979 = vmatpush2.bf16.msra.mxu0 %v4048
    %4980 = vmatprep.mubr.bf16.mxu0 %v1705
    %4981 = vmatmul.mubr.bf16.gmra.mxu0 %v1704
    %v4982 = vpop.f32.mrf.mxu0
    %v4983 = vadd.f32 %v4942, %v4982
    %v4984 = vpop.f32.mrf.mxu0
    %v4985 = vadd.f32 %v4944, %v4984
    %v4986 = vpop.f32.mrf.mxu0
    %v4987 = vpop.f32.mrf.mxu0
    %4988 = vdwg.mxu0
    %4989 = vmatprep.subr.bf16.mxu0 %v4109
    %4990 = vmatpush1.bf16.msra.mxu0 %v4108
    %4991 = vmatprep.subr.bf16.mxu0 %v4105
    %4992 = vmatpush1.bf16.msra.mxu0 %v4104
    %4993 = vmatprep.subr.bf16.mxu0 %v4101
    %4994 = vmatpush1.bf16.msra.mxu0 %v4100
    %4995 = vmatprep.subr.bf16.mxu0 %v4097
    %4996 = vmatpush1.bf16.msra.mxu0 %v4096
    %4997 = vmatprep.subr.bf16.mxu0 %v4093
    %4998 = vmatpush1.bf16.msra.mxu0 %v4092
    %4999 = vmatprep.subr.bf16.mxu0 %v4089
    %5000 = vmatpush1.bf16.msra.mxu0 %v4088
    %5001 = vmatprep.subr.bf16.mxu0 %v4085
    %5002 = vmatpush1.bf16.msra.mxu0 %v4084
    %5003 = vmatprep.subr.bf16.mxu0 %v4081
    %5004 = vmatpush1.bf16.msra.mxu0 %v4080
    %5005 = vmatprep.subr.bf16.mxu0 %v4141
    %5006 = vmatpush2.bf16.msra.mxu0 %v4140
    %5007 = vmatprep.subr.bf16.mxu0 %v4137
    %5008 = vmatpush2.bf16.msra.mxu0 %v4136
    %5009 = vmatprep.subr.bf16.mxu0 %v4133
    %5010 = vmatpush2.bf16.msra.mxu0 %v4132
    %5011 = vmatprep.subr.bf16.mxu0 %v4129
    %5012 = vmatpush2.bf16.msra.mxu0 %v4128
    %5013 = vmatprep.subr.bf16.mxu0 %v4125
    %5014 = vmatpush2.bf16.msra.mxu0 %v4124
    %5015 = vmatprep.subr.bf16.mxu0 %v4121
    %5016 = vmatpush2.bf16.msra.mxu0 %v4120
    %5017 = vmatprep.subr.bf16.mxu0 %v4117
    %5018 = vmatpush2.bf16.msra.mxu0 %v4116
    %5019 = vmatprep.subr.bf16.mxu0 %v4113
    %5020 = vmatpush2.bf16.msra.mxu0 %v4112
    %5021 = vmatprep.mubr.bf16.mxu0 %v1707
    %5022 = vmatmul.mubr.bf16.gmra.mxu0 %v1706
    %v5023 = vpop.f32.mrf.mxu0
    %v5024 = vadd.f32 %v4983, %v5023
    %v5025 = vpop.f32.mrf.mxu0
    %v5026 = vadd.f32 %v4985, %v5025
    %v5027 = vpop.f32.mrf.mxu0
    %v5028 = vpop.f32.mrf.mxu0
    %5029 = vdwg.mxu0
    %5030 = vmatprep.subr.bf16.mxu0 %v4173
    %5031 = vmatpush1.bf16.msra.mxu0 %v4172
    %5032 = vmatprep.subr.bf16.mxu0 %v4169
    %5033 = vmatpush1.bf16.msra.mxu0 %v4168
    %5034 = vmatprep.subr.bf16.mxu0 %v4165
    %5035 = vmatpush1.bf16.msra.mxu0 %v4164
    %5036 = vmatprep.subr.bf16.mxu0 %v4161
    %5037 = vmatpush1.bf16.msra.mxu0 %v4160
    %5038 = vmatprep.subr.bf16.mxu0 %v4157
    %5039 = vmatpush1.bf16.msra.mxu0 %v4156
    %5040 = vmatprep.subr.bf16.mxu0 %v4153
    %5041 = vmatpush1.bf16.msra.mxu0 %v4152
    %5042 = vmatprep.subr.bf16.mxu0 %v4149
    %5043 = vmatpush1.bf16.msra.mxu0 %v4148
    %5044 = vmatprep.subr.bf16.mxu0 %v4145
    %5045 = vmatpush1.bf16.msra.mxu0 %v4144
    %5046 = vmatprep.subr.bf16.mxu0 %v4205
    %5047 = vmatpush2.bf16.msra.mxu0 %v4204
    %5048 = vmatprep.subr.bf16.mxu0 %v4201
    %5049 = vmatpush2.bf16.msra.mxu0 %v4200
    %5050 = vmatprep.subr.bf16.mxu0 %v4197
    %5051 = vmatpush2.bf16.msra.mxu0 %v4196
    %5052 = vmatprep.subr.bf16.mxu0 %v4193
    %5053 = vmatpush2.bf16.msra.mxu0 %v4192
    %5054 = vmatprep.subr.bf16.mxu0 %v4189
    %5055 = vmatpush2.bf16.msra.mxu0 %v4188
    %5056 = vmatprep.subr.bf16.mxu0 %v4185
    %5057 = vmatpush2.bf16.msra.mxu0 %v4184
    %5058 = vmatprep.subr.bf16.mxu0 %v4181
    %5059 = vmatpush2.bf16.msra.mxu0 %v4180
    %5060 = vmatprep.subr.bf16.mxu0 %v4177
    %5061 = vmatpush2.bf16.msra.mxu0 %v4176
    %5062 = vmatprep.mubr.bf16.mxu0 %v1709
    %5063 = vmatmul.mubr.bf16.gmra.mxu0 %v1708
    %v5064 = vpop.f32.mrf.mxu0
    %v5065 = vadd.f32 %v5024, %v5064
    %v5066 = vpop.f32.mrf.mxu0
    %v5067 = vadd.f32 %v5026, %v5066
    %v5068 = vpop.f32.mrf.mxu0
    %v5069 = vpop.f32.mrf.mxu0
    %5070 = vdwg.mxu0
    %5071 = vmatprep.subr.bf16.mxu0 %v4237
    %5072 = vmatpush1.bf16.msra.mxu0 %v4236
    %5073 = vmatprep.subr.bf16.mxu0 %v4233
    %5074 = vmatpush1.bf16.msra.mxu0 %v4232
    %5075 = vmatprep.subr.bf16.mxu0 %v4229
    %5076 = vmatpush1.bf16.msra.mxu0 %v4228
    %5077 = vmatprep.subr.bf16.mxu0 %v4225
    %5078 = vmatpush1.bf16.msra.mxu0 %v4224
    %5079 = vmatprep.subr.bf16.mxu0 %v4221
    %5080 = vmatpush1.bf16.msra.mxu0 %v4220
    %5081 = vmatprep.subr.bf16.mxu0 %v4217
    %5082 = vmatpush1.bf16.msra.mxu0 %v4216
    %5083 = vmatprep.subr.bf16.mxu0 %v4213
    %5084 = vmatpush1.bf16.msra.mxu0 %v4212
    %5085 = vmatprep.subr.bf16.mxu0 %v4209
    %5086 = vmatpush1.bf16.msra.mxu0 %v4208
    %5087 = vmatprep.subr.bf16.mxu0 %v4269
    %5088 = vmatpush2.bf16.msra.mxu0 %v4268
    %5089 = vmatprep.subr.bf16.mxu0 %v4265
    %5090 = vmatpush2.bf16.msra.mxu0 %v4264
    %5091 = vmatprep.subr.bf16.mxu0 %v4261
    %5092 = vmatpush2.bf16.msra.mxu0 %v4260
    %5093 = vmatprep.subr.bf16.mxu0 %v4257
    %5094 = vmatpush2.bf16.msra.mxu0 %v4256
    %5095 = vmatprep.subr.bf16.mxu0 %v4253
    %5096 = vmatpush2.bf16.msra.mxu0 %v4252
    %5097 = vmatprep.subr.bf16.mxu0 %v4249
    %5098 = vmatpush2.bf16.msra.mxu0 %v4248
    %5099 = vmatprep.subr.bf16.mxu0 %v4245
    %5100 = vmatpush2.bf16.msra.mxu0 %v4244
    %5101 = vmatprep.subr.bf16.mxu0 %v4241
    %5102 = vmatpush2.bf16.msra.mxu0 %v4240
    %5103 = vmatprep.mubr.bf16.mxu0 %v1711
    %5104 = vmatmul.mubr.bf16.gmra.mxu0 %v1710
    %v5105 = vpop.f32.mrf.mxu0
    %v5106 = vadd.f32 %v5065, %v5105
    %v5107 = vpop.f32.mrf.mxu0
    %v5108 = vadd.f32 %v5067, %v5107
    %v5109 = vpop.f32.mrf.mxu0
    %v5110 = vpop.f32.mrf.mxu0
    %5111 = vdwg.mxu0
    %5112 = vmatprep.subr.bf16.mxu0 %v3791
    %5113 = vmatpush1.bf16.msra.mxu0 %v3790
    %5114 = vmatprep.subr.bf16.mxu0 %v3787
    %5115 = vmatpush1.bf16.msra.mxu0 %v3786
    %5116 = vmatprep.subr.bf16.mxu0 %v3783
    %5117 = vmatpush1.bf16.msra.mxu0 %v3782
    %5118 = vmatprep.subr.bf16.mxu0 %v3779
    %5119 = vmatpush1.bf16.msra.mxu0 %v3778
    %5120 = vmatprep.subr.bf16.mxu0 %v3775
    %5121 = vmatpush1.bf16.msra.mxu0 %v3774
    %5122 = vmatprep.subr.bf16.mxu0 %v3771
    %5123 = vmatpush1.bf16.msra.mxu0 %v3770
    %5124 = vmatprep.subr.bf16.mxu0 %v3767
    %5125 = vmatpush1.bf16.msra.mxu0 %v3766
    %5126 = vmatprep.subr.bf16.mxu0 %v3763
    %5127 = vmatpush1.bf16.msra.mxu0 %v3762
    %5128 = vmatprep.subr.bf16.mxu0 %v3823
    %5129 = vmatpush2.bf16.msra.mxu0 %v3822
    %5130 = vmatprep.subr.bf16.mxu0 %v3819
    %5131 = vmatpush2.bf16.msra.mxu0 %v3818
    %5132 = vmatprep.subr.bf16.mxu0 %v3815
    %5133 = vmatpush2.bf16.msra.mxu0 %v3814
    %5134 = vmatprep.subr.bf16.mxu0 %v3811
    %5135 = vmatpush2.bf16.msra.mxu0 %v3810
    %5136 = vmatprep.subr.bf16.mxu0 %v3807
    %5137 = vmatpush2.bf16.msra.mxu0 %v3806
    %5138 = vmatprep.subr.bf16.mxu0 %v3803
    %5139 = vmatpush2.bf16.msra.mxu0 %v3802
    %5140 = vmatprep.subr.bf16.mxu0 %v3799
    %5141 = vmatpush2.bf16.msra.mxu0 %v3798
    %5142 = vmatprep.subr.bf16.mxu0 %v3795
    %5143 = vmatpush2.bf16.msra.mxu0 %v3794
    %5144 = vmatprep.mubr.bf16.mxu0 %v1697
    %5145 = vmatmul.mubr.bf16.gmra.mxu0 %v1696
    %v5146 = vpop.f32.mrf.mxu0
    %v5147 = vadd.f32 0.0, %v5146
    %v5148 = vpop.f32.mrf.mxu0
    %v5149 = vadd.f32 0.0, %v5148
    %v5150 = vpop.f32.mrf.mxu0
    %v5151 = vpop.f32.mrf.mxu0
    %5152 = vdwg.mxu0
    %5153 = vmatprep.subr.bf16.mxu0 %v3855
    %5154 = vmatpush1.bf16.msra.mxu0 %v3854
    %5155 = vmatprep.subr.bf16.mxu0 %v3851
    %5156 = vmatpush1.bf16.msra.mxu0 %v3850
    %5157 = vmatprep.subr.bf16.mxu0 %v3847
    %5158 = vmatpush1.bf16.msra.mxu0 %v3846
    %5159 = vmatprep.subr.bf16.mxu0 %v3843
    %5160 = vmatpush1.bf16.msra.mxu0 %v3842
    %5161 = vmatprep.subr.bf16.mxu0 %v3839
    %5162 = vmatpush1.bf16.msra.mxu0 %v3838
    %5163 = vmatprep.subr.bf16.mxu0 %v3835
    %5164 = vmatpush1.bf16.msra.mxu0 %v3834
    %5165 = vmatprep.subr.bf16.mxu0 %v3831
    %5166 = vmatpush1.bf16.msra.mxu0 %v3830
    %5167 = vmatprep.subr.bf16.mxu0 %v3827
    %5168 = vmatpush1.bf16.msra.mxu0 %v3826
    %5169 = vmatprep.subr.bf16.mxu0 %v3887
    %5170 = vmatpush2.bf16.msra.mxu0 %v3886
    %5171 = vmatprep.subr.bf16.mxu0 %v3883
    %5172 = vmatpush2.bf16.msra.mxu0 %v3882
    %5173 = vmatprep.subr.bf16.mxu0 %v3879
    %5174 = vmatpush2.bf16.msra.mxu0 %v3878
    %5175 = vmatprep.subr.bf16.mxu0 %v3875
    %5176 = vmatpush2.bf16.msra.mxu0 %v3874
    %5177 = vmatprep.subr.bf16.mxu0 %v3871
    %5178 = vmatpush2.bf16.msra.mxu0 %v3870
    %5179 = vmatprep.subr.bf16.mxu0 %v3867
    %5180 = vmatpush2.bf16.msra.mxu0 %v3866
    %5181 = vmatprep.subr.bf16.mxu0 %v3863
    %5182 = vmatpush2.bf16.msra.mxu0 %v3862
    %5183 = vmatprep.subr.bf16.mxu0 %v3859
    %5184 = vmatpush2.bf16.msra.mxu0 %v3858
    %5185 = vmatprep.mubr.bf16.mxu0 %v1699
    %5186 = vmatmul.mubr.bf16.gmra.mxu0 %v1698
    %v5187 = vpop.f32.mrf.mxu0
    %v5188 = vadd.f32 %v5147, %v5187
    %v5189 = vpop.f32.mrf.mxu0
    %v5190 = vadd.f32 %v5149, %v5189
    %v5191 = vpop.f32.mrf.mxu0
    %v5192 = vpop.f32.mrf.mxu0
    %5193 = vdwg.mxu0
    %5194 = vmatprep.subr.bf16.mxu0 %v3919
    %5195 = vmatpush1.bf16.msra.mxu0 %v3918
    %5196 = vmatprep.subr.bf16.mxu0 %v3915
    %5197 = vmatpush1.bf16.msra.mxu0 %v3914
    %5198 = vmatprep.subr.bf16.mxu0 %v3911
    %5199 = vmatpush1.bf16.msra.mxu0 %v3910
    %5200 = vmatprep.subr.bf16.mxu0 %v3907
    %5201 = vmatpush1.bf16.msra.mxu0 %v3906
    %5202 = vmatprep.subr.bf16.mxu0 %v3903
    %5203 = vmatpush1.bf16.msra.mxu0 %v3902
    %5204 = vmatprep.subr.bf16.mxu0 %v3899
    %5205 = vmatpush1.bf16.msra.mxu0 %v3898
    %5206 = vmatprep.subr.bf16.mxu0 %v3895
    %5207 = vmatpush1.bf16.msra.mxu0 %v3894
    %5208 = vmatprep.subr.bf16.mxu0 %v3891
    %5209 = vmatpush1.bf16.msra.mxu0 %v3890
    %5210 = vmatprep.subr.bf16.mxu0 %v3951
    %5211 = vmatpush2.bf16.msra.mxu0 %v3950
    %5212 = vmatprep.subr.bf16.mxu0 %v3947
    %5213 = vmatpush2.bf16.msra.mxu0 %v3946
    %5214 = vmatprep.subr.bf16.mxu0 %v3943
    %5215 = vmatpush2.bf16.msra.mxu0 %v3942
    %5216 = vmatprep.subr.bf16.mxu0 %v3939
    %5217 = vmatpush2.bf16.msra.mxu0 %v3938
    %5218 = vmatprep.subr.bf16.mxu0 %v3935
    %5219 = vmatpush2.bf16.msra.mxu0 %v3934
    %5220 = vmatprep.subr.bf16.mxu0 %v3931
    %5221 = vmatpush2.bf16.msra.mxu0 %v3930
    %5222 = vmatprep.subr.bf16.mxu0 %v3927
    %5223 = vmatpush2.bf16.msra.mxu0 %v3926
    %5224 = vmatprep.subr.bf16.mxu0 %v3923
    %5225 = vmatpush2.bf16.msra.mxu0 %v3922
    %5226 = vmatprep.mubr.bf16.mxu0 %v1701
    %5227 = vmatmul.mubr.bf16.gmra.mxu0 %v1700
    %v5228 = vpop.f32.mrf.mxu0
    %v5229 = vadd.f32 %v5188, %v5228
    %v5230 = vpop.f32.mrf.mxu0
    %v5231 = vadd.f32 %v5190, %v5230
    %v5232 = vpop.f32.mrf.mxu0
    %v5233 = vpop.f32.mrf.mxu0
    %5234 = vdwg.mxu0
    %5235 = vmatprep.subr.bf16.mxu0 %v3983
    %5236 = vmatpush1.bf16.msra.mxu0 %v3982
    %5237 = vmatprep.subr.bf16.mxu0 %v3979
    %5238 = vmatpush1.bf16.msra.mxu0 %v3978
    %5239 = vmatprep.subr.bf16.mxu0 %v3975
    %5240 = vmatpush1.bf16.msra.mxu0 %v3974
    %5241 = vmatprep.subr.bf16.mxu0 %v3971
    %5242 = vmatpush1.bf16.msra.mxu0 %v3970
    %5243 = vmatprep.subr.bf16.mxu0 %v3967
    %5244 = vmatpush1.bf16.msra.mxu0 %v3966
    %5245 = vmatprep.subr.bf16.mxu0 %v3963
    %5246 = vmatpush1.bf16.msra.mxu0 %v3962
    %5247 = vmatprep.subr.bf16.mxu0 %v3959
    %5248 = vmatpush1.bf16.msra.mxu0 %v3958
    %5249 = vmatprep.subr.bf16.mxu0 %v3955
    %5250 = vmatpush1.bf16.msra.mxu0 %v3954
    %5251 = vmatprep.subr.bf16.mxu0 %v4015
    %5252 = vmatpush2.bf16.msra.mxu0 %v4014
    %5253 = vmatprep.subr.bf16.mxu0 %v4011
    %5254 = vmatpush2.bf16.msra.mxu0 %v4010
    %5255 = vmatprep.subr.bf16.mxu0 %v4007
    %5256 = vmatpush2.bf16.msra.mxu0 %v4006
    %5257 = vmatprep.subr.bf16.mxu0 %v4003
    %5258 = vmatpush2.bf16.msra.mxu0 %v4002
    %5259 = vmatprep.subr.bf16.mxu0 %v3999
    %5260 = vmatpush2.bf16.msra.mxu0 %v3998
    %5261 = vmatprep.subr.bf16.mxu0 %v3995
    %5262 = vmatpush2.bf16.msra.mxu0 %v3994
    %5263 = vmatprep.subr.bf16.mxu0 %v3991
    %5264 = vmatpush2.bf16.msra.mxu0 %v3990
    %5265 = vmatprep.subr.bf16.mxu0 %v3987
    %5266 = vmatpush2.bf16.msra.mxu0 %v3986
    %5267 = vmatprep.mubr.bf16.mxu0 %v1703
    %5268 = vmatmul.mubr.bf16.gmra.mxu0 %v1702
    %v5269 = vpop.f32.mrf.mxu0
    %v5270 = vadd.f32 %v5229, %v5269
    %v5271 = vpop.f32.mrf.mxu0
    %v5272 = vadd.f32 %v5231, %v5271
    %v5273 = vpop.f32.mrf.mxu0
    %v5274 = vpop.f32.mrf.mxu0
    %5275 = vdwg.mxu0
    %5276 = vmatprep.subr.bf16.mxu0 %v4047
    %5277 = vmatpush1.bf16.msra.mxu0 %v4046
    %5278 = vmatprep.subr.bf16.mxu0 %v4043
    %5279 = vmatpush1.bf16.msra.mxu0 %v4042
    %5280 = vmatprep.subr.bf16.mxu0 %v4039
    %5281 = vmatpush1.bf16.msra.mxu0 %v4038
    %5282 = vmatprep.subr.bf16.mxu0 %v4035
    %5283 = vmatpush1.bf16.msra.mxu0 %v4034
    %5284 = vmatprep.subr.bf16.mxu0 %v4031
    %5285 = vmatpush1.bf16.msra.mxu0 %v4030
    %5286 = vmatprep.subr.bf16.mxu0 %v4027
    %5287 = vmatpush1.bf16.msra.mxu0 %v4026
    %5288 = vmatprep.subr.bf16.mxu0 %v4023
    %5289 = vmatpush1.bf16.msra.mxu0 %v4022
    %5290 = vmatprep.subr.bf16.mxu0 %v4019
    %5291 = vmatpush1.bf16.msra.mxu0 %v4018
    %5292 = vmatprep.subr.bf16.mxu0 %v4079
    %5293 = vmatpush2.bf16.msra.mxu0 %v4078
    %5294 = vmatprep.subr.bf16.mxu0 %v4075
    %5295 = vmatpush2.bf16.msra.mxu0 %v4074
    %5296 = vmatprep.subr.bf16.mxu0 %v4071
    %5297 = vmatpush2.bf16.msra.mxu0 %v4070
    %5298 = vmatprep.subr.bf16.mxu0 %v4067
    %5299 = vmatpush2.bf16.msra.mxu0 %v4066
    %5300 = vmatprep.subr.bf16.mxu0 %v4063
    %5301 = vmatpush2.bf16.msra.mxu0 %v4062
    %5302 = vmatprep.subr.bf16.mxu0 %v4059
    %5303 = vmatpush2.bf16.msra.mxu0 %v4058
    %5304 = vmatprep.subr.bf16.mxu0 %v4055
    %5305 = vmatpush2.bf16.msra.mxu0 %v4054
    %5306 = vmatprep.subr.bf16.mxu0 %v4051
    %5307 = vmatpush2.bf16.msra.mxu0 %v4050
    %5308 = vmatprep.mubr.bf16.mxu0 %v1705
    %5309 = vmatmul.mubr.bf16.gmra.mxu0 %v1704
    %v5310 = vpop.f32.mrf.mxu0
    %v5311 = vadd.f32 %v5270, %v5310
    %v5312 = vpop.f32.mrf.mxu0
    %v5313 = vadd.f32 %v5272, %v5312
    %v5314 = vpop.f32.mrf.mxu0
    %v5315 = vpop.f32.mrf.mxu0
    %5316 = vdwg.mxu0
    %5317 = vmatprep.subr.bf16.mxu0 %v4111
    %5318 = vmatpush1.bf16.msra.mxu0 %v4110
    %5319 = vmatprep.subr.bf16.mxu0 %v4107
    %5320 = vmatpush1.bf16.msra.mxu0 %v4106
    %5321 = vmatprep.subr.bf16.mxu0 %v4103
    %5322 = vmatpush1.bf16.msra.mxu0 %v4102
    %5323 = vmatprep.subr.bf16.mxu0 %v4099
    %5324 = vmatpush1.bf16.msra.mxu0 %v4098
    %5325 = vmatprep.subr.bf16.mxu0 %v4095
    %5326 = vmatpush1.bf16.msra.mxu0 %v4094
    %5327 = vmatprep.subr.bf16.mxu0 %v4091
    %5328 = vmatpush1.bf16.msra.mxu0 %v4090
    %5329 = vmatprep.subr.bf16.mxu0 %v4087
    %5330 = vmatpush1.bf16.msra.mxu0 %v4086
    %5331 = vmatprep.subr.bf16.mxu0 %v4083
    %5332 = vmatpush1.bf16.msra.mxu0 %v4082
    %5333 = vmatprep.subr.bf16.mxu0 %v4143
    %5334 = vmatpush2.bf16.msra.mxu0 %v4142
    %5335 = vmatprep.subr.bf16.mxu0 %v4139
    %5336 = vmatpush2.bf16.msra.mxu0 %v4138
    %5337 = vmatprep.subr.bf16.mxu0 %v4135
    %5338 = vmatpush2.bf16.msra.mxu0 %v4134
    %5339 = vmatprep.subr.bf16.mxu0 %v4131
    %5340 = vmatpush2.bf16.msra.mxu0 %v4130
    %5341 = vmatprep.subr.bf16.mxu0 %v4127
    %5342 = vmatpush2.bf16.msra.mxu0 %v4126
    %5343 = vmatprep.subr.bf16.mxu0 %v4123
    %5344 = vmatpush2.bf16.msra.mxu0 %v4122
    %5345 = vmatprep.subr.bf16.mxu0 %v4119
    %5346 = vmatpush2.bf16.msra.mxu0 %v4118
    %5347 = vmatprep.subr.bf16.mxu0 %v4115
    %5348 = vmatpush2.bf16.msra.mxu0 %v4114
    %5349 = vmatprep.mubr.bf16.mxu0 %v1707
    %5350 = vmatmul.mubr.bf16.gmra.mxu0 %v1706
    %v5351 = vpop.f32.mrf.mxu0
    %v5352 = vadd.f32 %v5311, %v5351
    %v5353 = vpop.f32.mrf.mxu0
    %v5354 = vadd.f32 %v5313, %v5353
    %v5355 = vpop.f32.mrf.mxu0
    %v5356 = vpop.f32.mrf.mxu0
    %5357 = vdwg.mxu0
    %5358 = vmatprep.subr.bf16.mxu0 %v4175
    %5359 = vmatpush1.bf16.msra.mxu0 %v4174
    %5360 = vmatprep.subr.bf16.mxu0 %v4171
    %5361 = vmatpush1.bf16.msra.mxu0 %v4170
    %5362 = vmatprep.subr.bf16.mxu0 %v4167
    %5363 = vmatpush1.bf16.msra.mxu0 %v4166
    %5364 = vmatprep.subr.bf16.mxu0 %v4163
    %5365 = vmatpush1.bf16.msra.mxu0 %v4162
    %5366 = vmatprep.subr.bf16.mxu0 %v4159
    %5367 = vmatpush1.bf16.msra.mxu0 %v4158
    %5368 = vmatprep.subr.bf16.mxu0 %v4155
    %5369 = vmatpush1.bf16.msra.mxu0 %v4154
    %5370 = vmatprep.subr.bf16.mxu0 %v4151
    %5371 = vmatpush1.bf16.msra.mxu0 %v4150
    %5372 = vmatprep.subr.bf16.mxu0 %v4147
    %5373 = vmatpush1.bf16.msra.mxu0 %v4146
    %5374 = vmatprep.subr.bf16.mxu0 %v4207
    %5375 = vmatpush2.bf16.msra.mxu0 %v4206
    %5376 = vmatprep.subr.bf16.mxu0 %v4203
    %5377 = vmatpush2.bf16.msra.mxu0 %v4202
    %5378 = vmatprep.subr.bf16.mxu0 %v4199
    %5379 = vmatpush2.bf16.msra.mxu0 %v4198
    %5380 = vmatprep.subr.bf16.mxu0 %v4195
    %5381 = vmatpush2.bf16.msra.mxu0 %v4194
    %5382 = vmatprep.subr.bf16.mxu0 %v4191
    %5383 = vmatpush2.bf16.msra.mxu0 %v4190
    %5384 = vmatprep.subr.bf16.mxu0 %v4187
    %5385 = vmatpush2.bf16.msra.mxu0 %v4186
    %5386 = vmatprep.subr.bf16.mxu0 %v4183
    %5387 = vmatpush2.bf16.msra.mxu0 %v4182
    %5388 = vmatprep.subr.bf16.mxu0 %v4179
    %5389 = vmatpush2.bf16.msra.mxu0 %v4178
    %5390 = vmatprep.mubr.bf16.mxu0 %v1709
    %5391 = vmatmul.mubr.bf16.gmra.mxu0 %v1708
    %v5392 = vpop.f32.mrf.mxu0
    %v5393 = vadd.f32 %v5352, %v5392
    %v5394 = vpop.f32.mrf.mxu0
    %v5395 = vadd.f32 %v5354, %v5394
    %v5396 = vpop.f32.mrf.mxu0
    %v5397 = vpop.f32.mrf.mxu0
    %5398 = vdwg.mxu0
    %5399 = vmatprep.subr.bf16.mxu0 %v4239
    %5400 = vmatpush1.bf16.msra.mxu0 %v4238
    %5401 = vmatprep.subr.bf16.mxu0 %v4235
    %5402 = vmatpush1.bf16.msra.mxu0 %v4234
    %5403 = vmatprep.subr.bf16.mxu0 %v4231
    %5404 = vmatpush1.bf16.msra.mxu0 %v4230
    %5405 = vmatprep.subr.bf16.mxu0 %v4227
    %5406 = vmatpush1.bf16.msra.mxu0 %v4226
    %5407 = vmatprep.subr.bf16.mxu0 %v4223
    %5408 = vmatpush1.bf16.msra.mxu0 %v4222
    %5409 = vmatprep.subr.bf16.mxu0 %v4219
    %5410 = vmatpush1.bf16.msra.mxu0 %v4218
    %5411 = vmatprep.subr.bf16.mxu0 %v4215
    %5412 = vmatpush1.bf16.msra.mxu0 %v4214
    %5413 = vmatprep.subr.bf16.mxu0 %v4211
    %5414 = vmatpush1.bf16.msra.mxu0 %v4210
    %5415 = vmatprep.subr.bf16.mxu0 %v4271
    %5416 = vmatpush2.bf16.msra.mxu0 %v4270
    %5417 = vmatprep.subr.bf16.mxu0 %v4267
    %5418 = vmatpush2.bf16.msra.mxu0 %v4266
    %5419 = vmatprep.subr.bf16.mxu0 %v4263
    %5420 = vmatpush2.bf16.msra.mxu0 %v4262
    %5421 = vmatprep.subr.bf16.mxu0 %v4259
    %5422 = vmatpush2.bf16.msra.mxu0 %v4258
    %5423 = vmatprep.subr.bf16.mxu0 %v4255
    %5424 = vmatpush2.bf16.msra.mxu0 %v4254
    %5425 = vmatprep.subr.bf16.mxu0 %v4251
    %5426 = vmatpush2.bf16.msra.mxu0 %v4250
    %5427 = vmatprep.subr.bf16.mxu0 %v4247
    %5428 = vmatpush2.bf16.msra.mxu0 %v4246
    %5429 = vmatprep.subr.bf16.mxu0 %v4243
    %5430 = vmatpush2.bf16.msra.mxu0 %v4242
    %5431 = vmatprep.mubr.bf16.mxu0 %v1711
    %5432 = vmatmul.mubr.bf16.gmra.mxu0 %v1710
    %v5433 = vpop.f32.mrf.mxu0
    %v5434 = vadd.f32 %v5393, %v5433
    %v5435 = vpop.f32.mrf.mxu0
    %v5436 = vadd.f32 %v5395, %v5435
    %v5437 = vpop.f32.mrf.mxu0
    %v5438 = vpop.f32.mrf.mxu0
    %5439 = vdwg.mxu0
    %s5440 = scalar_lea.vmem %s1, 256
    %v5441 = vld [vmem:[%s5440] sm:$0xff]
    %v5442 = vld [vmem:[%s5440 + $0x8] sm:$0xff]
    %v5443 = vld [vmem:[%s5440 + $0x10] sm:$0xff]
    %v5444 = vld [vmem:[%s5440 + $0x18] sm:$0xff]
    %v5445 = vld [vmem:[%s5440 + $0x80] sm:$0x1]
    %v5446 = vld [vmem:[%s5440 + $0x88] sm:$0x1]
    %v5447 = vld [vmem:[%s5440 + $0x90] sm:$0x1]
    %v5448 = vld [vmem:[%s5440 + $0x98] sm:$0x1]
    %5449 = vrot.lane.b32.xlu0 %v5106, 9
    %v5450 = vpop.permute.xlu0 %5449
    %5451 = vrot.lane.b32.xlu0 %v5108, 9
    %v5452 = vpop.permute.xlu0 %5451
    %5453 = vrot.lane.b32.xlu0 %v5434, 9
    %v5454 = vpop.permute.xlu0 %5453
    %5455 = vrot.lane.b32.xlu0 %v5436, 9
    %v5456 = vpop.permute.xlu0 %5455
    %vm5457 = vcmp.lt.s32.totalorder %v211, 9
    %v5458 = vsel %vm5457, %v5454, %v5456
    %v5459 = vsel %vm5457, %v5452, %v5454
    %v5460 = vsel %vm5457, %v5450, %v5452
    %v5461 = vsel %vm5457, %v5456, %v5450
    %v5462 = vlaneseq
    %v5463 = vshrl.u32 %v5462, 7
    %v5464 = vsub.s32 0, %v5463
    %v5465 = vrot.slane %v5441, %v5464
    %v5466 = vlaneseq
    %v5467 = vshrl.u32 %v5466, 7
    %v5468 = vsub.s32 0, %v5467
    %v5469 = vrot.slane %v5442, %v5468
    %v5470 = vlaneseq
    %v5471 = vshrl.u32 %v5470, 7
    %v5472 = vsub.s32 0, %v5471
    %v5473 = vrot.slane %v5443, %v5472
    %v5474 = vlaneseq
    %v5475 = vshrl.u32 %v5474, 7
    %v5476 = vsub.s32 0, %v5475
    %v5477 = vrot.slane %v5444, %v5476
    %v5478 = vmul.f32 %v5461, %v5465
    %v5479 = vmul.f32 %v5460, %v5469
    %v5480 = vmul.f32 %v5459, %v5473
    %v5481 = vmul.f32 %v5458, %v5477
    %5482 = vrot.lane.b32.xlu0 %v5106, 8
    %v5483 = vpop.permute.xlu0 %5482
    %5484 = vrot.lane.b32.xlu0 %v5108, 8
    %v5485 = vpop.permute.xlu0 %5484
    %5486 = vrot.lane.b32.xlu0 %v5434, 8
    %v5487 = vpop.permute.xlu0 %5486
    %5488 = vrot.lane.b32.xlu0 %v5436, 8
    %v5489 = vpop.permute.xlu0 %5488
    %vm5490 = vcmp.lt.s32.totalorder %v211, 8
    %v5491 = vsel %vm5490, %v5487, %v5489
    %v5492 = vsel %vm5490, %v5485, %v5487
    %v5493 = vsel %vm5490, %v5483, %v5485
    %v5494 = vsel %vm5490, %v5489, %v5483
    %v5495 = vlaneseq
    %v5496 = vshrl.u32 %v5495, 7
    %v5497 = vsub.s32 1, %v5496
    %v5498 = vrot.slane %v5441, %v5497
    %v5499 = vlaneseq
    %v5500 = vshrl.u32 %v5499, 7
    %v5501 = vsub.s32 1, %v5500
    %v5502 = vrot.slane %v5442, %v5501
    %v5503 = vlaneseq
    %v5504 = vshrl.u32 %v5503, 7
    %v5505 = vsub.s32 1, %v5504
    %v5506 = vrot.slane %v5443, %v5505
    %v5507 = vlaneseq
    %v5508 = vshrl.u32 %v5507, 7
    %v5509 = vsub.s32 1, %v5508
    %v5510 = vrot.slane %v5444, %v5509
    %v5511 = vmul.f32 %v5494, %v5498
    %v5512 = vmul.f32 %v5493, %v5502
    %v5513 = vmul.f32 %v5492, %v5506
    %v5514 = vmul.f32 %v5491, %v5510
    %5515 = vrot.lane.b32.xlu0 %v5106, 7
    %v5516 = vpop.permute.xlu0 %5515
    %5517 = vrot.lane.b32.xlu0 %v5108, 7
    %v5518 = vpop.permute.xlu0 %5517
    %5519 = vrot.lane.b32.xlu0 %v5434, 7
    %v5520 = vpop.permute.xlu0 %5519
    %5521 = vrot.lane.b32.xlu0 %v5436, 7
    %v5522 = vpop.permute.xlu0 %5521
    %vm5523 = vcmp.lt.s32.totalorder %v211, 7
    %v5524 = vsel %vm5523, %v5520, %v5522
    %v5525 = vsel %vm5523, %v5518, %v5520
    %v5526 = vsel %vm5523, %v5516, %v5518
    %v5527 = vsel %vm5523, %v5522, %v5516
    %v5528 = vlaneseq
    %v5529 = vshrl.u32 %v5528, 7
    %v5530 = vsub.s32 2, %v5529
    %v5531 = vrot.slane %v5441, %v5530
    %v5532 = vlaneseq
    %v5533 = vshrl.u32 %v5532, 7
    %v5534 = vsub.s32 2, %v5533
    %v5535 = vrot.slane %v5442, %v5534
    %v5536 = vlaneseq
    %v5537 = vshrl.u32 %v5536, 7
    %v5538 = vsub.s32 2, %v5537
    %v5539 = vrot.slane %v5443, %v5538
    %v5540 = vlaneseq
    %v5541 = vshrl.u32 %v5540, 7
    %v5542 = vsub.s32 2, %v5541
    %v5543 = vrot.slane %v5444, %v5542
    %v5544 = vmul.f32 %v5527, %v5531
    %v5545 = vmul.f32 %v5526, %v5535
    %v5546 = vmul.f32 %v5525, %v5539
    %v5547 = vmul.f32 %v5524, %v5543
    %5548 = vrot.lane.b32.xlu0 %v5106, 1
    %v5549 = vpop.permute.xlu0 %5548
    %5550 = vrot.lane.b32.xlu0 %v5108, 1
    %v5551 = vpop.permute.xlu0 %5550
    %5552 = vrot.lane.b32.xlu0 %v5434, 1
    %v5553 = vpop.permute.xlu0 %5552
    %5554 = vrot.lane.b32.xlu0 %v5436, 1
    %v5555 = vpop.permute.xlu0 %5554
    %v5556 = vsel %vm599, %v5553, %v5555
    %v5557 = vsel %vm599, %v5551, %v5553
    %v5558 = vsel %vm599, %v5549, %v5551
    %v5559 = vsel %vm599, %v5555, %v5549
    %v5560 = vlaneseq
    %v5561 = vshrl.u32 %v5560, 7
    %v5562 = vsub.s32 3, %v5561
    %v5563 = vrot.slane %v5441, %v5562
    %v5564 = vlaneseq
    %v5565 = vshrl.u32 %v5564, 7
    %v5566 = vsub.s32 3, %v5565
    %v5567 = vrot.slane %v5442, %v5566
    %v5568 = vlaneseq
    %v5569 = vshrl.u32 %v5568, 7
    %v5570 = vsub.s32 3, %v5569
    %v5571 = vrot.slane %v5443, %v5570
    %v5572 = vlaneseq
    %v5573 = vshrl.u32 %v5572, 7
    %v5574 = vsub.s32 3, %v5573
    %v5575 = vrot.slane %v5444, %v5574
    %v5576 = vmul.f32 %v5559, %v5563
    %v5577 = vmul.f32 %v5558, %v5567
    %v5578 = vmul.f32 %v5557, %v5571
    %v5579 = vmul.f32 %v5556, %v5575
    %5580 = vrot.lane.b32.xlu0 %v5106, 127
    %v5581 = vpop.permute.xlu0 %5580
    %5582 = vrot.lane.b32.xlu0 %v5108, 127
    %v5583 = vpop.permute.xlu0 %5582
    %5584 = vrot.lane.b32.xlu0 %v5434, 127
    %v5585 = vpop.permute.xlu0 %5584
    %5586 = vrot.lane.b32.xlu0 %v5436, 127
    %v5587 = vpop.permute.xlu0 %5586
    %v5588 = vsel %vm728, %v5585, %v5587
    %v5589 = vsel %vm728, %v5583, %v5585
    %v5590 = vsel %vm728, %v5581, %v5583
    %v5591 = vsel %vm728, %v5587, %v5581
    %v5592 = vlaneseq
    %v5593 = vshrl.u32 %v5592, 7
    %v5594 = vsub.s32 5, %v5593
    %v5595 = vrot.slane %v5441, %v5594
    %v5596 = vlaneseq
    %v5597 = vshrl.u32 %v5596, 7
    %v5598 = vsub.s32 5, %v5597
    %v5599 = vrot.slane %v5442, %v5598
    %v5600 = vlaneseq
    %v5601 = vshrl.u32 %v5600, 7
    %v5602 = vsub.s32 5, %v5601
    %v5603 = vrot.slane %v5443, %v5602
    %v5604 = vlaneseq
    %v5605 = vshrl.u32 %v5604, 7
    %v5606 = vsub.s32 5, %v5605
    %v5607 = vrot.slane %v5444, %v5606
    %v5608 = vmul.f32 %v5590, %v5595
    %v5609 = vmul.f32 %v5589, %v5599
    %v5610 = vmul.f32 %v5588, %v5603
    %v5611 = vmul.f32 %v5591, %v5607
    %5612 = vrot.lane.b32.xlu0 %v5106, 121
    %v5613 = vpop.permute.xlu0 %5612
    %5614 = vrot.lane.b32.xlu0 %v5108, 121
    %v5615 = vpop.permute.xlu0 %5614
    %5616 = vrot.lane.b32.xlu0 %v5434, 121
    %v5617 = vpop.permute.xlu0 %5616
    %5618 = vrot.lane.b32.xlu0 %v5436, 121
    %v5619 = vpop.permute.xlu0 %5618
    %vm5620 = vcmp.lt.s32.totalorder %v211, 121
    %v5621 = vsel %vm5620, %v5617, %v5619
    %v5622 = vsel %vm5620, %v5615, %v5617
    %v5623 = vsel %vm5620, %v5613, %v5615
    %v5624 = vsel %vm5620, %v5619, %v5613
    %v5625 = vlaneseq
    %v5626 = vshrl.u32 %v5625, 7
    %v5627 = vsub.s32 6, %v5626
    %v5628 = vrot.slane %v5441, %v5627
    %v5629 = vlaneseq
    %v5630 = vshrl.u32 %v5629, 7
    %v5631 = vsub.s32 6, %v5630
    %v5632 = vrot.slane %v5442, %v5631
    %v5633 = vlaneseq
    %v5634 = vshrl.u32 %v5633, 7
    %v5635 = vsub.s32 6, %v5634
    %v5636 = vrot.slane %v5443, %v5635
    %v5637 = vlaneseq
    %v5638 = vshrl.u32 %v5637, 7
    %v5639 = vsub.s32 6, %v5638
    %v5640 = vrot.slane %v5444, %v5639
    %v5641 = vmul.f32 %v5623, %v5628
    %v5642 = vmul.f32 %v5622, %v5632
    %v5643 = vmul.f32 %v5621, %v5636
    %v5644 = vmul.f32 %v5624, %v5640
    %5645 = vrot.lane.b32.xlu0 %v5106, 120
    %v5646 = vpop.permute.xlu0 %5645
    %5647 = vrot.lane.b32.xlu0 %v5108, 120
    %v5648 = vpop.permute.xlu0 %5647
    %5649 = vrot.lane.b32.xlu0 %v5434, 120
    %v5650 = vpop.permute.xlu0 %5649
    %5651 = vrot.lane.b32.xlu0 %v5436, 120
    %v5652 = vpop.permute.xlu0 %5651
    %vm5653 = vcmp.lt.s32.totalorder %v211, 120
    %v5654 = vsel %vm5653, %v5650, %v5652
    %v5655 = vsel %vm5653, %v5648, %v5650
    %v5656 = vsel %vm5653, %v5646, %v5648
    %v5657 = vsel %vm5653, %v5652, %v5646
    %v5658 = vlaneseq
    %v5659 = vshrl.u32 %v5658, 7
    %v5660 = vsub.s32 7, %v5659
    %v5661 = vrot.slane %v5441, %v5660
    %v5662 = vlaneseq
    %v5663 = vshrl.u32 %v5662, 7
    %v5664 = vsub.s32 7, %v5663
    %v5665 = vrot.slane %v5442, %v5664
    %v5666 = vlaneseq
    %v5667 = vshrl.u32 %v5666, 7
    %v5668 = vsub.s32 7, %v5667
    %v5669 = vrot.slane %v5443, %v5668
    %v5670 = vlaneseq
    %v5671 = vshrl.u32 %v5670, 7
    %v5672 = vsub.s32 7, %v5671
    %v5673 = vrot.slane %v5444, %v5672
    %v5674 = vmul.f32 %v5656, %v5661
    %v5675 = vmul.f32 %v5655, %v5665
    %v5676 = vmul.f32 %v5654, %v5669
    %v5677 = vmul.f32 %v5657, %v5673
    %5678 = vrot.lane.b32.xlu0 %v5106, 119
    %v5679 = vpop.permute.xlu0 %5678
    %5680 = vrot.lane.b32.xlu0 %v5108, 119
    %v5681 = vpop.permute.xlu0 %5680
    %5682 = vrot.lane.b32.xlu0 %v5434, 119
    %v5683 = vpop.permute.xlu0 %5682
    %5684 = vrot.lane.b32.xlu0 %v5436, 119
    %v5685 = vpop.permute.xlu0 %5684
    %vm5686 = vcmp.lt.s32.totalorder %v211, 119
    %v5687 = vsel %vm5686, %v5683, %v5685
    %v5688 = vsel %vm5686, %v5681, %v5683
    %v5689 = vsel %vm5686, %v5679, %v5681
    %v5690 = vsel %vm5686, %v5685, %v5679
    %v5691 = vlaneseq
    %v5692 = vshrl.u32 %v5691, 7
    %v5693 = vsub.s32 0, %v5692
    %v5694 = vrot.slane %v5445, %v5693
    %v5695 = vlaneseq
    %v5696 = vshrl.u32 %v5695, 7
    %v5697 = vsub.s32 0, %v5696
    %v5698 = vrot.slane %v5446, %v5697
    %v5699 = vlaneseq
    %v5700 = vshrl.u32 %v5699, 7
    %v5701 = vsub.s32 0, %v5700
    %v5702 = vrot.slane %v5447, %v5701
    %v5703 = vlaneseq
    %v5704 = vshrl.u32 %v5703, 7
    %v5705 = vsub.s32 0, %v5704
    %v5706 = vrot.slane %v5448, %v5705
    %v5707 = vmul.f32 %v5689, %v5694
    %v5708 = vmul.f32 %v5688, %v5698
    %v5709 = vmul.f32 %v5687, %v5702
    %v5710 = vmul.f32 %v5690, %v5706
    %v5711 = vpack.c.bf16 %v5511, %v5478
    %v5712 = vpack.c.bf16 %v5512, %v5479
    %v5713 = vpack.c.bf16 %v5513, %v5480
    %v5714 = vpack.c.bf16 %v5514, %v5481
    %v5715 = vpack.c.bf16 %v5576, %v5544
    %v5716 = vpack.c.bf16 %v5577, %v5545
    %v5717 = vpack.c.bf16 %v5578, %v5546
    %v5718 = vpack.c.bf16 %v5579, %v5547
    %v5719 = vpack.c.bf16 %v5608, %v5106
    %v5720 = vpack.c.bf16 %v5609, %v5108
    %v5721 = vpack.c.bf16 %v5610, %v5434
    %v5722 = vpack.c.bf16 %v5611, %v5436
    %v5723 = vpack.c.bf16 %v5674, %v5641
    %v5724 = vpack.c.bf16 %v5675, %v5642
    %v5725 = vpack.c.bf16 %v5676, %v5643
    %v5726 = vpack.c.bf16 %v5677, %v5644
    %v5727 = vpack.c.bf16 %v5707, %v5707
    %v5728 = vpack.c.bf16 %v5708, %v5708
    %v5729 = vpack.c.bf16 %v5709, %v5709
    %v5730 = vpack.c.bf16 %v5710, %v5710
    %s5731 = scalar_lea.vmem [#allocation5], 4
    %v5732 = vld [vmem:[%s5731] sm:$0xf]
    %s5733 = scalar_lea.vmem %s3, 8
    %v5734 = vld [vmem:[%s5733] sm:$0xff]
    %5736 = vset.pattern.permute.xlu0 0
    %5737 = vperm.xlu0 %5736, %v5734
    %v5738 = vpop.permute.xlu0 %5737
    %v5741 = vsel %vm1299, %v5732, 0
    %v5744 = vsel %vm1303, %v5727, 0
    %v5747 = vsel %vm1303, %v5728, 0
    %v5750 = vsel %vm1303, %v5729, 0
    %v5753 = vsel %vm1303, %v5730, 0
    %5755 = vmatprep.subr.bf16.mxu0 0
    %5756 = vmatpush1.bf16.msra.mxu0 0
    %5757 = vmatprep.subr.bf16.mxu0 0
    %5758 = vmatpush1.bf16.msra.mxu0 0
    %5759 = vmatprep.subr.bf16.mxu0 0
    %5760 = vmatpush1.bf16.msra.mxu0 0
    %5761 = vmatprep.subr.bf16.mxu0 %v5747
    %5762 = vmatpush1.bf16.msra.mxu0 %v5744
    %5763 = vmatprep.subr.bf16.mxu0 %v5724
    %5764 = vmatpush1.bf16.msra.mxu0 %v5723
    %5765 = vmatprep.subr.bf16.mxu0 %v5720
    %5766 = vmatpush1.bf16.msra.mxu0 %v5719
    %5767 = vmatprep.subr.bf16.mxu0 %v5716
    %5768 = vmatpush1.bf16.msra.mxu0 %v5715
    %5769 = vmatprep.subr.bf16.mxu0 %v5712
    %5770 = vmatpush1.bf16.msra.mxu0 %v5711
    %5771 = vmatprep.subr.bf16.mxu0 0
    %5772 = vmatpush2.bf16.msra.mxu0 0
    %5773 = vmatprep.subr.bf16.mxu0 0
    %5774 = vmatpush2.bf16.msra.mxu0 0
    %5775 = vmatprep.subr.bf16.mxu0 0
    %5776 = vmatpush2.bf16.msra.mxu0 0
    %5777 = vmatprep.subr.bf16.mxu0 0
    %5778 = vmatpush2.bf16.msra.mxu0 0
    %5779 = vmatprep.subr.bf16.mxu0 0
    %5780 = vmatpush2.bf16.msra.mxu0 0
    %5781 = vmatprep.subr.bf16.mxu0 0
    %5782 = vmatpush2.bf16.msra.mxu0 0
    %5783 = vmatprep.subr.bf16.mxu0 0
    %5784 = vmatpush2.bf16.msra.mxu0 0
    %5785 = vmatprep.subr.bf16.mxu0 0
    %5786 = vmatpush2.bf16.msra.mxu0 0
    %5787 = vmatprep.mubr.bf16.mxu0 0
    %5788 = vmatmul.mubr.bf16.gmra.mxu0 %v5741
    %v5789 = vpop.f32.mrf.mxu0
    %v5790 = vadd.f32 %v5738, %v5789
    %v5791 = vpop.f32.mrf.mxu0
    %v5792 = vadd.f32 %v5738, %v5791
    %v5793 = vpop.f32.mrf.mxu0
    %v5794 = vpop.f32.mrf.mxu0
    %5795 = vdwg.mxu0
    %5796 = vmatprep.subr.bf16.mxu0 0
    %5797 = vmatpush1.bf16.msra.mxu0 0
    %5798 = vmatprep.subr.bf16.mxu0 0
    %5799 = vmatpush1.bf16.msra.mxu0 0
    %5800 = vmatprep.subr.bf16.mxu0 0
    %5801 = vmatpush1.bf16.msra.mxu0 0
    %5802 = vmatprep.subr.bf16.mxu0 %v5753
    %5803 = vmatpush1.bf16.msra.mxu0 %v5750
    %5804 = vmatprep.subr.bf16.mxu0 %v5726
    %5805 = vmatpush1.bf16.msra.mxu0 %v5725
    %5806 = vmatprep.subr.bf16.mxu0 %v5722
    %5807 = vmatpush1.bf16.msra.mxu0 %v5721
    %5808 = vmatprep.subr.bf16.mxu0 %v5718
    %5809 = vmatpush1.bf16.msra.mxu0 %v5717
    %5810 = vmatprep.subr.bf16.mxu0 %v5714
    %5811 = vmatpush1.bf16.msra.mxu0 %v5713
    %5812 = vmatprep.subr.bf16.mxu0 0
    %5813 = vmatpush2.bf16.msra.mxu0 0
    %5814 = vmatprep.subr.bf16.mxu0 0
    %5815 = vmatpush2.bf16.msra.mxu0 0
    %5816 = vmatprep.subr.bf16.mxu0 0
    %5817 = vmatpush2.bf16.msra.mxu0 0
    %5818 = vmatprep.subr.bf16.mxu0 0
    %5819 = vmatpush2.bf16.msra.mxu0 0
    %5820 = vmatprep.subr.bf16.mxu0 0
    %5821 = vmatpush2.bf16.msra.mxu0 0
    %5822 = vmatprep.subr.bf16.mxu0 0
    %5823 = vmatpush2.bf16.msra.mxu0 0
    %5824 = vmatprep.subr.bf16.mxu0 0
    %5825 = vmatpush2.bf16.msra.mxu0 0
    %5826 = vmatprep.subr.bf16.mxu0 0
    %5827 = vmatpush2.bf16.msra.mxu0 0
    %5828 = vmatprep.mubr.bf16.mxu0 0
    %5829 = vmatmul.mubr.bf16.gmra.mxu0 %v5741
    %v5830 = vpop.f32.mrf.mxu0
    %v5831 = vadd.f32 %v5738, %v5830
    %v5832 = vpop.f32.mrf.mxu0
    %v5833 = vadd.f32 %v5738, %v5832
    %v5834 = vpop.f32.mrf.mxu0
    %v5835 = vpop.f32.mrf.mxu0
    %5836 = vdwg.mxu0
    %v5837 = vmax.f32 %v5790, 0.0
    %v5838 = vmax.f32 %v5792, 0.0
    %v5839 = vmax.f32 %v5831, 0.0
    %v5840 = vmax.f32 %v5833, 0.0
    %v5841 = vpack.c.bf16 %v5837, %v5837
    %v5842 = vpack.c.bf16 %v5838, %v5838
    %v5843 = vpack.c.bf16 %v5839, %v5839
    %v5844 = vpack.c.bf16 %v5840, %v5840
    %v5845 = vld [vmem:[#allocation10] sm:$0xf]
    %v5846 = vld [vmem:[#allocation10 + $0x4] sm:$0xf]
    %v5847 = vld [vmem:[#allocation10 + $0x8] sm:$0xf]
    %v5848 = vld [vmem:[#allocation10 + $0xc] sm:$0xf]
    %v5849 = vld [vmem:[#allocation10 + $0x10] sm:$0xf]
    %v5850 = vld [vmem:[#allocation10 + $0x14] sm:$0xf]
    %v5851 = vld [vmem:[#allocation10 + $0x18] sm:$0xf]
    %v5852 = vld [vmem:[#allocation10 + $0x1c] sm:$0xf]
    %v5853 = vld [vmem:[#allocation10 + $0x20] sm:$0xf]
    %v5854 = vld [vmem:[#allocation10 + $0x24] sm:$0xf]
    %v5855 = vld [vmem:[#allocation10 + $0x28] sm:$0xf]
    %v5856 = vld [vmem:[#allocation10 + $0x2c] sm:$0xf]
    %v5857 = vld [vmem:[#allocation10 + $0x30] sm:$0xf]
    %v5858 = vld [vmem:[#allocation10 + $0x34] sm:$0xf]
    %v5859 = vld [vmem:[#allocation10 + $0x38] sm:$0xf]
    %v5860 = vld [vmem:[#allocation10 + $0x3c] sm:$0xf]
    %v5861 = vld [vmem:[#allocation10 + $0x40] sm:$0xf]
    %v5862 = vld [vmem:[#allocation10 + $0x44] sm:$0xf]
    %v5863 = vld [vmem:[#allocation10 + $0x48] sm:$0xf]
    %v5864 = vld [vmem:[#allocation10 + $0x4c] sm:$0xf]
    %v5865 = vld [vmem:[#allocation10 + $0x50] sm:$0xf]
    %v5866 = vld [vmem:[#allocation10 + $0x54] sm:$0xf]
    %v5867 = vld [vmem:[#allocation10 + $0x58] sm:$0xf]
    %v5868 = vld [vmem:[#allocation10 + $0x5c] sm:$0xf]
    %v5869 = vld [vmem:[#allocation10 + $0x60] sm:$0xf]
    %v5870 = vld [vmem:[#allocation10 + $0x64] sm:$0xf]
    %v5871 = vld [vmem:[#allocation10 + $0x68] sm:$0xf]
    %v5872 = vld [vmem:[#allocation10 + $0x6c] sm:$0xf]
    %v5873 = vld [vmem:[#allocation10 + $0x70] sm:$0xf]
    %v5874 = vld [vmem:[#allocation10 + $0x74] sm:$0xf]
    %v5875 = vld [vmem:[#allocation10 + $0x78] sm:$0xf]
    %v5876 = vld [vmem:[#allocation10 + $0x7c] sm:$0xf]
    %v5877 = vld [vmem:[#allocation10 + $0x80] sm:$0xf]
    %v5878 = vld [vmem:[#allocation10 + $0x84] sm:$0xf]
    %v5879 = vld [vmem:[#allocation10 + $0x88] sm:$0xf]
    %v5880 = vld [vmem:[#allocation10 + $0x8c] sm:$0xf]
    %v5881 = vld [vmem:[#allocation10 + $0x90] sm:$0xf]
    %v5882 = vld [vmem:[#allocation10 + $0x94] sm:$0xf]
    %v5883 = vld [vmem:[#allocation10 + $0x98] sm:$0xf]
    %v5884 = vld [vmem:[#allocation10 + $0x9c] sm:$0xf]
    %v5885 = vld [vmem:[#allocation10 + $0xa0] sm:$0xf]
    %v5886 = vld [vmem:[#allocation10 + $0xa4] sm:$0xf]
    %v5887 = vld [vmem:[#allocation10 + $0xa8] sm:$0xf]
    %v5888 = vld [vmem:[#allocation10 + $0xac] sm:$0xf]
    %v5889 = vld [vmem:[#allocation10 + $0xb0] sm:$0xf]
    %v5890 = vld [vmem:[#allocation10 + $0xb4] sm:$0xf]
    %v5891 = vld [vmem:[#allocation10 + $0xb8] sm:$0xf]
    %v5892 = vld [vmem:[#allocation10 + $0xbc] sm:$0xf]
    %v5893 = vld [vmem:[#allocation10 + $0xc0] sm:$0xf]
    %v5894 = vld [vmem:[#allocation10 + $0xc4] sm:$0xf]
    %v5895 = vld [vmem:[#allocation10 + $0xc8] sm:$0xf]
    %v5896 = vld [vmem:[#allocation10 + $0xcc] sm:$0xf]
    %v5897 = vld [vmem:[#allocation10 + $0xd0] sm:$0xf]
    %v5898 = vld [vmem:[#allocation10 + $0xd4] sm:$0xf]
    %v5899 = vld [vmem:[#allocation10 + $0xd8] sm:$0xf]
    %v5900 = vld [vmem:[#allocation10 + $0xdc] sm:$0xf]
    %v5901 = vld [vmem:[#allocation10 + $0xe0] sm:$0xf]
    %v5902 = vld [vmem:[#allocation10 + $0xe4] sm:$0xf]
    %v5903 = vld [vmem:[#allocation10 + $0xe8] sm:$0xf]
    %v5904 = vld [vmem:[#allocation10 + $0xec] sm:$0xf]
    %v5905 = vld [vmem:[#allocation10 + $0xf0] sm:$0xf]
    %v5906 = vld [vmem:[#allocation10 + $0xf4] sm:$0xf]
    %v5907 = vld [vmem:[#allocation10 + $0xf8] sm:$0xf]
    %v5908 = vld [vmem:[#allocation10 + $0xfc] sm:$0xf]
    %v5973 = vunpack.c.l.b16 %v5845
    %v5974 = vunpack.c.l.b16 %v5846
    %v5975 = vunpack.c.l.b16 %v5847
    %v5976 = vunpack.c.l.b16 %v5848
    %v5977 = vunpack.c.l.b16 %v5849
    %v5978 = vunpack.c.l.b16 %v5850
    %v5979 = vunpack.c.l.b16 %v5851
    %v5980 = vunpack.c.l.b16 %v5852
    %v5981 = vunpack.c.l.b16 %v5853
    %v5982 = vunpack.c.l.b16 %v5854
    %v5983 = vunpack.c.l.b16 %v5855
    %v5984 = vunpack.c.l.b16 %v5856
    %v5985 = vunpack.c.l.b16 %v5857
    %v5986 = vunpack.c.l.b16 %v5858
    %v5987 = vunpack.c.l.b16 %v5859
    %v5988 = vunpack.c.l.b16 %v5860
    %v5989 = vunpack.c.l.b16 %v5861
    %v5990 = vunpack.c.l.b16 %v5862
    %v5991 = vunpack.c.l.b16 %v5863
    %v5992 = vunpack.c.l.b16 %v5864
    %v5993 = vunpack.c.l.b16 %v5865
    %v5994 = vunpack.c.l.b16 %v5866
    %v5995 = vunpack.c.l.b16 %v5867
    %v5996 = vunpack.c.l.b16 %v5868
    %v5997 = vunpack.c.l.b16 %v5869
    %v5998 = vunpack.c.l.b16 %v5870
    %v5999 = vunpack.c.l.b16 %v5871
    %v6000 = vunpack.c.l.b16 %v5872
    %v6001 = vunpack.c.l.b16 %v5873
    %v6002 = vunpack.c.l.b16 %v5874
    %v6003 = vunpack.c.l.b16 %v5875
    %v6004 = vunpack.c.l.b16 %v5876
    %v6005 = vunpack.c.l.b16 %v5877
    %v6006 = vunpack.c.l.b16 %v5878
    %v6007 = vunpack.c.l.b16 %v5879
    %v6008 = vunpack.c.l.b16 %v5880
    %v6009 = vunpack.c.l.b16 %v5881
    %v6010 = vunpack.c.l.b16 %v5882
    %v6011 = vunpack.c.l.b16 %v5883
    %v6012 = vunpack.c.l.b16 %v5884
    %v6013 = vunpack.c.l.b16 %v5885
    %v6014 = vunpack.c.l.b16 %v5886
    %v6015 = vunpack.c.l.b16 %v5887
    %v6016 = vunpack.c.l.b16 %v5888
    %v6017 = vunpack.c.l.b16 %v5889
    %v6018 = vunpack.c.l.b16 %v5890
    %v6019 = vunpack.c.l.b16 %v5891
    %v6020 = vunpack.c.l.b16 %v5892
    %v6021 = vunpack.c.l.b16 %v5893
    %v6022 = vunpack.c.l.b16 %v5894
    %v6023 = vunpack.c.l.b16 %v5895
    %v6024 = vunpack.c.l.b16 %v5896
    %v6025 = vunpack.c.l.b16 %v5897
    %v6026 = vunpack.c.l.b16 %v5898
    %v6027 = vunpack.c.l.b16 %v5899
    %v6028 = vunpack.c.l.b16 %v5900
    %v6029 = vunpack.c.l.b16 %v5901
    %v6030 = vunpack.c.l.b16 %v5902
    %v6031 = vunpack.c.l.b16 %v5903
    %v6032 = vunpack.c.l.b16 %v5904
    %v6033 = vunpack.c.l.b16 %v5905
    %v6034 = vunpack.c.l.b16 %v5906
    %v6035 = vunpack.c.l.b16 %v5907
    %v6036 = vunpack.c.l.b16 %v5908
    %v6037 = vpack.c.b16 %v5974, %v5973
    %v6038 = vpack.c.b16 %v5976, %v5975
    %v6039 = vpack.c.b16 %v5978, %v5977
    %v6040 = vpack.c.b16 %v5980, %v5979
    %v6041 = vpack.c.b16 %v5982, %v5981
    %v6042 = vpack.c.b16 %v5984, %v5983
    %v6043 = vpack.c.b16 %v5986, %v5985
    %v6044 = vpack.c.b16 %v5988, %v5987
    %v6045 = vpack.c.b16 %v5990, %v5989
    %v6046 = vpack.c.b16 %v5992, %v5991
    %v6047 = vpack.c.b16 %v5994, %v5993
    %v6048 = vpack.c.b16 %v5996, %v5995
    %v6049 = vpack.c.b16 %v5998, %v5997
    %v6050 = vpack.c.b16 %v6000, %v5999
    %v6051 = vpack.c.b16 %v6002, %v6001
    %v6052 = vpack.c.b16 %v6004, %v6003
    %v6053 = vpack.c.b16 %v6006, %v6005
    %v6054 = vpack.c.b16 %v6008, %v6007
    %v6055 = vpack.c.b16 %v6010, %v6009
    %v6056 = vpack.c.b16 %v6012, %v6011
    %v6057 = vpack.c.b16 %v6014, %v6013
    %v6058 = vpack.c.b16 %v6016, %v6015
    %v6059 = vpack.c.b16 %v6018, %v6017
    %v6060 = vpack.c.b16 %v6020, %v6019
    %v6061 = vpack.c.b16 %v6022, %v6021
    %v6062 = vpack.c.b16 %v6024, %v6023
    %v6063 = vpack.c.b16 %v6026, %v6025
    %v6064 = vpack.c.b16 %v6028, %v6027
    %v6065 = vpack.c.b16 %v6030, %v6029
    %v6066 = vpack.c.b16 %v6032, %v6031
    %v6067 = vpack.c.b16 %v6034, %v6033
    %v6068 = vpack.c.b16 %v6036, %v6035
    %6101 = vmatprep.subr.bf16.mxu0 0
    %6102 = vmatpush1.bf16.msra.mxu0 %v6044
    %6103 = vmatprep.subr.bf16.mxu0 0
    %6104 = vmatpush1.bf16.msra.mxu0 %v6043
    %6105 = vmatprep.subr.bf16.mxu0 0
    %6106 = vmatpush1.bf16.msra.mxu0 %v6042
    %6107 = vmatprep.subr.bf16.mxu0 0
    %6108 = vmatpush1.bf16.msra.mxu0 %v6041
    %6109 = vmatprep.subr.bf16.mxu0 0
    %6110 = vmatpush1.bf16.msra.mxu0 %v6040
    %6111 = vmatprep.subr.bf16.mxu0 0
    %6112 = vmatpush1.bf16.msra.mxu0 %v6039
    %6113 = vmatprep.subr.bf16.mxu0 0
    %6114 = vmatpush1.bf16.msra.mxu0 %v6038
    %6115 = vmatprep.subr.bf16.mxu0 0
    %6116 = vmatpush1.bf16.msra.mxu0 %v6037
    %6117 = vmatprep.subr.bf16.mxu0 0
    %6118 = vmatpush2.bf16.msra.mxu0 %v6052
    %6119 = vmatprep.subr.bf16.mxu0 0
    %6120 = vmatpush2.bf16.msra.mxu0 %v6051
    %6121 = vmatprep.subr.bf16.mxu0 0
    %6122 = vmatpush2.bf16.msra.mxu0 %v6050
    %6123 = vmatprep.subr.bf16.mxu0 0
    %6124 = vmatpush2.bf16.msra.mxu0 %v6049
    %6125 = vmatprep.subr.bf16.mxu0 0
    %6126 = vmatpush2.bf16.msra.mxu0 %v6048
    %6127 = vmatprep.subr.bf16.mxu0 0
    %6128 = vmatpush2.bf16.msra.mxu0 %v6047
    %6129 = vmatprep.subr.bf16.mxu0 0
    %6130 = vmatpush2.bf16.msra.mxu0 %v6046
    %6131 = vmatprep.subr.bf16.mxu0 0
    %6132 = vmatpush2.bf16.msra.mxu0 %v6045
    %6133 = vmatprep.mubr.bf16.mxu0 %v5842
    %6134 = vmatmul.mubr.bf16.gmra.mxu0 %v5841
    %v6135 = vpop.f32.mrf.mxu0
    %v6136 = vadd.f32 0.0, %v6135
    %v6137 = vpop.f32.mrf.mxu0
    %v6138 = vpop.f32.mrf.mxu0
    %v6139 = vpop.f32.mrf.mxu0
    %6140 = vdwg.mxu0
    %6141 = vmatprep.subr.bf16.mxu0 0
    %6142 = vmatpush1.bf16.msra.mxu0 %v6060
    %6143 = vmatprep.subr.bf16.mxu0 0
    %6144 = vmatpush1.bf16.msra.mxu0 %v6059
    %6145 = vmatprep.subr.bf16.mxu0 0
    %6146 = vmatpush1.bf16.msra.mxu0 %v6058
    %6147 = vmatprep.subr.bf16.mxu0 0
    %6148 = vmatpush1.bf16.msra.mxu0 %v6057
    %6149 = vmatprep.subr.bf16.mxu0 0
    %6150 = vmatpush1.bf16.msra.mxu0 %v6056
    %6151 = vmatprep.subr.bf16.mxu0 0
    %6152 = vmatpush1.bf16.msra.mxu0 %v6055
    %6153 = vmatprep.subr.bf16.mxu0 0
    %6154 = vmatpush1.bf16.msra.mxu0 %v6054
    %6155 = vmatprep.subr.bf16.mxu0 0
    %6156 = vmatpush1.bf16.msra.mxu0 %v6053
    %6157 = vmatprep.subr.bf16.mxu0 0
    %6158 = vmatpush2.bf16.msra.mxu0 %v6068
    %6159 = vmatprep.subr.bf16.mxu0 0
    %6160 = vmatpush2.bf16.msra.mxu0 %v6067
    %6161 = vmatprep.subr.bf16.mxu0 0
    %6162 = vmatpush2.bf16.msra.mxu0 %v6066
    %6163 = vmatprep.subr.bf16.mxu0 0
    %6164 = vmatpush2.bf16.msra.mxu0 %v6065
    %6165 = vmatprep.subr.bf16.mxu0 0
    %6166 = vmatpush2.bf16.msra.mxu0 %v6064
    %6167 = vmatprep.subr.bf16.mxu0 0
    %6168 = vmatpush2.bf16.msra.mxu0 %v6063
    %6169 = vmatprep.subr.bf16.mxu0 0
    %6170 = vmatpush2.bf16.msra.mxu0 %v6062
    %6171 = vmatprep.subr.bf16.mxu0 0
    %6172 = vmatpush2.bf16.msra.mxu0 %v6061
    %6173 = vmatprep.mubr.bf16.mxu0 %v5844
    %6174 = vmatmul.mubr.bf16.gmra.mxu0 %v5843
    %v6175 = vpop.f32.mrf.mxu0
    %v6176 = vadd.f32 %v6136, %v6175
    %v6177 = vpop.f32.mrf.mxu0
    %v6178 = vpop.f32.mrf.mxu0
    %v6179 = vpop.f32.mrf.mxu0
    %6180 = vdwg.mxu0
    %s6181 = scalar_lea.vmem %s1, 512
    %v6182 = vld [vmem:[%s6181] sm:$0xff]
    %v6183 = vld [vmem:[%s6181 + $0x80] sm:$0x1]
    %6184 = vrot.lane.b32.xlu0 %v6176, 5
    %v6185 = vpop.permute.xlu0 %6184
    %v6186 = vlaneseq
    %v6187 = vshrl.u32 %v6186, 7
    %v6188 = vsub.s32 0, %v6187
    %v6189 = vrot.slane %v6182, %v6188
    %v6190 = vmul.f32 %v6185, %v6189
    %6191 = vrot.lane.b32.xlu0 %v6176, 4
    %v6192 = vpop.permute.xlu0 %6191
    %v6193 = vlaneseq
    %v6194 = vshrl.u32 %v6193, 7
    %v6195 = vsub.s32 1, %v6194
    %v6196 = vrot.slane %v6182, %v6195
    %v6197 = vmul.f32 %v6192, %v6196
    %6198 = vrot.lane.b32.xlu0 %v6176, 3
    %v6199 = vpop.permute.xlu0 %6198
    %v6200 = vlaneseq
    %v6201 = vshrl.u32 %v6200, 7
    %v6202 = vsub.s32 2, %v6201
    %v6203 = vrot.slane %v6182, %v6202
    %v6204 = vmul.f32 %v6199, %v6203
    %6205 = vrot.lane.b32.xlu0 %v6176, 1
    %v6206 = vpop.permute.xlu0 %6205
    %v6207 = vlaneseq
    %v6208 = vshrl.u32 %v6207, 7
    %v6209 = vsub.s32 3, %v6208
    %v6210 = vrot.slane %v6182, %v6209
    %v6211 = vmul.f32 %v6206, %v6210
    %6212 = vrot.lane.b32.xlu0 %v6176, 127
    %v6213 = vpop.permute.xlu0 %6212
    %v6214 = vlaneseq
    %v6215 = vshrl.u32 %v6214, 7
    %v6216 = vsub.s32 5, %v6215
    %v6217 = vrot.slane %v6182, %v6216
    %v6218 = vmul.f32 %v6213, %v6217
    %6219 = vrot.lane.b32.xlu0 %v6176, 125
    %v6220 = vpop.permute.xlu0 %6219
    %v6221 = vlaneseq
    %v6222 = vshrl.u32 %v6221, 7
    %v6223 = vsub.s32 6, %v6222
    %v6224 = vrot.slane %v6182, %v6223
    %v6225 = vmul.f32 %v6220, %v6224
    %6226 = vrot.lane.b32.xlu0 %v6176, 124
    %v6227 = vpop.permute.xlu0 %6226
    %v6228 = vlaneseq
    %v6229 = vshrl.u32 %v6228, 7
    %v6230 = vsub.s32 7, %v6229
    %v6231 = vrot.slane %v6182, %v6230
    %v6232 = vmul.f32 %v6227, %v6231
    %6233 = vrot.lane.b32.xlu0 %v6176, 123
    %v6234 = vpop.permute.xlu0 %6233
    %v6235 = vlaneseq
    %v6236 = vshrl.u32 %v6235, 7
    %v6237 = vsub.s32 0, %v6236
    %v6238 = vrot.slane %v6183, %v6237
    %v6239 = vmul.f32 %v6234, %v6238
    %v6240 = vpack.c.bf16 %v6197, %v6190
    %v6241 = vpack.c.bf16 %v6211, %v6204
    %v6242 = vpack.c.bf16 %v6218, %v6176
    %v6243 = vpack.c.bf16 %v6232, %v6225
    %v6244 = vpack.c.bf16 %v6239, %v6239
    %s6245 = scalar_lea.vmem [#allocation5], 8
    %v6246 = vld [vmem:[%s6245] sm:$0xf]
    %s6247 = scalar_lea.vmem %s3, 16
    %v6248 = vld [vmem:[%s6247] sm:$0xff]
    %6250 = vset.pattern.permute.xlu0 0
    %6251 = vperm.xlu0 %6250, %v6248
    %v6252 = vpop.permute.xlu0 %6251
    %v6255 = vsel %vm1299, %v6246, 0
    %v6258 = vsel %vm1303, %v6244, 0
    %6260 = vmatprep.subr.bf16.mxu0 0
    %6261 = vmatpush1.bf16.msra.mxu0 0
    %6262 = vmatprep.subr.bf16.mxu0 0
    %6263 = vmatpush1.bf16.msra.mxu0 0
    %6264 = vmatprep.subr.bf16.mxu0 0
    %6265 = vmatpush1.bf16.msra.mxu0 0
    %6266 = vmatprep.subr.bf16.mxu0 0
    %6267 = vmatpush1.bf16.msra.mxu0 %v6258
    %6268 = vmatprep.subr.bf16.mxu0 0
    %6269 = vmatpush1.bf16.msra.mxu0 %v6243
    %6270 = vmatprep.subr.bf16.mxu0 0
    %6271 = vmatpush1.bf16.msra.mxu0 %v6242
    %6272 = vmatprep.subr.bf16.mxu0 0
    %6273 = vmatpush1.bf16.msra.mxu0 %v6241
    %6274 = vmatprep.subr.bf16.mxu0 0
    %6275 = vmatpush1.bf16.msra.mxu0 %v6240
    %6276 = vmatprep.subr.bf16.mxu0 0
    %6277 = vmatpush2.bf16.msra.mxu0 0
    %6278 = vmatprep.subr.bf16.mxu0 0
    %6279 = vmatpush2.bf16.msra.mxu0 0
    %6280 = vmatprep.subr.bf16.mxu0 0
    %6281 = vmatpush2.bf16.msra.mxu0 0
    %6282 = vmatprep.subr.bf16.mxu0 0
    %6283 = vmatpush2.bf16.msra.mxu0 0
    %6284 = vmatprep.subr.bf16.mxu0 0
    %6285 = vmatpush2.bf16.msra.mxu0 0
    %6286 = vmatprep.subr.bf16.mxu0 0
    %6287 = vmatpush2.bf16.msra.mxu0 0
    %6288 = vmatprep.subr.bf16.mxu0 0
    %6289 = vmatpush2.bf16.msra.mxu0 0
    %6290 = vmatprep.subr.bf16.mxu0 0
    %6291 = vmatpush2.bf16.msra.mxu0 0
    %6292 = vmatprep.mubr.bf16.mxu0 0
    %6293 = vmatmul.mubr.bf16.gmra.mxu0 %v6255
    %v6294 = vpop.f32.mrf.mxu0
    %v6295 = vadd.f32 %v6252, %v6294
    %v6296 = vpop.f32.mrf.mxu0
    %v6297 = vpop.f32.mrf.mxu0
    %v6298 = vpop.f32.mrf.mxu0
    %6299 = vdwg.mxu0
    %v6300 = vmax.f32 %v6295, 0.0
    %6301 = vrot.lane.b32.xlu0 %v6300, 5
    %v6302 = vpop.permute.xlu0 %6301
    %v6303 = vmul.f32 %v6302, %v6189
    %6304 = vrot.lane.b32.xlu0 %v6300, 4
    %v6305 = vpop.permute.xlu0 %6304
    %v6306 = vmul.f32 %v6305, %v6196
    %6307 = vrot.lane.b32.xlu0 %v6300, 3
    %v6308 = vpop.permute.xlu0 %6307
    %v6309 = vmul.f32 %v6308, %v6203
    %6310 = vrot.lane.b32.xlu0 %v6300, 1
    %v6311 = vpop.permute.xlu0 %6310
    %v6312 = vmul.f32 %v6311, %v6210
    %6313 = vrot.lane.b32.xlu0 %v6300, 127
    %v6314 = vpop.permute.xlu0 %6313
    %v6315 = vmul.f32 %v6314, %v6217
    %6316 = vrot.lane.b32.xlu0 %v6300, 125
    %v6317 = vpop.permute.xlu0 %6316
    %v6318 = vmul.f32 %v6317, %v6224
    %6319 = vrot.lane.b32.xlu0 %v6300, 124
    %v6320 = vpop.permute.xlu0 %6319
    %v6321 = vmul.f32 %v6320, %v6231
    %6322 = vrot.lane.b32.xlu0 %v6300, 123
    %v6323 = vpop.permute.xlu0 %6322
    %v6324 = vmul.f32 %v6323, %v6238
    %v6325 = vpack.c.bf16 %v6306, %v6303
    %v6326 = vpack.c.bf16 %v6312, %v6309
    %v6327 = vpack.c.bf16 %v6315, %v6300
    %v6328 = vpack.c.bf16 %v6321, %v6318
    %v6329 = vpack.c.bf16 %v6324, %v6324
    %s6330 = scalar_lea.vmem [#allocation5], 12
    %v6331 = vld [vmem:[%s6330] sm:$0xf]
    %s6332 = scalar_lea.vmem %s3, 24
    %v6333 = vld [vmem:[%s6332] sm:$0xff]
    %6335 = vset.pattern.permute.xlu0 0
    %6336 = vperm.xlu0 %6335, %v6333
    %v6337 = vpop.permute.xlu0 %6336
    %v6340 = vsel %vm1299, %v6331, 0
    %v6343 = vsel %vm1303, %v6329, 0
    %6345 = vmatprep.subr.bf16.mxu0 0
    %6346 = vmatpush1.bf16.msra.mxu0 0
    %6347 = vmatprep.subr.bf16.mxu0 0
    %6348 = vmatpush1.bf16.msra.mxu0 0
    %6349 = vmatprep.subr.bf16.mxu0 0
    %6350 = vmatpush1.bf16.msra.mxu0 0
    %6351 = vmatprep.subr.bf16.mxu0 0
    %6352 = vmatpush1.bf16.msra.mxu0 %v6343
    %6353 = vmatprep.subr.bf16.mxu0 0
    %6354 = vmatpush1.bf16.msra.mxu0 %v6328
    %6355 = vmatprep.subr.bf16.mxu0 0
    %6356 = vmatpush1.bf16.msra.mxu0 %v6327
    %6357 = vmatprep.subr.bf16.mxu0 0
    %6358 = vmatpush1.bf16.msra.mxu0 %v6326
    %6359 = vmatprep.subr.bf16.mxu0 0
    %6360 = vmatpush1.bf16.msra.mxu0 %v6325
    %6361 = vmatprep.subr.bf16.mxu0 0
    %6362 = vmatpush2.bf16.msra.mxu0 0
    %6363 = vmatprep.subr.bf16.mxu0 0
    %6364 = vmatpush2.bf16.msra.mxu0 0
    %6365 = vmatprep.subr.bf16.mxu0 0
    %6366 = vmatpush2.bf16.msra.mxu0 0
    %6367 = vmatprep.subr.bf16.mxu0 0
    %6368 = vmatpush2.bf16.msra.mxu0 0
    %6369 = vmatprep.subr.bf16.mxu0 0
    %6370 = vmatpush2.bf16.msra.mxu0 0
    %6371 = vmatprep.subr.bf16.mxu0 0
    %6372 = vmatpush2.bf16.msra.mxu0 0
    %6373 = vmatprep.subr.bf16.mxu0 0
    %6374 = vmatpush2.bf16.msra.mxu0 0
    %6375 = vmatprep.subr.bf16.mxu0 0
    %6376 = vmatpush2.bf16.msra.mxu0 0
    %6377 = vmatprep.mubr.bf16.mxu0 0
    %6378 = vmatmul.mubr.bf16.gmra.mxu0 %v6340
    %v6379 = vpop.f32.mrf.mxu0
    %v6380 = vadd.f32 %v6337, %v6379
    %v6381 = vpop.f32.mrf.mxu0
    %v6382 = vpop.f32.mrf.mxu0
    %v6383 = vpop.f32.mrf.mxu0
    %6384 = vdwg.mxu0
    %v6385 = vadd.f32 %v6380, %v6176
    %v6386 = vmax.f32 %v6385, 0.0
    %s6387 = scalar_lea.vmem [#allocation7], 4
    %v6388 = vld [vmem:[%s6387] sm:$0xf]
    %v6389 = vpack.c.bf16 %v6176, %v6176
    %s6390 = scalar_lea.vmem %s5, 8
    %v6391 = vld [vmem:[%s6390] sm:$0xff]
    %6393 = vset.pattern.permute.xlu0 0
    %6394 = vperm.xlu0 %6393, %v6391
    %v6395 = vpop.permute.xlu0 %6394
    %vm6397 = vcmask 64512
    %v6399 = vsel %vm6397, %v6388, 0
    %v6402 = vsel %vm1303, %v6389, 0
    %6404 = vmatprep.subr.bf16.mxu0 0
    %6405 = vmatpush1.bf16.msra.mxu0 0
    %6406 = vmatprep.subr.bf16.mxu0 0
    %6407 = vmatpush1.bf16.msra.mxu0 0
    %6408 = vmatprep.subr.bf16.mxu0 0
    %6409 = vmatpush1.bf16.msra.mxu0 0
    %6410 = vmatprep.subr.bf16.mxu0 0
    %6411 = vmatpush1.bf16.msra.mxu0 0
    %6412 = vmatprep.subr.bf16.mxu0 0
    %6413 = vmatpush1.bf16.msra.mxu0 0
    %6414 = vmatprep.subr.bf16.mxu0 0
    %6415 = vmatpush1.bf16.msra.mxu0 0
    %6416 = vmatprep.subr.bf16.mxu0 0
    %6417 = vmatpush1.bf16.msra.mxu0 0
    %6418 = vmatprep.subr.bf16.mxu0 0
    %6419 = vmatpush1.bf16.msra.mxu0 %v6402
    %6420 = vmatprep.subr.bf16.mxu0 0
    %6421 = vmatpush2.bf16.msra.mxu0 0
    %6422 = vmatprep.subr.bf16.mxu0 0
    %6423 = vmatpush2.bf16.msra.mxu0 0
    %6424 = vmatprep.subr.bf16.mxu0 0
    %6425 = vmatpush2.bf16.msra.mxu0 0
    %6426 = vmatprep.subr.bf16.mxu0 0
    %6427 = vmatpush2.bf16.msra.mxu0 0
    %6428 = vmatprep.subr.bf16.mxu0 0
    %6429 = vmatpush2.bf16.msra.mxu0 0
    %6430 = vmatprep.subr.bf16.mxu0 0
    %6431 = vmatpush2.bf16.msra.mxu0 0
    %6432 = vmatprep.subr.bf16.mxu0 0
    %6433 = vmatpush2.bf16.msra.mxu0 0
    %6434 = vmatprep.subr.bf16.mxu0 0
    %6435 = vmatpush2.bf16.msra.mxu0 0
    %6436 = vmatprep.mubr.bf16.mxu0 0
    %6437 = vmatmul.mubr.bf16.gmra.mxu0 %v6399
    %v6438 = vpop.f32.mrf.mxu0
    %v6439 = vadd.f32 %v6395, %v6438
    %v6440 = vpop.f32.mrf.mxu0
    %v6441 = vpop.f32.mrf.mxu0
    %v6442 = vpop.f32.mrf.mxu0
    %6443 = vdwg.mxu0
    %v6444 = vadd.f32 %v6386, %v6439
    %v6445 = vpack.c.bf16 %v6444, %v6444
    %v6446 = vld [vmem:[#allocation11] sm:$0xff]
    %v6447 = vld [vmem:[#allocation11 + $0x8] sm:$0xff]
    %v6448 = vld [vmem:[#allocation11 + $0x10] sm:$0xff]
    %v6449 = vld [vmem:[#allocation11 + $0x18] sm:$0xff]
    %v6450 = vld [vmem:[#allocation11 + $0x20] sm:$0xff]
    %v6451 = vld [vmem:[#allocation11 + $0x28] sm:$0xff]
    %v6452 = vld [vmem:[#allocation11 + $0x30] sm:$0xff]
    %v6453 = vld [vmem:[#allocation11 + $0x38] sm:$0xff]
    %v6454 = vld [vmem:[#allocation11 + $0x40] sm:$0xff]
    %v6455 = vld [vmem:[#allocation11 + $0x48] sm:$0xff]
    %v6456 = vld [vmem:[#allocation11 + $0x50] sm:$0xff]
    %v6457 = vld [vmem:[#allocation11 + $0x58] sm:$0xff]
    %v6458 = vld [vmem:[#allocation11 + $0x60] sm:$0xff]
    %v6459 = vld [vmem:[#allocation11 + $0x68] sm:$0xff]
    %v6460 = vld [vmem:[#allocation11 + $0x70] sm:$0xff]
    %v6461 = vld [vmem:[#allocation11 + $0x78] sm:$0xff]
    %v6462 = vld [vmem:[#allocation11 + $0x80] sm:$0xff]
    %v6463 = vld [vmem:[#allocation11 + $0x88] sm:$0xff]
    %v6464 = vld [vmem:[#allocation11 + $0x90] sm:$0xff]
    %v6465 = vld [vmem:[#allocation11 + $0x98] sm:$0xff]
    %v6466 = vld [vmem:[#allocation11 + $0xa0] sm:$0xff]
    %v6467 = vld [vmem:[#allocation11 + $0xa8] sm:$0xff]
    %v6468 = vld [vmem:[#allocation11 + $0xb0] sm:$0xff]
    %v6469 = vld [vmem:[#allocation11 + $0xb8] sm:$0xff]
    %v6470 = vld [vmem:[#allocation11 + $0xc0] sm:$0xff]
    %v6471 = vld [vmem:[#allocation11 + $0xc8] sm:$0xff]
    %v6472 = vld [vmem:[#allocation11 + $0xd0] sm:$0xff]
    %v6473 = vld [vmem:[#allocation11 + $0xd8] sm:$0xff]
    %v6474 = vld [vmem:[#allocation11 + $0xe0] sm:$0xff]
    %v6475 = vld [vmem:[#allocation11 + $0xe8] sm:$0xff]
    %v6476 = vld [vmem:[#allocation11 + $0xf0] sm:$0xff]
    %v6477 = vld [vmem:[#allocation11 + $0xf8] sm:$0xff]
    %v6510 = vunpack.c.l.b16 %v6446
    %v6511 = vunpack.c.h.b16 %v6446
    %v6512 = vunpack.c.l.b16 %v6447
    %v6513 = vunpack.c.h.b16 %v6447
    %v6514 = vunpack.c.l.b16 %v6448
    %v6515 = vunpack.c.h.b16 %v6448
    %v6516 = vunpack.c.l.b16 %v6449
    %v6517 = vunpack.c.h.b16 %v6449
    %v6518 = vunpack.c.l.b16 %v6450
    %v6519 = vunpack.c.h.b16 %v6450
    %v6520 = vunpack.c.l.b16 %v6451
    %v6521 = vunpack.c.h.b16 %v6451
    %v6522 = vunpack.c.l.b16 %v6452
    %v6523 = vunpack.c.h.b16 %v6452
    %v6524 = vunpack.c.l.b16 %v6453
    %v6525 = vunpack.c.h.b16 %v6453
    %v6526 = vunpack.c.l.b16 %v6454
    %v6527 = vunpack.c.h.b16 %v6454
    %v6528 = vunpack.c.l.b16 %v6455
    %v6529 = vunpack.c.h.b16 %v6455
    %v6530 = vunpack.c.l.b16 %v6456
    %v6531 = vunpack.c.h.b16 %v6456
    %v6532 = vunpack.c.l.b16 %v6457
    %v6533 = vunpack.c.h.b16 %v6457
    %v6534 = vunpack.c.l.b16 %v6458
    %v6535 = vunpack.c.h.b16 %v6458
    %v6536 = vunpack.c.l.b16 %v6459
    %v6537 = vunpack.c.h.b16 %v6459
    %v6538 = vunpack.c.l.b16 %v6460
    %v6539 = vunpack.c.h.b16 %v6460
    %v6540 = vunpack.c.l.b16 %v6461
    %v6541 = vunpack.c.h.b16 %v6461
    %v6542 = vunpack.c.l.b16 %v6462
    %v6543 = vunpack.c.h.b16 %v6462
    %v6544 = vunpack.c.l.b16 %v6463
    %v6545 = vunpack.c.h.b16 %v6463
    %v6546 = vunpack.c.l.b16 %v6464
    %v6547 = vunpack.c.h.b16 %v6464
    %v6548 = vunpack.c.l.b16 %v6465
    %v6549 = vunpack.c.h.b16 %v6465
    %v6550 = vunpack.c.l.b16 %v6466
    %v6551 = vunpack.c.h.b16 %v6466
    %v6552 = vunpack.c.l.b16 %v6467
    %v6553 = vunpack.c.h.b16 %v6467
    %v6554 = vunpack.c.l.b16 %v6468
    %v6555 = vunpack.c.h.b16 %v6468
    %v6556 = vunpack.c.l.b16 %v6469
    %v6557 = vunpack.c.h.b16 %v6469
    %v6558 = vunpack.c.l.b16 %v6470
    %v6559 = vunpack.c.h.b16 %v6470
    %v6560 = vunpack.c.l.b16 %v6471
    %v6561 = vunpack.c.h.b16 %v6471
    %v6562 = vunpack.c.l.b16 %v6472
    %v6563 = vunpack.c.h.b16 %v6472
    %v6564 = vunpack.c.l.b16 %v6473
    %v6565 = vunpack.c.h.b16 %v6473
    %v6566 = vunpack.c.l.b16 %v6474
    %v6567 = vunpack.c.h.b16 %v6474
    %v6568 = vunpack.c.l.b16 %v6475
    %v6569 = vunpack.c.h.b16 %v6475
    %v6570 = vunpack.c.l.b16 %v6476
    %v6571 = vunpack.c.h.b16 %v6476
    %v6572 = vunpack.c.l.b16 %v6477
    %v6573 = vunpack.c.h.b16 %v6477
    %v6574 = vpack.c.b16 %v6514, %v6510
    %v6575 = vpack.c.b16 %v6515, %v6511
    %v6576 = vpack.c.b16 %v6516, %v6512
    %v6577 = vpack.c.b16 %v6517, %v6513
    %v6578 = vpack.c.b16 %v6522, %v6518
    %v6579 = vpack.c.b16 %v6523, %v6519
    %v6580 = vpack.c.b16 %v6524, %v6520
    %v6581 = vpack.c.b16 %v6525, %v6521
    %v6582 = vpack.c.b16 %v6530, %v6526
    %v6583 = vpack.c.b16 %v6531, %v6527
    %v6584 = vpack.c.b16 %v6532, %v6528
    %v6585 = vpack.c.b16 %v6533, %v6529
    %v6586 = vpack.c.b16 %v6538, %v6534
    %v6587 = vpack.c.b16 %v6539, %v6535
    %v6588 = vpack.c.b16 %v6540, %v6536
    %v6589 = vpack.c.b16 %v6541, %v6537
    %v6590 = vpack.c.b16 %v6546, %v6542
    %v6591 = vpack.c.b16 %v6547, %v6543
    %v6592 = vpack.c.b16 %v6548, %v6544
    %v6593 = vpack.c.b16 %v6549, %v6545
    %v6594 = vpack.c.b16 %v6554, %v6550
    %v6595 = vpack.c.b16 %v6555, %v6551
    %v6596 = vpack.c.b16 %v6556, %v6552
    %v6597 = vpack.c.b16 %v6557, %v6553
    %v6598 = vpack.c.b16 %v6562, %v6558
    %v6599 = vpack.c.b16 %v6563, %v6559
    %v6600 = vpack.c.b16 %v6564, %v6560
    %v6601 = vpack.c.b16 %v6565, %v6561
    %v6602 = vpack.c.b16 %v6570, %v6566
    %v6603 = vpack.c.b16 %v6571, %v6567
    %v6604 = vpack.c.b16 %v6572, %v6568
    %v6605 = vpack.c.b16 %v6573, %v6569
    %6638 = vmatprep.subr.bf16.mxu0 %v6603
    %6639 = vmatpush1.bf16.msra.mxu0 %v6602
    %6640 = vmatprep.subr.bf16.mxu0 %v6599
    %6641 = vmatpush1.bf16.msra.mxu0 %v6598
    %6642 = vmatprep.subr.bf16.mxu0 %v6595
    %6643 = vmatpush1.bf16.msra.mxu0 %v6594
    %6644 = vmatprep.subr.bf16.mxu0 %v6591
    %6645 = vmatpush1.bf16.msra.mxu0 %v6590
    %6646 = vmatprep.subr.bf16.mxu0 %v6587
    %6647 = vmatpush1.bf16.msra.mxu0 %v6586
    %6648 = vmatprep.subr.bf16.mxu0 %v6583
    %6649 = vmatpush1.bf16.msra.mxu0 %v6582
    %6650 = vmatprep.subr.bf16.mxu0 %v6579
    %6651 = vmatpush1.bf16.msra.mxu0 %v6578
    %6652 = vmatprep.subr.bf16.mxu0 %v6575
    %6653 = vmatpush1.bf16.msra.mxu0 %v6574
    %6654 = vmatprep.subr.bf16.mxu0 0
    %6655 = vmatpush2.bf16.msra.mxu0 0
    %6656 = vmatprep.subr.bf16.mxu0 0
    %6657 = vmatpush2.bf16.msra.mxu0 0
    %6658 = vmatprep.subr.bf16.mxu0 0
    %6659 = vmatpush2.bf16.msra.mxu0 0
    %6660 = vmatprep.subr.bf16.mxu0 0
    %6661 = vmatpush2.bf16.msra.mxu0 0
    %6662 = vmatprep.subr.bf16.mxu0 0
    %6663 = vmatpush2.bf16.msra.mxu0 0
    %6664 = vmatprep.subr.bf16.mxu0 0
    %6665 = vmatpush2.bf16.msra.mxu0 0
    %6666 = vmatprep.subr.bf16.mxu0 0
    %6667 = vmatpush2.bf16.msra.mxu0 0
    %6668 = vmatprep.subr.bf16.mxu0 0
    %6669 = vmatpush2.bf16.msra.mxu0 0
    %6670 = vmatprep.mubr.bf16.mxu0 0
    %6671 = vmatmul.mubr.bf16.gmra.mxu0 %v6445
    %v6672 = vpop.f32.mrf.mxu0
    %v6673 = vadd.f32 0.0, %v6672
    %v6674 = vpop.f32.mrf.mxu0
    %v6675 = vadd.f32 0.0, %v6674
    %v6676 = vpop.f32.mrf.mxu0
    %v6677 = vpop.f32.mrf.mxu0
    %6678 = vdwg.mxu0
    %6679 = vmatprep.subr.bf16.mxu0 %v6605
    %6680 = vmatpush1.bf16.msra.mxu0 %v6604
    %6681 = vmatprep.subr.bf16.mxu0 %v6601
    %6682 = vmatpush1.bf16.msra.mxu0 %v6600
    %6683 = vmatprep.subr.bf16.mxu0 %v6597
    %6684 = vmatpush1.bf16.msra.mxu0 %v6596
    %6685 = vmatprep.subr.bf16.mxu0 %v6593
    %6686 = vmatpush1.bf16.msra.mxu0 %v6592
    %6687 = vmatprep.subr.bf16.mxu0 %v6589
    %6688 = vmatpush1.bf16.msra.mxu0 %v6588
    %6689 = vmatprep.subr.bf16.mxu0 %v6585
    %6690 = vmatpush1.bf16.msra.mxu0 %v6584
    %6691 = vmatprep.subr.bf16.mxu0 %v6581
    %6692 = vmatpush1.bf16.msra.mxu0 %v6580
    %6693 = vmatprep.subr.bf16.mxu0 %v6577
    %6694 = vmatpush1.bf16.msra.mxu0 %v6576
    %6695 = vmatprep.subr.bf16.mxu0 0
    %6696 = vmatpush2.bf16.msra.mxu0 0
    %6697 = vmatprep.subr.bf16.mxu0 0
    %6698 = vmatpush2.bf16.msra.mxu0 0
    %6699 = vmatprep.subr.bf16.mxu0 0
    %6700 = vmatpush2.bf16.msra.mxu0 0
    %6701 = vmatprep.subr.bf16.mxu0 0
    %6702 = vmatpush2.bf16.msra.mxu0 0
    %6703 = vmatprep.subr.bf16.mxu0 0
    %6704 = vmatpush2.bf16.msra.mxu0 0
    %6705 = vmatprep.subr.bf16.mxu0 0
    %6706 = vmatpush2.bf16.msra.mxu0 0
    %6707 = vmatprep.subr.bf16.mxu0 0
    %6708 = vmatpush2.bf16.msra.mxu0 0
    %6709 = vmatprep.subr.bf16.mxu0 0
    %6710 = vmatpush2.bf16.msra.mxu0 0
    %6711 = vmatprep.mubr.bf16.mxu0 0
    %6712 = vmatmul.mubr.bf16.gmra.mxu0 %v6445
    %v6713 = vpop.f32.mrf.mxu0
    %v6714 = vadd.f32 0.0, %v6713
    %v6715 = vpop.f32.mrf.mxu0
    %v6716 = vadd.f32 0.0, %v6715
    %v6717 = vpop.f32.mrf.mxu0
    %v6718 = vpop.f32.mrf.mxu0
    %6719 = vdwg.mxu0
    %6720 = vrot.lane.b32.xlu0 %v6673, 9
    %v6721 = vpop.permute.xlu0 %6720
    %6722 = vrot.lane.b32.xlu0 %v6675, 9
    %v6723 = vpop.permute.xlu0 %6722
    %6724 = vrot.lane.b32.xlu0 %v6714, 9
    %v6725 = vpop.permute.xlu0 %6724
    %6726 = vrot.lane.b32.xlu0 %v6716, 9
    %v6727 = vpop.permute.xlu0 %6726
    %v6728 = vsel %vm5457, %v6725, %v6727
    %v6729 = vsel %vm5457, %v6723, %v6725
    %v6730 = vsel %vm5457, %v6721, %v6723
    %v6731 = vsel %vm5457, %v6727, %v6721
    %v6732 = vmul.f32 %v6731, %v5465
    %v6733 = vmul.f32 %v6730, %v5469
    %v6734 = vmul.f32 %v6729, %v5473
    %v6735 = vmul.f32 %v6728, %v5477
    %6736 = vrot.lane.b32.xlu0 %v6673, 8
    %v6737 = vpop.permute.xlu0 %6736
    %6738 = vrot.lane.b32.xlu0 %v6675, 8
    %v6739 = vpop.permute.xlu0 %6738
    %6740 = vrot.lane.b32.xlu0 %v6714, 8
    %v6741 = vpop.permute.xlu0 %6740
    %6742 = vrot.lane.b32.xlu0 %v6716, 8
    %v6743 = vpop.permute.xlu0 %6742
    %v6744 = vsel %vm5490, %v6741, %v6743
    %v6745 = vsel %vm5490, %v6739, %v6741
    %v6746 = vsel %vm5490, %v6737, %v6739
    %v6747 = vsel %vm5490, %v6743, %v6737
    %v6748 = vmul.f32 %v6747, %v5498
    %v6749 = vmul.f32 %v6746, %v5502
    %v6750 = vmul.f32 %v6745, %v5506
    %v6751 = vmul.f32 %v6744, %v5510
    %6752 = vrot.lane.b32.xlu0 %v6673, 7
    %v6753 = vpop.permute.xlu0 %6752
    %6754 = vrot.lane.b32.xlu0 %v6675, 7
    %v6755 = vpop.permute.xlu0 %6754
    %6756 = vrot.lane.b32.xlu0 %v6714, 7
    %v6757 = vpop.permute.xlu0 %6756
    %6758 = vrot.lane.b32.xlu0 %v6716, 7
    %v6759 = vpop.permute.xlu0 %6758
    %v6760 = vsel %vm5523, %v6757, %v6759
    %v6761 = vsel %vm5523, %v6755, %v6757
    %v6762 = vsel %vm5523, %v6753, %v6755
    %v6763 = vsel %vm5523, %v6759, %v6753
    %v6764 = vmul.f32 %v6763, %v5531
    %v6765 = vmul.f32 %v6762, %v5535
    %v6766 = vmul.f32 %v6761, %v5539
    %v6767 = vmul.f32 %v6760, %v5543
    %6768 = vrot.lane.b32.xlu0 %v6673, 1
    %v6769 = vpop.permute.xlu0 %6768
    %6770 = vrot.lane.b32.xlu0 %v6675, 1
    %v6771 = vpop.permute.xlu0 %6770
    %6772 = vrot.lane.b32.xlu0 %v6714, 1
    %v6773 = vpop.permute.xlu0 %6772
    %6774 = vrot.lane.b32.xlu0 %v6716, 1
    %v6775 = vpop.permute.xlu0 %6774
    %v6776 = vsel %vm599, %v6773, %v6775
    %v6777 = vsel %vm599, %v6771, %v6773
    %v6778 = vsel %vm599, %v6769, %v6771
    %v6779 = vsel %vm599, %v6775, %v6769
    %v6780 = vmul.f32 %v6779, %v5563
    %v6781 = vmul.f32 %v6778, %v5567
    %v6782 = vmul.f32 %v6777, %v5571
    %v6783 = vmul.f32 %v6776, %v5575
    %6784 = vrot.lane.b32.xlu0 %v6673, 127
    %v6785 = vpop.permute.xlu0 %6784
    %6786 = vrot.lane.b32.xlu0 %v6675, 127
    %v6787 = vpop.permute.xlu0 %6786
    %6788 = vrot.lane.b32.xlu0 %v6714, 127
    %v6789 = vpop.permute.xlu0 %6788
    %6790 = vrot.lane.b32.xlu0 %v6716, 127
    %v6791 = vpop.permute.xlu0 %6790
    %v6792 = vsel %vm728, %v6789, %v6791
    %v6793 = vsel %vm728, %v6787, %v6789
    %v6794 = vsel %vm728, %v6785, %v6787
    %v6795 = vsel %vm728, %v6791, %v6785
    %v6796 = vmul.f32 %v6794, %v5595
    %v6797 = vmul.f32 %v6793, %v5599
    %v6798 = vmul.f32 %v6792, %v5603
    %v6799 = vmul.f32 %v6795, %v5607
    %6800 = vrot.lane.b32.xlu0 %v6673, 121
    %v6801 = vpop.permute.xlu0 %6800
    %6802 = vrot.lane.b32.xlu0 %v6675, 121
    %v6803 = vpop.permute.xlu0 %6802
    %6804 = vrot.lane.b32.xlu0 %v6714, 121
    %v6805 = vpop.permute.xlu0 %6804
    %6806 = vrot.lane.b32.xlu0 %v6716, 121
    %v6807 = vpop.permute.xlu0 %6806
    %v6808 = vsel %vm5620, %v6805, %v6807
    %v6809 = vsel %vm5620, %v6803, %v6805
    %v6810 = vsel %vm5620, %v6801, %v6803
    %v6811 = vsel %vm5620, %v6807, %v6801
    %v6812 = vmul.f32 %v6810, %v5628
    %v6813 = vmul.f32 %v6809, %v5632
    %v6814 = vmul.f32 %v6808, %v5636
    %v6815 = vmul.f32 %v6811, %v5640
    %6816 = vrot.lane.b32.xlu0 %v6673, 120
    %v6817 = vpop.permute.xlu0 %6816
    %6818 = vrot.lane.b32.xlu0 %v6675, 120
    %v6819 = vpop.permute.xlu0 %6818
    %6820 = vrot.lane.b32.xlu0 %v6714, 120
    %v6821 = vpop.permute.xlu0 %6820
    %6822 = vrot.lane.b32.xlu0 %v6716, 120
    %v6823 = vpop.permute.xlu0 %6822
    %v6824 = vsel %vm5653, %v6821, %v6823
    %v6825 = vsel %vm5653, %v6819, %v6821
    %v6826 = vsel %vm5653, %v6817, %v6819
    %v6827 = vsel %vm5653, %v6823, %v6817
    %v6828 = vmul.f32 %v6826, %v5661
    %v6829 = vmul.f32 %v6825, %v5665
    %v6830 = vmul.f32 %v6824, %v5669
    %v6831 = vmul.f32 %v6827, %v5673
    %6832 = vrot.lane.b32.xlu0 %v6673, 119
    %v6833 = vpop.permute.xlu0 %6832
    %6834 = vrot.lane.b32.xlu0 %v6675, 119
    %v6835 = vpop.permute.xlu0 %6834
    %6836 = vrot.lane.b32.xlu0 %v6714, 119
    %v6837 = vpop.permute.xlu0 %6836
    %6838 = vrot.lane.b32.xlu0 %v6716, 119
    %v6839 = vpop.permute.xlu0 %6838
    %v6840 = vsel %vm5686, %v6837, %v6839
    %v6841 = vsel %vm5686, %v6835, %v6837
    %v6842 = vsel %vm5686, %v6833, %v6835
    %v6843 = vsel %vm5686, %v6839, %v6833
    %v6844 = vmul.f32 %v6842, %v5694
    %v6845 = vmul.f32 %v6841, %v5698
    %v6846 = vmul.f32 %v6840, %v5702
    %v6847 = vmul.f32 %v6843, %v5706
    %v6848 = vpack.c.bf16 %v6748, %v6732
    %v6849 = vpack.c.bf16 %v6749, %v6733
    %v6850 = vpack.c.bf16 %v6750, %v6734
    %v6851 = vpack.c.bf16 %v6751, %v6735
    %v6852 = vpack.c.bf16 %v6780, %v6764
    %v6853 = vpack.c.bf16 %v6781, %v6765
    %v6854 = vpack.c.bf16 %v6782, %v6766
    %v6855 = vpack.c.bf16 %v6783, %v6767
    %v6856 = vpack.c.bf16 %v6796, %v6673
    %v6857 = vpack.c.bf16 %v6797, %v6675
    %v6858 = vpack.c.bf16 %v6798, %v6714
    %v6859 = vpack.c.bf16 %v6799, %v6716
    %v6860 = vpack.c.bf16 %v6828, %v6812
    %v6861 = vpack.c.bf16 %v6829, %v6813
    %v6862 = vpack.c.bf16 %v6830, %v6814
    %v6863 = vpack.c.bf16 %v6831, %v6815
    %v6864 = vpack.c.bf16 %v6844, %v6844
    %v6865 = vpack.c.bf16 %v6845, %v6845
    %v6866 = vpack.c.bf16 %v6846, %v6846
    %v6867 = vpack.c.bf16 %v6847, %v6847
    %s6868 = scalar_lea.vmem [#allocation5], 16
    %v6869 = vld [vmem:[%s6868] sm:$0xf]
    %s6870 = scalar_lea.vmem %s3, 32
    %v6871 = vld [vmem:[%s6870] sm:$0xff]
    %6873 = vset.pattern.permute.xlu0 0
    %6874 = vperm.xlu0 %6873, %v6871
    %v6875 = vpop.permute.xlu0 %6874
    %v6878 = vsel %vm1299, %v6869, 0
    %v6881 = vsel %vm1303, %v6864, 0
    %v6884 = vsel %vm1303, %v6865, 0
    %v6887 = vsel %vm1303, %v6866, 0
    %v6890 = vsel %vm1303, %v6867, 0
    %6892 = vmatprep.subr.bf16.mxu0 0
    %6893 = vmatpush1.bf16.msra.mxu0 0
    %6894 = vmatprep.subr.bf16.mxu0 0
    %6895 = vmatpush1.bf16.msra.mxu0 0
    %6896 = vmatprep.subr.bf16.mxu0 0
    %6897 = vmatpush1.bf16.msra.mxu0 0
    %6898 = vmatprep.subr.bf16.mxu0 %v6884
    %6899 = vmatpush1.bf16.msra.mxu0 %v6881
    %6900 = vmatprep.subr.bf16.mxu0 %v6861
    %6901 = vmatpush1.bf16.msra.mxu0 %v6860
    %6902 = vmatprep.subr.bf16.mxu0 %v6857
    %6903 = vmatpush1.bf16.msra.mxu0 %v6856
    %6904 = vmatprep.subr.bf16.mxu0 %v6853
    %6905 = vmatpush1.bf16.msra.mxu0 %v6852
    %6906 = vmatprep.subr.bf16.mxu0 %v6849
    %6907 = vmatpush1.bf16.msra.mxu0 %v6848
    %6908 = vmatprep.subr.bf16.mxu0 0
    %6909 = vmatpush2.bf16.msra.mxu0 0
    %6910 = vmatprep.subr.bf16.mxu0 0
    %6911 = vmatpush2.bf16.msra.mxu0 0
    %6912 = vmatprep.subr.bf16.mxu0 0
    %6913 = vmatpush2.bf16.msra.mxu0 0
    %6914 = vmatprep.subr.bf16.mxu0 0
    %6915 = vmatpush2.bf16.msra.mxu0 0
    %6916 = vmatprep.subr.bf16.mxu0 0
    %6917 = vmatpush2.bf16.msra.mxu0 0
    %6918 = vmatprep.subr.bf16.mxu0 0
    %6919 = vmatpush2.bf16.msra.mxu0 0
    %6920 = vmatprep.subr.bf16.mxu0 0
    %6921 = vmatpush2.bf16.msra.mxu0 0
    %6922 = vmatprep.subr.bf16.mxu0 0
    %6923 = vmatpush2.bf16.msra.mxu0 0
    %6924 = vmatprep.mubr.bf16.mxu0 0
    %6925 = vmatmul.mubr.bf16.gmra.mxu0 %v6878
    %v6926 = vpop.f32.mrf.mxu0
    %v6927 = vadd.f32 %v6875, %v6926
    %v6928 = vpop.f32.mrf.mxu0
    %v6929 = vadd.f32 %v6875, %v6928
    %v6930 = vpop.f32.mrf.mxu0
    %v6931 = vpop.f32.mrf.mxu0
    %6932 = vdwg.mxu0
    %6933 = vmatprep.subr.bf16.mxu0 0
    %6934 = vmatpush1.bf16.msra.mxu0 0
    %6935 = vmatprep.subr.bf16.mxu0 0
    %6936 = vmatpush1.bf16.msra.mxu0 0
    %6937 = vmatprep.subr.bf16.mxu0 0
    %6938 = vmatpush1.bf16.msra.mxu0 0
    %6939 = vmatprep.subr.bf16.mxu0 %v6890
    %6940 = vmatpush1.bf16.msra.mxu0 %v6887
    %6941 = vmatprep.subr.bf16.mxu0 %v6863
    %6942 = vmatpush1.bf16.msra.mxu0 %v6862
    %6943 = vmatprep.subr.bf16.mxu0 %v6859
    %6944 = vmatpush1.bf16.msra.mxu0 %v6858
    %6945 = vmatprep.subr.bf16.mxu0 %v6855
    %6946 = vmatpush1.bf16.msra.mxu0 %v6854
    %6947 = vmatprep.subr.bf16.mxu0 %v6851
    %6948 = vmatpush1.bf16.msra.mxu0 %v6850
    %6949 = vmatprep.subr.bf16.mxu0 0
    %6950 = vmatpush2.bf16.msra.mxu0 0
    %6951 = vmatprep.subr.bf16.mxu0 0
    %6952 = vmatpush2.bf16.msra.mxu0 0
    %6953 = vmatprep.subr.bf16.mxu0 0
    %6954 = vmatpush2.bf16.msra.mxu0 0
    %6955 = vmatprep.subr.bf16.mxu0 0
    %6956 = vmatpush2.bf16.msra.mxu0 0
    %6957 = vmatprep.subr.bf16.mxu0 0
    %6958 = vmatpush2.bf16.msra.mxu0 0
    %6959 = vmatprep.subr.bf16.mxu0 0
    %6960 = vmatpush2.bf16.msra.mxu0 0
    %6961 = vmatprep.subr.bf16.mxu0 0
    %6962 = vmatpush2.bf16.msra.mxu0 0
    %6963 = vmatprep.subr.bf16.mxu0 0
    %6964 = vmatpush2.bf16.msra.mxu0 0
    %6965 = vmatprep.mubr.bf16.mxu0 0
    %6966 = vmatmul.mubr.bf16.gmra.mxu0 %v6878
    %v6967 = vpop.f32.mrf.mxu0
    %v6968 = vadd.f32 %v6875, %v6967
    %v6969 = vpop.f32.mrf.mxu0
    %v6970 = vadd.f32 %v6875, %v6969
    %v6971 = vpop.f32.mrf.mxu0
    %v6972 = vpop.f32.mrf.mxu0
    %6973 = vdwg.mxu0
    %v6974 = vmax.f32 %v6927, 0.0
    %v6975 = vmax.f32 %v6929, 0.0
    %v6976 = vmax.f32 %v6968, 0.0
    %v6977 = vmax.f32 %v6970, 0.0
    %v6978 = vld [vmem:[#allocation7] sm:$0xf]
    %v6979 = vpack.c.bf16 %v5106, %v5106
    %v6980 = vpack.c.bf16 %v5108, %v5108
    %v6981 = vpack.c.bf16 %v5434, %v5434
    %v6982 = vpack.c.bf16 %v5436, %v5436
    %v6983 = vld [vmem:[%s5] sm:$0xff]
    %6985 = vset.pattern.permute.xlu0 0
    %6986 = vperm.xlu0 %6985, %v6983
    %v6987 = vpop.permute.xlu0 %6986
    %v6990 = vsel %vm6397, %v6978, 0
    %v6993 = vsel %vm1303, %v6979, 0
    %v6996 = vsel %vm1303, %v6980, 0
    %v6999 = vsel %vm1303, %v6981, 0
    %v7002 = vsel %vm1303, %v6982, 0
    %7004 = vmatprep.subr.bf16.mxu0 0
    %7005 = vmatpush1.bf16.msra.mxu0 0
    %7006 = vmatprep.subr.bf16.mxu0 0
    %7007 = vmatpush1.bf16.msra.mxu0 0
    %7008 = vmatprep.subr.bf16.mxu0 0
    %7009 = vmatpush1.bf16.msra.mxu0 0
    %7010 = vmatprep.subr.bf16.mxu0 0
    %7011 = vmatpush1.bf16.msra.mxu0 0
    %7012 = vmatprep.subr.bf16.mxu0 0
    %7013 = vmatpush1.bf16.msra.mxu0 0
    %7014 = vmatprep.subr.bf16.mxu0 0
    %7015 = vmatpush1.bf16.msra.mxu0 0
    %7016 = vmatprep.subr.bf16.mxu0 0
    %7017 = vmatpush1.bf16.msra.mxu0 0
    %7018 = vmatprep.subr.bf16.mxu0 %v6996
    %7019 = vmatpush1.bf16.msra.mxu0 %v6993
    %7020 = vmatprep.subr.bf16.mxu0 0
    %7021 = vmatpush2.bf16.msra.mxu0 0
    %7022 = vmatprep.subr.bf16.mxu0 0
    %7023 = vmatpush2.bf16.msra.mxu0 0
    %7024 = vmatprep.subr.bf16.mxu0 0
    %7025 = vmatpush2.bf16.msra.mxu0 0
    %7026 = vmatprep.subr.bf16.mxu0 0
    %7027 = vmatpush2.bf16.msra.mxu0 0
    %7028 = vmatprep.subr.bf16.mxu0 0
    %7029 = vmatpush2.bf16.msra.mxu0 0
    %7030 = vmatprep.subr.bf16.mxu0 0
    %7031 = vmatpush2.bf16.msra.mxu0 0
    %7032 = vmatprep.subr.bf16.mxu0 0
    %7033 = vmatpush2.bf16.msra.mxu0 0
    %7034 = vmatprep.subr.bf16.mxu0 0
    %7035 = vmatpush2.bf16.msra.mxu0 0
    %7036 = vmatprep.mubr.bf16.mxu0 0
    %7037 = vmatmul.mubr.bf16.gmra.mxu0 %v6990
    %v7038 = vpop.f32.mrf.mxu0
    %v7039 = vadd.f32 %v6987, %v7038
    %v7040 = vpop.f32.mrf.mxu0
    %v7041 = vadd.f32 %v6987, %v7040
    %v7042 = vpop.f32.mrf.mxu0
    %v7043 = vpop.f32.mrf.mxu0
    %7044 = vdwg.mxu0
    %7045 = vmatprep.subr.bf16.mxu0 0
    %7046 = vmatpush1.bf16.msra.mxu0 0
    %7047 = vmatprep.subr.bf16.mxu0 0
    %7048 = vmatpush1.bf16.msra.mxu0 0
    %7049 = vmatprep.subr.bf16.mxu0 0
    %7050 = vmatpush1.bf16.msra.mxu0 0
    %7051 = vmatprep.subr.bf16.mxu0 0
    %7052 = vmatpush1.bf16.msra.mxu0 0
    %7053 = vmatprep.subr.bf16.mxu0 0
    %7054 = vmatpush1.bf16.msra.mxu0 0
    %7055 = vmatprep.subr.bf16.mxu0 0
    %7056 = vmatpush1.bf16.msra.mxu0 0
    %7057 = vmatprep.subr.bf16.mxu0 0
    %7058 = vmatpush1.bf16.msra.mxu0 0
    %7059 = vmatprep.subr.bf16.mxu0 %v7002
    %7060 = vmatpush1.bf16.msra.mxu0 %v6999
    %7061 = vmatprep.subr.bf16.mxu0 0
    %7062 = vmatpush2.bf16.msra.mxu0 0
    %7063 = vmatprep.subr.bf16.mxu0 0
    %7064 = vmatpush2.bf16.msra.mxu0 0
    %7065 = vmatprep.subr.bf16.mxu0 0
    %7066 = vmatpush2.bf16.msra.mxu0 0
    %7067 = vmatprep.subr.bf16.mxu0 0
    %7068 = vmatpush2.bf16.msra.mxu0 0
    %7069 = vmatprep.subr.bf16.mxu0 0
    %7070 = vmatpush2.bf16.msra.mxu0 0
    %7071 = vmatprep.subr.bf16.mxu0 0
    %7072 = vmatpush2.bf16.msra.mxu0 0
    %7073 = vmatprep.subr.bf16.mxu0 0
    %7074 = vmatpush2.bf16.msra.mxu0 0
    %7075 = vmatprep.subr.bf16.mxu0 0
    %7076 = vmatpush2.bf16.msra.mxu0 0
    %7077 = vmatprep.mubr.bf16.mxu0 0
    %7078 = vmatmul.mubr.bf16.gmra.mxu0 %v6990
    %v7079 = vpop.f32.mrf.mxu0
    %v7080 = vadd.f32 %v6987, %v7079
    %v7081 = vpop.f32.mrf.mxu0
    %v7082 = vadd.f32 %v6987, %v7081
    %v7083 = vpop.f32.mrf.mxu0
    %v7084 = vpop.f32.mrf.mxu0
    %7085 = vdwg.mxu0
    %v7086 = vadd.f32 %v6974, %v7039
    %v7087 = vadd.f32 %v6975, %v7041
    %v7088 = vadd.f32 %v6976, %v7080
    %v7089 = vadd.f32 %v6977, %v7082
    %v7090 = vpack.c.bf16 %v7086, %v7086
    %v7091 = vpack.c.bf16 %v7087, %v7087
    %v7092 = vpack.c.bf16 %v7088, %v7088
    %v7093 = vpack.c.bf16 %v7089, %v7089
    %v7094 = vld [vmem:[#allocation13] sm:$0xff]
    %v7095 = vld [vmem:[#allocation13 + $0x8] sm:$0xff]
    %v7096 = vld [vmem:[#allocation13 + $0x10] sm:$0xff]
    %v7097 = vld [vmem:[#allocation13 + $0x18] sm:$0xff]
    %v7098 = vld [vmem:[#allocation13 + $0x20] sm:$0xff]
    %v7099 = vld [vmem:[#allocation13 + $0x28] sm:$0xff]
    %v7100 = vld [vmem:[#allocation13 + $0x30] sm:$0xff]
    %v7101 = vld [vmem:[#allocation13 + $0x38] sm:$0xff]
    %v7102 = vld [vmem:[#allocation13 + $0x40] sm:$0xff]
    %v7103 = vld [vmem:[#allocation13 + $0x48] sm:$0xff]
    %v7104 = vld [vmem:[#allocation13 + $0x50] sm:$0xff]
    %v7105 = vld [vmem:[#allocation13 + $0x58] sm:$0xff]
    %v7106 = vld [vmem:[#allocation13 + $0x60] sm:$0xff]
    %v7107 = vld [vmem:[#allocation13 + $0x68] sm:$0xff]
    %v7108 = vld [vmem:[#allocation13 + $0x70] sm:$0xff]
    %v7109 = vld [vmem:[#allocation13 + $0x78] sm:$0xff]
    %v7110 = vld [vmem:[#allocation13 + $0x80] sm:$0xff]
    %v7111 = vld [vmem:[#allocation13 + $0x88] sm:$0xff]
    %v7112 = vld [vmem:[#allocation13 + $0x90] sm:$0xff]
    %v7113 = vld [vmem:[#allocation13 + $0x98] sm:$0xff]
    %v7114 = vld [vmem:[#allocation13 + $0xa0] sm:$0xff]
    %v7115 = vld [vmem:[#allocation13 + $0xa8] sm:$0xff]
    %v7116 = vld [vmem:[#allocation13 + $0xb0] sm:$0xff]
    %v7117 = vld [vmem:[#allocation13 + $0xb8] sm:$0xff]
    %v7118 = vld [vmem:[#allocation13 + $0xc0] sm:$0xff]
    %v7119 = vld [vmem:[#allocation13 + $0xc8] sm:$0xff]
    %v7120 = vld [vmem:[#allocation13 + $0xd0] sm:$0xff]
    %v7121 = vld [vmem:[#allocation13 + $0xd8] sm:$0xff]
    %v7122 = vld [vmem:[#allocation13 + $0xe0] sm:$0xff]
    %v7123 = vld [vmem:[#allocation13 + $0xe8] sm:$0xff]
    %v7124 = vld [vmem:[#allocation13 + $0xf0] sm:$0xff]
    %v7125 = vld [vmem:[#allocation13 + $0xf8] sm:$0xff]
    %v7126 = vld [vmem:[#allocation13 + $0x100] sm:$0xff]
    %v7127 = vld [vmem:[#allocation13 + $0x108] sm:$0xff]
    %v7128 = vld [vmem:[#allocation13 + $0x110] sm:$0xff]
    %v7129 = vld [vmem:[#allocation13 + $0x118] sm:$0xff]
    %v7130 = vld [vmem:[#allocation13 + $0x120] sm:$0xff]
    %v7131 = vld [vmem:[#allocation13 + $0x128] sm:$0xff]
    %v7132 = vld [vmem:[#allocation13 + $0x130] sm:$0xff]
    %v7133 = vld [vmem:[#allocation13 + $0x138] sm:$0xff]
    %v7134 = vld [vmem:[#allocation13 + $0x140] sm:$0xff]
    %v7135 = vld [vmem:[#allocation13 + $0x148] sm:$0xff]
    %v7136 = vld [vmem:[#allocation13 + $0x150] sm:$0xff]
    %v7137 = vld [vmem:[#allocation13 + $0x158] sm:$0xff]
    %v7138 = vld [vmem:[#allocation13 + $0x160] sm:$0xff]
    %v7139 = vld [vmem:[#allocation13 + $0x168] sm:$0xff]
    %v7140 = vld [vmem:[#allocation13 + $0x170] sm:$0xff]
    %v7141 = vld [vmem:[#allocation13 + $0x178] sm:$0xff]
    %v7142 = vld [vmem:[#allocation13 + $0x180] sm:$0xff]
    %v7143 = vld [vmem:[#allocation13 + $0x188] sm:$0xff]
    %v7144 = vld [vmem:[#allocation13 + $0x190] sm:$0xff]
    %v7145 = vld [vmem:[#allocation13 + $0x198] sm:$0xff]
    %v7146 = vld [vmem:[#allocation13 + $0x1a0] sm:$0xff]
    %v7147 = vld [vmem:[#allocation13 + $0x1a8] sm:$0xff]
    %v7148 = vld [vmem:[#allocation13 + $0x1b0] sm:$0xff]
    %v7149 = vld [vmem:[#allocation13 + $0x1b8] sm:$0xff]
    %v7150 = vld [vmem:[#allocation13 + $0x1c0] sm:$0xff]
    %v7151 = vld [vmem:[#allocation13 + $0x1c8] sm:$0xff]
    %v7152 = vld [vmem:[#allocation13 + $0x1d0] sm:$0xff]
    %v7153 = vld [vmem:[#allocation13 + $0x1d8] sm:$0xff]
    %v7154 = vld [vmem:[#allocation13 + $0x1e0] sm:$0xff]
    %v7155 = vld [vmem:[#allocation13 + $0x1e8] sm:$0xff]
    %v7156 = vld [vmem:[#allocation13 + $0x1f0] sm:$0xff]
    %v7157 = vld [vmem:[#allocation13 + $0x1f8] sm:$0xff]
    %v7158 = vld [vmem:[#allocation13 + $0x200] sm:$0xff]
    %v7159 = vld [vmem:[#allocation13 + $0x208] sm:$0xff]
    %v7160 = vld [vmem:[#allocation13 + $0x210] sm:$0xff]
    %v7161 = vld [vmem:[#allocation13 + $0x218] sm:$0xff]
    %v7162 = vld [vmem:[#allocation13 + $0x220] sm:$0xff]
    %v7163 = vld [vmem:[#allocation13 + $0x228] sm:$0xff]
    %v7164 = vld [vmem:[#allocation13 + $0x230] sm:$0xff]
    %v7165 = vld [vmem:[#allocation13 + $0x238] sm:$0xff]
    %v7166 = vld [vmem:[#allocation13 + $0x240] sm:$0xff]
    %v7167 = vld [vmem:[#allocation13 + $0x248] sm:$0xff]
    %v7168 = vld [vmem:[#allocation13 + $0x250] sm:$0xff]
    %v7169 = vld [vmem:[#allocation13 + $0x258] sm:$0xff]
    %v7170 = vld [vmem:[#allocation13 + $0x260] sm:$0xff]
    %v7171 = vld [vmem:[#allocation13 + $0x268] sm:$0xff]
    %v7172 = vld [vmem:[#allocation13 + $0x270] sm:$0xff]
    %v7173 = vld [vmem:[#allocation13 + $0x278] sm:$0xff]
    %v7174 = vld [vmem:[#allocation13 + $0x280] sm:$0xff]
    %v7175 = vld [vmem:[#allocation13 + $0x288] sm:$0xff]
    %v7176 = vld [vmem:[#allocation13 + $0x290] sm:$0xff]
    %v7177 = vld [vmem:[#allocation13 + $0x298] sm:$0xff]
    %v7178 = vld [vmem:[#allocation13 + $0x2a0] sm:$0xff]
    %v7179 = vld [vmem:[#allocation13 + $0x2a8] sm:$0xff]
    %v7180 = vld [vmem:[#allocation13 + $0x2b0] sm:$0xff]
    %v7181 = vld [vmem:[#allocation13 + $0x2b8] sm:$0xff]
    %v7182 = vld [vmem:[#allocation13 + $0x2c0] sm:$0xff]
    %v7183 = vld [vmem:[#allocation13 + $0x2c8] sm:$0xff]
    %v7184 = vld [vmem:[#allocation13 + $0x2d0] sm:$0xff]
    %v7185 = vld [vmem:[#allocation13 + $0x2d8] sm:$0xff]
    %v7186 = vld [vmem:[#allocation13 + $0x2e0] sm:$0xff]
    %v7187 = vld [vmem:[#allocation13 + $0x2e8] sm:$0xff]
    %v7188 = vld [vmem:[#allocation13 + $0x2f0] sm:$0xff]
    %v7189 = vld [vmem:[#allocation13 + $0x2f8] sm:$0xff]
    %v7190 = vld [vmem:[#allocation13 + $0x300] sm:$0xff]
    %v7191 = vld [vmem:[#allocation13 + $0x308] sm:$0xff]
    %v7192 = vld [vmem:[#allocation13 + $0x310] sm:$0xff]
    %v7193 = vld [vmem:[#allocation13 + $0x318] sm:$0xff]
    %v7194 = vld [vmem:[#allocation13 + $0x320] sm:$0xff]
    %v7195 = vld [vmem:[#allocation13 + $0x328] sm:$0xff]
    %v7196 = vld [vmem:[#allocation13 + $0x330] sm:$0xff]
    %v7197 = vld [vmem:[#allocation13 + $0x338] sm:$0xff]
    %v7198 = vld [vmem:[#allocation13 + $0x340] sm:$0xff]
    %v7199 = vld [vmem:[#allocation13 + $0x348] sm:$0xff]
    %v7200 = vld [vmem:[#allocation13 + $0x350] sm:$0xff]
    %v7201 = vld [vmem:[#allocation13 + $0x358] sm:$0xff]
    %v7202 = vld [vmem:[#allocation13 + $0x360] sm:$0xff]
    %v7203 = vld [vmem:[#allocation13 + $0x368] sm:$0xff]
    %v7204 = vld [vmem:[#allocation13 + $0x370] sm:$0xff]
    %v7205 = vld [vmem:[#allocation13 + $0x378] sm:$0xff]
    %v7206 = vld [vmem:[#allocation13 + $0x380] sm:$0xff]
    %v7207 = vld [vmem:[#allocation13 + $0x388] sm:$0xff]
    %v7208 = vld [vmem:[#allocation13 + $0x390] sm:$0xff]
    %v7209 = vld [vmem:[#allocation13 + $0x398] sm:$0xff]
    %v7210 = vld [vmem:[#allocation13 + $0x3a0] sm:$0xff]
    %v7211 = vld [vmem:[#allocation13 + $0x3a8] sm:$0xff]
    %v7212 = vld [vmem:[#allocation13 + $0x3b0] sm:$0xff]
    %v7213 = vld [vmem:[#allocation13 + $0x3b8] sm:$0xff]
    %v7214 = vld [vmem:[#allocation13 + $0x3c0] sm:$0xff]
    %v7215 = vld [vmem:[#allocation13 + $0x3c8] sm:$0xff]
    %v7216 = vld [vmem:[#allocation13 + $0x3d0] sm:$0xff]
    %v7217 = vld [vmem:[#allocation13 + $0x3d8] sm:$0xff]
    %v7218 = vld [vmem:[#allocation13 + $0x3e0] sm:$0xff]
    %v7219 = vld [vmem:[#allocation13 + $0x3e8] sm:$0xff]
    %v7220 = vld [vmem:[#allocation13 + $0x3f0] sm:$0xff]
    %v7221 = vld [vmem:[#allocation13 + $0x3f8] sm:$0xff]
    %v7222 = vld [vmem:[#allocation13 + $0x400] sm:$0xff]
    %v7223 = vld [vmem:[#allocation13 + $0x408] sm:$0xff]
    %v7224 = vld [vmem:[#allocation13 + $0x410] sm:$0xff]
    %v7225 = vld [vmem:[#allocation13 + $0x418] sm:$0xff]
    %v7226 = vld [vmem:[#allocation13 + $0x420] sm:$0xff]
    %v7227 = vld [vmem:[#allocation13 + $0x428] sm:$0xff]
    %v7228 = vld [vmem:[#allocation13 + $0x430] sm:$0xff]
    %v7229 = vld [vmem:[#allocation13 + $0x438] sm:$0xff]
    %v7230 = vld [vmem:[#allocation13 + $0x440] sm:$0xff]
    %v7231 = vld [vmem:[#allocation13 + $0x448] sm:$0xff]
    %v7232 = vld [vmem:[#allocation13 + $0x450] sm:$0xff]
    %v7233 = vld [vmem:[#allocation13 + $0x458] sm:$0xff]
    %v7234 = vld [vmem:[#allocation13 + $0x460] sm:$0xff]
    %v7235 = vld [vmem:[#allocation13 + $0x468] sm:$0xff]
    %v7236 = vld [vmem:[#allocation13 + $0x470] sm:$0xff]
    %v7237 = vld [vmem:[#allocation13 + $0x478] sm:$0xff]
    %v7238 = vld [vmem:[#allocation13 + $0x480] sm:$0xff]
    %v7239 = vld [vmem:[#allocation13 + $0x488] sm:$0xff]
    %v7240 = vld [vmem:[#allocation13 + $0x490] sm:$0xff]
    %v7241 = vld [vmem:[#allocation13 + $0x498] sm:$0xff]
    %v7242 = vld [vmem:[#allocation13 + $0x4a0] sm:$0xff]
    %v7243 = vld [vmem:[#allocation13 + $0x4a8] sm:$0xff]
    %v7244 = vld [vmem:[#allocation13 + $0x4b0] sm:$0xff]
    %v7245 = vld [vmem:[#allocation13 + $0x4b8] sm:$0xff]
    %v7246 = vld [vmem:[#allocation13 + $0x4c0] sm:$0xff]
    %v7247 = vld [vmem:[#allocation13 + $0x4c8] sm:$0xff]
    %v7248 = vld [vmem:[#allocation13 + $0x4d0] sm:$0xff]
    %v7249 = vld [vmem:[#allocation13 + $0x4d8] sm:$0xff]
    %v7250 = vld [vmem:[#allocation13 + $0x4e0] sm:$0xff]
    %v7251 = vld [vmem:[#allocation13 + $0x4e8] sm:$0xff]
    %v7252 = vld [vmem:[#allocation13 + $0x4f0] sm:$0xff]
    %v7253 = vld [vmem:[#allocation13 + $0x4f8] sm:$0xff]
    %v7254 = vld [vmem:[#allocation13 + $0x500] sm:$0xff]
    %v7255 = vld [vmem:[#allocation13 + $0x508] sm:$0xff]
    %v7256 = vld [vmem:[#allocation13 + $0x510] sm:$0xff]
    %v7257 = vld [vmem:[#allocation13 + $0x518] sm:$0xff]
    %v7258 = vld [vmem:[#allocation13 + $0x520] sm:$0xff]
    %v7259 = vld [vmem:[#allocation13 + $0x528] sm:$0xff]
    %v7260 = vld [vmem:[#allocation13 + $0x530] sm:$0xff]
    %v7261 = vld [vmem:[#allocation13 + $0x538] sm:$0xff]
    %v7262 = vld [vmem:[#allocation13 + $0x540] sm:$0xff]
    %v7263 = vld [vmem:[#allocation13 + $0x548] sm:$0xff]
    %v7264 = vld [vmem:[#allocation13 + $0x550] sm:$0xff]
    %v7265 = vld [vmem:[#allocation13 + $0x558] sm:$0xff]
    %v7266 = vld [vmem:[#allocation13 + $0x560] sm:$0xff]
    %v7267 = vld [vmem:[#allocation13 + $0x568] sm:$0xff]
    %v7268 = vld [vmem:[#allocation13 + $0x570] sm:$0xff]
    %v7269 = vld [vmem:[#allocation13 + $0x578] sm:$0xff]
    %v7270 = vld [vmem:[#allocation13 + $0x580] sm:$0xff]
    %v7271 = vld [vmem:[#allocation13 + $0x588] sm:$0xff]
    %v7272 = vld [vmem:[#allocation13 + $0x590] sm:$0xff]
    %v7273 = vld [vmem:[#allocation13 + $0x598] sm:$0xff]
    %v7274 = vld [vmem:[#allocation13 + $0x5a0] sm:$0xff]
    %v7275 = vld [vmem:[#allocation13 + $0x5a8] sm:$0xff]
    %v7276 = vld [vmem:[#allocation13 + $0x5b0] sm:$0xff]
    %v7277 = vld [vmem:[#allocation13 + $0x5b8] sm:$0xff]
    %v7278 = vld [vmem:[#allocation13 + $0x5c0] sm:$0xff]
    %v7279 = vld [vmem:[#allocation13 + $0x5c8] sm:$0xff]
    %v7280 = vld [vmem:[#allocation13 + $0x5d0] sm:$0xff]
    %v7281 = vld [vmem:[#allocation13 + $0x5d8] sm:$0xff]
    %v7282 = vld [vmem:[#allocation13 + $0x5e0] sm:$0xff]
    %v7283 = vld [vmem:[#allocation13 + $0x5e8] sm:$0xff]
    %v7284 = vld [vmem:[#allocation13 + $0x5f0] sm:$0xff]
    %v7285 = vld [vmem:[#allocation13 + $0x5f8] sm:$0xff]
    %v7286 = vld [vmem:[#allocation13 + $0x600] sm:$0xff]
    %v7287 = vld [vmem:[#allocation13 + $0x608] sm:$0xff]
    %v7288 = vld [vmem:[#allocation13 + $0x610] sm:$0xff]
    %v7289 = vld [vmem:[#allocation13 + $0x618] sm:$0xff]
    %v7290 = vld [vmem:[#allocation13 + $0x620] sm:$0xff]
    %v7291 = vld [vmem:[#allocation13 + $0x628] sm:$0xff]
    %v7292 = vld [vmem:[#allocation13 + $0x630] sm:$0xff]
    %v7293 = vld [vmem:[#allocation13 + $0x638] sm:$0xff]
    %v7294 = vld [vmem:[#allocation13 + $0x640] sm:$0xff]
    %v7295 = vld [vmem:[#allocation13 + $0x648] sm:$0xff]
    %v7296 = vld [vmem:[#allocation13 + $0x650] sm:$0xff]
    %v7297 = vld [vmem:[#allocation13 + $0x658] sm:$0xff]
    %v7298 = vld [vmem:[#allocation13 + $0x660] sm:$0xff]
    %v7299 = vld [vmem:[#allocation13 + $0x668] sm:$0xff]
    %v7300 = vld [vmem:[#allocation13 + $0x670] sm:$0xff]
    %v7301 = vld [vmem:[#allocation13 + $0x678] sm:$0xff]
    %v7302 = vld [vmem:[#allocation13 + $0x680] sm:$0xff]
    %v7303 = vld [vmem:[#allocation13 + $0x688] sm:$0xff]
    %v7304 = vld [vmem:[#allocation13 + $0x690] sm:$0xff]
    %v7305 = vld [vmem:[#allocation13 + $0x698] sm:$0xff]
    %v7306 = vld [vmem:[#allocation13 + $0x6a0] sm:$0xff]
    %v7307 = vld [vmem:[#allocation13 + $0x6a8] sm:$0xff]
    %v7308 = vld [vmem:[#allocation13 + $0x6b0] sm:$0xff]
    %v7309 = vld [vmem:[#allocation13 + $0x6b8] sm:$0xff]
    %v7310 = vld [vmem:[#allocation13 + $0x6c0] sm:$0xff]
    %v7311 = vld [vmem:[#allocation13 + $0x6c8] sm:$0xff]
    %v7312 = vld [vmem:[#allocation13 + $0x6d0] sm:$0xff]
    %v7313 = vld [vmem:[#allocation13 + $0x6d8] sm:$0xff]
    %v7314 = vld [vmem:[#allocation13 + $0x6e0] sm:$0xff]
    %v7315 = vld [vmem:[#allocation13 + $0x6e8] sm:$0xff]
    %v7316 = vld [vmem:[#allocation13 + $0x6f0] sm:$0xff]
    %v7317 = vld [vmem:[#allocation13 + $0x6f8] sm:$0xff]
    %v7318 = vld [vmem:[#allocation13 + $0x700] sm:$0xff]
    %v7319 = vld [vmem:[#allocation13 + $0x708] sm:$0xff]
    %v7320 = vld [vmem:[#allocation13 + $0x710] sm:$0xff]
    %v7321 = vld [vmem:[#allocation13 + $0x718] sm:$0xff]
    %v7322 = vld [vmem:[#allocation13 + $0x720] sm:$0xff]
    %v7323 = vld [vmem:[#allocation13 + $0x728] sm:$0xff]
    %v7324 = vld [vmem:[#allocation13 + $0x730] sm:$0xff]
    %v7325 = vld [vmem:[#allocation13 + $0x738] sm:$0xff]
    %v7326 = vld [vmem:[#allocation13 + $0x740] sm:$0xff]
    %v7327 = vld [vmem:[#allocation13 + $0x748] sm:$0xff]
    %v7328 = vld [vmem:[#allocation13 + $0x750] sm:$0xff]
    %v7329 = vld [vmem:[#allocation13 + $0x758] sm:$0xff]
    %v7330 = vld [vmem:[#allocation13 + $0x760] sm:$0xff]
    %v7331 = vld [vmem:[#allocation13 + $0x768] sm:$0xff]
    %v7332 = vld [vmem:[#allocation13 + $0x770] sm:$0xff]
    %v7333 = vld [vmem:[#allocation13 + $0x778] sm:$0xff]
    %v7334 = vld [vmem:[#allocation13 + $0x780] sm:$0xff]
    %v7335 = vld [vmem:[#allocation13 + $0x788] sm:$0xff]
    %v7336 = vld [vmem:[#allocation13 + $0x790] sm:$0xff]
    %v7337 = vld [vmem:[#allocation13 + $0x798] sm:$0xff]
    %v7338 = vld [vmem:[#allocation13 + $0x7a0] sm:$0xff]
    %v7339 = vld [vmem:[#allocation13 + $0x7a8] sm:$0xff]
    %v7340 = vld [vmem:[#allocation13 + $0x7b0] sm:$0xff]
    %v7341 = vld [vmem:[#allocation13 + $0x7b8] sm:$0xff]
    %v7342 = vld [vmem:[#allocation13 + $0x7c0] sm:$0xff]
    %v7343 = vld [vmem:[#allocation13 + $0x7c8] sm:$0xff]
    %v7344 = vld [vmem:[#allocation13 + $0x7d0] sm:$0xff]
    %v7345 = vld [vmem:[#allocation13 + $0x7d8] sm:$0xff]
    %v7346 = vld [vmem:[#allocation13 + $0x7e0] sm:$0xff]
    %v7347 = vld [vmem:[#allocation13 + $0x7e8] sm:$0xff]
    %v7348 = vld [vmem:[#allocation13 + $0x7f0] sm:$0xff]
    %v7349 = vld [vmem:[#allocation13 + $0x7f8] sm:$0xff]
    %v7350 = vld [vmem:[#allocation13 + $0x800] sm:$0xff]
    %v7351 = vld [vmem:[#allocation13 + $0x808] sm:$0xff]
    %v7352 = vld [vmem:[#allocation13 + $0x810] sm:$0xff]
    %v7353 = vld [vmem:[#allocation13 + $0x818] sm:$0xff]
    %v7354 = vld [vmem:[#allocation13 + $0x820] sm:$0xff]
    %v7355 = vld [vmem:[#allocation13 + $0x828] sm:$0xff]
    %v7356 = vld [vmem:[#allocation13 + $0x830] sm:$0xff]
    %v7357 = vld [vmem:[#allocation13 + $0x838] sm:$0xff]
    %v7358 = vld [vmem:[#allocation13 + $0x840] sm:$0xff]
    %v7359 = vld [vmem:[#allocation13 + $0x848] sm:$0xff]
    %v7360 = vld [vmem:[#allocation13 + $0x850] sm:$0xff]
    %v7361 = vld [vmem:[#allocation13 + $0x858] sm:$0xff]
    %v7362 = vld [vmem:[#allocation13 + $0x860] sm:$0xff]
    %v7363 = vld [vmem:[#allocation13 + $0x868] sm:$0xff]
    %v7364 = vld [vmem:[#allocation13 + $0x870] sm:$0xff]
    %v7365 = vld [vmem:[#allocation13 + $0x878] sm:$0xff]
    %v7366 = vld [vmem:[#allocation13 + $0x880] sm:$0xff]
    %v7367 = vld [vmem:[#allocation13 + $0x888] sm:$0xff]
    %v7368 = vld [vmem:[#allocation13 + $0x890] sm:$0xff]
    %v7369 = vld [vmem:[#allocation13 + $0x898] sm:$0xff]
    %v7370 = vld [vmem:[#allocation13 + $0x8a0] sm:$0xff]
    %v7371 = vld [vmem:[#allocation13 + $0x8a8] sm:$0xff]
    %v7372 = vld [vmem:[#allocation13 + $0x8b0] sm:$0xff]
    %v7373 = vld [vmem:[#allocation13 + $0x8b8] sm:$0xff]
    %v7374 = vld [vmem:[#allocation13 + $0x8c0] sm:$0xff]
    %v7375 = vld [vmem:[#allocation13 + $0x8c8] sm:$0xff]
    %v7376 = vld [vmem:[#allocation13 + $0x8d0] sm:$0xff]
    %v7377 = vld [vmem:[#allocation13 + $0x8d8] sm:$0xff]
    %v7378 = vld [vmem:[#allocation13 + $0x8e0] sm:$0xff]
    %v7379 = vld [vmem:[#allocation13 + $0x8e8] sm:$0xff]
    %v7380 = vld [vmem:[#allocation13 + $0x8f0] sm:$0xff]
    %v7381 = vld [vmem:[#allocation13 + $0x8f8] sm:$0xff]
    %v7382 = vld [vmem:[#allocation13 + $0x900] sm:$0xff]
    %v7383 = vld [vmem:[#allocation13 + $0x908] sm:$0xff]
    %v7384 = vld [vmem:[#allocation13 + $0x910] sm:$0xff]
    %v7385 = vld [vmem:[#allocation13 + $0x918] sm:$0xff]
    %v7386 = vld [vmem:[#allocation13 + $0x920] sm:$0xff]
    %v7387 = vld [vmem:[#allocation13 + $0x928] sm:$0xff]
    %v7388 = vld [vmem:[#allocation13 + $0x930] sm:$0xff]
    %v7389 = vld [vmem:[#allocation13 + $0x938] sm:$0xff]
    %v7390 = vld [vmem:[#allocation13 + $0x940] sm:$0xff]
    %v7391 = vld [vmem:[#allocation13 + $0x948] sm:$0xff]
    %v7392 = vld [vmem:[#allocation13 + $0x950] sm:$0xff]
    %v7393 = vld [vmem:[#allocation13 + $0x958] sm:$0xff]
    %v7394 = vld [vmem:[#allocation13 + $0x960] sm:$0xff]
    %v7395 = vld [vmem:[#allocation13 + $0x968] sm:$0xff]
    %v7396 = vld [vmem:[#allocation13 + $0x970] sm:$0xff]
    %v7397 = vld [vmem:[#allocation13 + $0x978] sm:$0xff]
    %v7398 = vld [vmem:[#allocation13 + $0x980] sm:$0xff]
    %v7399 = vld [vmem:[#allocation13 + $0x988] sm:$0xff]
    %v7400 = vld [vmem:[#allocation13 + $0x990] sm:$0xff]
    %v7401 = vld [vmem:[#allocation13 + $0x998] sm:$0xff]
    %v7402 = vld [vmem:[#allocation13 + $0x9a0] sm:$0xff]
    %v7403 = vld [vmem:[#allocation13 + $0x9a8] sm:$0xff]
    %v7404 = vld [vmem:[#allocation13 + $0x9b0] sm:$0xff]
    %v7405 = vld [vmem:[#allocation13 + $0x9b8] sm:$0xff]
    %v7406 = vld [vmem:[#allocation13 + $0x9c0] sm:$0xff]
    %v7407 = vld [vmem:[#allocation13 + $0x9c8] sm:$0xff]
    %v7408 = vld [vmem:[#allocation13 + $0x9d0] sm:$0xff]
    %v7409 = vld [vmem:[#allocation13 + $0x9d8] sm:$0xff]
    %v7410 = vld [vmem:[#allocation13 + $0x9e0] sm:$0xff]
    %v7411 = vld [vmem:[#allocation13 + $0x9e8] sm:$0xff]
    %v7412 = vld [vmem:[#allocation13 + $0x9f0] sm:$0xff]
    %v7413 = vld [vmem:[#allocation13 + $0x9f8] sm:$0xff]
    %v7414 = vld [vmem:[#allocation13 + $0xa00] sm:$0xff]
    %v7415 = vld [vmem:[#allocation13 + $0xa08] sm:$0xff]
    %v7416 = vld [vmem:[#allocation13 + $0xa10] sm:$0xff]
    %v7417 = vld [vmem:[#allocation13 + $0xa18] sm:$0xff]
    %v7418 = vld [vmem:[#allocation13 + $0xa20] sm:$0xff]
    %v7419 = vld [vmem:[#allocation13 + $0xa28] sm:$0xff]
    %v7420 = vld [vmem:[#allocation13 + $0xa30] sm:$0xff]
    %v7421 = vld [vmem:[#allocation13 + $0xa38] sm:$0xff]
    %v7422 = vld [vmem:[#allocation13 + $0xa40] sm:$0xff]
    %v7423 = vld [vmem:[#allocation13 + $0xa48] sm:$0xff]
    %v7424 = vld [vmem:[#allocation13 + $0xa50] sm:$0xff]
    %v7425 = vld [vmem:[#allocation13 + $0xa58] sm:$0xff]
    %v7426 = vld [vmem:[#allocation13 + $0xa60] sm:$0xff]
    %v7427 = vld [vmem:[#allocation13 + $0xa68] sm:$0xff]
    %v7428 = vld [vmem:[#allocation13 + $0xa70] sm:$0xff]
    %v7429 = vld [vmem:[#allocation13 + $0xa78] sm:$0xff]
    %v7430 = vld [vmem:[#allocation13 + $0xa80] sm:$0xff]
    %v7431 = vld [vmem:[#allocation13 + $0xa88] sm:$0xff]
    %v7432 = vld [vmem:[#allocation13 + $0xa90] sm:$0xff]
    %v7433 = vld [vmem:[#allocation13 + $0xa98] sm:$0xff]
    %v7434 = vld [vmem:[#allocation13 + $0xaa0] sm:$0xff]
    %v7435 = vld [vmem:[#allocation13 + $0xaa8] sm:$0xff]
    %v7436 = vld [vmem:[#allocation13 + $0xab0] sm:$0xff]
    %v7437 = vld [vmem:[#allocation13 + $0xab8] sm:$0xff]
    %v7438 = vld [vmem:[#allocation13 + $0xac0] sm:$0xff]
    %v7439 = vld [vmem:[#allocation13 + $0xac8] sm:$0xff]
    %v7440 = vld [vmem:[#allocation13 + $0xad0] sm:$0xff]
    %v7441 = vld [vmem:[#allocation13 + $0xad8] sm:$0xff]
    %v7442 = vld [vmem:[#allocation13 + $0xae0] sm:$0xff]
    %v7443 = vld [vmem:[#allocation13 + $0xae8] sm:$0xff]
    %v7444 = vld [vmem:[#allocation13 + $0xaf0] sm:$0xff]
    %v7445 = vld [vmem:[#allocation13 + $0xaf8] sm:$0xff]
    %v7446 = vld [vmem:[#allocation13 + $0xb00] sm:$0xff]
    %v7447 = vld [vmem:[#allocation13 + $0xb08] sm:$0xff]
    %v7448 = vld [vmem:[#allocation13 + $0xb10] sm:$0xff]
    %v7449 = vld [vmem:[#allocation13 + $0xb18] sm:$0xff]
    %v7450 = vld [vmem:[#allocation13 + $0xb20] sm:$0xff]
    %v7451 = vld [vmem:[#allocation13 + $0xb28] sm:$0xff]
    %v7452 = vld [vmem:[#allocation13 + $0xb30] sm:$0xff]
    %v7453 = vld [vmem:[#allocation13 + $0xb38] sm:$0xff]
    %v7454 = vld [vmem:[#allocation13 + $0xb40] sm:$0xff]
    %v7455 = vld [vmem:[#allocation13 + $0xb48] sm:$0xff]
    %v7456 = vld [vmem:[#allocation13 + $0xb50] sm:$0xff]
    %v7457 = vld [vmem:[#allocation13 + $0xb58] sm:$0xff]
    %v7458 = vld [vmem:[#allocation13 + $0xb60] sm:$0xff]
    %v7459 = vld [vmem:[#allocation13 + $0xb68] sm:$0xff]
    %v7460 = vld [vmem:[#allocation13 + $0xb70] sm:$0xff]
    %v7461 = vld [vmem:[#allocation13 + $0xb78] sm:$0xff]
    %v7462 = vld [vmem:[#allocation13 + $0xb80] sm:$0xff]
    %v7463 = vld [vmem:[#allocation13 + $0xb88] sm:$0xff]
    %v7464 = vld [vmem:[#allocation13 + $0xb90] sm:$0xff]
    %v7465 = vld [vmem:[#allocation13 + $0xb98] sm:$0xff]
    %v7466 = vld [vmem:[#allocation13 + $0xba0] sm:$0xff]
    %v7467 = vld [vmem:[#allocation13 + $0xba8] sm:$0xff]
    %v7468 = vld [vmem:[#allocation13 + $0xbb0] sm:$0xff]
    %v7469 = vld [vmem:[#allocation13 + $0xbb8] sm:$0xff]
    %v7470 = vld [vmem:[#allocation13 + $0xbc0] sm:$0xff]
    %v7471 = vld [vmem:[#allocation13 + $0xbc8] sm:$0xff]
    %v7472 = vld [vmem:[#allocation13 + $0xbd0] sm:$0xff]
    %v7473 = vld [vmem:[#allocation13 + $0xbd8] sm:$0xff]
    %v7474 = vld [vmem:[#allocation13 + $0xbe0] sm:$0xff]
    %v7475 = vld [vmem:[#allocation13 + $0xbe8] sm:$0xff]
    %v7476 = vld [vmem:[#allocation13 + $0xbf0] sm:$0xff]
    %v7477 = vld [vmem:[#allocation13 + $0xbf8] sm:$0xff]
    %v7478 = vld [vmem:[#allocation13 + $0xc00] sm:$0xff]
    %v7479 = vld [vmem:[#allocation13 + $0xc08] sm:$0xff]
    %v7480 = vld [vmem:[#allocation13 + $0xc10] sm:$0xff]
    %v7481 = vld [vmem:[#allocation13 + $0xc18] sm:$0xff]
    %v7482 = vld [vmem:[#allocation13 + $0xc20] sm:$0xff]
    %v7483 = vld [vmem:[#allocation13 + $0xc28] sm:$0xff]
    %v7484 = vld [vmem:[#allocation13 + $0xc30] sm:$0xff]
    %v7485 = vld [vmem:[#allocation13 + $0xc38] sm:$0xff]
    %v7486 = vld [vmem:[#allocation13 + $0xc40] sm:$0xff]
    %v7487 = vld [vmem:[#allocation13 + $0xc48] sm:$0xff]
    %v7488 = vld [vmem:[#allocation13 + $0xc50] sm:$0xff]
    %v7489 = vld [vmem:[#allocation13 + $0xc58] sm:$0xff]
    %v7490 = vld [vmem:[#allocation13 + $0xc60] sm:$0xff]
    %v7491 = vld [vmem:[#allocation13 + $0xc68] sm:$0xff]
    %v7492 = vld [vmem:[#allocation13 + $0xc70] sm:$0xff]
    %v7493 = vld [vmem:[#allocation13 + $0xc78] sm:$0xff]
    %v7494 = vld [vmem:[#allocation13 + $0xc80] sm:$0xff]
    %v7495 = vld [vmem:[#allocation13 + $0xc88] sm:$0xff]
    %v7496 = vld [vmem:[#allocation13 + $0xc90] sm:$0xff]
    %v7497 = vld [vmem:[#allocation13 + $0xc98] sm:$0xff]
    %v7498 = vld [vmem:[#allocation13 + $0xca0] sm:$0xff]
    %v7499 = vld [vmem:[#allocation13 + $0xca8] sm:$0xff]
    %v7500 = vld [vmem:[#allocation13 + $0xcb0] sm:$0xff]
    %v7501 = vld [vmem:[#allocation13 + $0xcb8] sm:$0xff]
    %v7502 = vld [vmem:[#allocation13 + $0xcc0] sm:$0xff]
    %v7503 = vld [vmem:[#allocation13 + $0xcc8] sm:$0xff]
    %v7504 = vld [vmem:[#allocation13 + $0xcd0] sm:$0xff]
    %v7505 = vld [vmem:[#allocation13 + $0xcd8] sm:$0xff]
    %v7506 = vld [vmem:[#allocation13 + $0xce0] sm:$0xff]
    %v7507 = vld [vmem:[#allocation13 + $0xce8] sm:$0xff]
    %v7508 = vld [vmem:[#allocation13 + $0xcf0] sm:$0xff]
    %v7509 = vld [vmem:[#allocation13 + $0xcf8] sm:$0xff]
    %v7510 = vld [vmem:[#allocation13 + $0xd00] sm:$0xff]
    %v7511 = vld [vmem:[#allocation13 + $0xd08] sm:$0xff]
    %v7512 = vld [vmem:[#allocation13 + $0xd10] sm:$0xff]
    %v7513 = vld [vmem:[#allocation13 + $0xd18] sm:$0xff]
    %v7514 = vld [vmem:[#allocation13 + $0xd20] sm:$0xff]
    %v7515 = vld [vmem:[#allocation13 + $0xd28] sm:$0xff]
    %v7516 = vld [vmem:[#allocation13 + $0xd30] sm:$0xff]
    %v7517 = vld [vmem:[#allocation13 + $0xd38] sm:$0xff]
    %v7518 = vld [vmem:[#allocation13 + $0xd40] sm:$0xff]
    %v7519 = vld [vmem:[#allocation13 + $0xd48] sm:$0xff]
    %v7520 = vld [vmem:[#allocation13 + $0xd50] sm:$0xff]
    %v7521 = vld [vmem:[#allocation13 + $0xd58] sm:$0xff]
    %v7522 = vld [vmem:[#allocation13 + $0xd60] sm:$0xff]
    %v7523 = vld [vmem:[#allocation13 + $0xd68] sm:$0xff]
    %v7524 = vld [vmem:[#allocation13 + $0xd70] sm:$0xff]
    %v7525 = vld [vmem:[#allocation13 + $0xd78] sm:$0xff]
    %v7526 = vld [vmem:[#allocation13 + $0xd80] sm:$0xff]
    %v7527 = vld [vmem:[#allocation13 + $0xd88] sm:$0xff]
    %v7528 = vld [vmem:[#allocation13 + $0xd90] sm:$0xff]
    %v7529 = vld [vmem:[#allocation13 + $0xd98] sm:$0xff]
    %v7530 = vld [vmem:[#allocation13 + $0xda0] sm:$0xff]
    %v7531 = vld [vmem:[#allocation13 + $0xda8] sm:$0xff]
    %v7532 = vld [vmem:[#allocation13 + $0xdb0] sm:$0xff]
    %v7533 = vld [vmem:[#allocation13 + $0xdb8] sm:$0xff]
    %v7534 = vld [vmem:[#allocation13 + $0xdc0] sm:$0xff]
    %v7535 = vld [vmem:[#allocation13 + $0xdc8] sm:$0xff]
    %v7536 = vld [vmem:[#allocation13 + $0xdd0] sm:$0xff]
    %v7537 = vld [vmem:[#allocation13 + $0xdd8] sm:$0xff]
    %v7538 = vld [vmem:[#allocation13 + $0xde0] sm:$0xff]
    %v7539 = vld [vmem:[#allocation13 + $0xde8] sm:$0xff]
    %v7540 = vld [vmem:[#allocation13 + $0xdf0] sm:$0xff]
    %v7541 = vld [vmem:[#allocation13 + $0xdf8] sm:$0xff]
    %v7542 = vld [vmem:[#allocation13 + $0xe00] sm:$0xff]
    %v7543 = vld [vmem:[#allocation13 + $0xe08] sm:$0xff]
    %v7544 = vld [vmem:[#allocation13 + $0xe10] sm:$0xff]
    %v7545 = vld [vmem:[#allocation13 + $0xe18] sm:$0xff]
    %v7546 = vld [vmem:[#allocation13 + $0xe20] sm:$0xff]
    %v7547 = vld [vmem:[#allocation13 + $0xe28] sm:$0xff]
    %v7548 = vld [vmem:[#allocation13 + $0xe30] sm:$0xff]
    %v7549 = vld [vmem:[#allocation13 + $0xe38] sm:$0xff]
    %v7550 = vld [vmem:[#allocation13 + $0xe40] sm:$0xff]
    %v7551 = vld [vmem:[#allocation13 + $0xe48] sm:$0xff]
    %v7552 = vld [vmem:[#allocation13 + $0xe50] sm:$0xff]
    %v7553 = vld [vmem:[#allocation13 + $0xe58] sm:$0xff]
    %v7554 = vld [vmem:[#allocation13 + $0xe60] sm:$0xff]
    %v7555 = vld [vmem:[#allocation13 + $0xe68] sm:$0xff]
    %v7556 = vld [vmem:[#allocation13 + $0xe70] sm:$0xff]
    %v7557 = vld [vmem:[#allocation13 + $0xe78] sm:$0xff]
    %v7558 = vld [vmem:[#allocation13 + $0xe80] sm:$0xff]
    %v7559 = vld [vmem:[#allocation13 + $0xe88] sm:$0xff]
    %v7560 = vld [vmem:[#allocation13 + $0xe90] sm:$0xff]
    %v7561 = vld [vmem:[#allocation13 + $0xe98] sm:$0xff]
    %v7562 = vld [vmem:[#allocation13 + $0xea0] sm:$0xff]
    %v7563 = vld [vmem:[#allocation13 + $0xea8] sm:$0xff]
    %v7564 = vld [vmem:[#allocation13 + $0xeb0] sm:$0xff]
    %v7565 = vld [vmem:[#allocation13 + $0xeb8] sm:$0xff]
    %v7566 = vld [vmem:[#allocation13 + $0xec0] sm:$0xff]
    %v7567 = vld [vmem:[#allocation13 + $0xec8] sm:$0xff]
    %v7568 = vld [vmem:[#allocation13 + $0xed0] sm:$0xff]
    %v7569 = vld [vmem:[#allocation13 + $0xed8] sm:$0xff]
    %v7570 = vld [vmem:[#allocation13 + $0xee0] sm:$0xff]
    %v7571 = vld [vmem:[#allocation13 + $0xee8] sm:$0xff]
    %v7572 = vld [vmem:[#allocation13 + $0xef0] sm:$0xff]
    %v7573 = vld [vmem:[#allocation13 + $0xef8] sm:$0xff]
    %v7574 = vld [vmem:[#allocation13 + $0xf00] sm:$0xff]
    %v7575 = vld [vmem:[#allocation13 + $0xf08] sm:$0xff]
    %v7576 = vld [vmem:[#allocation13 + $0xf10] sm:$0xff]
    %v7577 = vld [vmem:[#allocation13 + $0xf18] sm:$0xff]
    %v7578 = vld [vmem:[#allocation13 + $0xf20] sm:$0xff]
    %v7579 = vld [vmem:[#allocation13 + $0xf28] sm:$0xff]
    %v7580 = vld [vmem:[#allocation13 + $0xf30] sm:$0xff]
    %v7581 = vld [vmem:[#allocation13 + $0xf38] sm:$0xff]
    %v7582 = vld [vmem:[#allocation13 + $0xf40] sm:$0xff]
    %v7583 = vld [vmem:[#allocation13 + $0xf48] sm:$0xff]
    %v7584 = vld [vmem:[#allocation13 + $0xf50] sm:$0xff]
    %v7585 = vld [vmem:[#allocation13 + $0xf58] sm:$0xff]
    %v7586 = vld [vmem:[#allocation13 + $0xf60] sm:$0xff]
    %v7587 = vld [vmem:[#allocation13 + $0xf68] sm:$0xff]
    %v7588 = vld [vmem:[#allocation13 + $0xf70] sm:$0xff]
    %v7589 = vld [vmem:[#allocation13 + $0xf78] sm:$0xff]
    %v7590 = vld [vmem:[#allocation13 + $0xf80] sm:$0xff]
    %v7591 = vld [vmem:[#allocation13 + $0xf88] sm:$0xff]
    %v7592 = vld [vmem:[#allocation13 + $0xf90] sm:$0xff]
    %v7593 = vld [vmem:[#allocation13 + $0xf98] sm:$0xff]
    %v7594 = vld [vmem:[#allocation13 + $0xfa0] sm:$0xff]
    %v7595 = vld [vmem:[#allocation13 + $0xfa8] sm:$0xff]
    %v7596 = vld [vmem:[#allocation13 + $0xfb0] sm:$0xff]
    %v7597 = vld [vmem:[#allocation13 + $0xfb8] sm:$0xff]
    %v7598 = vld [vmem:[#allocation13 + $0xfc0] sm:$0xff]
    %v7599 = vld [vmem:[#allocation13 + $0xfc8] sm:$0xff]
    %v7600 = vld [vmem:[#allocation13 + $0xfd0] sm:$0xff]
    %v7601 = vld [vmem:[#allocation13 + $0xfd8] sm:$0xff]
    %v7602 = vld [vmem:[#allocation13 + $0xfe0] sm:$0xff]
    %v7603 = vld [vmem:[#allocation13 + $0xfe8] sm:$0xff]
    %v7604 = vld [vmem:[#allocation13 + $0xff0] sm:$0xff]
    %v7605 = vld [vmem:[#allocation13 + $0xff8] sm:$0xff]
    %v8118 = vunpack.c.l.b16 %v7094
    %v8119 = vunpack.c.h.b16 %v7094
    %v8120 = vunpack.c.l.b16 %v7095
    %v8121 = vunpack.c.h.b16 %v7095
    %v8122 = vunpack.c.l.b16 %v7096
    %v8123 = vunpack.c.h.b16 %v7096
    %v8124 = vunpack.c.l.b16 %v7097
    %v8125 = vunpack.c.h.b16 %v7097
    %v8126 = vunpack.c.l.b16 %v7098
    %v8127 = vunpack.c.h.b16 %v7098
    %v8128 = vunpack.c.l.b16 %v7099
    %v8129 = vunpack.c.h.b16 %v7099
    %v8130 = vunpack.c.l.b16 %v7100
    %v8131 = vunpack.c.h.b16 %v7100
    %v8132 = vunpack.c.l.b16 %v7101
    %v8133 = vunpack.c.h.b16 %v7101
    %v8134 = vunpack.c.l.b16 %v7102
    %v8135 = vunpack.c.h.b16 %v7102
    %v8136 = vunpack.c.l.b16 %v7103
    %v8137 = vunpack.c.h.b16 %v7103
    %v8138 = vunpack.c.l.b16 %v7104
    %v8139 = vunpack.c.h.b16 %v7104
    %v8140 = vunpack.c.l.b16 %v7105
    %v8141 = vunpack.c.h.b16 %v7105
    %v8142 = vunpack.c.l.b16 %v7106
    %v8143 = vunpack.c.h.b16 %v7106
    %v8144 = vunpack.c.l.b16 %v7107
    %v8145 = vunpack.c.h.b16 %v7107
    %v8146 = vunpack.c.l.b16 %v7108
    %v8147 = vunpack.c.h.b16 %v7108
    %v8148 = vunpack.c.l.b16 %v7109
    %v8149 = vunpack.c.h.b16 %v7109
    %v8150 = vunpack.c.l.b16 %v7110
    %v8151 = vunpack.c.h.b16 %v7110
    %v8152 = vunpack.c.l.b16 %v7111
    %v8153 = vunpack.c.h.b16 %v7111
    %v8154 = vunpack.c.l.b16 %v7112
    %v8155 = vunpack.c.h.b16 %v7112
    %v8156 = vunpack.c.l.b16 %v7113
    %v8157 = vunpack.c.h.b16 %v7113
    %v8158 = vunpack.c.l.b16 %v7114
    %v8159 = vunpack.c.h.b16 %v7114
    %v8160 = vunpack.c.l.b16 %v7115
    %v8161 = vunpack.c.h.b16 %v7115
    %v8162 = vunpack.c.l.b16 %v7116
    %v8163 = vunpack.c.h.b16 %v7116
    %v8164 = vunpack.c.l.b16 %v7117
    %v8165 = vunpack.c.h.b16 %v7117
    %v8166 = vunpack.c.l.b16 %v7118
    %v8167 = vunpack.c.h.b16 %v7118
    %v8168 = vunpack.c.l.b16 %v7119
    %v8169 = vunpack.c.h.b16 %v7119
    %v8170 = vunpack.c.l.b16 %v7120
    %v8171 = vunpack.c.h.b16 %v7120
    %v8172 = vunpack.c.l.b16 %v7121
    %v8173 = vunpack.c.h.b16 %v7121
    %v8174 = vunpack.c.l.b16 %v7122
    %v8175 = vunpack.c.h.b16 %v7122
    %v8176 = vunpack.c.l.b16 %v7123
    %v8177 = vunpack.c.h.b16 %v7123
    %v8178 = vunpack.c.l.b16 %v7124
    %v8179 = vunpack.c.h.b16 %v7124
    %v8180 = vunpack.c.l.b16 %v7125
    %v8181 = vunpack.c.h.b16 %v7125
    %v8182 = vunpack.c.l.b16 %v7126
    %v8183 = vunpack.c.h.b16 %v7126
    %v8184 = vunpack.c.l.b16 %v7127
    %v8185 = vunpack.c.h.b16 %v7127
    %v8186 = vunpack.c.l.b16 %v7128
    %v8187 = vunpack.c.h.b16 %v7128
    %v8188 = vunpack.c.l.b16 %v7129
    %v8189 = vunpack.c.h.b16 %v7129
    %v8190 = vunpack.c.l.b16 %v7130
    %v8191 = vunpack.c.h.b16 %v7130
    %v8192 = vunpack.c.l.b16 %v7131
    %v8193 = vunpack.c.h.b16 %v7131
    %v8194 = vunpack.c.l.b16 %v7132
    %v8195 = vunpack.c.h.b16 %v7132
    %v8196 = vunpack.c.l.b16 %v7133
    %v8197 = vunpack.c.h.b16 %v7133
    %v8198 = vunpack.c.l.b16 %v7134
    %v8199 = vunpack.c.h.b16 %v7134
    %v8200 = vunpack.c.l.b16 %v7135
    %v8201 = vunpack.c.h.b16 %v7135
    %v8202 = vunpack.c.l.b16 %v7136
    %v8203 = vunpack.c.h.b16 %v7136
    %v8204 = vunpack.c.l.b16 %v7137
    %v8205 = vunpack.c.h.b16 %v7137
    %v8206 = vunpack.c.l.b16 %v7138
    %v8207 = vunpack.c.h.b16 %v7138
    %v8208 = vunpack.c.l.b16 %v7139
    %v8209 = vunpack.c.h.b16 %v7139
    %v8210 = vunpack.c.l.b16 %v7140
    %v8211 = vunpack.c.h.b16 %v7140
    %v8212 = vunpack.c.l.b16 %v7141
    %v8213 = vunpack.c.h.b16 %v7141
    %v8214 = vunpack.c.l.b16 %v7142
    %v8215 = vunpack.c.h.b16 %v7142
    %v8216 = vunpack.c.l.b16 %v7143
    %v8217 = vunpack.c.h.b16 %v7143
    %v8218 = vunpack.c.l.b16 %v7144
    %v8219 = vunpack.c.h.b16 %v7144
    %v8220 = vunpack.c.l.b16 %v7145
    %v8221 = vunpack.c.h.b16 %v7145
    %v8222 = vunpack.c.l.b16 %v7146
    %v8223 = vunpack.c.h.b16 %v7146
    %v8224 = vunpack.c.l.b16 %v7147
    %v8225 = vunpack.c.h.b16 %v7147
    %v8226 = vunpack.c.l.b16 %v7148
    %v8227 = vunpack.c.h.b16 %v7148
    %v8228 = vunpack.c.l.b16 %v7149
    %v8229 = vunpack.c.h.b16 %v7149
    %v8230 = vunpack.c.l.b16 %v7150
    %v8231 = vunpack.c.h.b16 %v7150
    %v8232 = vunpack.c.l.b16 %v7151
    %v8233 = vunpack.c.h.b16 %v7151
    %v8234 = vunpack.c.l.b16 %v7152
    %v8235 = vunpack.c.h.b16 %v7152
    %v8236 = vunpack.c.l.b16 %v7153
    %v8237 = vunpack.c.h.b16 %v7153
    %v8238 = vunpack.c.l.b16 %v7154
    %v8239 = vunpack.c.h.b16 %v7154
    %v8240 = vunpack.c.l.b16 %v7155
    %v8241 = vunpack.c.h.b16 %v7155
    %v8242 = vunpack.c.l.b16 %v7156
    %v8243 = vunpack.c.h.b16 %v7156
    %v8244 = vunpack.c.l.b16 %v7157
    %v8245 = vunpack.c.h.b16 %v7157
    %v8246 = vunpack.c.l.b16 %v7158
    %v8247 = vunpack.c.h.b16 %v7158
    %v8248 = vunpack.c.l.b16 %v7159
    %v8249 = vunpack.c.h.b16 %v7159
    %v8250 = vunpack.c.l.b16 %v7160
    %v8251 = vunpack.c.h.b16 %v7160
    %v8252 = vunpack.c.l.b16 %v7161
    %v8253 = vunpack.c.h.b16 %v7161
    %v8254 = vunpack.c.l.b16 %v7162
    %v8255 = vunpack.c.h.b16 %v7162
    %v8256 = vunpack.c.l.b16 %v7163
    %v8257 = vunpack.c.h.b16 %v7163
    %v8258 = vunpack.c.l.b16 %v7164
    %v8259 = vunpack.c.h.b16 %v7164
    %v8260 = vunpack.c.l.b16 %v7165
    %v8261 = vunpack.c.h.b16 %v7165
    %v8262 = vunpack.c.l.b16 %v7166
    %v8263 = vunpack.c.h.b16 %v7166
    %v8264 = vunpack.c.l.b16 %v7167
    %v8265 = vunpack.c.h.b16 %v7167
    %v8266 = vunpack.c.l.b16 %v7168
    %v8267 = vunpack.c.h.b16 %v7168
    %v8268 = vunpack.c.l.b16 %v7169
    %v8269 = vunpack.c.h.b16 %v7169
    %v8270 = vunpack.c.l.b16 %v7170
    %v8271 = vunpack.c.h.b16 %v7170
    %v8272 = vunpack.c.l.b16 %v7171
    %v8273 = vunpack.c.h.b16 %v7171
    %v8274 = vunpack.c.l.b16 %v7172
    %v8275 = vunpack.c.h.b16 %v7172
    %v8276 = vunpack.c.l.b16 %v7173
    %v8277 = vunpack.c.h.b16 %v7173
    %v8278 = vunpack.c.l.b16 %v7174
    %v8279 = vunpack.c.h.b16 %v7174
    %v8280 = vunpack.c.l.b16 %v7175
    %v8281 = vunpack.c.h.b16 %v7175
    %v8282 = vunpack.c.l.b16 %v7176
    %v8283 = vunpack.c.h.b16 %v7176
    %v8284 = vunpack.c.l.b16 %v7177
    %v8285 = vunpack.c.h.b16 %v7177
    %v8286 = vunpack.c.l.b16 %v7178
    %v8287 = vunpack.c.h.b16 %v7178
    %v8288 = vunpack.c.l.b16 %v7179
    %v8289 = vunpack.c.h.b16 %v7179
    %v8290 = vunpack.c.l.b16 %v7180
    %v8291 = vunpack.c.h.b16 %v7180
    %v8292 = vunpack.c.l.b16 %v7181
    %v8293 = vunpack.c.h.b16 %v7181
    %v8294 = vunpack.c.l.b16 %v7182
    %v8295 = vunpack.c.h.b16 %v7182
    %v8296 = vunpack.c.l.b16 %v7183
    %v8297 = vunpack.c.h.b16 %v7183
    %v8298 = vunpack.c.l.b16 %v7184
    %v8299 = vunpack.c.h.b16 %v7184
    %v8300 = vunpack.c.l.b16 %v7185
    %v8301 = vunpack.c.h.b16 %v7185
    %v8302 = vunpack.c.l.b16 %v7186
    %v8303 = vunpack.c.h.b16 %v7186
    %v8304 = vunpack.c.l.b16 %v7187
    %v8305 = vunpack.c.h.b16 %v7187
    %v8306 = vunpack.c.l.b16 %v7188
    %v8307 = vunpack.c.h.b16 %v7188
    %v8308 = vunpack.c.l.b16 %v7189
    %v8309 = vunpack.c.h.b16 %v7189
    %v8310 = vunpack.c.l.b16 %v7190
    %v8311 = vunpack.c.h.b16 %v7190
    %v8312 = vunpack.c.l.b16 %v7191
    %v8313 = vunpack.c.h.b16 %v7191
    %v8314 = vunpack.c.l.b16 %v7192
    %v8315 = vunpack.c.h.b16 %v7192
    %v8316 = vunpack.c.l.b16 %v7193
    %v8317 = vunpack.c.h.b16 %v7193
    %v8318 = vunpack.c.l.b16 %v7194
    %v8319 = vunpack.c.h.b16 %v7194
    %v8320 = vunpack.c.l.b16 %v7195
    %v8321 = vunpack.c.h.b16 %v7195
    %v8322 = vunpack.c.l.b16 %v7196
    %v8323 = vunpack.c.h.b16 %v7196
    %v8324 = vunpack.c.l.b16 %v7197
    %v8325 = vunpack.c.h.b16 %v7197
    %v8326 = vunpack.c.l.b16 %v7198
    %v8327 = vunpack.c.h.b16 %v7198
    %v8328 = vunpack.c.l.b16 %v7199
    %v8329 = vunpack.c.h.b16 %v7199
    %v8330 = vunpack.c.l.b16 %v7200
    %v8331 = vunpack.c.h.b16 %v7200
    %v8332 = vunpack.c.l.b16 %v7201
    %v8333 = vunpack.c.h.b16 %v7201
    %v8334 = vunpack.c.l.b16 %v7202
    %v8335 = vunpack.c.h.b16 %v7202
    %v8336 = vunpack.c.l.b16 %v7203
    %v8337 = vunpack.c.h.b16 %v7203
    %v8338 = vunpack.c.l.b16 %v7204
    %v8339 = vunpack.c.h.b16 %v7204
    %v8340 = vunpack.c.l.b16 %v7205
    %v8341 = vunpack.c.h.b16 %v7205
    %v8342 = vunpack.c.l.b16 %v7206
    %v8343 = vunpack.c.h.b16 %v7206
    %v8344 = vunpack.c.l.b16 %v7207
    %v8345 = vunpack.c.h.b16 %v7207
    %v8346 = vunpack.c.l.b16 %v7208
    %v8347 = vunpack.c.h.b16 %v7208
    %v8348 = vunpack.c.l.b16 %v7209
    %v8349 = vunpack.c.h.b16 %v7209
    %v8350 = vunpack.c.l.b16 %v7210
    %v8351 = vunpack.c.h.b16 %v7210
    %v8352 = vunpack.c.l.b16 %v7211
    %v8353 = vunpack.c.h.b16 %v7211
    %v8354 = vunpack.c.l.b16 %v7212
    %v8355 = vunpack.c.h.b16 %v7212
    %v8356 = vunpack.c.l.b16 %v7213
    %v8357 = vunpack.c.h.b16 %v7213
    %v8358 = vunpack.c.l.b16 %v7214
    %v8359 = vunpack.c.h.b16 %v7214
    %v8360 = vunpack.c.l.b16 %v7215
    %v8361 = vunpack.c.h.b16 %v7215
    %v8362 = vunpack.c.l.b16 %v7216
    %v8363 = vunpack.c.h.b16 %v7216
    %v8364 = vunpack.c.l.b16 %v7217
    %v8365 = vunpack.c.h.b16 %v7217
    %v8366 = vunpack.c.l.b16 %v7218
    %v8367 = vunpack.c.h.b16 %v7218
    %v8368 = vunpack.c.l.b16 %v7219
    %v8369 = vunpack.c.h.b16 %v7219
    %v8370 = vunpack.c.l.b16 %v7220
    %v8371 = vunpack.c.h.b16 %v7220
    %v8372 = vunpack.c.l.b16 %v7221
    %v8373 = vunpack.c.h.b16 %v7221
    %v8374 = vunpack.c.l.b16 %v7222
    %v8375 = vunpack.c.h.b16 %v7222
    %v8376 = vunpack.c.l.b16 %v7223
    %v8377 = vunpack.c.h.b16 %v7223
    %v8378 = vunpack.c.l.b16 %v7224
    %v8379 = vunpack.c.h.b16 %v7224
    %v8380 = vunpack.c.l.b16 %v7225
    %v8381 = vunpack.c.h.b16 %v7225
    %v8382 = vunpack.c.l.b16 %v7226
    %v8383 = vunpack.c.h.b16 %v7226
    %v8384 = vunpack.c.l.b16 %v7227
    %v8385 = vunpack.c.h.b16 %v7227
    %v8386 = vunpack.c.l.b16 %v7228
    %v8387 = vunpack.c.h.b16 %v7228
    %v8388 = vunpack.c.l.b16 %v7229
    %v8389 = vunpack.c.h.b16 %v7229
    %v8390 = vunpack.c.l.b16 %v7230
    %v8391 = vunpack.c.h.b16 %v7230
    %v8392 = vunpack.c.l.b16 %v7231
    %v8393 = vunpack.c.h.b16 %v7231
    %v8394 = vunpack.c.l.b16 %v7232
    %v8395 = vunpack.c.h.b16 %v7232
    %v8396 = vunpack.c.l.b16 %v7233
    %v8397 = vunpack.c.h.b16 %v7233
    %v8398 = vunpack.c.l.b16 %v7234
    %v8399 = vunpack.c.h.b16 %v7234
    %v8400 = vunpack.c.l.b16 %v7235
    %v8401 = vunpack.c.h.b16 %v7235
    %v8402 = vunpack.c.l.b16 %v7236
    %v8403 = vunpack.c.h.b16 %v7236
    %v8404 = vunpack.c.l.b16 %v7237
    %v8405 = vunpack.c.h.b16 %v7237
    %v8406 = vunpack.c.l.b16 %v7238
    %v8407 = vunpack.c.h.b16 %v7238
    %v8408 = vunpack.c.l.b16 %v7239
    %v8409 = vunpack.c.h.b16 %v7239
    %v8410 = vunpack.c.l.b16 %v7240
    %v8411 = vunpack.c.h.b16 %v7240
    %v8412 = vunpack.c.l.b16 %v7241
    %v8413 = vunpack.c.h.b16 %v7241
    %v8414 = vunpack.c.l.b16 %v7242
    %v8415 = vunpack.c.h.b16 %v7242
    %v8416 = vunpack.c.l.b16 %v7243
    %v8417 = vunpack.c.h.b16 %v7243
    %v8418 = vunpack.c.l.b16 %v7244
    %v8419 = vunpack.c.h.b16 %v7244
    %v8420 = vunpack.c.l.b16 %v7245
    %v8421 = vunpack.c.h.b16 %v7245
    %v8422 = vunpack.c.l.b16 %v7246
    %v8423 = vunpack.c.h.b16 %v7246
    %v8424 = vunpack.c.l.b16 %v7247
    %v8425 = vunpack.c.h.b16 %v7247
    %v8426 = vunpack.c.l.b16 %v7248
    %v8427 = vunpack.c.h.b16 %v7248
    %v8428 = vunpack.c.l.b16 %v7249
    %v8429 = vunpack.c.h.b16 %v7249
    %v8430 = vunpack.c.l.b16 %v7250
    %v8431 = vunpack.c.h.b16 %v7250
    %v8432 = vunpack.c.l.b16 %v7251
    %v8433 = vunpack.c.h.b16 %v7251
    %v8434 = vunpack.c.l.b16 %v7252
    %v8435 = vunpack.c.h.b16 %v7252
    %v8436 = vunpack.c.l.b16 %v7253
    %v8437 = vunpack.c.h.b16 %v7253
    %v8438 = vunpack.c.l.b16 %v7254
    %v8439 = vunpack.c.h.b16 %v7254
    %v8440 = vunpack.c.l.b16 %v7255
    %v8441 = vunpack.c.h.b16 %v7255
    %v8442 = vunpack.c.l.b16 %v7256
    %v8443 = vunpack.c.h.b16 %v7256
    %v8444 = vunpack.c.l.b16 %v7257
    %v8445 = vunpack.c.h.b16 %v7257
    %v8446 = vunpack.c.l.b16 %v7258
    %v8447 = vunpack.c.h.b16 %v7258
    %v8448 = vunpack.c.l.b16 %v7259
    %v8449 = vunpack.c.h.b16 %v7259
    %v8450 = vunpack.c.l.b16 %v7260
    %v8451 = vunpack.c.h.b16 %v7260
    %v8452 = vunpack.c.l.b16 %v7261
    %v8453 = vunpack.c.h.b16 %v7261
    %v8454 = vunpack.c.l.b16 %v7262
    %v8455 = vunpack.c.h.b16 %v7262
    %v8456 = vunpack.c.l.b16 %v7263
    %v8457 = vunpack.c.h.b16 %v7263
    %v8458 = vunpack.c.l.b16 %v7264
    %v8459 = vunpack.c.h.b16 %v7264
    %v8460 = vunpack.c.l.b16 %v7265
    %v8461 = vunpack.c.h.b16 %v7265
    %v8462 = vunpack.c.l.b16 %v7266
    %v8463 = vunpack.c.h.b16 %v7266
    %v8464 = vunpack.c.l.b16 %v7267
    %v8465 = vunpack.c.h.b16 %v7267
    %v8466 = vunpack.c.l.b16 %v7268
    %v8467 = vunpack.c.h.b16 %v7268
    %v8468 = vunpack.c.l.b16 %v7269
    %v8469 = vunpack.c.h.b16 %v7269
    %v8470 = vunpack.c.l.b16 %v7270
    %v8471 = vunpack.c.h.b16 %v7270
    %v8472 = vunpack.c.l.b16 %v7271
    %v8473 = vunpack.c.h.b16 %v7271
    %v8474 = vunpack.c.l.b16 %v7272
    %v8475 = vunpack.c.h.b16 %v7272
    %v8476 = vunpack.c.l.b16 %v7273
    %v8477 = vunpack.c.h.b16 %v7273
    %v8478 = vunpack.c.l.b16 %v7274
    %v8479 = vunpack.c.h.b16 %v7274
    %v8480 = vunpack.c.l.b16 %v7275
    %v8481 = vunpack.c.h.b16 %v7275
    %v8482 = vunpack.c.l.b16 %v7276
    %v8483 = vunpack.c.h.b16 %v7276
    %v8484 = vunpack.c.l.b16 %v7277
    %v8485 = vunpack.c.h.b16 %v7277
    %v8486 = vunpack.c.l.b16 %v7278
    %v8487 = vunpack.c.h.b16 %v7278
    %v8488 = vunpack.c.l.b16 %v7279
    %v8489 = vunpack.c.h.b16 %v7279
    %v8490 = vunpack.c.l.b16 %v7280
    %v8491 = vunpack.c.h.b16 %v7280
    %v8492 = vunpack.c.l.b16 %v7281
    %v8493 = vunpack.c.h.b16 %v7281
    %v8494 = vunpack.c.l.b16 %v7282
    %v8495 = vunpack.c.h.b16 %v7282
    %v8496 = vunpack.c.l.b16 %v7283
    %v8497 = vunpack.c.h.b16 %v7283
    %v8498 = vunpack.c.l.b16 %v7284
    %v8499 = vunpack.c.h.b16 %v7284
    %v8500 = vunpack.c.l.b16 %v7285
    %v8501 = vunpack.c.h.b16 %v7285
    %v8502 = vunpack.c.l.b16 %v7286
    %v8503 = vunpack.c.h.b16 %v7286
    %v8504 = vunpack.c.l.b16 %v7287
    %v8505 = vunpack.c.h.b16 %v7287
    %v8506 = vunpack.c.l.b16 %v7288
    %v8507 = vunpack.c.h.b16 %v7288
    %v8508 = vunpack.c.l.b16 %v7289
    %v8509 = vunpack.c.h.b16 %v7289
    %v8510 = vunpack.c.l.b16 %v7290
    %v8511 = vunpack.c.h.b16 %v7290
    %v8512 = vunpack.c.l.b16 %v7291
    %v8513 = vunpack.c.h.b16 %v7291
    %v8514 = vunpack.c.l.b16 %v7292
    %v8515 = vunpack.c.h.b16 %v7292
    %v8516 = vunpack.c.l.b16 %v7293
    %v8517 = vunpack.c.h.b16 %v7293
    %v8518 = vunpack.c.l.b16 %v7294
    %v8519 = vunpack.c.h.b16 %v7294
    %v8520 = vunpack.c.l.b16 %v7295
    %v8521 = vunpack.c.h.b16 %v7295
    %v8522 = vunpack.c.l.b16 %v7296
    %v8523 = vunpack.c.h.b16 %v7296
    %v8524 = vunpack.c.l.b16 %v7297
    %v8525 = vunpack.c.h.b16 %v7297
    %v8526 = vunpack.c.l.b16 %v7298
    %v8527 = vunpack.c.h.b16 %v7298
    %v8528 = vunpack.c.l.b16 %v7299
    %v8529 = vunpack.c.h.b16 %v7299
    %v8530 = vunpack.c.l.b16 %v7300
    %v8531 = vunpack.c.h.b16 %v7300
    %v8532 = vunpack.c.l.b16 %v7301
    %v8533 = vunpack.c.h.b16 %v7301
    %v8534 = vunpack.c.l.b16 %v7302
    %v8535 = vunpack.c.h.b16 %v7302
    %v8536 = vunpack.c.l.b16 %v7303
    %v8537 = vunpack.c.h.b16 %v7303
    %v8538 = vunpack.c.l.b16 %v7304
    %v8539 = vunpack.c.h.b16 %v7304
    %v8540 = vunpack.c.l.b16 %v7305
    %v8541 = vunpack.c.h.b16 %v7305
    %v8542 = vunpack.c.l.b16 %v7306
    %v8543 = vunpack.c.h.b16 %v7306
    %v8544 = vunpack.c.l.b16 %v7307
    %v8545 = vunpack.c.h.b16 %v7307
    %v8546 = vunpack.c.l.b16 %v7308
    %v8547 = vunpack.c.h.b16 %v7308
    %v8548 = vunpack.c.l.b16 %v7309
    %v8549 = vunpack.c.h.b16 %v7309
    %v8550 = vunpack.c.l.b16 %v7310
    %v8551 = vunpack.c.h.b16 %v7310
    %v8552 = vunpack.c.l.b16 %v7311
    %v8553 = vunpack.c.h.b16 %v7311
    %v8554 = vunpack.c.l.b16 %v7312
    %v8555 = vunpack.c.h.b16 %v7312
    %v8556 = vunpack.c.l.b16 %v7313
    %v8557 = vunpack.c.h.b16 %v7313
    %v8558 = vunpack.c.l.b16 %v7314
    %v8559 = vunpack.c.h.b16 %v7314
    %v8560 = vunpack.c.l.b16 %v7315
    %v8561 = vunpack.c.h.b16 %v7315
    %v8562 = vunpack.c.l.b16 %v7316
    %v8563 = vunpack.c.h.b16 %v7316
    %v8564 = vunpack.c.l.b16 %v7317
    %v8565 = vunpack.c.h.b16 %v7317
    %v8566 = vunpack.c.l.b16 %v7318
    %v8567 = vunpack.c.h.b16 %v7318
    %v8568 = vunpack.c.l.b16 %v7319
    %v8569 = vunpack.c.h.b16 %v7319
    %v8570 = vunpack.c.l.b16 %v7320
    %v8571 = vunpack.c.h.b16 %v7320
    %v8572 = vunpack.c.l.b16 %v7321
    %v8573 = vunpack.c.h.b16 %v7321
    %v8574 = vunpack.c.l.b16 %v7322
    %v8575 = vunpack.c.h.b16 %v7322
    %v8576 = vunpack.c.l.b16 %v7323
    %v8577 = vunpack.c.h.b16 %v7323
    %v8578 = vunpack.c.l.b16 %v7324
    %v8579 = vunpack.c.h.b16 %v7324
    %v8580 = vunpack.c.l.b16 %v7325
    %v8581 = vunpack.c.h.b16 %v7325
    %v8582 = vunpack.c.l.b16 %v7326
    %v8583 = vunpack.c.h.b16 %v7326
    %v8584 = vunpack.c.l.b16 %v7327
    %v8585 = vunpack.c.h.b16 %v7327
    %v8586 = vunpack.c.l.b16 %v7328
    %v8587 = vunpack.c.h.b16 %v7328
    %v8588 = vunpack.c.l.b16 %v7329
    %v8589 = vunpack.c.h.b16 %v7329
    %v8590 = vunpack.c.l.b16 %v7330
    %v8591 = vunpack.c.h.b16 %v7330
    %v8592 = vunpack.c.l.b16 %v7331
    %v8593 = vunpack.c.h.b16 %v7331
    %v8594 = vunpack.c.l.b16 %v7332
    %v8595 = vunpack.c.h.b16 %v7332
    %v8596 = vunpack.c.l.b16 %v7333
    %v8597 = vunpack.c.h.b16 %v7333
    %v8598 = vunpack.c.l.b16 %v7334
    %v8599 = vunpack.c.h.b16 %v7334
    %v8600 = vunpack.c.l.b16 %v7335
    %v8601 = vunpack.c.h.b16 %v7335
    %v8602 = vunpack.c.l.b16 %v7336
    %v8603 = vunpack.c.h.b16 %v7336
    %v8604 = vunpack.c.l.b16 %v7337
    %v8605 = vunpack.c.h.b16 %v7337
    %v8606 = vunpack.c.l.b16 %v7338
    %v8607 = vunpack.c.h.b16 %v7338
    %v8608 = vunpack.c.l.b16 %v7339
    %v8609 = vunpack.c.h.b16 %v7339
    %v8610 = vunpack.c.l.b16 %v7340
    %v8611 = vunpack.c.h.b16 %v7340
    %v8612 = vunpack.c.l.b16 %v7341
    %v8613 = vunpack.c.h.b16 %v7341
    %v8614 = vunpack.c.l.b16 %v7342
    %v8615 = vunpack.c.h.b16 %v7342
    %v8616 = vunpack.c.l.b16 %v7343
    %v8617 = vunpack.c.h.b16 %v7343
    %v8618 = vunpack.c.l.b16 %v7344
    %v8619 = vunpack.c.h.b16 %v7344
    %v8620 = vunpack.c.l.b16 %v7345
    %v8621 = vunpack.c.h.b16 %v7345
    %v8622 = vunpack.c.l.b16 %v7346
    %v8623 = vunpack.c.h.b16 %v7346
    %v8624 = vunpack.c.l.b16 %v7347
    %v8625 = vunpack.c.h.b16 %v7347
    %v8626 = vunpack.c.l.b16 %v7348
    %v8627 = vunpack.c.h.b16 %v7348
    %v8628 = vunpack.c.l.b16 %v7349
    %v8629 = vunpack.c.h.b16 %v7349
    %v8630 = vunpack.c.l.b16 %v7350
    %v8631 = vunpack.c.h.b16 %v7350
    %v8632 = vunpack.c.l.b16 %v7351
    %v8633 = vunpack.c.h.b16 %v7351
    %v8634 = vunpack.c.l.b16 %v7352
    %v8635 = vunpack.c.h.b16 %v7352
    %v8636 = vunpack.c.l.b16 %v7353
    %v8637 = vunpack.c.h.b16 %v7353
    %v8638 = vunpack.c.l.b16 %v7354
    %v8639 = vunpack.c.h.b16 %v7354
    %v8640 = vunpack.c.l.b16 %v7355
    %v8641 = vunpack.c.h.b16 %v7355
    %v8642 = vunpack.c.l.b16 %v7356
    %v8643 = vunpack.c.h.b16 %v7356
    %v8644 = vunpack.c.l.b16 %v7357
    %v8645 = vunpack.c.h.b16 %v7357
    %v8646 = vunpack.c.l.b16 %v7358
    %v8647 = vunpack.c.h.b16 %v7358
    %v8648 = vunpack.c.l.b16 %v7359
    %v8649 = vunpack.c.h.b16 %v7359
    %v8650 = vunpack.c.l.b16 %v7360
    %v8651 = vunpack.c.h.b16 %v7360
    %v8652 = vunpack.c.l.b16 %v7361
    %v8653 = vunpack.c.h.b16 %v7361
    %v8654 = vunpack.c.l.b16 %v7362
    %v8655 = vunpack.c.h.b16 %v7362
    %v8656 = vunpack.c.l.b16 %v7363
    %v8657 = vunpack.c.h.b16 %v7363
    %v8658 = vunpack.c.l.b16 %v7364
    %v8659 = vunpack.c.h.b16 %v7364
    %v8660 = vunpack.c.l.b16 %v7365
    %v8661 = vunpack.c.h.b16 %v7365
    %v8662 = vunpack.c.l.b16 %v7366
    %v8663 = vunpack.c.h.b16 %v7366
    %v8664 = vunpack.c.l.b16 %v7367
    %v8665 = vunpack.c.h.b16 %v7367
    %v8666 = vunpack.c.l.b16 %v7368
    %v8667 = vunpack.c.h.b16 %v7368
    %v8668 = vunpack.c.l.b16 %v7369
    %v8669 = vunpack.c.h.b16 %v7369
    %v8670 = vunpack.c.l.b16 %v7370
    %v8671 = vunpack.c.h.b16 %v7370
    %v8672 = vunpack.c.l.b16 %v7371
    %v8673 = vunpack.c.h.b16 %v7371
    %v8674 = vunpack.c.l.b16 %v7372
    %v8675 = vunpack.c.h.b16 %v7372
    %v8676 = vunpack.c.l.b16 %v7373
    %v8677 = vunpack.c.h.b16 %v7373
    %v8678 = vunpack.c.l.b16 %v7374
    %v8679 = vunpack.c.h.b16 %v7374
    %v8680 = vunpack.c.l.b16 %v7375
    %v8681 = vunpack.c.h.b16 %v7375
    %v8682 = vunpack.c.l.b16 %v7376
    %v8683 = vunpack.c.h.b16 %v7376
    %v8684 = vunpack.c.l.b16 %v7377
    %v8685 = vunpack.c.h.b16 %v7377
    %v8686 = vunpack.c.l.b16 %v7378
    %v8687 = vunpack.c.h.b16 %v7378
    %v8688 = vunpack.c.l.b16 %v7379
    %v8689 = vunpack.c.h.b16 %v7379
    %v8690 = vunpack.c.l.b16 %v7380
    %v8691 = vunpack.c.h.b16 %v7380
    %v8692 = vunpack.c.l.b16 %v7381
    %v8693 = vunpack.c.h.b16 %v7381
    %v8694 = vunpack.c.l.b16 %v7382
    %v8695 = vunpack.c.h.b16 %v7382
    %v8696 = vunpack.c.l.b16 %v7383
    %v8697 = vunpack.c.h.b16 %v7383
    %v8698 = vunpack.c.l.b16 %v7384
    %v8699 = vunpack.c.h.b16 %v7384
    %v8700 = vunpack.c.l.b16 %v7385
    %v8701 = vunpack.c.h.b16 %v7385
    %v8702 = vunpack.c.l.b16 %v7386
    %v8703 = vunpack.c.h.b16 %v7386
    %v8704 = vunpack.c.l.b16 %v7387
    %v8705 = vunpack.c.h.b16 %v7387
    %v8706 = vunpack.c.l.b16 %v7388
    %v8707 = vunpack.c.h.b16 %v7388
    %v8708 = vunpack.c.l.b16 %v7389
    %v8709 = vunpack.c.h.b16 %v7389
    %v8710 = vunpack.c.l.b16 %v7390
    %v8711 = vunpack.c.h.b16 %v7390
    %v8712 = vunpack.c.l.b16 %v7391
    %v8713 = vunpack.c.h.b16 %v7391
    %v8714 = vunpack.c.l.b16 %v7392
    %v8715 = vunpack.c.h.b16 %v7392
    %v8716 = vunpack.c.l.b16 %v7393
    %v8717 = vunpack.c.h.b16 %v7393
    %v8718 = vunpack.c.l.b16 %v7394
    %v8719 = vunpack.c.h.b16 %v7394
    %v8720 = vunpack.c.l.b16 %v7395
    %v8721 = vunpack.c.h.b16 %v7395
    %v8722 = vunpack.c.l.b16 %v7396
    %v8723 = vunpack.c.h.b16 %v7396
    %v8724 = vunpack.c.l.b16 %v7397
    %v8725 = vunpack.c.h.b16 %v7397
    %v8726 = vunpack.c.l.b16 %v7398
    %v8727 = vunpack.c.h.b16 %v7398
    %v8728 = vunpack.c.l.b16 %v7399
    %v8729 = vunpack.c.h.b16 %v7399
    %v8730 = vunpack.c.l.b16 %v7400
    %v8731 = vunpack.c.h.b16 %v7400
    %v8732 = vunpack.c.l.b16 %v7401
    %v8733 = vunpack.c.h.b16 %v7401
    %v8734 = vunpack.c.l.b16 %v7402
    %v8735 = vunpack.c.h.b16 %v7402
    %v8736 = vunpack.c.l.b16 %v7403
    %v8737 = vunpack.c.h.b16 %v7403
    %v8738 = vunpack.c.l.b16 %v7404
    %v8739 = vunpack.c.h.b16 %v7404
    %v8740 = vunpack.c.l.b16 %v7405
    %v8741 = vunpack.c.h.b16 %v7405
    %v8742 = vunpack.c.l.b16 %v7406
    %v8743 = vunpack.c.h.b16 %v7406
    %v8744 = vunpack.c.l.b16 %v7407
    %v8745 = vunpack.c.h.b16 %v7407
    %v8746 = vunpack.c.l.b16 %v7408
    %v8747 = vunpack.c.h.b16 %v7408
    %v8748 = vunpack.c.l.b16 %v7409
    %v8749 = vunpack.c.h.b16 %v7409
    %v8750 = vunpack.c.l.b16 %v7410
    %v8751 = vunpack.c.h.b16 %v7410
    %v8752 = vunpack.c.l.b16 %v7411
    %v8753 = vunpack.c.h.b16 %v7411
    %v8754 = vunpack.c.l.b16 %v7412
    %v8755 = vunpack.c.h.b16 %v7412
    %v8756 = vunpack.c.l.b16 %v7413
    %v8757 = vunpack.c.h.b16 %v7413
    %v8758 = vunpack.c.l.b16 %v7414
    %v8759 = vunpack.c.h.b16 %v7414
    %v8760 = vunpack.c.l.b16 %v7415
    %v8761 = vunpack.c.h.b16 %v7415
    %v8762 = vunpack.c.l.b16 %v7416
    %v8763 = vunpack.c.h.b16 %v7416
    %v8764 = vunpack.c.l.b16 %v7417
    %v8765 = vunpack.c.h.b16 %v7417
    %v8766 = vunpack.c.l.b16 %v7418
    %v8767 = vunpack.c.h.b16 %v7418
    %v8768 = vunpack.c.l.b16 %v7419
    %v8769 = vunpack.c.h.b16 %v7419
    %v8770 = vunpack.c.l.b16 %v7420
    %v8771 = vunpack.c.h.b16 %v7420
    %v8772 = vunpack.c.l.b16 %v7421
    %v8773 = vunpack.c.h.b16 %v7421
    %v8774 = vunpack.c.l.b16 %v7422
    %v8775 = vunpack.c.h.b16 %v7422
    %v8776 = vunpack.c.l.b16 %v7423
    %v8777 = vunpack.c.h.b16 %v7423
    %v8778 = vunpack.c.l.b16 %v7424
    %v8779 = vunpack.c.h.b16 %v7424
    %v8780 = vunpack.c.l.b16 %v7425
    %v8781 = vunpack.c.h.b16 %v7425
    %v8782 = vunpack.c.l.b16 %v7426
    %v8783 = vunpack.c.h.b16 %v7426
    %v8784 = vunpack.c.l.b16 %v7427
    %v8785 = vunpack.c.h.b16 %v7427
    %v8786 = vunpack.c.l.b16 %v7428
    %v8787 = vunpack.c.h.b16 %v7428
    %v8788 = vunpack.c.l.b16 %v7429
    %v8789 = vunpack.c.h.b16 %v7429
    %v8790 = vunpack.c.l.b16 %v7430
    %v8791 = vunpack.c.h.b16 %v7430
    %v8792 = vunpack.c.l.b16 %v7431
    %v8793 = vunpack.c.h.b16 %v7431
    %v8794 = vunpack.c.l.b16 %v7432
    %v8795 = vunpack.c.h.b16 %v7432
    %v8796 = vunpack.c.l.b16 %v7433
    %v8797 = vunpack.c.h.b16 %v7433
    %v8798 = vunpack.c.l.b16 %v7434
    %v8799 = vunpack.c.h.b16 %v7434
    %v8800 = vunpack.c.l.b16 %v7435
    %v8801 = vunpack.c.h.b16 %v7435
    %v8802 = vunpack.c.l.b16 %v7436
    %v8803 = vunpack.c.h.b16 %v7436
    %v8804 = vunpack.c.l.b16 %v7437
    %v8805 = vunpack.c.h.b16 %v7437
    %v8806 = vunpack.c.l.b16 %v7438
    %v8807 = vunpack.c.h.b16 %v7438
    %v8808 = vunpack.c.l.b16 %v7439
    %v8809 = vunpack.c.h.b16 %v7439
    %v8810 = vunpack.c.l.b16 %v7440
    %v8811 = vunpack.c.h.b16 %v7440
    %v8812 = vunpack.c.l.b16 %v7441
    %v8813 = vunpack.c.h.b16 %v7441
    %v8814 = vunpack.c.l.b16 %v7442
    %v8815 = vunpack.c.h.b16 %v7442
    %v8816 = vunpack.c.l.b16 %v7443
    %v8817 = vunpack.c.h.b16 %v7443
    %v8818 = vunpack.c.l.b16 %v7444
    %v8819 = vunpack.c.h.b16 %v7444
    %v8820 = vunpack.c.l.b16 %v7445
    %v8821 = vunpack.c.h.b16 %v7445
    %v8822 = vunpack.c.l.b16 %v7446
    %v8823 = vunpack.c.h.b16 %v7446
    %v8824 = vunpack.c.l.b16 %v7447
    %v8825 = vunpack.c.h.b16 %v7447
    %v8826 = vunpack.c.l.b16 %v7448
    %v8827 = vunpack.c.h.b16 %v7448
    %v8828 = vunpack.c.l.b16 %v7449
    %v8829 = vunpack.c.h.b16 %v7449
    %v8830 = vunpack.c.l.b16 %v7450
    %v8831 = vunpack.c.h.b16 %v7450
    %v8832 = vunpack.c.l.b16 %v7451
    %v8833 = vunpack.c.h.b16 %v7451
    %v8834 = vunpack.c.l.b16 %v7452
    %v8835 = vunpack.c.h.b16 %v7452
    %v8836 = vunpack.c.l.b16 %v7453
    %v8837 = vunpack.c.h.b16 %v7453
    %v8838 = vunpack.c.l.b16 %v7454
    %v8839 = vunpack.c.h.b16 %v7454
    %v8840 = vunpack.c.l.b16 %v7455
    %v8841 = vunpack.c.h.b16 %v7455
    %v8842 = vunpack.c.l.b16 %v7456
    %v8843 = vunpack.c.h.b16 %v7456
    %v8844 = vunpack.c.l.b16 %v7457
    %v8845 = vunpack.c.h.b16 %v7457
    %v8846 = vunpack.c.l.b16 %v7458
    %v8847 = vunpack.c.h.b16 %v7458
    %v8848 = vunpack.c.l.b16 %v7459
    %v8849 = vunpack.c.h.b16 %v7459
    %v8850 = vunpack.c.l.b16 %v7460
    %v8851 = vunpack.c.h.b16 %v7460
    %v8852 = vunpack.c.l.b16 %v7461
    %v8853 = vunpack.c.h.b16 %v7461
    %v8854 = vunpack.c.l.b16 %v7462
    %v8855 = vunpack.c.h.b16 %v7462
    %v8856 = vunpack.c.l.b16 %v7463
    %v8857 = vunpack.c.h.b16 %v7463
    %v8858 = vunpack.c.l.b16 %v7464
    %v8859 = vunpack.c.h.b16 %v7464
    %v8860 = vunpack.c.l.b16 %v7465
    %v8861 = vunpack.c.h.b16 %v7465
    %v8862 = vunpack.c.l.b16 %v7466
    %v8863 = vunpack.c.h.b16 %v7466
    %v8864 = vunpack.c.l.b16 %v7467
    %v8865 = vunpack.c.h.b16 %v7467
    %v8866 = vunpack.c.l.b16 %v7468
    %v8867 = vunpack.c.h.b16 %v7468
    %v8868 = vunpack.c.l.b16 %v7469
    %v8869 = vunpack.c.h.b16 %v7469
    %v8870 = vunpack.c.l.b16 %v7470
    %v8871 = vunpack.c.h.b16 %v7470
    %v8872 = vunpack.c.l.b16 %v7471
    %v8873 = vunpack.c.h.b16 %v7471
    %v8874 = vunpack.c.l.b16 %v7472
    %v8875 = vunpack.c.h.b16 %v7472
    %v8876 = vunpack.c.l.b16 %v7473
    %v8877 = vunpack.c.h.b16 %v7473
    %v8878 = vunpack.c.l.b16 %v7474
    %v8879 = vunpack.c.h.b16 %v7474
    %v8880 = vunpack.c.l.b16 %v7475
    %v8881 = vunpack.c.h.b16 %v7475
    %v8882 = vunpack.c.l.b16 %v7476
    %v8883 = vunpack.c.h.b16 %v7476
    %v8884 = vunpack.c.l.b16 %v7477
    %v8885 = vunpack.c.h.b16 %v7477
    %v8886 = vunpack.c.l.b16 %v7478
    %v8887 = vunpack.c.h.b16 %v7478
    %v8888 = vunpack.c.l.b16 %v7479
    %v8889 = vunpack.c.h.b16 %v7479
    %v8890 = vunpack.c.l.b16 %v7480
    %v8891 = vunpack.c.h.b16 %v7480
    %v8892 = vunpack.c.l.b16 %v7481
    %v8893 = vunpack.c.h.b16 %v7481
    %v8894 = vunpack.c.l.b16 %v7482
    %v8895 = vunpack.c.h.b16 %v7482
    %v8896 = vunpack.c.l.b16 %v7483
    %v8897 = vunpack.c.h.b16 %v7483
    %v8898 = vunpack.c.l.b16 %v7484
    %v8899 = vunpack.c.h.b16 %v7484
    %v8900 = vunpack.c.l.b16 %v7485
    %v8901 = vunpack.c.h.b16 %v7485
    %v8902 = vunpack.c.l.b16 %v7486
    %v8903 = vunpack.c.h.b16 %v7486
    %v8904 = vunpack.c.l.b16 %v7487
    %v8905 = vunpack.c.h.b16 %v7487
    %v8906 = vunpack.c.l.b16 %v7488
    %v8907 = vunpack.c.h.b16 %v7488
    %v8908 = vunpack.c.l.b16 %v7489
    %v8909 = vunpack.c.h.b16 %v7489
    %v8910 = vunpack.c.l.b16 %v7490
    %v8911 = vunpack.c.h.b16 %v7490
    %v8912 = vunpack.c.l.b16 %v7491
    %v8913 = vunpack.c.h.b16 %v7491
    %v8914 = vunpack.c.l.b16 %v7492
    %v8915 = vunpack.c.h.b16 %v7492
    %v8916 = vunpack.c.l.b16 %v7493
    %v8917 = vunpack.c.h.b16 %v7493
    %v8918 = vunpack.c.l.b16 %v7494
    %v8919 = vunpack.c.h.b16 %v7494
    %v8920 = vunpack.c.l.b16 %v7495
    %v8921 = vunpack.c.h.b16 %v7495
    %v8922 = vunpack.c.l.b16 %v7496
    %v8923 = vunpack.c.h.b16 %v7496
    %v8924 = vunpack.c.l.b16 %v7497
    %v8925 = vunpack.c.h.b16 %v7497
    %v8926 = vunpack.c.l.b16 %v7498
    %v8927 = vunpack.c.h.b16 %v7498
    %v8928 = vunpack.c.l.b16 %v7499
    %v8929 = vunpack.c.h.b16 %v7499
    %v8930 = vunpack.c.l.b16 %v7500
    %v8931 = vunpack.c.h.b16 %v7500
    %v8932 = vunpack.c.l.b16 %v7501
    %v8933 = vunpack.c.h.b16 %v7501
    %v8934 = vunpack.c.l.b16 %v7502
    %v8935 = vunpack.c.h.b16 %v7502
    %v8936 = vunpack.c.l.b16 %v7503
    %v8937 = vunpack.c.h.b16 %v7503
    %v8938 = vunpack.c.l.b16 %v7504
    %v8939 = vunpack.c.h.b16 %v7504
    %v8940 = vunpack.c.l.b16 %v7505
    %v8941 = vunpack.c.h.b16 %v7505
    %v8942 = vunpack.c.l.b16 %v7506
    %v8943 = vunpack.c.h.b16 %v7506
    %v8944 = vunpack.c.l.b16 %v7507
    %v8945 = vunpack.c.h.b16 %v7507
    %v8946 = vunpack.c.l.b16 %v7508
    %v8947 = vunpack.c.h.b16 %v7508
    %v8948 = vunpack.c.l.b16 %v7509
    %v8949 = vunpack.c.h.b16 %v7509
    %v8950 = vunpack.c.l.b16 %v7510
    %v8951 = vunpack.c.h.b16 %v7510
    %v8952 = vunpack.c.l.b16 %v7511
    %v8953 = vunpack.c.h.b16 %v7511
    %v8954 = vunpack.c.l.b16 %v7512
    %v8955 = vunpack.c.h.b16 %v7512
    %v8956 = vunpack.c.l.b16 %v7513
    %v8957 = vunpack.c.h.b16 %v7513
    %v8958 = vunpack.c.l.b16 %v7514
    %v8959 = vunpack.c.h.b16 %v7514
    %v8960 = vunpack.c.l.b16 %v7515
    %v8961 = vunpack.c.h.b16 %v7515
    %v8962 = vunpack.c.l.b16 %v7516
    %v8963 = vunpack.c.h.b16 %v7516
    %v8964 = vunpack.c.l.b16 %v7517
    %v8965 = vunpack.c.h.b16 %v7517
    %v8966 = vunpack.c.l.b16 %v7518
    %v8967 = vunpack.c.h.b16 %v7518
    %v8968 = vunpack.c.l.b16 %v7519
    %v8969 = vunpack.c.h.b16 %v7519
    %v8970 = vunpack.c.l.b16 %v7520
    %v8971 = vunpack.c.h.b16 %v7520
    %v8972 = vunpack.c.l.b16 %v7521
    %v8973 = vunpack.c.h.b16 %v7521
    %v8974 = vunpack.c.l.b16 %v7522
    %v8975 = vunpack.c.h.b16 %v7522
    %v8976 = vunpack.c.l.b16 %v7523
    %v8977 = vunpack.c.h.b16 %v7523
    %v8978 = vunpack.c.l.b16 %v7524
    %v8979 = vunpack.c.h.b16 %v7524
    %v8980 = vunpack.c.l.b16 %v7525
    %v8981 = vunpack.c.h.b16 %v7525
    %v8982 = vunpack.c.l.b16 %v7526
    %v8983 = vunpack.c.h.b16 %v7526
    %v8984 = vunpack.c.l.b16 %v7527
    %v8985 = vunpack.c.h.b16 %v7527
    %v8986 = vunpack.c.l.b16 %v7528
    %v8987 = vunpack.c.h.b16 %v7528
    %v8988 = vunpack.c.l.b16 %v7529
    %v8989 = vunpack.c.h.b16 %v7529
    %v8990 = vunpack.c.l.b16 %v7530
    %v8991 = vunpack.c.h.b16 %v7530
    %v8992 = vunpack.c.l.b16 %v7531
    %v8993 = vunpack.c.h.b16 %v7531
    %v8994 = vunpack.c.l.b16 %v7532
    %v8995 = vunpack.c.h.b16 %v7532
    %v8996 = vunpack.c.l.b16 %v7533
    %v8997 = vunpack.c.h.b16 %v7533
    %v8998 = vunpack.c.l.b16 %v7534
    %v8999 = vunpack.c.h.b16 %v7534
    %v9000 = vunpack.c.l.b16 %v7535
    %v9001 = vunpack.c.h.b16 %v7535
    %v9002 = vunpack.c.l.b16 %v7536
    %v9003 = vunpack.c.h.b16 %v7536
    %v9004 = vunpack.c.l.b16 %v7537
    %v9005 = vunpack.c.h.b16 %v7537
    %v9006 = vunpack.c.l.b16 %v7538
    %v9007 = vunpack.c.h.b16 %v7538
    %v9008 = vunpack.c.l.b16 %v7539
    %v9009 = vunpack.c.h.b16 %v7539
    %v9010 = vunpack.c.l.b16 %v7540
    %v9011 = vunpack.c.h.b16 %v7540
    %v9012 = vunpack.c.l.b16 %v7541
    %v9013 = vunpack.c.h.b16 %v7541
    %v9014 = vunpack.c.l.b16 %v7542
    %v9015 = vunpack.c.h.b16 %v7542
    %v9016 = vunpack.c.l.b16 %v7543
    %v9017 = vunpack.c.h.b16 %v7543
    %v9018 = vunpack.c.l.b16 %v7544
    %v9019 = vunpack.c.h.b16 %v7544
    %v9020 = vunpack.c.l.b16 %v7545
    %v9021 = vunpack.c.h.b16 %v7545
    %v9022 = vunpack.c.l.b16 %v7546
    %v9023 = vunpack.c.h.b16 %v7546
    %v9024 = vunpack.c.l.b16 %v7547
    %v9025 = vunpack.c.h.b16 %v7547
    %v9026 = vunpack.c.l.b16 %v7548
    %v9027 = vunpack.c.h.b16 %v7548
    %v9028 = vunpack.c.l.b16 %v7549
    %v9029 = vunpack.c.h.b16 %v7549
    %v9030 = vunpack.c.l.b16 %v7550
    %v9031 = vunpack.c.h.b16 %v7550
    %v9032 = vunpack.c.l.b16 %v7551
    %v9033 = vunpack.c.h.b16 %v7551
    %v9034 = vunpack.c.l.b16 %v7552
    %v9035 = vunpack.c.h.b16 %v7552
    %v9036 = vunpack.c.l.b16 %v7553
    %v9037 = vunpack.c.h.b16 %v7553
    %v9038 = vunpack.c.l.b16 %v7554
    %v9039 = vunpack.c.h.b16 %v7554
    %v9040 = vunpack.c.l.b16 %v7555
    %v9041 = vunpack.c.h.b16 %v7555
    %v9042 = vunpack.c.l.b16 %v7556
    %v9043 = vunpack.c.h.b16 %v7556
    %v9044 = vunpack.c.l.b16 %v7557
    %v9045 = vunpack.c.h.b16 %v7557
    %v9046 = vunpack.c.l.b16 %v7558
    %v9047 = vunpack.c.h.b16 %v7558
    %v9048 = vunpack.c.l.b16 %v7559
    %v9049 = vunpack.c.h.b16 %v7559
    %v9050 = vunpack.c.l.b16 %v7560
    %v9051 = vunpack.c.h.b16 %v7560
    %v9052 = vunpack.c.l.b16 %v7561
    %v9053 = vunpack.c.h.b16 %v7561
    %v9054 = vunpack.c.l.b16 %v7562
    %v9055 = vunpack.c.h.b16 %v7562
    %v9056 = vunpack.c.l.b16 %v7563
    %v9057 = vunpack.c.h.b16 %v7563
    %v9058 = vunpack.c.l.b16 %v7564
    %v9059 = vunpack.c.h.b16 %v7564
    %v9060 = vunpack.c.l.b16 %v7565
    %v9061 = vunpack.c.h.b16 %v7565
    %v9062 = vunpack.c.l.b16 %v7566
    %v9063 = vunpack.c.h.b16 %v7566
    %v9064 = vunpack.c.l.b16 %v7567
    %v9065 = vunpack.c.h.b16 %v7567
    %v9066 = vunpack.c.l.b16 %v7568
    %v9067 = vunpack.c.h.b16 %v7568
    %v9068 = vunpack.c.l.b16 %v7569
    %v9069 = vunpack.c.h.b16 %v7569
    %v9070 = vunpack.c.l.b16 %v7570
    %v9071 = vunpack.c.h.b16 %v7570
    %v9072 = vunpack.c.l.b16 %v7571
    %v9073 = vunpack.c.h.b16 %v7571
    %v9074 = vunpack.c.l.b16 %v7572
    %v9075 = vunpack.c.h.b16 %v7572
    %v9076 = vunpack.c.l.b16 %v7573
    %v9077 = vunpack.c.h.b16 %v7573
    %v9078 = vunpack.c.l.b16 %v7574
    %v9079 = vunpack.c.h.b16 %v7574
    %v9080 = vunpack.c.l.b16 %v7575
    %v9081 = vunpack.c.h.b16 %v7575
    %v9082 = vunpack.c.l.b16 %v7576
    %v9083 = vunpack.c.h.b16 %v7576
    %v9084 = vunpack.c.l.b16 %v7577
    %v9085 = vunpack.c.h.b16 %v7577
    %v9086 = vunpack.c.l.b16 %v7578
    %v9087 = vunpack.c.h.b16 %v7578
    %v9088 = vunpack.c.l.b16 %v7579
    %v9089 = vunpack.c.h.b16 %v7579
    %v9090 = vunpack.c.l.b16 %v7580
    %v9091 = vunpack.c.h.b16 %v7580
    %v9092 = vunpack.c.l.b16 %v7581
    %v9093 = vunpack.c.h.b16 %v7581
    %v9094 = vunpack.c.l.b16 %v7582
    %v9095 = vunpack.c.h.b16 %v7582
    %v9096 = vunpack.c.l.b16 %v7583
    %v9097 = vunpack.c.h.b16 %v7583
    %v9098 = vunpack.c.l.b16 %v7584
    %v9099 = vunpack.c.h.b16 %v7584
    %v9100 = vunpack.c.l.b16 %v7585
    %v9101 = vunpack.c.h.b16 %v7585
    %v9102 = vunpack.c.l.b16 %v7586
    %v9103 = vunpack.c.h.b16 %v7586
    %v9104 = vunpack.c.l.b16 %v7587
    %v9105 = vunpack.c.h.b16 %v7587
    %v9106 = vunpack.c.l.b16 %v7588
    %v9107 = vunpack.c.h.b16 %v7588
    %v9108 = vunpack.c.l.b16 %v7589
    %v9109 = vunpack.c.h.b16 %v7589
    %v9110 = vunpack.c.l.b16 %v7590
    %v9111 = vunpack.c.h.b16 %v7590
    %v9112 = vunpack.c.l.b16 %v7591
    %v9113 = vunpack.c.h.b16 %v7591
    %v9114 = vunpack.c.l.b16 %v7592
    %v9115 = vunpack.c.h.b16 %v7592
    %v9116 = vunpack.c.l.b16 %v7593
    %v9117 = vunpack.c.h.b16 %v7593
    %v9118 = vunpack.c.l.b16 %v7594
    %v9119 = vunpack.c.h.b16 %v7594
    %v9120 = vunpack.c.l.b16 %v7595
    %v9121 = vunpack.c.h.b16 %v7595
    %v9122 = vunpack.c.l.b16 %v7596
    %v9123 = vunpack.c.h.b16 %v7596
    %v9124 = vunpack.c.l.b16 %v7597
    %v9125 = vunpack.c.h.b16 %v7597
    %v9126 = vunpack.c.l.b16 %v7598
    %v9127 = vunpack.c.h.b16 %v7598
    %v9128 = vunpack.c.l.b16 %v7599
    %v9129 = vunpack.c.h.b16 %v7599
    %v9130 = vunpack.c.l.b16 %v7600
    %v9131 = vunpack.c.h.b16 %v7600
    %v9132 = vunpack.c.l.b16 %v7601
    %v9133 = vunpack.c.h.b16 %v7601
    %v9134 = vunpack.c.l.b16 %v7602
    %v9135 = vunpack.c.h.b16 %v7602
    %v9136 = vunpack.c.l.b16 %v7603
    %v9137 = vunpack.c.h.b16 %v7603
    %v9138 = vunpack.c.l.b16 %v7604
    %v9139 = vunpack.c.h.b16 %v7604
    %v9140 = vunpack.c.l.b16 %v7605
    %v9141 = vunpack.c.h.b16 %v7605
    %v9142 = vpack.c.b16 %v8134, %v8118
    %v9143 = vpack.c.b16 %v8135, %v8119
    %v9144 = vpack.c.b16 %v8136, %v8120
    %v9145 = vpack.c.b16 %v8137, %v8121
    %v9146 = vpack.c.b16 %v8138, %v8122
    %v9147 = vpack.c.b16 %v8139, %v8123
    %v9148 = vpack.c.b16 %v8140, %v8124
    %v9149 = vpack.c.b16 %v8141, %v8125
    %v9150 = vpack.c.b16 %v8142, %v8126
    %v9151 = vpack.c.b16 %v8143, %v8127
    %v9152 = vpack.c.b16 %v8144, %v8128
    %v9153 = vpack.c.b16 %v8145, %v8129
    %v9154 = vpack.c.b16 %v8146, %v8130
    %v9155 = vpack.c.b16 %v8147, %v8131
    %v9156 = vpack.c.b16 %v8148, %v8132
    %v9157 = vpack.c.b16 %v8149, %v8133
    %v9158 = vpack.c.b16 %v8166, %v8150
    %v9159 = vpack.c.b16 %v8167, %v8151
    %v9160 = vpack.c.b16 %v8168, %v8152
    %v9161 = vpack.c.b16 %v8169, %v8153
    %v9162 = vpack.c.b16 %v8170, %v8154
    %v9163 = vpack.c.b16 %v8171, %v8155
    %v9164 = vpack.c.b16 %v8172, %v8156
    %v9165 = vpack.c.b16 %v8173, %v8157
    %v9166 = vpack.c.b16 %v8174, %v8158
    %v9167 = vpack.c.b16 %v8175, %v8159
    %v9168 = vpack.c.b16 %v8176, %v8160
    %v9169 = vpack.c.b16 %v8177, %v8161
    %v9170 = vpack.c.b16 %v8178, %v8162
    %v9171 = vpack.c.b16 %v8179, %v8163
    %v9172 = vpack.c.b16 %v8180, %v8164
    %v9173 = vpack.c.b16 %v8181, %v8165
    %v9174 = vpack.c.b16 %v8198, %v8182
    %v9175 = vpack.c.b16 %v8199, %v8183
    %v9176 = vpack.c.b16 %v8200, %v8184
    %v9177 = vpack.c.b16 %v8201, %v8185
    %v9178 = vpack.c.b16 %v8202, %v8186
    %v9179 = vpack.c.b16 %v8203, %v8187
    %v9180 = vpack.c.b16 %v8204, %v8188
    %v9181 = vpack.c.b16 %v8205, %v8189
    %v9182 = vpack.c.b16 %v8206, %v8190
    %v9183 = vpack.c.b16 %v8207, %v8191
    %v9184 = vpack.c.b16 %v8208, %v8192
    %v9185 = vpack.c.b16 %v8209, %v8193
    %v9186 = vpack.c.b16 %v8210, %v8194
    %v9187 = vpack.c.b16 %v8211, %v8195
    %v9188 = vpack.c.b16 %v8212, %v8196
    %v9189 = vpack.c.b16 %v8213, %v8197
    %v9190 = vpack.c.b16 %v8230, %v8214
    %v9191 = vpack.c.b16 %v8231, %v8215
    %v9192 = vpack.c.b16 %v8232, %v8216
    %v9193 = vpack.c.b16 %v8233, %v8217
    %v9194 = vpack.c.b16 %v8234, %v8218
    %v9195 = vpack.c.b16 %v8235, %v8219
    %v9196 = vpack.c.b16 %v8236, %v8220
    %v9197 = vpack.c.b16 %v8237, %v8221
    %v9198 = vpack.c.b16 %v8238, %v8222
    %v9199 = vpack.c.b16 %v8239, %v8223
    %v9200 = vpack.c.b16 %v8240, %v8224
    %v9201 = vpack.c.b16 %v8241, %v8225
    %v9202 = vpack.c.b16 %v8242, %v8226
    %v9203 = vpack.c.b16 %v8243, %v8227
    %v9204 = vpack.c.b16 %v8244, %v8228
    %v9205 = vpack.c.b16 %v8245, %v8229
    %v9206 = vpack.c.b16 %v8262, %v8246
    %v9207 = vpack.c.b16 %v8263, %v8247
    %v9208 = vpack.c.b16 %v8264, %v8248
    %v9209 = vpack.c.b16 %v8265, %v8249
    %v9210 = vpack.c.b16 %v8266, %v8250
    %v9211 = vpack.c.b16 %v8267, %v8251
    %v9212 = vpack.c.b16 %v8268, %v8252
    %v9213 = vpack.c.b16 %v8269, %v8253
    %v9214 = vpack.c.b16 %v8270, %v8254
    %v9215 = vpack.c.b16 %v8271, %v8255
    %v9216 = vpack.c.b16 %v8272, %v8256
    %v9217 = vpack.c.b16 %v8273, %v8257
    %v9218 = vpack.c.b16 %v8274, %v8258
    %v9219 = vpack.c.b16 %v8275, %v8259
    %v9220 = vpack.c.b16 %v8276, %v8260
    %v9221 = vpack.c.b16 %v8277, %v8261
    %v9222 = vpack.c.b16 %v8294, %v8278
    %v9223 = vpack.c.b16 %v8295, %v8279
    %v9224 = vpack.c.b16 %v8296, %v8280
    %v9225 = vpack.c.b16 %v8297, %v8281
    %v9226 = vpack.c.b16 %v8298, %v8282
    %v9227 = vpack.c.b16 %v8299, %v8283
    %v9228 = vpack.c.b16 %v8300, %v8284
    %v9229 = vpack.c.b16 %v8301, %v8285
    %v9230 = vpack.c.b16 %v8302, %v8286
    %v9231 = vpack.c.b16 %v8303, %v8287
    %v9232 = vpack.c.b16 %v8304, %v8288
    %v9233 = vpack.c.b16 %v8305, %v8289
    %v9234 = vpack.c.b16 %v8306, %v8290
    %v9235 = vpack.c.b16 %v8307, %v8291
    %v9236 = vpack.c.b16 %v8308, %v8292
    %v9237 = vpack.c.b16 %v8309, %v8293
    %v9238 = vpack.c.b16 %v8326, %v8310
    %v9239 = vpack.c.b16 %v8327, %v8311
    %v9240 = vpack.c.b16 %v8328, %v8312
    %v9241 = vpack.c.b16 %v8329, %v8313
    %v9242 = vpack.c.b16 %v8330, %v8314
    %v9243 = vpack.c.b16 %v8331, %v8315
    %v9244 = vpack.c.b16 %v8332, %v8316
    %v9245 = vpack.c.b16 %v8333, %v8317
    %v9246 = vpack.c.b16 %v8334, %v8318
    %v9247 = vpack.c.b16 %v8335, %v8319
    %v9248 = vpack.c.b16 %v8336, %v8320
    %v9249 = vpack.c.b16 %v8337, %v8321
    %v9250 = vpack.c.b16 %v8338, %v8322
    %v9251 = vpack.c.b16 %v8339, %v8323
    %v9252 = vpack.c.b16 %v8340, %v8324
    %v9253 = vpack.c.b16 %v8341, %v8325
    %v9254 = vpack.c.b16 %v8358, %v8342
    %v9255 = vpack.c.b16 %v8359, %v8343
    %v9256 = vpack.c.b16 %v8360, %v8344
    %v9257 = vpack.c.b16 %v8361, %v8345
    %v9258 = vpack.c.b16 %v8362, %v8346
    %v9259 = vpack.c.b16 %v8363, %v8347
    %v9260 = vpack.c.b16 %v8364, %v8348
    %v9261 = vpack.c.b16 %v8365, %v8349
    %v9262 = vpack.c.b16 %v8366, %v8350
    %v9263 = vpack.c.b16 %v8367, %v8351
    %v9264 = vpack.c.b16 %v8368, %v8352
    %v9265 = vpack.c.b16 %v8369, %v8353
    %v9266 = vpack.c.b16 %v8370, %v8354
    %v9267 = vpack.c.b16 %v8371, %v8355
    %v9268 = vpack.c.b16 %v8372, %v8356
    %v9269 = vpack.c.b16 %v8373, %v8357
    %v9270 = vpack.c.b16 %v8390, %v8374
    %v9271 = vpack.c.b16 %v8391, %v8375
    %v9272 = vpack.c.b16 %v8392, %v8376
    %v9273 = vpack.c.b16 %v8393, %v8377
    %v9274 = vpack.c.b16 %v8394, %v8378
    %v9275 = vpack.c.b16 %v8395, %v8379
    %v9276 = vpack.c.b16 %v8396, %v8380
    %v9277 = vpack.c.b16 %v8397, %v8381
    %v9278 = vpack.c.b16 %v8398, %v8382
    %v9279 = vpack.c.b16 %v8399, %v8383
    %v9280 = vpack.c.b16 %v8400, %v8384
    %v9281 = vpack.c.b16 %v8401, %v8385
    %v9282 = vpack.c.b16 %v8402, %v8386
    %v9283 = vpack.c.b16 %v8403, %v8387
    %v9284 = vpack.c.b16 %v8404, %v8388
    %v9285 = vpack.c.b16 %v8405, %v8389
    %v9286 = vpack.c.b16 %v8422, %v8406
    %v9287 = vpack.c.b16 %v8423, %v8407
    %v9288 = vpack.c.b16 %v8424, %v8408
    %v9289 = vpack.c.b16 %v8425, %v8409
    %v9290 = vpack.c.b16 %v8426, %v8410
    %v9291 = vpack.c.b16 %v8427, %v8411
    %v9292 = vpack.c.b16 %v8428, %v8412
    %v9293 = vpack.c.b16 %v8429, %v8413
    %v9294 = vpack.c.b16 %v8430, %v8414
    %v9295 = vpack.c.b16 %v8431, %v8415
    %v9296 = vpack.c.b16 %v8432, %v8416
    %v9297 = vpack.c.b16 %v8433, %v8417
    %v9298 = vpack.c.b16 %v8434, %v8418
    %v9299 = vpack.c.b16 %v8435, %v8419
    %v9300 = vpack.c.b16 %v8436, %v8420
    %v9301 = vpack.c.b16 %v8437, %v8421
    %v9302 = vpack.c.b16 %v8454, %v8438
    %v9303 = vpack.c.b16 %v8455, %v8439
    %v9304 = vpack.c.b16 %v8456, %v8440
    %v9305 = vpack.c.b16 %v8457, %v8441
    %v9306 = vpack.c.b16 %v8458, %v8442
    %v9307 = vpack.c.b16 %v8459, %v8443
    %v9308 = vpack.c.b16 %v8460, %v8444
    %v9309 = vpack.c.b16 %v8461, %v8445
    %v9310 = vpack.c.b16 %v8462, %v8446
    %v9311 = vpack.c.b16 %v8463, %v8447
    %v9312 = vpack.c.b16 %v8464, %v8448
    %v9313 = vpack.c.b16 %v8465, %v8449
    %v9314 = vpack.c.b16 %v8466, %v8450
    %v9315 = vpack.c.b16 %v8467, %v8451
    %v9316 = vpack.c.b16 %v8468, %v8452
    %v9317 = vpack.c.b16 %v8469, %v8453
    %v9318 = vpack.c.b16 %v8486, %v8470
    %v9319 = vpack.c.b16 %v8487, %v8471
    %v9320 = vpack.c.b16 %v8488, %v8472
    %v9321 = vpack.c.b16 %v8489, %v8473
    %v9322 = vpack.c.b16 %v8490, %v8474
    %v9323 = vpack.c.b16 %v8491, %v8475
    %v9324 = vpack.c.b16 %v8492, %v8476
    %v9325 = vpack.c.b16 %v8493, %v8477
    %v9326 = vpack.c.b16 %v8494, %v8478
    %v9327 = vpack.c.b16 %v8495, %v8479
    %v9328 = vpack.c.b16 %v8496, %v8480
    %v9329 = vpack.c.b16 %v8497, %v8481
    %v9330 = vpack.c.b16 %v8498, %v8482
    %v9331 = vpack.c.b16 %v8499, %v8483
    %v9332 = vpack.c.b16 %v8500, %v8484
    %v9333 = vpack.c.b16 %v8501, %v8485
    %v9334 = vpack.c.b16 %v8518, %v8502
    %v9335 = vpack.c.b16 %v8519, %v8503
    %v9336 = vpack.c.b16 %v8520, %v8504
    %v9337 = vpack.c.b16 %v8521, %v8505
    %v9338 = vpack.c.b16 %v8522, %v8506
    %v9339 = vpack.c.b16 %v8523, %v8507
    %v9340 = vpack.c.b16 %v8524, %v8508
    %v9341 = vpack.c.b16 %v8525, %v8509
    %v9342 = vpack.c.b16 %v8526, %v8510
    %v9343 = vpack.c.b16 %v8527, %v8511
    %v9344 = vpack.c.b16 %v8528, %v8512
    %v9345 = vpack.c.b16 %v8529, %v8513
    %v9346 = vpack.c.b16 %v8530, %v8514
    %v9347 = vpack.c.b16 %v8531, %v8515
    %v9348 = vpack.c.b16 %v8532, %v8516
    %v9349 = vpack.c.b16 %v8533, %v8517
    %v9350 = vpack.c.b16 %v8550, %v8534
    %v9351 = vpack.c.b16 %v8551, %v8535
    %v9352 = vpack.c.b16 %v8552, %v8536
    %v9353 = vpack.c.b16 %v8553, %v8537
    %v9354 = vpack.c.b16 %v8554, %v8538
    %v9355 = vpack.c.b16 %v8555, %v8539
    %v9356 = vpack.c.b16 %v8556, %v8540
    %v9357 = vpack.c.b16 %v8557, %v8541
    %v9358 = vpack.c.b16 %v8558, %v8542
    %v9359 = vpack.c.b16 %v8559, %v8543
    %v9360 = vpack.c.b16 %v8560, %v8544
    %v9361 = vpack.c.b16 %v8561, %v8545
    %v9362 = vpack.c.b16 %v8562, %v8546
    %v9363 = vpack.c.b16 %v8563, %v8547
    %v9364 = vpack.c.b16 %v8564, %v8548
    %v9365 = vpack.c.b16 %v8565, %v8549
    %v9366 = vpack.c.b16 %v8582, %v8566
    %v9367 = vpack.c.b16 %v8583, %v8567
    %v9368 = vpack.c.b16 %v8584, %v8568
    %v9369 = vpack.c.b16 %v8585, %v8569
    %v9370 = vpack.c.b16 %v8586, %v8570
    %v9371 = vpack.c.b16 %v8587, %v8571
    %v9372 = vpack.c.b16 %v8588, %v8572
    %v9373 = vpack.c.b16 %v8589, %v8573
    %v9374 = vpack.c.b16 %v8590, %v8574
    %v9375 = vpack.c.b16 %v8591, %v8575
    %v9376 = vpack.c.b16 %v8592, %v8576
    %v9377 = vpack.c.b16 %v8593, %v8577
    %v9378 = vpack.c.b16 %v8594, %v8578
    %v9379 = vpack.c.b16 %v8595, %v8579
    %v9380 = vpack.c.b16 %v8596, %v8580
    %v9381 = vpack.c.b16 %v8597, %v8581
    %v9382 = vpack.c.b16 %v8614, %v8598
    %v9383 = vpack.c.b16 %v8615, %v8599
    %v9384 = vpack.c.b16 %v8616, %v8600
    %v9385 = vpack.c.b16 %v8617, %v8601
    %v9386 = vpack.c.b16 %v8618, %v8602
    %v9387 = vpack.c.b16 %v8619, %v8603
    %v9388 = vpack.c.b16 %v8620, %v8604
    %v9389 = vpack.c.b16 %v8621, %v8605
    %v9390 = vpack.c.b16 %v8622, %v8606
    %v9391 = vpack.c.b16 %v8623, %v8607
    %v9392 = vpack.c.b16 %v8624, %v8608
    %v9393 = vpack.c.b16 %v8625, %v8609
    %v9394 = vpack.c.b16 %v8626, %v8610
    %v9395 = vpack.c.b16 %v8627, %v8611
    %v9396 = vpack.c.b16 %v8628, %v8612
    %v9397 = vpack.c.b16 %v8629, %v8613
    %v9398 = vpack.c.b16 %v8646, %v8630
    %v9399 = vpack.c.b16 %v8647, %v8631
    %v9400 = vpack.c.b16 %v8648, %v8632
    %v9401 = vpack.c.b16 %v8649, %v8633
    %v9402 = vpack.c.b16 %v8650, %v8634
    %v9403 = vpack.c.b16 %v8651, %v8635
    %v9404 = vpack.c.b16 %v8652, %v8636
    %v9405 = vpack.c.b16 %v8653, %v8637
    %v9406 = vpack.c.b16 %v8654, %v8638
    %v9407 = vpack.c.b16 %v8655, %v8639
    %v9408 = vpack.c.b16 %v8656, %v8640
    %v9409 = vpack.c.b16 %v8657, %v8641
    %v9410 = vpack.c.b16 %v8658, %v8642
    %v9411 = vpack.c.b16 %v8659, %v8643
    %v9412 = vpack.c.b16 %v8660, %v8644
    %v9413 = vpack.c.b16 %v8661, %v8645
    %v9414 = vpack.c.b16 %v8678, %v8662
    %v9415 = vpack.c.b16 %v8679, %v8663
    %v9416 = vpack.c.b16 %v8680, %v8664
    %v9417 = vpack.c.b16 %v8681, %v8665
    %v9418 = vpack.c.b16 %v8682, %v8666
    %v9419 = vpack.c.b16 %v8683, %v8667
    %v9420 = vpack.c.b16 %v8684, %v8668
    %v9421 = vpack.c.b16 %v8685, %v8669
    %v9422 = vpack.c.b16 %v8686, %v8670
    %v9423 = vpack.c.b16 %v8687, %v8671
    %v9424 = vpack.c.b16 %v8688, %v8672
    %v9425 = vpack.c.b16 %v8689, %v8673
    %v9426 = vpack.c.b16 %v8690, %v8674
    %v9427 = vpack.c.b16 %v8691, %v8675
    %v9428 = vpack.c.b16 %v8692, %v8676
    %v9429 = vpack.c.b16 %v8693, %v8677
    %v9430 = vpack.c.b16 %v8710, %v8694
    %v9431 = vpack.c.b16 %v8711, %v8695
    %v9432 = vpack.c.b16 %v8712, %v8696
    %v9433 = vpack.c.b16 %v8713, %v8697
    %v9434 = vpack.c.b16 %v8714, %v8698
    %v9435 = vpack.c.b16 %v8715, %v8699
    %v9436 = vpack.c.b16 %v8716, %v8700
    %v9437 = vpack.c.b16 %v8717, %v8701
    %v9438 = vpack.c.b16 %v8718, %v8702
    %v9439 = vpack.c.b16 %v8719, %v8703
    %v9440 = vpack.c.b16 %v8720, %v8704
    %v9441 = vpack.c.b16 %v8721, %v8705
    %v9442 = vpack.c.b16 %v8722, %v8706
    %v9443 = vpack.c.b16 %v8723, %v8707
    %v9444 = vpack.c.b16 %v8724, %v8708
    %v9445 = vpack.c.b16 %v8725, %v8709
    %v9446 = vpack.c.b16 %v8742, %v8726
    %v9447 = vpack.c.b16 %v8743, %v8727
    %v9448 = vpack.c.b16 %v8744, %v8728
    %v9449 = vpack.c.b16 %v8745, %v8729
    %v9450 = vpack.c.b16 %v8746, %v8730
    %v9451 = vpack.c.b16 %v8747, %v8731
    %v9452 = vpack.c.b16 %v8748, %v8732
    %v9453 = vpack.c.b16 %v8749, %v8733
    %v9454 = vpack.c.b16 %v8750, %v8734
    %v9455 = vpack.c.b16 %v8751, %v8735
    %v9456 = vpack.c.b16 %v8752, %v8736
    %v9457 = vpack.c.b16 %v8753, %v8737
    %v9458 = vpack.c.b16 %v8754, %v8738
    %v9459 = vpack.c.b16 %v8755, %v8739
    %v9460 = vpack.c.b16 %v8756, %v8740
    %v9461 = vpack.c.b16 %v8757, %v8741
    %v9462 = vpack.c.b16 %v8774, %v8758
    %v9463 = vpack.c.b16 %v8775, %v8759
    %v9464 = vpack.c.b16 %v8776, %v8760
    %v9465 = vpack.c.b16 %v8777, %v8761
    %v9466 = vpack.c.b16 %v8778, %v8762
    %v9467 = vpack.c.b16 %v8779, %v8763
    %v9468 = vpack.c.b16 %v8780, %v8764
    %v9469 = vpack.c.b16 %v8781, %v8765
    %v9470 = vpack.c.b16 %v8782, %v8766
    %v9471 = vpack.c.b16 %v8783, %v8767
    %v9472 = vpack.c.b16 %v8784, %v8768
    %v9473 = vpack.c.b16 %v8785, %v8769
    %v9474 = vpack.c.b16 %v8786, %v8770
    %v9475 = vpack.c.b16 %v8787, %v8771
    %v9476 = vpack.c.b16 %v8788, %v8772
    %v9477 = vpack.c.b16 %v8789, %v8773
    %v9478 = vpack.c.b16 %v8806, %v8790
    %v9479 = vpack.c.b16 %v8807, %v8791
    %v9480 = vpack.c.b16 %v8808, %v8792
    %v9481 = vpack.c.b16 %v8809, %v8793
    %v9482 = vpack.c.b16 %v8810, %v8794
    %v9483 = vpack.c.b16 %v8811, %v8795
    %v9484 = vpack.c.b16 %v8812, %v8796
    %v9485 = vpack.c.b16 %v8813, %v8797
    %v9486 = vpack.c.b16 %v8814, %v8798
    %v9487 = vpack.c.b16 %v8815, %v8799
    %v9488 = vpack.c.b16 %v8816, %v8800
    %v9489 = vpack.c.b16 %v8817, %v8801
    %v9490 = vpack.c.b16 %v8818, %v8802
    %v9491 = vpack.c.b16 %v8819, %v8803
    %v9492 = vpack.c.b16 %v8820, %v8804
    %v9493 = vpack.c.b16 %v8821, %v8805
    %v9494 = vpack.c.b16 %v8838, %v8822
    %v9495 = vpack.c.b16 %v8839, %v8823
    %v9496 = vpack.c.b16 %v8840, %v8824
    %v9497 = vpack.c.b16 %v8841, %v8825
    %v9498 = vpack.c.b16 %v8842, %v8826
    %v9499 = vpack.c.b16 %v8843, %v8827
    %v9500 = vpack.c.b16 %v8844, %v8828
    %v9501 = vpack.c.b16 %v8845, %v8829
    %v9502 = vpack.c.b16 %v8846, %v8830
    %v9503 = vpack.c.b16 %v8847, %v8831
    %v9504 = vpack.c.b16 %v8848, %v8832
    %v9505 = vpack.c.b16 %v8849, %v8833
    %v9506 = vpack.c.b16 %v8850, %v8834
    %v9507 = vpack.c.b16 %v8851, %v8835
    %v9508 = vpack.c.b16 %v8852, %v8836
    %v9509 = vpack.c.b16 %v8853, %v8837
    %v9510 = vpack.c.b16 %v8870, %v8854
    %v9511 = vpack.c.b16 %v8871, %v8855
    %v9512 = vpack.c.b16 %v8872, %v8856
    %v9513 = vpack.c.b16 %v8873, %v8857
    %v9514 = vpack.c.b16 %v8874, %v8858
    %v9515 = vpack.c.b16 %v8875, %v8859
    %v9516 = vpack.c.b16 %v8876, %v8860
    %v9517 = vpack.c.b16 %v8877, %v8861
    %v9518 = vpack.c.b16 %v8878, %v8862
    %v9519 = vpack.c.b16 %v8879, %v8863
    %v9520 = vpack.c.b16 %v8880, %v8864
    %v9521 = vpack.c.b16 %v8881, %v8865
    %v9522 = vpack.c.b16 %v8882, %v8866
    %v9523 = vpack.c.b16 %v8883, %v8867
    %v9524 = vpack.c.b16 %v8884, %v8868
    %v9525 = vpack.c.b16 %v8885, %v8869
    %v9526 = vpack.c.b16 %v8902, %v8886
    %v9527 = vpack.c.b16 %v8903, %v8887
    %v9528 = vpack.c.b16 %v8904, %v8888
    %v9529 = vpack.c.b16 %v8905, %v8889
    %v9530 = vpack.c.b16 %v8906, %v8890
    %v9531 = vpack.c.b16 %v8907, %v8891
    %v9532 = vpack.c.b16 %v8908, %v8892
    %v9533 = vpack.c.b16 %v8909, %v8893
    %v9534 = vpack.c.b16 %v8910, %v8894
    %v9535 = vpack.c.b16 %v8911, %v8895
    %v9536 = vpack.c.b16 %v8912, %v8896
    %v9537 = vpack.c.b16 %v8913, %v8897
    %v9538 = vpack.c.b16 %v8914, %v8898
    %v9539 = vpack.c.b16 %v8915, %v8899
    %v9540 = vpack.c.b16 %v8916, %v8900
    %v9541 = vpack.c.b16 %v8917, %v8901
    %v9542 = vpack.c.b16 %v8934, %v8918
    %v9543 = vpack.c.b16 %v8935, %v8919
    %v9544 = vpack.c.b16 %v8936, %v8920
    %v9545 = vpack.c.b16 %v8937, %v8921
    %v9546 = vpack.c.b16 %v8938, %v8922
    %v9547 = vpack.c.b16 %v8939, %v8923
    %v9548 = vpack.c.b16 %v8940, %v8924
    %v9549 = vpack.c.b16 %v8941, %v8925
    %v9550 = vpack.c.b16 %v8942, %v8926
    %v9551 = vpack.c.b16 %v8943, %v8927
    %v9552 = vpack.c.b16 %v8944, %v8928
    %v9553 = vpack.c.b16 %v8945, %v8929
    %v9554 = vpack.c.b16 %v8946, %v8930
    %v9555 = vpack.c.b16 %v8947, %v8931
    %v9556 = vpack.c.b16 %v8948, %v8932
    %v9557 = vpack.c.b16 %v8949, %v8933
    %v9558 = vpack.c.b16 %v8966, %v8950
    %v9559 = vpack.c.b16 %v8967, %v8951
    %v9560 = vpack.c.b16 %v8968, %v8952
    %v9561 = vpack.c.b16 %v8969, %v8953
    %v9562 = vpack.c.b16 %v8970, %v8954
    %v9563 = vpack.c.b16 %v8971, %v8955
    %v9564 = vpack.c.b16 %v8972, %v8956
    %v9565 = vpack.c.b16 %v8973, %v8957
    %v9566 = vpack.c.b16 %v8974, %v8958
    %v9567 = vpack.c.b16 %v8975, %v8959
    %v9568 = vpack.c.b16 %v8976, %v8960
    %v9569 = vpack.c.b16 %v8977, %v8961
    %v9570 = vpack.c.b16 %v8978, %v8962
    %v9571 = vpack.c.b16 %v8979, %v8963
    %v9572 = vpack.c.b16 %v8980, %v8964
    %v9573 = vpack.c.b16 %v8981, %v8965
    %v9574 = vpack.c.b16 %v8998, %v8982
    %v9575 = vpack.c.b16 %v8999, %v8983
    %v9576 = vpack.c.b16 %v9000, %v8984
    %v9577 = vpack.c.b16 %v9001, %v8985
    %v9578 = vpack.c.b16 %v9002, %v8986
    %v9579 = vpack.c.b16 %v9003, %v8987
    %v9580 = vpack.c.b16 %v9004, %v8988
    %v9581 = vpack.c.b16 %v9005, %v8989
    %v9582 = vpack.c.b16 %v9006, %v8990
    %v9583 = vpack.c.b16 %v9007, %v8991
    %v9584 = vpack.c.b16 %v9008, %v8992
    %v9585 = vpack.c.b16 %v9009, %v8993
    %v9586 = vpack.c.b16 %v9010, %v8994
    %v9587 = vpack.c.b16 %v9011, %v8995
    %v9588 = vpack.c.b16 %v9012, %v8996
    %v9589 = vpack.c.b16 %v9013, %v8997
    %v9590 = vpack.c.b16 %v9030, %v9014
    %v9591 = vpack.c.b16 %v9031, %v9015
    %v9592 = vpack.c.b16 %v9032, %v9016
    %v9593 = vpack.c.b16 %v9033, %v9017
    %v9594 = vpack.c.b16 %v9034, %v9018
    %v9595 = vpack.c.b16 %v9035, %v9019
    %v9596 = vpack.c.b16 %v9036, %v9020
    %v9597 = vpack.c.b16 %v9037, %v9021
    %v9598 = vpack.c.b16 %v9038, %v9022
    %v9599 = vpack.c.b16 %v9039, %v9023
    %v9600 = vpack.c.b16 %v9040, %v9024
    %v9601 = vpack.c.b16 %v9041, %v9025
    %v9602 = vpack.c.b16 %v9042, %v9026
    %v9603 = vpack.c.b16 %v9043, %v9027
    %v9604 = vpack.c.b16 %v9044, %v9028
    %v9605 = vpack.c.b16 %v9045, %v9029
    %v9606 = vpack.c.b16 %v9062, %v9046
    %v9607 = vpack.c.b16 %v9063, %v9047
    %v9608 = vpack.c.b16 %v9064, %v9048
    %v9609 = vpack.c.b16 %v9065, %v9049
    %v9610 = vpack.c.b16 %v9066, %v9050
    %v9611 = vpack.c.b16 %v9067, %v9051
    %v9612 = vpack.c.b16 %v9068, %v9052
    %v9613 = vpack.c.b16 %v9069, %v9053
    %v9614 = vpack.c.b16 %v9070, %v9054
    %v9615 = vpack.c.b16 %v9071, %v9055
    %v9616 = vpack.c.b16 %v9072, %v9056
    %v9617 = vpack.c.b16 %v9073, %v9057
    %v9618 = vpack.c.b16 %v9074, %v9058
    %v9619 = vpack.c.b16 %v9075, %v9059
    %v9620 = vpack.c.b16 %v9076, %v9060
    %v9621 = vpack.c.b16 %v9077, %v9061
    %v9622 = vpack.c.b16 %v9094, %v9078
    %v9623 = vpack.c.b16 %v9095, %v9079
    %v9624 = vpack.c.b16 %v9096, %v9080
    %v9625 = vpack.c.b16 %v9097, %v9081
    %v9626 = vpack.c.b16 %v9098, %v9082
    %v9627 = vpack.c.b16 %v9099, %v9083
    %v9628 = vpack.c.b16 %v9100, %v9084
    %v9629 = vpack.c.b16 %v9101, %v9085
    %v9630 = vpack.c.b16 %v9102, %v9086
    %v9631 = vpack.c.b16 %v9103, %v9087
    %v9632 = vpack.c.b16 %v9104, %v9088
    %v9633 = vpack.c.b16 %v9105, %v9089
    %v9634 = vpack.c.b16 %v9106, %v9090
    %v9635 = vpack.c.b16 %v9107, %v9091
    %v9636 = vpack.c.b16 %v9108, %v9092
    %v9637 = vpack.c.b16 %v9109, %v9093
    %v9638 = vpack.c.b16 %v9126, %v9110
    %v9639 = vpack.c.b16 %v9127, %v9111
    %v9640 = vpack.c.b16 %v9128, %v9112
    %v9641 = vpack.c.b16 %v9129, %v9113
    %v9642 = vpack.c.b16 %v9130, %v9114
    %v9643 = vpack.c.b16 %v9131, %v9115
    %v9644 = vpack.c.b16 %v9132, %v9116
    %v9645 = vpack.c.b16 %v9133, %v9117
    %v9646 = vpack.c.b16 %v9134, %v9118
    %v9647 = vpack.c.b16 %v9135, %v9119
    %v9648 = vpack.c.b16 %v9136, %v9120
    %v9649 = vpack.c.b16 %v9137, %v9121
    %v9650 = vpack.c.b16 %v9138, %v9122
    %v9651 = vpack.c.b16 %v9139, %v9123
    %v9652 = vpack.c.b16 %v9140, %v9124
    %v9653 = vpack.c.b16 %v9141, %v9125
    %10166 = vmatprep.subr.bf16.mxu0 %v9255
    %10167 = vmatpush1.bf16.msra.mxu0 %v9254
    %10168 = vmatprep.subr.bf16.mxu0 %v9239
    %10169 = vmatpush1.bf16.msra.mxu0 %v9238
    %10170 = vmatprep.subr.bf16.mxu0 %v9223
    %10171 = vmatpush1.bf16.msra.mxu0 %v9222
    %10172 = vmatprep.subr.bf16.mxu0 %v9207
    %10173 = vmatpush1.bf16.msra.mxu0 %v9206
    %10174 = vmatprep.subr.bf16.mxu0 %v9191
    %10175 = vmatpush1.bf16.msra.mxu0 %v9190
    %10176 = vmatprep.subr.bf16.mxu0 %v9175
    %10177 = vmatpush1.bf16.msra.mxu0 %v9174
    %10178 = vmatprep.subr.bf16.mxu0 %v9159
    %10179 = vmatpush1.bf16.msra.mxu0 %v9158
    %10180 = vmatprep.subr.bf16.mxu0 %v9143
    %10181 = vmatpush1.bf16.msra.mxu0 %v9142
    %10182 = vmatprep.subr.bf16.mxu0 %v9383
    %10183 = vmatpush2.bf16.msra.mxu0 %v9382
    %10184 = vmatprep.subr.bf16.mxu0 %v9367
    %10185 = vmatpush2.bf16.msra.mxu0 %v9366
    %10186 = vmatprep.subr.bf16.mxu0 %v9351
    %10187 = vmatpush2.bf16.msra.mxu0 %v9350
    %10188 = vmatprep.subr.bf16.mxu0 %v9335
    %10189 = vmatpush2.bf16.msra.mxu0 %v9334
    %10190 = vmatprep.subr.bf16.mxu0 %v9319
    %10191 = vmatpush2.bf16.msra.mxu0 %v9318
    %10192 = vmatprep.subr.bf16.mxu0 %v9303
    %10193 = vmatpush2.bf16.msra.mxu0 %v9302
    %10194 = vmatprep.subr.bf16.mxu0 %v9287
    %10195 = vmatpush2.bf16.msra.mxu0 %v9286
    %10196 = vmatprep.subr.bf16.mxu0 %v9271
    %10197 = vmatpush2.bf16.msra.mxu0 %v9270
    %10198 = vmatprep.mubr.bf16.mxu0 %v7091
    %10199 = vmatmul.mubr.bf16.gmra.mxu0 %v7090
    %v10200 = vpop.f32.mrf.mxu0
    %v10201 = vadd.f32 0.0, %v10200
    %v10202 = vpop.f32.mrf.mxu0
    %v10203 = vadd.f32 0.0, %v10202
    %v10204 = vpop.f32.mrf.mxu0
    %v10205 = vpop.f32.mrf.mxu0
    %10206 = vdwg.mxu0
    %10207 = vmatprep.subr.bf16.mxu0 %v9511
    %10208 = vmatpush1.bf16.msra.mxu0 %v9510
    %10209 = vmatprep.subr.bf16.mxu0 %v9495
    %10210 = vmatpush1.bf16.msra.mxu0 %v9494
    %10211 = vmatprep.subr.bf16.mxu0 %v9479
    %10212 = vmatpush1.bf16.msra.mxu0 %v9478
    %10213 = vmatprep.subr.bf16.mxu0 %v9463
    %10214 = vmatpush1.bf16.msra.mxu0 %v9462
    %10215 = vmatprep.subr.bf16.mxu0 %v9447
    %10216 = vmatpush1.bf16.msra.mxu0 %v9446
    %10217 = vmatprep.subr.bf16.mxu0 %v9431
    %10218 = vmatpush1.bf16.msra.mxu0 %v9430
    %10219 = vmatprep.subr.bf16.mxu0 %v9415
    %10220 = vmatpush1.bf16.msra.mxu0 %v9414
    %10221 = vmatprep.subr.bf16.mxu0 %v9399
    %10222 = vmatpush1.bf16.msra.mxu0 %v9398
    %10223 = vmatprep.subr.bf16.mxu0 %v9639
    %10224 = vmatpush2.bf16.msra.mxu0 %v9638
    %10225 = vmatprep.subr.bf16.mxu0 %v9623
    %10226 = vmatpush2.bf16.msra.mxu0 %v9622
    %10227 = vmatprep.subr.bf16.mxu0 %v9607
    %10228 = vmatpush2.bf16.msra.mxu0 %v9606
    %10229 = vmatprep.subr.bf16.mxu0 %v9591
    %10230 = vmatpush2.bf16.msra.mxu0 %v9590
    %10231 = vmatprep.subr.bf16.mxu0 %v9575
    %10232 = vmatpush2.bf16.msra.mxu0 %v9574
    %10233 = vmatprep.subr.bf16.mxu0 %v9559
    %10234 = vmatpush2.bf16.msra.mxu0 %v9558
    %10235 = vmatprep.subr.bf16.mxu0 %v9543
    %10236 = vmatpush2.bf16.msra.mxu0 %v9542
    %10237 = vmatprep.subr.bf16.mxu0 %v9527
    %10238 = vmatpush2.bf16.msra.mxu0 %v9526
    %10239 = vmatprep.mubr.bf16.mxu0 %v7093
    %10240 = vmatmul.mubr.bf16.gmra.mxu0 %v7092
    %v10241 = vpop.f32.mrf.mxu0
    %v10242 = vadd.f32 %v10201, %v10241
    %v10243 = vpop.f32.mrf.mxu0
    %v10244 = vadd.f32 %v10203, %v10243
    %v10245 = vpop.f32.mrf.mxu0
    %v10246 = vpop.f32.mrf.mxu0
    %10247 = vdwg.mxu0
    %10248 = vmatprep.subr.bf16.mxu0 %v9257
    %10249 = vmatpush1.bf16.msra.mxu0 %v9256
    %10250 = vmatprep.subr.bf16.mxu0 %v9241
    %10251 = vmatpush1.bf16.msra.mxu0 %v9240
    %10252 = vmatprep.subr.bf16.mxu0 %v9225
    %10253 = vmatpush1.bf16.msra.mxu0 %v9224
    %10254 = vmatprep.subr.bf16.mxu0 %v9209
    %10255 = vmatpush1.bf16.msra.mxu0 %v9208
    %10256 = vmatprep.subr.bf16.mxu0 %v9193
    %10257 = vmatpush1.bf16.msra.mxu0 %v9192
    %10258 = vmatprep.subr.bf16.mxu0 %v9177
    %10259 = vmatpush1.bf16.msra.mxu0 %v9176
    %10260 = vmatprep.subr.bf16.mxu0 %v9161
    %10261 = vmatpush1.bf16.msra.mxu0 %v9160
    %10262 = vmatprep.subr.bf16.mxu0 %v9145
    %10263 = vmatpush1.bf16.msra.mxu0 %v9144
    %10264 = vmatprep.subr.bf16.mxu0 %v9385
    %10265 = vmatpush2.bf16.msra.mxu0 %v9384
    %10266 = vmatprep.subr.bf16.mxu0 %v9369
    %10267 = vmatpush2.bf16.msra.mxu0 %v9368
    %10268 = vmatprep.subr.bf16.mxu0 %v9353
    %10269 = vmatpush2.bf16.msra.mxu0 %v9352
    %10270 = vmatprep.subr.bf16.mxu0 %v9337
    %10271 = vmatpush2.bf16.msra.mxu0 %v9336
    %10272 = vmatprep.subr.bf16.mxu0 %v9321
    %10273 = vmatpush2.bf16.msra.mxu0 %v9320
    %10274 = vmatprep.subr.bf16.mxu0 %v9305
    %10275 = vmatpush2.bf16.msra.mxu0 %v9304
    %10276 = vmatprep.subr.bf16.mxu0 %v9289
    %10277 = vmatpush2.bf16.msra.mxu0 %v9288
    %10278 = vmatprep.subr.bf16.mxu0 %v9273
    %10279 = vmatpush2.bf16.msra.mxu0 %v9272
    %10280 = vmatprep.mubr.bf16.mxu0 %v7091
    %10281 = vmatmul.mubr.bf16.gmra.mxu0 %v7090
    %v10282 = vpop.f32.mrf.mxu0
    %v10283 = vadd.f32 0.0, %v10282
    %v10284 = vpop.f32.mrf.mxu0
    %v10285 = vadd.f32 0.0, %v10284
    %v10286 = vpop.f32.mrf.mxu0
    %v10287 = vpop.f32.mrf.mxu0
    %10288 = vdwg.mxu0
    %10289 = vmatprep.subr.bf16.mxu0 %v9513
    %10290 = vmatpush1.bf16.msra.mxu0 %v9512
    %10291 = vmatprep.subr.bf16.mxu0 %v9497
    %10292 = vmatpush1.bf16.msra.mxu0 %v9496
    %10293 = vmatprep.subr.bf16.mxu0 %v9481
    %10294 = vmatpush1.bf16.msra.mxu0 %v9480
    %10295 = vmatprep.subr.bf16.mxu0 %v9465
    %10296 = vmatpush1.bf16.msra.mxu0 %v9464
    %10297 = vmatprep.subr.bf16.mxu0 %v9449
    %10298 = vmatpush1.bf16.msra.mxu0 %v9448
    %10299 = vmatprep.subr.bf16.mxu0 %v9433
    %10300 = vmatpush1.bf16.msra.mxu0 %v9432
    %10301 = vmatprep.subr.bf16.mxu0 %v9417
    %10302 = vmatpush1.bf16.msra.mxu0 %v9416
    %10303 = vmatprep.subr.bf16.mxu0 %v9401
    %10304 = vmatpush1.bf16.msra.mxu0 %v9400
    %10305 = vmatprep.subr.bf16.mxu0 %v9641
    %10306 = vmatpush2.bf16.msra.mxu0 %v9640
    %10307 = vmatprep.subr.bf16.mxu0 %v9625
    %10308 = vmatpush2.bf16.msra.mxu0 %v9624
    %10309 = vmatprep.subr.bf16.mxu0 %v9609
    %10310 = vmatpush2.bf16.msra.mxu0 %v9608
    %10311 = vmatprep.subr.bf16.mxu0 %v9593
    %10312 = vmatpush2.bf16.msra.mxu0 %v9592
    %10313 = vmatprep.subr.bf16.mxu0 %v9577
    %10314 = vmatpush2.bf16.msra.mxu0 %v9576
    %10315 = vmatprep.subr.bf16.mxu0 %v9561
    %10316 = vmatpush2.bf16.msra.mxu0 %v9560
    %10317 = vmatprep.subr.bf16.mxu0 %v9545
    %10318 = vmatpush2.bf16.msra.mxu0 %v9544
    %10319 = vmatprep.subr.bf16.mxu0 %v9529
    %10320 = vmatpush2.bf16.msra.mxu0 %v9528
    %10321 = vmatprep.mubr.bf16.mxu0 %v7093
    %10322 = vmatmul.mubr.bf16.gmra.mxu0 %v7092
    %v10323 = vpop.f32.mrf.mxu0
    %v10324 = vadd.f32 %v10283, %v10323
    %v10325 = vpop.f32.mrf.mxu0
    %v10326 = vadd.f32 %v10285, %v10325
    %v10327 = vpop.f32.mrf.mxu0
    %v10328 = vpop.f32.mrf.mxu0
    %10329 = vdwg.mxu0
    %10330 = vmatprep.subr.bf16.mxu0 %v9259
    %10331 = vmatpush1.bf16.msra.mxu0 %v9258
    %10332 = vmatprep.subr.bf16.mxu0 %v9243
    %10333 = vmatpush1.bf16.msra.mxu0 %v9242
    %10334 = vmatprep.subr.bf16.mxu0 %v9227
    %10335 = vmatpush1.bf16.msra.mxu0 %v9226
    %10336 = vmatprep.subr.bf16.mxu0 %v9211
    %10337 = vmatpush1.bf16.msra.mxu0 %v9210
    %10338 = vmatprep.subr.bf16.mxu0 %v9195
    %10339 = vmatpush1.bf16.msra.mxu0 %v9194
    %10340 = vmatprep.subr.bf16.mxu0 %v9179
    %10341 = vmatpush1.bf16.msra.mxu0 %v9178
    %10342 = vmatprep.subr.bf16.mxu0 %v9163
    %10343 = vmatpush1.bf16.msra.mxu0 %v9162
    %10344 = vmatprep.subr.bf16.mxu0 %v9147
    %10345 = vmatpush1.bf16.msra.mxu0 %v9146
    %10346 = vmatprep.subr.bf16.mxu0 %v9387
    %10347 = vmatpush2.bf16.msra.mxu0 %v9386
    %10348 = vmatprep.subr.bf16.mxu0 %v9371
    %10349 = vmatpush2.bf16.msra.mxu0 %v9370
    %10350 = vmatprep.subr.bf16.mxu0 %v9355
    %10351 = vmatpush2.bf16.msra.mxu0 %v9354
    %10352 = vmatprep.subr.bf16.mxu0 %v9339
    %10353 = vmatpush2.bf16.msra.mxu0 %v9338
    %10354 = vmatprep.subr.bf16.mxu0 %v9323
    %10355 = vmatpush2.bf16.msra.mxu0 %v9322
    %10356 = vmatprep.subr.bf16.mxu0 %v9307
    %10357 = vmatpush2.bf16.msra.mxu0 %v9306
    %10358 = vmatprep.subr.bf16.mxu0 %v9291
    %10359 = vmatpush2.bf16.msra.mxu0 %v9290
    %10360 = vmatprep.subr.bf16.mxu0 %v9275
    %10361 = vmatpush2.bf16.msra.mxu0 %v9274
    %10362 = vmatprep.mubr.bf16.mxu0 %v7091
    %10363 = vmatmul.mubr.bf16.gmra.mxu0 %v7090
    %v10364 = vpop.f32.mrf.mxu0
    %v10365 = vadd.f32 0.0, %v10364
    %v10366 = vpop.f32.mrf.mxu0
    %v10367 = vadd.f32 0.0, %v10366
    %v10368 = vpop.f32.mrf.mxu0
    %v10369 = vpop.f32.mrf.mxu0
    %10370 = vdwg.mxu0
    %10371 = vmatprep.subr.bf16.mxu0 %v9515
    %10372 = vmatpush1.bf16.msra.mxu0 %v9514
    %10373 = vmatprep.subr.bf16.mxu0 %v9499
    %10374 = vmatpush1.bf16.msra.mxu0 %v9498
    %10375 = vmatprep.subr.bf16.mxu0 %v9483
    %10376 = vmatpush1.bf16.msra.mxu0 %v9482
    %10377 = vmatprep.subr.bf16.mxu0 %v9467
    %10378 = vmatpush1.bf16.msra.mxu0 %v9466
    %10379 = vmatprep.subr.bf16.mxu0 %v9451
    %10380 = vmatpush1.bf16.msra.mxu0 %v9450
    %10381 = vmatprep.subr.bf16.mxu0 %v9435
    %10382 = vmatpush1.bf16.msra.mxu0 %v9434
    %10383 = vmatprep.subr.bf16.mxu0 %v9419
    %10384 = vmatpush1.bf16.msra.mxu0 %v9418
    %10385 = vmatprep.subr.bf16.mxu0 %v9403
    %10386 = vmatpush1.bf16.msra.mxu0 %v9402
    %10387 = vmatprep.subr.bf16.mxu0 %v9643
    %10388 = vmatpush2.bf16.msra.mxu0 %v9642
    %10389 = vmatprep.subr.bf16.mxu0 %v9627
    %10390 = vmatpush2.bf16.msra.mxu0 %v9626
    %10391 = vmatprep.subr.bf16.mxu0 %v9611
    %10392 = vmatpush2.bf16.msra.mxu0 %v9610
    %10393 = vmatprep.subr.bf16.mxu0 %v9595
    %10394 = vmatpush2.bf16.msra.mxu0 %v9594
    %10395 = vmatprep.subr.bf16.mxu0 %v9579
    %10396 = vmatpush2.bf16.msra.mxu0 %v9578
    %10397 = vmatprep.subr.bf16.mxu0 %v9563
    %10398 = vmatpush2.bf16.msra.mxu0 %v9562
    %10399 = vmatprep.subr.bf16.mxu0 %v9547
    %10400 = vmatpush2.bf16.msra.mxu0 %v9546
    %10401 = vmatprep.subr.bf16.mxu0 %v9531
    %10402 = vmatpush2.bf16.msra.mxu0 %v9530
    %10403 = vmatprep.mubr.bf16.mxu0 %v7093
    %10404 = vmatmul.mubr.bf16.gmra.mxu0 %v7092
    %v10405 = vpop.f32.mrf.mxu0
    %v10406 = vadd.f32 %v10365, %v10405
    %v10407 = vpop.f32.mrf.mxu0
    %v10408 = vadd.f32 %v10367, %v10407
    %v10409 = vpop.f32.mrf.mxu0
    %v10410 = vpop.f32.mrf.mxu0
    %10411 = vdwg.mxu0
    %10412 = vmatprep.subr.bf16.mxu0 %v9261
    %10413 = vmatpush1.bf16.msra.mxu0 %v9260
    %10414 = vmatprep.subr.bf16.mxu0 %v9245
    %10415 = vmatpush1.bf16.msra.mxu0 %v9244
    %10416 = vmatprep.subr.bf16.mxu0 %v9229
    %10417 = vmatpush1.bf16.msra.mxu0 %v9228
    %10418 = vmatprep.subr.bf16.mxu0 %v9213
    %10419 = vmatpush1.bf16.msra.mxu0 %v9212
    %10420 = vmatprep.subr.bf16.mxu0 %v9197
    %10421 = vmatpush1.bf16.msra.mxu0 %v9196
    %10422 = vmatprep.subr.bf16.mxu0 %v9181
    %10423 = vmatpush1.bf16.msra.mxu0 %v9180
    %10424 = vmatprep.subr.bf16.mxu0 %v9165
    %10425 = vmatpush1.bf16.msra.mxu0 %v9164
    %10426 = vmatprep.subr.bf16.mxu0 %v9149
    %10427 = vmatpush1.bf16.msra.mxu0 %v9148
    %10428 = vmatprep.subr.bf16.mxu0 %v9389
    %10429 = vmatpush2.bf16.msra.mxu0 %v9388
    %10430 = vmatprep.subr.bf16.mxu0 %v9373
    %10431 = vmatpush2.bf16.msra.mxu0 %v9372
    %10432 = vmatprep.subr.bf16.mxu0 %v9357
    %10433 = vmatpush2.bf16.msra.mxu0 %v9356
    %10434 = vmatprep.subr.bf16.mxu0 %v9341
    %10435 = vmatpush2.bf16.msra.mxu0 %v9340
    %10436 = vmatprep.subr.bf16.mxu0 %v9325
    %10437 = vmatpush2.bf16.msra.mxu0 %v9324
    %10438 = vmatprep.subr.bf16.mxu0 %v9309
    %10439 = vmatpush2.bf16.msra.mxu0 %v9308
    %10440 = vmatprep.subr.bf16.mxu0 %v9293
    %10441 = vmatpush2.bf16.msra.mxu0 %v9292
    %10442 = vmatprep.subr.bf16.mxu0 %v9277
    %10443 = vmatpush2.bf16.msra.mxu0 %v9276
    %10444 = vmatprep.mubr.bf16.mxu0 %v7091
    %10445 = vmatmul.mubr.bf16.gmra.mxu0 %v7090
    %v10446 = vpop.f32.mrf.mxu0
    %v10447 = vadd.f32 0.0, %v10446
    %v10448 = vpop.f32.mrf.mxu0
    %v10449 = vadd.f32 0.0, %v10448
    %v10450 = vpop.f32.mrf.mxu0
    %v10451 = vpop.f32.mrf.mxu0
    %10452 = vdwg.mxu0
    %10453 = vmatprep.subr.bf16.mxu0 %v9517
    %10454 = vmatpush1.bf16.msra.mxu0 %v9516
    %10455 = vmatprep.subr.bf16.mxu0 %v9501
    %10456 = vmatpush1.bf16.msra.mxu0 %v9500
    %10457 = vmatprep.subr.bf16.mxu0 %v9485
    %10458 = vmatpush1.bf16.msra.mxu0 %v9484
    %10459 = vmatprep.subr.bf16.mxu0 %v9469
    %10460 = vmatpush1.bf16.msra.mxu0 %v9468
    %10461 = vmatprep.subr.bf16.mxu0 %v9453
    %10462 = vmatpush1.bf16.msra.mxu0 %v9452
    %10463 = vmatprep.subr.bf16.mxu0 %v9437
    %10464 = vmatpush1.bf16.msra.mxu0 %v9436
    %10465 = vmatprep.subr.bf16.mxu0 %v9421
    %10466 = vmatpush1.bf16.msra.mxu0 %v9420
    %10467 = vmatprep.subr.bf16.mxu0 %v9405
    %10468 = vmatpush1.bf16.msra.mxu0 %v9404
    %10469 = vmatprep.subr.bf16.mxu0 %v9645
    %10470 = vmatpush2.bf16.msra.mxu0 %v9644
    %10471 = vmatprep.subr.bf16.mxu0 %v9629
    %10472 = vmatpush2.bf16.msra.mxu0 %v9628
    %10473 = vmatprep.subr.bf16.mxu0 %v9613
    %10474 = vmatpush2.bf16.msra.mxu0 %v9612
    %10475 = vmatprep.subr.bf16.mxu0 %v9597
    %10476 = vmatpush2.bf16.msra.mxu0 %v9596
    %10477 = vmatprep.subr.bf16.mxu0 %v9581
    %10478 = vmatpush2.bf16.msra.mxu0 %v9580
    %10479 = vmatprep.subr.bf16.mxu0 %v9565
    %10480 = vmatpush2.bf16.msra.mxu0 %v9564
    %10481 = vmatprep.subr.bf16.mxu0 %v9549
    %10482 = vmatpush2.bf16.msra.mxu0 %v9548
    %10483 = vmatprep.subr.bf16.mxu0 %v9533
    %10484 = vmatpush2.bf16.msra.mxu0 %v9532
    %10485 = vmatprep.mubr.bf16.mxu0 %v7093
    %10486 = vmatmul.mubr.bf16.gmra.mxu0 %v7092
    %v10487 = vpop.f32.mrf.mxu0
    %v10488 = vadd.f32 %v10447, %v10487
    %v10489 = vpop.f32.mrf.mxu0
    %v10490 = vadd.f32 %v10449, %v10489
    %v10491 = vpop.f32.mrf.mxu0
    %v10492 = vpop.f32.mrf.mxu0
    %10493 = vdwg.mxu0
    %10494 = vmatprep.subr.bf16.mxu0 %v9263
    %10495 = vmatpush1.bf16.msra.mxu0 %v9262
    %10496 = vmatprep.subr.bf16.mxu0 %v9247
    %10497 = vmatpush1.bf16.msra.mxu0 %v9246
    %10498 = vmatprep.subr.bf16.mxu0 %v9231
    %10499 = vmatpush1.bf16.msra.mxu0 %v9230
    %10500 = vmatprep.subr.bf16.mxu0 %v9215
    %10501 = vmatpush1.bf16.msra.mxu0 %v9214
    %10502 = vmatprep.subr.bf16.mxu0 %v9199
    %10503 = vmatpush1.bf16.msra.mxu0 %v9198
    %10504 = vmatprep.subr.bf16.mxu0 %v9183
    %10505 = vmatpush1.bf16.msra.mxu0 %v9182
    %10506 = vmatprep.subr.bf16.mxu0 %v9167
    %10507 = vmatpush1.bf16.msra.mxu0 %v9166
    %10508 = vmatprep.subr.bf16.mxu0 %v9151
    %10509 = vmatpush1.bf16.msra.mxu0 %v9150
    %10510 = vmatprep.subr.bf16.mxu0 %v9391
    %10511 = vmatpush2.bf16.msra.mxu0 %v9390
    %10512 = vmatprep.subr.bf16.mxu0 %v9375
    %10513 = vmatpush2.bf16.msra.mxu0 %v9374
    %10514 = vmatprep.subr.bf16.mxu0 %v9359
    %10515 = vmatpush2.bf16.msra.mxu0 %v9358
    %10516 = vmatprep.subr.bf16.mxu0 %v9343
    %10517 = vmatpush2.bf16.msra.mxu0 %v9342
    %10518 = vmatprep.subr.bf16.mxu0 %v9327
    %10519 = vmatpush2.bf16.msra.mxu0 %v9326
    %10520 = vmatprep.subr.bf16.mxu0 %v9311
    %10521 = vmatpush2.bf16.msra.mxu0 %v9310
    %10522 = vmatprep.subr.bf16.mxu0 %v9295
    %10523 = vmatpush2.bf16.msra.mxu0 %v9294
    %10524 = vmatprep.subr.bf16.mxu0 %v9279
    %10525 = vmatpush2.bf16.msra.mxu0 %v9278
    %10526 = vmatprep.mubr.bf16.mxu0 %v7091
    %10527 = vmatmul.mubr.bf16.gmra.mxu0 %v7090
    %v10528 = vpop.f32.mrf.mxu0
    %v10529 = vadd.f32 0.0, %v10528
    %v10530 = vpop.f32.mrf.mxu0
    %v10531 = vadd.f32 0.0, %v10530
    %v10532 = vpop.f32.mrf.mxu0
    %v10533 = vpop.f32.mrf.mxu0
    %10534 = vdwg.mxu0
    %10535 = vmatprep.subr.bf16.mxu0 %v9519
    %10536 = vmatpush1.bf16.msra.mxu0 %v9518
    %10537 = vmatprep.subr.bf16.mxu0 %v9503
    %10538 = vmatpush1.bf16.msra.mxu0 %v9502
    %10539 = vmatprep.subr.bf16.mxu0 %v9487
    %10540 = vmatpush1.bf16.msra.mxu0 %v9486
    %10541 = vmatprep.subr.bf16.mxu0 %v9471
    %10542 = vmatpush1.bf16.msra.mxu0 %v9470
    %10543 = vmatprep.subr.bf16.mxu0 %v9455
    %10544 = vmatpush1.bf16.msra.mxu0 %v9454
    %10545 = vmatprep.subr.bf16.mxu0 %v9439
    %10546 = vmatpush1.bf16.msra.mxu0 %v9438
    %10547 = vmatprep.subr.bf16.mxu0 %v9423
    %10548 = vmatpush1.bf16.msra.mxu0 %v9422
    %10549 = vmatprep.subr.bf16.mxu0 %v9407
    %10550 = vmatpush1.bf16.msra.mxu0 %v9406
    %10551 = vmatprep.subr.bf16.mxu0 %v9647
    %10552 = vmatpush2.bf16.msra.mxu0 %v9646
    %10553 = vmatprep.subr.bf16.mxu0 %v9631
    %10554 = vmatpush2.bf16.msra.mxu0 %v9630
    %10555 = vmatprep.subr.bf16.mxu0 %v9615
    %10556 = vmatpush2.bf16.msra.mxu0 %v9614
    %10557 = vmatprep.subr.bf16.mxu0 %v9599
    %10558 = vmatpush2.bf16.msra.mxu0 %v9598
    %10559 = vmatprep.subr.bf16.mxu0 %v9583
    %10560 = vmatpush2.bf16.msra.mxu0 %v9582
    %10561 = vmatprep.subr.bf16.mxu0 %v9567
    %10562 = vmatpush2.bf16.msra.mxu0 %v9566
    %10563 = vmatprep.subr.bf16.mxu0 %v9551
    %10564 = vmatpush2.bf16.msra.mxu0 %v9550
    %10565 = vmatprep.subr.bf16.mxu0 %v9535
    %10566 = vmatpush2.bf16.msra.mxu0 %v9534
    %10567 = vmatprep.mubr.bf16.mxu0 %v7093
    %10568 = vmatmul.mubr.bf16.gmra.mxu0 %v7092
    %v10569 = vpop.f32.mrf.mxu0
    %v10570 = vadd.f32 %v10529, %v10569
    %v10571 = vpop.f32.mrf.mxu0
    %v10572 = vadd.f32 %v10531, %v10571
    %v10573 = vpop.f32.mrf.mxu0
    %v10574 = vpop.f32.mrf.mxu0
    %10575 = vdwg.mxu0
    %10576 = vmatprep.subr.bf16.mxu0 %v9265
    %10577 = vmatpush1.bf16.msra.mxu0 %v9264
    %10578 = vmatprep.subr.bf16.mxu0 %v9249
    %10579 = vmatpush1.bf16.msra.mxu0 %v9248
    %10580 = vmatprep.subr.bf16.mxu0 %v9233
    %10581 = vmatpush1.bf16.msra.mxu0 %v9232
    %10582 = vmatprep.subr.bf16.mxu0 %v9217
    %10583 = vmatpush1.bf16.msra.mxu0 %v9216
    %10584 = vmatprep.subr.bf16.mxu0 %v9201
    %10585 = vmatpush1.bf16.msra.mxu0 %v9200
    %10586 = vmatprep.subr.bf16.mxu0 %v9185
    %10587 = vmatpush1.bf16.msra.mxu0 %v9184
    %10588 = vmatprep.subr.bf16.mxu0 %v9169
    %10589 = vmatpush1.bf16.msra.mxu0 %v9168
    %10590 = vmatprep.subr.bf16.mxu0 %v9153
    %10591 = vmatpush1.bf16.msra.mxu0 %v9152
    %10592 = vmatprep.subr.bf16.mxu0 %v9393
    %10593 = vmatpush2.bf16.msra.mxu0 %v9392
    %10594 = vmatprep.subr.bf16.mxu0 %v9377
    %10595 = vmatpush2.bf16.msra.mxu0 %v9376
    %10596 = vmatprep.subr.bf16.mxu0 %v9361
    %10597 = vmatpush2.bf16.msra.mxu0 %v9360
    %10598 = vmatprep.subr.bf16.mxu0 %v9345
    %10599 = vmatpush2.bf16.msra.mxu0 %v9344
    %10600 = vmatprep.subr.bf16.mxu0 %v9329
    %10601 = vmatpush2.bf16.msra.mxu0 %v9328
    %10602 = vmatprep.subr.bf16.mxu0 %v9313
    %10603 = vmatpush2.bf16.msra.mxu0 %v9312
    %10604 = vmatprep.subr.bf16.mxu0 %v9297
    %10605 = vmatpush2.bf16.msra.mxu0 %v9296
    %10606 = vmatprep.subr.bf16.mxu0 %v9281
    %10607 = vmatpush2.bf16.msra.mxu0 %v9280
    %10608 = vmatprep.mubr.bf16.mxu0 %v7091
    %10609 = vmatmul.mubr.bf16.gmra.mxu0 %v7090
    %v10610 = vpop.f32.mrf.mxu0
    %v10611 = vadd.f32 0.0, %v10610
    %v10612 = vpop.f32.mrf.mxu0
    %v10613 = vadd.f32 0.0, %v10612
    %v10614 = vpop.f32.mrf.mxu0
    %v10615 = vpop.f32.mrf.mxu0
    %10616 = vdwg.mxu0
    %10617 = vmatprep.subr.bf16.mxu0 %v9521
    %10618 = vmatpush1.bf16.msra.mxu0 %v9520
    %10619 = vmatprep.subr.bf16.mxu0 %v9505
    %10620 = vmatpush1.bf16.msra.mxu0 %v9504
    %10621 = vmatprep.subr.bf16.mxu0 %v9489
    %10622 = vmatpush1.bf16.msra.mxu0 %v9488
    %10623 = vmatprep.subr.bf16.mxu0 %v9473
    %10624 = vmatpush1.bf16.msra.mxu0 %v9472
    %10625 = vmatprep.subr.bf16.mxu0 %v9457
    %10626 = vmatpush1.bf16.msra.mxu0 %v9456
    %10627 = vmatprep.subr.bf16.mxu0 %v9441
    %10628 = vmatpush1.bf16.msra.mxu0 %v9440
    %10629 = vmatprep.subr.bf16.mxu0 %v9425
    %10630 = vmatpush1.bf16.msra.mxu0 %v9424
    %10631 = vmatprep.subr.bf16.mxu0 %v9409
    %10632 = vmatpush1.bf16.msra.mxu0 %v9408
    %10633 = vmatprep.subr.bf16.mxu0 %v9649
    %10634 = vmatpush2.bf16.msra.mxu0 %v9648
    %10635 = vmatprep.subr.bf16.mxu0 %v9633
    %10636 = vmatpush2.bf16.msra.mxu0 %v9632
    %10637 = vmatprep.subr.bf16.mxu0 %v9617
    %10638 = vmatpush2.bf16.msra.mxu0 %v9616
    %10639 = vmatprep.subr.bf16.mxu0 %v9601
    %10640 = vmatpush2.bf16.msra.mxu0 %v9600
    %10641 = vmatprep.subr.bf16.mxu0 %v9585
    %10642 = vmatpush2.bf16.msra.mxu0 %v9584
    %10643 = vmatprep.subr.bf16.mxu0 %v9569
    %10644 = vmatpush2.bf16.msra.mxu0 %v9568
    %10645 = vmatprep.subr.bf16.mxu0 %v9553
    %10646 = vmatpush2.bf16.msra.mxu0 %v9552
    %10647 = vmatprep.subr.bf16.mxu0 %v9537
    %10648 = vmatpush2.bf16.msra.mxu0 %v9536
    %10649 = vmatprep.mubr.bf16.mxu0 %v7093
    %10650 = vmatmul.mubr.bf16.gmra.mxu0 %v7092
    %v10651 = vpop.f32.mrf.mxu0
    %v10652 = vadd.f32 %v10611, %v10651
    %v10653 = vpop.f32.mrf.mxu0
    %v10654 = vadd.f32 %v10613, %v10653
    %v10655 = vpop.f32.mrf.mxu0
    %v10656 = vpop.f32.mrf.mxu0
    %10657 = vdwg.mxu0
    %10658 = vmatprep.subr.bf16.mxu0 %v9267
    %10659 = vmatpush1.bf16.msra.mxu0 %v9266
    %10660 = vmatprep.subr.bf16.mxu0 %v9251
    %10661 = vmatpush1.bf16.msra.mxu0 %v9250
    %10662 = vmatprep.subr.bf16.mxu0 %v9235
    %10663 = vmatpush1.bf16.msra.mxu0 %v9234
    %10664 = vmatprep.subr.bf16.mxu0 %v9219
    %10665 = vmatpush1.bf16.msra.mxu0 %v9218
    %10666 = vmatprep.subr.bf16.mxu0 %v9203
    %10667 = vmatpush1.bf16.msra.mxu0 %v9202
    %10668 = vmatprep.subr.bf16.mxu0 %v9187
    %10669 = vmatpush1.bf16.msra.mxu0 %v9186
    %10670 = vmatprep.subr.bf16.mxu0 %v9171
    %10671 = vmatpush1.bf16.msra.mxu0 %v9170
    %10672 = vmatprep.subr.bf16.mxu0 %v9155
    %10673 = vmatpush1.bf16.msra.mxu0 %v9154
    %10674 = vmatprep.subr.bf16.mxu0 %v9395
    %10675 = vmatpush2.bf16.msra.mxu0 %v9394
    %10676 = vmatprep.subr.bf16.mxu0 %v9379
    %10677 = vmatpush2.bf16.msra.mxu0 %v9378
    %10678 = vmatprep.subr.bf16.mxu0 %v9363
    %10679 = vmatpush2.bf16.msra.mxu0 %v9362
    %10680 = vmatprep.subr.bf16.mxu0 %v9347
    %10681 = vmatpush2.bf16.msra.mxu0 %v9346
    %10682 = vmatprep.subr.bf16.mxu0 %v9331
    %10683 = vmatpush2.bf16.msra.mxu0 %v9330
    %10684 = vmatprep.subr.bf16.mxu0 %v9315
    %10685 = vmatpush2.bf16.msra.mxu0 %v9314
    %10686 = vmatprep.subr.bf16.mxu0 %v9299
    %10687 = vmatpush2.bf16.msra.mxu0 %v9298
    %10688 = vmatprep.subr.bf16.mxu0 %v9283
    %10689 = vmatpush2.bf16.msra.mxu0 %v9282
    %10690 = vmatprep.mubr.bf16.mxu0 %v7091
    %10691 = vmatmul.mubr.bf16.gmra.mxu0 %v7090
    %v10692 = vpop.f32.mrf.mxu0
    %v10693 = vadd.f32 0.0, %v10692
    %v10694 = vpop.f32.mrf.mxu0
    %v10695 = vadd.f32 0.0, %v10694
    %v10696 = vpop.f32.mrf.mxu0
    %v10697 = vpop.f32.mrf.mxu0
    %10698 = vdwg.mxu0
    %10699 = vmatprep.subr.bf16.mxu0 %v9523
    %10700 = vmatpush1.bf16.msra.mxu0 %v9522
    %10701 = vmatprep.subr.bf16.mxu0 %v9507
    %10702 = vmatpush1.bf16.msra.mxu0 %v9506
    %10703 = vmatprep.subr.bf16.mxu0 %v9491
    %10704 = vmatpush1.bf16.msra.mxu0 %v9490
    %10705 = vmatprep.subr.bf16.mxu0 %v9475
    %10706 = vmatpush1.bf16.msra.mxu0 %v9474
    %10707 = vmatprep.subr.bf16.mxu0 %v9459
    %10708 = vmatpush1.bf16.msra.mxu0 %v9458
    %10709 = vmatprep.subr.bf16.mxu0 %v9443
    %10710 = vmatpush1.bf16.msra.mxu0 %v9442
    %10711 = vmatprep.subr.bf16.mxu0 %v9427
    %10712 = vmatpush1.bf16.msra.mxu0 %v9426
    %10713 = vmatprep.subr.bf16.mxu0 %v9411
    %10714 = vmatpush1.bf16.msra.mxu0 %v9410
    %10715 = vmatprep.subr.bf16.mxu0 %v9651
    %10716 = vmatpush2.bf16.msra.mxu0 %v9650
    %10717 = vmatprep.subr.bf16.mxu0 %v9635
    %10718 = vmatpush2.bf16.msra.mxu0 %v9634
    %10719 = vmatprep.subr.bf16.mxu0 %v9619
    %10720 = vmatpush2.bf16.msra.mxu0 %v9618
    %10721 = vmatprep.subr.bf16.mxu0 %v9603
    %10722 = vmatpush2.bf16.msra.mxu0 %v9602
    %10723 = vmatprep.subr.bf16.mxu0 %v9587
    %10724 = vmatpush2.bf16.msra.mxu0 %v9586
    %10725 = vmatprep.subr.bf16.mxu0 %v9571
    %10726 = vmatpush2.bf16.msra.mxu0 %v9570
    %10727 = vmatprep.subr.bf16.mxu0 %v9555
    %10728 = vmatpush2.bf16.msra.mxu0 %v9554
    %10729 = vmatprep.subr.bf16.mxu0 %v9539
    %10730 = vmatpush2.bf16.msra.mxu0 %v9538
    %10731 = vmatprep.mubr.bf16.mxu0 %v7093
    %10732 = vmatmul.mubr.bf16.gmra.mxu0 %v7092
    %v10733 = vpop.f32.mrf.mxu0
    %v10734 = vadd.f32 %v10693, %v10733
    %v10735 = vpop.f32.mrf.mxu0
    %v10736 = vadd.f32 %v10695, %v10735
    %v10737 = vpop.f32.mrf.mxu0
    %v10738 = vpop.f32.mrf.mxu0
    %10739 = vdwg.mxu0
    %10740 = vmatprep.subr.bf16.mxu0 %v9269
    %10741 = vmatpush1.bf16.msra.mxu0 %v9268
    %10742 = vmatprep.subr.bf16.mxu0 %v9253
    %10743 = vmatpush1.bf16.msra.mxu0 %v9252
    %10744 = vmatprep.subr.bf16.mxu0 %v9237
    %10745 = vmatpush1.bf16.msra.mxu0 %v9236
    %10746 = vmatprep.subr.bf16.mxu0 %v9221
    %10747 = vmatpush1.bf16.msra.mxu0 %v9220
    %10748 = vmatprep.subr.bf16.mxu0 %v9205
    %10749 = vmatpush1.bf16.msra.mxu0 %v9204
    %10750 = vmatprep.subr.bf16.mxu0 %v9189
    %10751 = vmatpush1.bf16.msra.mxu0 %v9188
    %10752 = vmatprep.subr.bf16.mxu0 %v9173
    %10753 = vmatpush1.bf16.msra.mxu0 %v9172
    %10754 = vmatprep.subr.bf16.mxu0 %v9157
    %10755 = vmatpush1.bf16.msra.mxu0 %v9156
    %10756 = vmatprep.subr.bf16.mxu0 %v9397
    %10757 = vmatpush2.bf16.msra.mxu0 %v9396
    %10758 = vmatprep.subr.bf16.mxu0 %v9381
    %10759 = vmatpush2.bf16.msra.mxu0 %v9380
    %10760 = vmatprep.subr.bf16.mxu0 %v9365
    %10761 = vmatpush2.bf16.msra.mxu0 %v9364
    %10762 = vmatprep.subr.bf16.mxu0 %v9349
    %10763 = vmatpush2.bf16.msra.mxu0 %v9348
    %10764 = vmatprep.subr.bf16.mxu0 %v9333
    %10765 = vmatpush2.bf16.msra.mxu0 %v9332
    %10766 = vmatprep.subr.bf16.mxu0 %v9317
    %10767 = vmatpush2.bf16.msra.mxu0 %v9316
    %10768 = vmatprep.subr.bf16.mxu0 %v9301
    %10769 = vmatpush2.bf16.msra.mxu0 %v9300
    %10770 = vmatprep.subr.bf16.mxu0 %v9285
    %10771 = vmatpush2.bf16.msra.mxu0 %v9284
    %10772 = vmatprep.mubr.bf16.mxu0 %v7091
    %10773 = vmatmul.mubr.bf16.gmra.mxu0 %v7090
    %v10774 = vpop.f32.mrf.mxu0
    %v10775 = vadd.f32 0.0, %v10774
    %v10776 = vpop.f32.mrf.mxu0
    %v10777 = vadd.f32 0.0, %v10776
    %v10778 = vpop.f32.mrf.mxu0
    %v10779 = vpop.f32.mrf.mxu0
    %10780 = vdwg.mxu0
    %10781 = vmatprep.subr.bf16.mxu0 %v9525
    %10782 = vmatpush1.bf16.msra.mxu0 %v9524
    %10783 = vmatprep.subr.bf16.mxu0 %v9509
    %10784 = vmatpush1.bf16.msra.mxu0 %v9508
    %10785 = vmatprep.subr.bf16.mxu0 %v9493
    %10786 = vmatpush1.bf16.msra.mxu0 %v9492
    %10787 = vmatprep.subr.bf16.mxu0 %v9477
    %10788 = vmatpush1.bf16.msra.mxu0 %v9476
    %10789 = vmatprep.subr.bf16.mxu0 %v9461
    %10790 = vmatpush1.bf16.msra.mxu0 %v9460
    %10791 = vmatprep.subr.bf16.mxu0 %v9445
    %10792 = vmatpush1.bf16.msra.mxu0 %v9444
    %10793 = vmatprep.subr.bf16.mxu0 %v9429
    %10794 = vmatpush1.bf16.msra.mxu0 %v9428
    %10795 = vmatprep.subr.bf16.mxu0 %v9413
    %10796 = vmatpush1.bf16.msra.mxu0 %v9412
    %10797 = vmatprep.subr.bf16.mxu0 %v9653
    %10798 = vmatpush2.bf16.msra.mxu0 %v9652
    %10799 = vmatprep.subr.bf16.mxu0 %v9637
    %10800 = vmatpush2.bf16.msra.mxu0 %v9636
    %10801 = vmatprep.subr.bf16.mxu0 %v9621
    %10802 = vmatpush2.bf16.msra.mxu0 %v9620
    %10803 = vmatprep.subr.bf16.mxu0 %v9605
    %10804 = vmatpush2.bf16.msra.mxu0 %v9604
    %10805 = vmatprep.subr.bf16.mxu0 %v9589
    %10806 = vmatpush2.bf16.msra.mxu0 %v9588
    %10807 = vmatprep.subr.bf16.mxu0 %v9573
    %10808 = vmatpush2.bf16.msra.mxu0 %v9572
    %10809 = vmatprep.subr.bf16.mxu0 %v9557
    %10810 = vmatpush2.bf16.msra.mxu0 %v9556
    %10811 = vmatprep.subr.bf16.mxu0 %v9541
    %10812 = vmatpush2.bf16.msra.mxu0 %v9540
    %10813 = vmatprep.mubr.bf16.mxu0 %v7093
    %10814 = vmatmul.mubr.bf16.gmra.mxu0 %v7092
    %v10815 = vpop.f32.mrf.mxu0
    %v10816 = vadd.f32 %v10775, %v10815
    %v10817 = vpop.f32.mrf.mxu0
    %v10818 = vadd.f32 %v10777, %v10817
    %v10819 = vpop.f32.mrf.mxu0
    %v10820 = vpop.f32.mrf.mxu0
    %10821 = vdwg.mxu0
    %10822 = vrot.lane.b32.xlu0 %v10242, 17
    %v10823 = vpop.permute.xlu0 %10822
    %10824 = vrot.lane.b32.xlu0 %v10244, 17
    %v10825 = vpop.permute.xlu0 %10824
    %10826 = vrot.lane.b32.xlu0 %v10324, 17
    %v10827 = vpop.permute.xlu0 %10826
    %10828 = vrot.lane.b32.xlu0 %v10326, 17
    %v10829 = vpop.permute.xlu0 %10828
    %10830 = vrot.lane.b32.xlu0 %v10406, 17
    %v10831 = vpop.permute.xlu0 %10830
    %10832 = vrot.lane.b32.xlu0 %v10408, 17
    %v10833 = vpop.permute.xlu0 %10832
    %10834 = vrot.lane.b32.xlu0 %v10488, 17
    %v10835 = vpop.permute.xlu0 %10834
    %10836 = vrot.lane.b32.xlu0 %v10490, 17
    %v10837 = vpop.permute.xlu0 %10836
    %10838 = vrot.lane.b32.xlu0 %v10570, 17
    %v10839 = vpop.permute.xlu0 %10838
    %10840 = vrot.lane.b32.xlu0 %v10572, 17
    %v10841 = vpop.permute.xlu0 %10840
    %10842 = vrot.lane.b32.xlu0 %v10652, 17
    %v10843 = vpop.permute.xlu0 %10842
    %10844 = vrot.lane.b32.xlu0 %v10654, 17
    %v10845 = vpop.permute.xlu0 %10844
    %10846 = vrot.lane.b32.xlu0 %v10734, 17
    %v10847 = vpop.permute.xlu0 %10846
    %10848 = vrot.lane.b32.xlu0 %v10736, 17
    %v10849 = vpop.permute.xlu0 %10848
    %10850 = vrot.lane.b32.xlu0 %v10816, 17
    %v10851 = vpop.permute.xlu0 %10850
    %10852 = vrot.lane.b32.xlu0 %v10818, 17
    %v10853 = vpop.permute.xlu0 %10852
    %v10854 = vsel %vm212, %v10851, %v10853
    %v10855 = vsel %vm212, %v10849, %v10851
    %v10856 = vsel %vm212, %v10847, %v10849
    %v10857 = vsel %vm212, %v10845, %v10847
    %v10858 = vsel %vm212, %v10843, %v10845
    %v10859 = vsel %vm212, %v10841, %v10843
    %v10860 = vsel %vm212, %v10839, %v10841
    %v10861 = vsel %vm212, %v10837, %v10839
    %v10862 = vsel %vm212, %v10835, %v10837
    %v10863 = vsel %vm212, %v10833, %v10835
    %v10864 = vsel %vm212, %v10831, %v10833
    %v10865 = vsel %vm212, %v10829, %v10831
    %v10866 = vsel %vm212, %v10827, %v10829
    %v10867 = vsel %vm212, %v10825, %v10827
    %v10868 = vsel %vm212, %v10823, %v10825
    %v10869 = vsel %vm212, %v10853, %v10823
    %v10870 = vmul.f32 %v10869, %v232
    %v10871 = vmul.f32 %v10868, %v236
    %v10872 = vmul.f32 %v10867, %v240
    %v10873 = vmul.f32 %v10866, %v244
    %v10874 = vmul.f32 %v10865, %v248
    %v10875 = vmul.f32 %v10864, %v252
    %v10876 = vmul.f32 %v10863, %v256
    %v10877 = vmul.f32 %v10862, %v260
    %v10878 = vmul.f32 %v10861, %v264
    %v10879 = vmul.f32 %v10860, %v268
    %v10880 = vmul.f32 %v10859, %v272
    %v10881 = vmul.f32 %v10858, %v276
    %v10882 = vmul.f32 %v10857, %v280
    %v10883 = vmul.f32 %v10856, %v284
    %v10884 = vmul.f32 %v10855, %v288
    %v10885 = vmul.f32 %v10854, %v292
    %10886 = vrot.lane.b32.xlu0 %v10242, 16
    %v10887 = vpop.permute.xlu0 %10886
    %10888 = vrot.lane.b32.xlu0 %v10244, 16
    %v10889 = vpop.permute.xlu0 %10888
    %10890 = vrot.lane.b32.xlu0 %v10324, 16
    %v10891 = vpop.permute.xlu0 %10890
    %10892 = vrot.lane.b32.xlu0 %v10326, 16
    %v10893 = vpop.permute.xlu0 %10892
    %10894 = vrot.lane.b32.xlu0 %v10406, 16
    %v10895 = vpop.permute.xlu0 %10894
    %10896 = vrot.lane.b32.xlu0 %v10408, 16
    %v10897 = vpop.permute.xlu0 %10896
    %10898 = vrot.lane.b32.xlu0 %v10488, 16
    %v10899 = vpop.permute.xlu0 %10898
    %10900 = vrot.lane.b32.xlu0 %v10490, 16
    %v10901 = vpop.permute.xlu0 %10900
    %10902 = vrot.lane.b32.xlu0 %v10570, 16
    %v10903 = vpop.permute.xlu0 %10902
    %10904 = vrot.lane.b32.xlu0 %v10572, 16
    %v10905 = vpop.permute.xlu0 %10904
    %10906 = vrot.lane.b32.xlu0 %v10652, 16
    %v10907 = vpop.permute.xlu0 %10906
    %10908 = vrot.lane.b32.xlu0 %v10654, 16
    %v10909 = vpop.permute.xlu0 %10908
    %10910 = vrot.lane.b32.xlu0 %v10734, 16
    %v10911 = vpop.permute.xlu0 %10910
    %10912 = vrot.lane.b32.xlu0 %v10736, 16
    %v10913 = vpop.permute.xlu0 %10912
    %10914 = vrot.lane.b32.xlu0 %v10816, 16
    %v10915 = vpop.permute.xlu0 %10914
    %10916 = vrot.lane.b32.xlu0 %v10818, 16
    %v10917 = vpop.permute.xlu0 %10916
    %v10918 = vsel %vm341, %v10915, %v10917
    %v10919 = vsel %vm341, %v10913, %v10915
    %v10920 = vsel %vm341, %v10911, %v10913
    %v10921 = vsel %vm341, %v10909, %v10911
    %v10922 = vsel %vm341, %v10907, %v10909
    %v10923 = vsel %vm341, %v10905, %v10907
    %v10924 = vsel %vm341, %v10903, %v10905
    %v10925 = vsel %vm341, %v10901, %v10903
    %v10926 = vsel %vm341, %v10899, %v10901
    %v10927 = vsel %vm341, %v10897, %v10899
    %v10928 = vsel %vm341, %v10895, %v10897
    %v10929 = vsel %vm341, %v10893, %v10895
    %v10930 = vsel %vm341, %v10891, %v10893
    %v10931 = vsel %vm341, %v10889, %v10891
    %v10932 = vsel %vm341, %v10887, %v10889
    %v10933 = vsel %vm341, %v10917, %v10887
    %v10934 = vmul.f32 %v10933, %v361
    %v10935 = vmul.f32 %v10932, %v365
    %v10936 = vmul.f32 %v10931, %v369
    %v10937 = vmul.f32 %v10930, %v373
    %v10938 = vmul.f32 %v10929, %v377
    %v10939 = vmul.f32 %v10928, %v381
    %v10940 = vmul.f32 %v10927, %v385
    %v10941 = vmul.f32 %v10926, %v389
    %v10942 = vmul.f32 %v10925, %v393
    %v10943 = vmul.f32 %v10924, %v397
    %v10944 = vmul.f32 %v10923, %v401
    %v10945 = vmul.f32 %v10922, %v405
    %v10946 = vmul.f32 %v10921, %v409
    %v10947 = vmul.f32 %v10920, %v413
    %v10948 = vmul.f32 %v10919, %v417
    %v10949 = vmul.f32 %v10918, %v421
    %10950 = vrot.lane.b32.xlu0 %v10242, 15
    %v10951 = vpop.permute.xlu0 %10950
    %10952 = vrot.lane.b32.xlu0 %v10244, 15
    %v10953 = vpop.permute.xlu0 %10952
    %10954 = vrot.lane.b32.xlu0 %v10324, 15
    %v10955 = vpop.permute.xlu0 %10954
    %10956 = vrot.lane.b32.xlu0 %v10326, 15
    %v10957 = vpop.permute.xlu0 %10956
    %10958 = vrot.lane.b32.xlu0 %v10406, 15
    %v10959 = vpop.permute.xlu0 %10958
    %10960 = vrot.lane.b32.xlu0 %v10408, 15
    %v10961 = vpop.permute.xlu0 %10960
    %10962 = vrot.lane.b32.xlu0 %v10488, 15
    %v10963 = vpop.permute.xlu0 %10962
    %10964 = vrot.lane.b32.xlu0 %v10490, 15
    %v10965 = vpop.permute.xlu0 %10964
    %10966 = vrot.lane.b32.xlu0 %v10570, 15
    %v10967 = vpop.permute.xlu0 %10966
    %10968 = vrot.lane.b32.xlu0 %v10572, 15
    %v10969 = vpop.permute.xlu0 %10968
    %10970 = vrot.lane.b32.xlu0 %v10652, 15
    %v10971 = vpop.permute.xlu0 %10970
    %10972 = vrot.lane.b32.xlu0 %v10654, 15
    %v10973 = vpop.permute.xlu0 %10972
    %10974 = vrot.lane.b32.xlu0 %v10734, 15
    %v10975 = vpop.permute.xlu0 %10974
    %10976 = vrot.lane.b32.xlu0 %v10736, 15
    %v10977 = vpop.permute.xlu0 %10976
    %10978 = vrot.lane.b32.xlu0 %v10816, 15
    %v10979 = vpop.permute.xlu0 %10978
    %10980 = vrot.lane.b32.xlu0 %v10818, 15
    %v10981 = vpop.permute.xlu0 %10980
    %v10982 = vsel %vm470, %v10979, %v10981
    %v10983 = vsel %vm470, %v10977, %v10979
    %v10984 = vsel %vm470, %v10975, %v10977
    %v10985 = vsel %vm470, %v10973, %v10975
    %v10986 = vsel %vm470, %v10971, %v10973
    %v10987 = vsel %vm470, %v10969, %v10971
    %v10988 = vsel %vm470, %v10967, %v10969
    %v10989 = vsel %vm470, %v10965, %v10967
    %v10990 = vsel %vm470, %v10963, %v10965
    %v10991 = vsel %vm470, %v10961, %v10963
    %v10992 = vsel %vm470, %v10959, %v10961
    %v10993 = vsel %vm470, %v10957, %v10959
    %v10994 = vsel %vm470, %v10955, %v10957
    %v10995 = vsel %vm470, %v10953, %v10955
    %v10996 = vsel %vm470, %v10951, %v10953
    %v10997 = vsel %vm470, %v10981, %v10951
    %v10998 = vmul.f32 %v10997, %v490
    %v10999 = vmul.f32 %v10996, %v494
    %v11000 = vmul.f32 %v10995, %v498
    %v11001 = vmul.f32 %v10994, %v502
    %v11002 = vmul.f32 %v10993, %v506
    %v11003 = vmul.f32 %v10992, %v510
    %v11004 = vmul.f32 %v10991, %v514
    %v11005 = vmul.f32 %v10990, %v518
    %v11006 = vmul.f32 %v10989, %v522
    %v11007 = vmul.f32 %v10988, %v526
    %v11008 = vmul.f32 %v10987, %v530
    %v11009 = vmul.f32 %v10986, %v534
    %v11010 = vmul.f32 %v10985, %v538
    %v11011 = vmul.f32 %v10984, %v542
    %v11012 = vmul.f32 %v10983, %v546
    %v11013 = vmul.f32 %v10982, %v550
    %11014 = vrot.lane.b32.xlu0 %v10242, 1
    %v11015 = vpop.permute.xlu0 %11014
    %11016 = vrot.lane.b32.xlu0 %v10244, 1
    %v11017 = vpop.permute.xlu0 %11016
    %11018 = vrot.lane.b32.xlu0 %v10324, 1
    %v11019 = vpop.permute.xlu0 %11018
    %11020 = vrot.lane.b32.xlu0 %v10326, 1
    %v11021 = vpop.permute.xlu0 %11020
    %11022 = vrot.lane.b32.xlu0 %v10406, 1
    %v11023 = vpop.permute.xlu0 %11022
    %11024 = vrot.lane.b32.xlu0 %v10408, 1
    %v11025 = vpop.permute.xlu0 %11024
    %11026 = vrot.lane.b32.xlu0 %v10488, 1
    %v11027 = vpop.permute.xlu0 %11026
    %11028 = vrot.lane.b32.xlu0 %v10490, 1
    %v11029 = vpop.permute.xlu0 %11028
    %11030 = vrot.lane.b32.xlu0 %v10570, 1
    %v11031 = vpop.permute.xlu0 %11030
    %11032 = vrot.lane.b32.xlu0 %v10572, 1
    %v11033 = vpop.permute.xlu0 %11032
    %11034 = vrot.lane.b32.xlu0 %v10652, 1
    %v11035 = vpop.permute.xlu0 %11034
    %11036 = vrot.lane.b32.xlu0 %v10654, 1
    %v11037 = vpop.permute.xlu0 %11036
    %11038 = vrot.lane.b32.xlu0 %v10734, 1
    %v11039 = vpop.permute.xlu0 %11038
    %11040 = vrot.lane.b32.xlu0 %v10736, 1
    %v11041 = vpop.permute.xlu0 %11040
    %11042 = vrot.lane.b32.xlu0 %v10816, 1
    %v11043 = vpop.permute.xlu0 %11042
    %11044 = vrot.lane.b32.xlu0 %v10818, 1
    %v11045 = vpop.permute.xlu0 %11044
    %v11046 = vsel %vm599, %v11043, %v11045
    %v11047 = vsel %vm599, %v11041, %v11043
    %v11048 = vsel %vm599, %v11039, %v11041
    %v11049 = vsel %vm599, %v11037, %v11039
    %v11050 = vsel %vm599, %v11035, %v11037
    %v11051 = vsel %vm599, %v11033, %v11035
    %v11052 = vsel %vm599, %v11031, %v11033
    %v11053 = vsel %vm599, %v11029, %v11031
    %v11054 = vsel %vm599, %v11027, %v11029
    %v11055 = vsel %vm599, %v11025, %v11027
    %v11056 = vsel %vm599, %v11023, %v11025
    %v11057 = vsel %vm599, %v11021, %v11023
    %v11058 = vsel %vm599, %v11019, %v11021
    %v11059 = vsel %vm599, %v11017, %v11019
    %v11060 = vsel %vm599, %v11015, %v11017
    %v11061 = vsel %vm599, %v11045, %v11015
    %v11062 = vmul.f32 %v11061, %v619
    %v11063 = vmul.f32 %v11060, %v623
    %v11064 = vmul.f32 %v11059, %v627
    %v11065 = vmul.f32 %v11058, %v631
    %v11066 = vmul.f32 %v11057, %v635
    %v11067 = vmul.f32 %v11056, %v639
    %v11068 = vmul.f32 %v11055, %v643
    %v11069 = vmul.f32 %v11054, %v647
    %v11070 = vmul.f32 %v11053, %v651
    %v11071 = vmul.f32 %v11052, %v655
    %v11072 = vmul.f32 %v11051, %v659
    %v11073 = vmul.f32 %v11050, %v663
    %v11074 = vmul.f32 %v11049, %v667
    %v11075 = vmul.f32 %v11048, %v671
    %v11076 = vmul.f32 %v11047, %v675
    %v11077 = vmul.f32 %v11046, %v679
    %11078 = vrot.lane.b32.xlu0 %v10242, 127
    %v11079 = vpop.permute.xlu0 %11078
    %11080 = vrot.lane.b32.xlu0 %v10244, 127
    %v11081 = vpop.permute.xlu0 %11080
    %11082 = vrot.lane.b32.xlu0 %v10324, 127
    %v11083 = vpop.permute.xlu0 %11082
    %11084 = vrot.lane.b32.xlu0 %v10326, 127
    %v11085 = vpop.permute.xlu0 %11084
    %11086 = vrot.lane.b32.xlu0 %v10406, 127
    %v11087 = vpop.permute.xlu0 %11086
    %11088 = vrot.lane.b32.xlu0 %v10408, 127
    %v11089 = vpop.permute.xlu0 %11088
    %11090 = vrot.lane.b32.xlu0 %v10488, 127
    %v11091 = vpop.permute.xlu0 %11090
    %11092 = vrot.lane.b32.xlu0 %v10490, 127
    %v11093 = vpop.permute.xlu0 %11092
    %11094 = vrot.lane.b32.xlu0 %v10570, 127
    %v11095 = vpop.permute.xlu0 %11094
    %11096 = vrot.lane.b32.xlu0 %v10572, 127
    %v11097 = vpop.permute.xlu0 %11096
    %11098 = vrot.lane.b32.xlu0 %v10652, 127
    %v11099 = vpop.permute.xlu0 %11098
    %11100 = vrot.lane.b32.xlu0 %v10654, 127
    %v11101 = vpop.permute.xlu0 %11100
    %11102 = vrot.lane.b32.xlu0 %v10734, 127
    %v11103 = vpop.permute.xlu0 %11102
    %11104 = vrot.lane.b32.xlu0 %v10736, 127
    %v11105 = vpop.permute.xlu0 %11104
    %11106 = vrot.lane.b32.xlu0 %v10816, 127
    %v11107 = vpop.permute.xlu0 %11106
    %11108 = vrot.lane.b32.xlu0 %v10818, 127
    %v11109 = vpop.permute.xlu0 %11108
    %v11110 = vsel %vm728, %v11107, %v11109
    %v11111 = vsel %vm728, %v11105, %v11107
    %v11112 = vsel %vm728, %v11103, %v11105
    %v11113 = vsel %vm728, %v11101, %v11103
    %v11114 = vsel %vm728, %v11099, %v11101
    %v11115 = vsel %vm728, %v11097, %v11099
    %v11116 = vsel %vm728, %v11095, %v11097
    %v11117 = vsel %vm728, %v11093, %v11095
    %v11118 = vsel %vm728, %v11091, %v11093
    %v11119 = vsel %vm728, %v11089, %v11091
    %v11120 = vsel %vm728, %v11087, %v11089
    %v11121 = vsel %vm728, %v11085, %v11087
    %v11122 = vsel %vm728, %v11083, %v11085
    %v11123 = vsel %vm728, %v11081, %v11083
    %v11124 = vsel %vm728, %v11079, %v11081
    %v11125 = vsel %vm728, %v11109, %v11079
    %v11126 = vmul.f32 %v11124, %v748
    %v11127 = vmul.f32 %v11123, %v752
    %v11128 = vmul.f32 %v11122, %v756
    %v11129 = vmul.f32 %v11121, %v760
    %v11130 = vmul.f32 %v11120, %v764
    %v11131 = vmul.f32 %v11119, %v768
    %v11132 = vmul.f32 %v11118, %v772
    %v11133 = vmul.f32 %v11117, %v776
    %v11134 = vmul.f32 %v11116, %v780
    %v11135 = vmul.f32 %v11115, %v784
    %v11136 = vmul.f32 %v11114, %v788
    %v11137 = vmul.f32 %v11113, %v792
    %v11138 = vmul.f32 %v11112, %v796
    %v11139 = vmul.f32 %v11111, %v800
    %v11140 = vmul.f32 %v11110, %v804
    %v11141 = vmul.f32 %v11125, %v808
    %11142 = vrot.lane.b32.xlu0 %v10242, 113
    %v11143 = vpop.permute.xlu0 %11142
    %11144 = vrot.lane.b32.xlu0 %v10244, 113
    %v11145 = vpop.permute.xlu0 %11144
    %11146 = vrot.lane.b32.xlu0 %v10324, 113
    %v11147 = vpop.permute.xlu0 %11146
    %11148 = vrot.lane.b32.xlu0 %v10326, 113
    %v11149 = vpop.permute.xlu0 %11148
    %11150 = vrot.lane.b32.xlu0 %v10406, 113
    %v11151 = vpop.permute.xlu0 %11150
    %11152 = vrot.lane.b32.xlu0 %v10408, 113
    %v11153 = vpop.permute.xlu0 %11152
    %11154 = vrot.lane.b32.xlu0 %v10488, 113
    %v11155 = vpop.permute.xlu0 %11154
    %11156 = vrot.lane.b32.xlu0 %v10490, 113
    %v11157 = vpop.permute.xlu0 %11156
    %11158 = vrot.lane.b32.xlu0 %v10570, 113
    %v11159 = vpop.permute.xlu0 %11158
    %11160 = vrot.lane.b32.xlu0 %v10572, 113
    %v11161 = vpop.permute.xlu0 %11160
    %11162 = vrot.lane.b32.xlu0 %v10652, 113
    %v11163 = vpop.permute.xlu0 %11162
    %11164 = vrot.lane.b32.xlu0 %v10654, 113
    %v11165 = vpop.permute.xlu0 %11164
    %11166 = vrot.lane.b32.xlu0 %v10734, 113
    %v11167 = vpop.permute.xlu0 %11166
    %11168 = vrot.lane.b32.xlu0 %v10736, 113
    %v11169 = vpop.permute.xlu0 %11168
    %11170 = vrot.lane.b32.xlu0 %v10816, 113
    %v11171 = vpop.permute.xlu0 %11170
    %11172 = vrot.lane.b32.xlu0 %v10818, 113
    %v11173 = vpop.permute.xlu0 %11172
    %v11174 = vsel %vm857, %v11171, %v11173
    %v11175 = vsel %vm857, %v11169, %v11171
    %v11176 = vsel %vm857, %v11167, %v11169
    %v11177 = vsel %vm857, %v11165, %v11167
    %v11178 = vsel %vm857, %v11163, %v11165
    %v11179 = vsel %vm857, %v11161, %v11163
    %v11180 = vsel %vm857, %v11159, %v11161
    %v11181 = vsel %vm857, %v11157, %v11159
    %v11182 = vsel %vm857, %v11155, %v11157
    %v11183 = vsel %vm857, %v11153, %v11155
    %v11184 = vsel %vm857, %v11151, %v11153
    %v11185 = vsel %vm857, %v11149, %v11151
    %v11186 = vsel %vm857, %v11147, %v11149
    %v11187 = vsel %vm857, %v11145, %v11147
    %v11188 = vsel %vm857, %v11143, %v11145
    %v11189 = vsel %vm857, %v11173, %v11143
    %v11190 = vmul.f32 %v11188, %v877
    %v11191 = vmul.f32 %v11187, %v881
    %v11192 = vmul.f32 %v11186, %v885
    %v11193 = vmul.f32 %v11185, %v889
    %v11194 = vmul.f32 %v11184, %v893
    %v11195 = vmul.f32 %v11183, %v897
    %v11196 = vmul.f32 %v11182, %v901
    %v11197 = vmul.f32 %v11181, %v905
    %v11198 = vmul.f32 %v11180, %v909
    %v11199 = vmul.f32 %v11179, %v913
    %v11200 = vmul.f32 %v11178, %v917
    %v11201 = vmul.f32 %v11177, %v921
    %v11202 = vmul.f32 %v11176, %v925
    %v11203 = vmul.f32 %v11175, %v929
    %v11204 = vmul.f32 %v11174, %v933
    %v11205 = vmul.f32 %v11189, %v937
    %11206 = vrot.lane.b32.xlu0 %v10242, 112
    %v11207 = vpop.permute.xlu0 %11206
    %11208 = vrot.lane.b32.xlu0 %v10244, 112
    %v11209 = vpop.permute.xlu0 %11208
    %11210 = vrot.lane.b32.xlu0 %v10324, 112
    %v11211 = vpop.permute.xlu0 %11210
    %11212 = vrot.lane.b32.xlu0 %v10326, 112
    %v11213 = vpop.permute.xlu0 %11212
    %11214 = vrot.lane.b32.xlu0 %v10406, 112
    %v11215 = vpop.permute.xlu0 %11214
    %11216 = vrot.lane.b32.xlu0 %v10408, 112
    %v11217 = vpop.permute.xlu0 %11216
    %11218 = vrot.lane.b32.xlu0 %v10488, 112
    %v11219 = vpop.permute.xlu0 %11218
    %11220 = vrot.lane.b32.xlu0 %v10490, 112
    %v11221 = vpop.permute.xlu0 %11220
    %11222 = vrot.lane.b32.xlu0 %v10570, 112
    %v11223 = vpop.permute.xlu0 %11222
    %11224 = vrot.lane.b32.xlu0 %v10572, 112
    %v11225 = vpop.permute.xlu0 %11224
    %11226 = vrot.lane.b32.xlu0 %v10652, 112
    %v11227 = vpop.permute.xlu0 %11226
    %11228 = vrot.lane.b32.xlu0 %v10654, 112
    %v11229 = vpop.permute.xlu0 %11228
    %11230 = vrot.lane.b32.xlu0 %v10734, 112
    %v11231 = vpop.permute.xlu0 %11230
    %11232 = vrot.lane.b32.xlu0 %v10736, 112
    %v11233 = vpop.permute.xlu0 %11232
    %11234 = vrot.lane.b32.xlu0 %v10816, 112
    %v11235 = vpop.permute.xlu0 %11234
    %11236 = vrot.lane.b32.xlu0 %v10818, 112
    %v11237 = vpop.permute.xlu0 %11236
    %v11238 = vsel %vm986, %v11235, %v11237
    %v11239 = vsel %vm986, %v11233, %v11235
    %v11240 = vsel %vm986, %v11231, %v11233
    %v11241 = vsel %vm986, %v11229, %v11231
    %v11242 = vsel %vm986, %v11227, %v11229
    %v11243 = vsel %vm986, %v11225, %v11227
    %v11244 = vsel %vm986, %v11223, %v11225
    %v11245 = vsel %vm986, %v11221, %v11223
    %v11246 = vsel %vm986, %v11219, %v11221
    %v11247 = vsel %vm986, %v11217, %v11219
    %v11248 = vsel %vm986, %v11215, %v11217
    %v11249 = vsel %vm986, %v11213, %v11215
    %v11250 = vsel %vm986, %v11211, %v11213
    %v11251 = vsel %vm986, %v11209, %v11211
    %v11252 = vsel %vm986, %v11207, %v11209
    %v11253 = vsel %vm986, %v11237, %v11207
    %v11254 = vmul.f32 %v11252, %v1006
    %v11255 = vmul.f32 %v11251, %v1010
    %v11256 = vmul.f32 %v11250, %v1014
    %v11257 = vmul.f32 %v11249, %v1018
    %v11258 = vmul.f32 %v11248, %v1022
    %v11259 = vmul.f32 %v11247, %v1026
    %v11260 = vmul.f32 %v11246, %v1030
    %v11261 = vmul.f32 %v11245, %v1034
    %v11262 = vmul.f32 %v11244, %v1038
    %v11263 = vmul.f32 %v11243, %v1042
    %v11264 = vmul.f32 %v11242, %v1046
    %v11265 = vmul.f32 %v11241, %v1050
    %v11266 = vmul.f32 %v11240, %v1054
    %v11267 = vmul.f32 %v11239, %v1058
    %v11268 = vmul.f32 %v11238, %v1062
    %v11269 = vmul.f32 %v11253, %v1066
    %11270 = vrot.lane.b32.xlu0 %v10242, 111
    %v11271 = vpop.permute.xlu0 %11270
    %11272 = vrot.lane.b32.xlu0 %v10244, 111
    %v11273 = vpop.permute.xlu0 %11272
    %11274 = vrot.lane.b32.xlu0 %v10324, 111
    %v11275 = vpop.permute.xlu0 %11274
    %11276 = vrot.lane.b32.xlu0 %v10326, 111
    %v11277 = vpop.permute.xlu0 %11276
    %11278 = vrot.lane.b32.xlu0 %v10406, 111
    %v11279 = vpop.permute.xlu0 %11278
    %11280 = vrot.lane.b32.xlu0 %v10408, 111
    %v11281 = vpop.permute.xlu0 %11280
    %11282 = vrot.lane.b32.xlu0 %v10488, 111
    %v11283 = vpop.permute.xlu0 %11282
    %11284 = vrot.lane.b32.xlu0 %v10490, 111
    %v11285 = vpop.permute.xlu0 %11284
    %11286 = vrot.lane.b32.xlu0 %v10570, 111
    %v11287 = vpop.permute.xlu0 %11286
    %11288 = vrot.lane.b32.xlu0 %v10572, 111
    %v11289 = vpop.permute.xlu0 %11288
    %11290 = vrot.lane.b32.xlu0 %v10652, 111
    %v11291 = vpop.permute.xlu0 %11290
    %11292 = vrot.lane.b32.xlu0 %v10654, 111
    %v11293 = vpop.permute.xlu0 %11292
    %11294 = vrot.lane.b32.xlu0 %v10734, 111
    %v11295 = vpop.permute.xlu0 %11294
    %11296 = vrot.lane.b32.xlu0 %v10736, 111
    %v11297 = vpop.permute.xlu0 %11296
    %11298 = vrot.lane.b32.xlu0 %v10816, 111
    %v11299 = vpop.permute.xlu0 %11298
    %11300 = vrot.lane.b32.xlu0 %v10818, 111
    %v11301 = vpop.permute.xlu0 %11300
    %v11302 = vsel %vm1115, %v11299, %v11301
    %v11303 = vsel %vm1115, %v11297, %v11299
    %v11304 = vsel %vm1115, %v11295, %v11297
    %v11305 = vsel %vm1115, %v11293, %v11295
    %v11306 = vsel %vm1115, %v11291, %v11293
    %v11307 = vsel %vm1115, %v11289, %v11291
    %v11308 = vsel %vm1115, %v11287, %v11289
    %v11309 = vsel %vm1115, %v11285, %v11287
    %v11310 = vsel %vm1115, %v11283, %v11285
    %v11311 = vsel %vm1115, %v11281, %v11283
    %v11312 = vsel %vm1115, %v11279, %v11281
    %v11313 = vsel %vm1115, %v11277, %v11279
    %v11314 = vsel %vm1115, %v11275, %v11277
    %v11315 = vsel %vm1115, %v11273, %v11275
    %v11316 = vsel %vm1115, %v11271, %v11273
    %v11317 = vsel %vm1115, %v11301, %v11271
    %v11318 = vmul.f32 %v11316, %v1135
    %v11319 = vmul.f32 %v11315, %v1139
    %v11320 = vmul.f32 %v11314, %v1143
    %v11321 = vmul.f32 %v11313, %v1147
    %v11322 = vmul.f32 %v11312, %v1151
    %v11323 = vmul.f32 %v11311, %v1155
    %v11324 = vmul.f32 %v11310, %v1159
    %v11325 = vmul.f32 %v11309, %v1163
    %v11326 = vmul.f32 %v11308, %v1167
    %v11327 = vmul.f32 %v11307, %v1171
    %v11328 = vmul.f32 %v11306, %v1175
    %v11329 = vmul.f32 %v11305, %v1179
    %v11330 = vmul.f32 %v11304, %v1183
    %v11331 = vmul.f32 %v11303, %v1187
    %v11332 = vmul.f32 %v11302, %v1191
    %v11333 = vmul.f32 %v11317, %v1195
    %v11334 = vpack.c.bf16 %v10934, %v10870
    %v11335 = vpack.c.bf16 %v10935, %v10871
    %v11336 = vpack.c.bf16 %v10936, %v10872
    %v11337 = vpack.c.bf16 %v10937, %v10873
    %v11338 = vpack.c.bf16 %v10938, %v10874
    %v11339 = vpack.c.bf16 %v10939, %v10875
    %v11340 = vpack.c.bf16 %v10940, %v10876
    %v11341 = vpack.c.bf16 %v10941, %v10877
    %v11342 = vpack.c.bf16 %v10942, %v10878
    %v11343 = vpack.c.bf16 %v10943, %v10879
    %v11344 = vpack.c.bf16 %v10944, %v10880
    %v11345 = vpack.c.bf16 %v10945, %v10881
    %v11346 = vpack.c.bf16 %v10946, %v10882
    %v11347 = vpack.c.bf16 %v10947, %v10883
    %v11348 = vpack.c.bf16 %v10948, %v10884
    %v11349 = vpack.c.bf16 %v10949, %v10885
    %v11350 = vpack.c.bf16 %v11062, %v10998
    %v11351 = vpack.c.bf16 %v11063, %v10999
    %v11352 = vpack.c.bf16 %v11064, %v11000
    %v11353 = vpack.c.bf16 %v11065, %v11001
    %v11354 = vpack.c.bf16 %v11066, %v11002
    %v11355 = vpack.c.bf16 %v11067, %v11003
    %v11356 = vpack.c.bf16 %v11068, %v11004
    %v11357 = vpack.c.bf16 %v11069, %v11005
    %v11358 = vpack.c.bf16 %v11070, %v11006
    %v11359 = vpack.c.bf16 %v11071, %v11007
    %v11360 = vpack.c.bf16 %v11072, %v11008
    %v11361 = vpack.c.bf16 %v11073, %v11009
    %v11362 = vpack.c.bf16 %v11074, %v11010
    %v11363 = vpack.c.bf16 %v11075, %v11011
    %v11364 = vpack.c.bf16 %v11076, %v11012
    %v11365 = vpack.c.bf16 %v11077, %v11013
    %v11366 = vpack.c.bf16 %v11126, %v10242
    %v11367 = vpack.c.bf16 %v11127, %v10244
    %v11368 = vpack.c.bf16 %v11128, %v10324
    %v11369 = vpack.c.bf16 %v11129, %v10326
    %v11370 = vpack.c.bf16 %v11130, %v10406
    %v11371 = vpack.c.bf16 %v11131, %v10408
    %v11372 = vpack.c.bf16 %v11132, %v10488
    %v11373 = vpack.c.bf16 %v11133, %v10490
    %v11374 = vpack.c.bf16 %v11134, %v10570
    %v11375 = vpack.c.bf16 %v11135, %v10572
    %v11376 = vpack.c.bf16 %v11136, %v10652
    %v11377 = vpack.c.bf16 %v11137, %v10654
    %v11378 = vpack.c.bf16 %v11138, %v10734
    %v11379 = vpack.c.bf16 %v11139, %v10736
    %v11380 = vpack.c.bf16 %v11140, %v10816
    %v11381 = vpack.c.bf16 %v11141, %v10818
    %v11382 = vpack.c.bf16 %v11254, %v11190
    %v11383 = vpack.c.bf16 %v11255, %v11191
    %v11384 = vpack.c.bf16 %v11256, %v11192
    %v11385 = vpack.c.bf16 %v11257, %v11193
    %v11386 = vpack.c.bf16 %v11258, %v11194
    %v11387 = vpack.c.bf16 %v11259, %v11195
    %v11388 = vpack.c.bf16 %v11260, %v11196
    %v11389 = vpack.c.bf16 %v11261, %v11197
    %v11390 = vpack.c.bf16 %v11262, %v11198
    %v11391 = vpack.c.bf16 %v11263, %v11199
    %v11392 = vpack.c.bf16 %v11264, %v11200
    %v11393 = vpack.c.bf16 %v11265, %v11201
    %v11394 = vpack.c.bf16 %v11266, %v11202
    %v11395 = vpack.c.bf16 %v11267, %v11203
    %v11396 = vpack.c.bf16 %v11268, %v11204
    %v11397 = vpack.c.bf16 %v11269, %v11205
    %v11398 = vpack.c.bf16 %v11318, %v11318
    %v11399 = vpack.c.bf16 %v11319, %v11319
    %v11400 = vpack.c.bf16 %v11320, %v11320
    %v11401 = vpack.c.bf16 %v11321, %v11321
    %v11402 = vpack.c.bf16 %v11322, %v11322
    %v11403 = vpack.c.bf16 %v11323, %v11323
    %v11404 = vpack.c.bf16 %v11324, %v11324
    %v11405 = vpack.c.bf16 %v11325, %v11325
    %v11406 = vpack.c.bf16 %v11326, %v11326
    %v11407 = vpack.c.bf16 %v11327, %v11327
    %v11408 = vpack.c.bf16 %v11328, %v11328
    %v11409 = vpack.c.bf16 %v11329, %v11329
    %v11410 = vpack.c.bf16 %v11330, %v11330
    %v11411 = vpack.c.bf16 %v11331, %v11331
    %v11412 = vpack.c.bf16 %v11332, %v11332
    %v11413 = vpack.c.bf16 %v11333, %v11333
    %s11414 = scalar_lea.vmem [#allocation5], 20
    %v11415 = vld [vmem:[%s11414] sm:$0xf]
    %s11416 = scalar_lea.vmem %s3, 40
    %v11417 = vld [vmem:[%s11416] sm:$0xff]
    %11419 = vset.pattern.permute.xlu0 0
    %11420 = vperm.xlu0 %11419, %v11417
    %v11421 = vpop.permute.xlu0 %11420
    %v11424 = vsel %vm1299, %v11415, 0
    %v11427 = vsel %vm1303, %v11398, 0
    %v11430 = vsel %vm1303, %v11399, 0
    %v11433 = vsel %vm1303, %v11400, 0
    %v11436 = vsel %vm1303, %v11401, 0
    %v11439 = vsel %vm1303, %v11402, 0
    %v11442 = vsel %vm1303, %v11403, 0
    %v11445 = vsel %vm1303, %v11404, 0
    %v11448 = vsel %vm1303, %v11405, 0
    %v11451 = vsel %vm1303, %v11406, 0
    %v11454 = vsel %vm1303, %v11407, 0
    %v11457 = vsel %vm1303, %v11408, 0
    %v11460 = vsel %vm1303, %v11409, 0
    %v11463 = vsel %vm1303, %v11410, 0
    %v11466 = vsel %vm1303, %v11411, 0
    %v11469 = vsel %vm1303, %v11412, 0
    %v11472 = vsel %vm1303, %v11413, 0
    %11474 = vmatprep.subr.bf16.mxu0 0
    %11475 = vmatpush1.bf16.msra.mxu0 0
    %11476 = vmatprep.subr.bf16.mxu0 0
    %11477 = vmatpush1.bf16.msra.mxu0 0
    %11478 = vmatprep.subr.bf16.mxu0 0
    %11479 = vmatpush1.bf16.msra.mxu0 0
    %11480 = vmatprep.subr.bf16.mxu0 %v11430
    %11481 = vmatpush1.bf16.msra.mxu0 %v11427
    %11482 = vmatprep.subr.bf16.mxu0 %v11383
    %11483 = vmatpush1.bf16.msra.mxu0 %v11382
    %11484 = vmatprep.subr.bf16.mxu0 %v11367
    %11485 = vmatpush1.bf16.msra.mxu0 %v11366
    %11486 = vmatprep.subr.bf16.mxu0 %v11351
    %11487 = vmatpush1.bf16.msra.mxu0 %v11350
    %11488 = vmatprep.subr.bf16.mxu0 %v11335
    %11489 = vmatpush1.bf16.msra.mxu0 %v11334
    %11490 = vmatprep.subr.bf16.mxu0 0
    %11491 = vmatpush2.bf16.msra.mxu0 0
    %11492 = vmatprep.subr.bf16.mxu0 0
    %11493 = vmatpush2.bf16.msra.mxu0 0
    %11494 = vmatprep.subr.bf16.mxu0 0
    %11495 = vmatpush2.bf16.msra.mxu0 0
    %11496 = vmatprep.subr.bf16.mxu0 0
    %11497 = vmatpush2.bf16.msra.mxu0 0
    %11498 = vmatprep.subr.bf16.mxu0 0
    %11499 = vmatpush2.bf16.msra.mxu0 0
    %11500 = vmatprep.subr.bf16.mxu0 0
    %11501 = vmatpush2.bf16.msra.mxu0 0
    %11502 = vmatprep.subr.bf16.mxu0 0
    %11503 = vmatpush2.bf16.msra.mxu0 0
    %11504 = vmatprep.subr.bf16.mxu0 0
    %11505 = vmatpush2.bf16.msra.mxu0 0
    %11506 = vmatprep.mubr.bf16.mxu0 0
    %11507 = vmatmul.mubr.bf16.gmra.mxu0 %v11424
    %v11508 = vpop.f32.mrf.mxu0
    %v11509 = vadd.f32 %v11421, %v11508
    %v11510 = vpop.f32.mrf.mxu0
    %v11511 = vadd.f32 %v11421, %v11510
    %v11512 = vpop.f32.mrf.mxu0
    %v11513 = vpop.f32.mrf.mxu0
    %11514 = vdwg.mxu0
    %11515 = vmatprep.subr.bf16.mxu0 0
    %11516 = vmatpush1.bf16.msra.mxu0 0
    %11517 = vmatprep.subr.bf16.mxu0 0
    %11518 = vmatpush1.bf16.msra.mxu0 0
    %11519 = vmatprep.subr.bf16.mxu0 0
    %11520 = vmatpush1.bf16.msra.mxu0 0
    %11521 = vmatprep.subr.bf16.mxu0 %v11436
    %11522 = vmatpush1.bf16.msra.mxu0 %v11433
    %11523 = vmatprep.subr.bf16.mxu0 %v11385
    %11524 = vmatpush1.bf16.msra.mxu0 %v11384
    %11525 = vmatprep.subr.bf16.mxu0 %v11369
    %11526 = vmatpush1.bf16.msra.mxu0 %v11368
    %11527 = vmatprep.subr.bf16.mxu0 %v11353
    %11528 = vmatpush1.bf16.msra.mxu0 %v11352
    %11529 = vmatprep.subr.bf16.mxu0 %v11337
    %11530 = vmatpush1.bf16.msra.mxu0 %v11336
    %11531 = vmatprep.subr.bf16.mxu0 0
    %11532 = vmatpush2.bf16.msra.mxu0 0
    %11533 = vmatprep.subr.bf16.mxu0 0
    %11534 = vmatpush2.bf16.msra.mxu0 0
    %11535 = vmatprep.subr.bf16.mxu0 0
    %11536 = vmatpush2.bf16.msra.mxu0 0
    %11537 = vmatprep.subr.bf16.mxu0 0
    %11538 = vmatpush2.bf16.msra.mxu0 0
    %11539 = vmatprep.subr.bf16.mxu0 0
    %11540 = vmatpush2.bf16.msra.mxu0 0
    %11541 = vmatprep.subr.bf16.mxu0 0
    %11542 = vmatpush2.bf16.msra.mxu0 0
    %11543 = vmatprep.subr.bf16.mxu0 0
    %11544 = vmatpush2.bf16.msra.mxu0 0
    %11545 = vmatprep.subr.bf16.mxu0 0
    %11546 = vmatpush2.bf16.msra.mxu0 0
    %11547 = vmatprep.mubr.bf16.mxu0 0
    %11548 = vmatmul.mubr.bf16.gmra.mxu0 %v11424
    %v11549 = vpop.f32.mrf.mxu0
    %v11550 = vadd.f32 %v11421, %v11549
    %v11551 = vpop.f32.mrf.mxu0
    %v11552 = vadd.f32 %v11421, %v11551
    %v11553 = vpop.f32.mrf.mxu0
    %v11554 = vpop.f32.mrf.mxu0
    %11555 = vdwg.mxu0
    %11556 = vmatprep.subr.bf16.mxu0 0
    %11557 = vmatpush1.bf16.msra.mxu0 0
    %11558 = vmatprep.subr.bf16.mxu0 0
    %11559 = vmatpush1.bf16.msra.mxu0 0
    %11560 = vmatprep.subr.bf16.mxu0 0
    %11561 = vmatpush1.bf16.msra.mxu0 0
    %11562 = vmatprep.subr.bf16.mxu0 %v11442
    %11563 = vmatpush1.bf16.msra.mxu0 %v11439
    %11564 = vmatprep.subr.bf16.mxu0 %v11387
    %11565 = vmatpush1.bf16.msra.mxu0 %v11386
    %11566 = vmatprep.subr.bf16.mxu0 %v11371
    %11567 = vmatpush1.bf16.msra.mxu0 %v11370
    %11568 = vmatprep.subr.bf16.mxu0 %v11355
    %11569 = vmatpush1.bf16.msra.mxu0 %v11354
    %11570 = vmatprep.subr.bf16.mxu0 %v11339
    %11571 = vmatpush1.bf16.msra.mxu0 %v11338
    %11572 = vmatprep.subr.bf16.mxu0 0
    %11573 = vmatpush2.bf16.msra.mxu0 0
    %11574 = vmatprep.subr.bf16.mxu0 0
    %11575 = vmatpush2.bf16.msra.mxu0 0
    %11576 = vmatprep.subr.bf16.mxu0 0
    %11577 = vmatpush2.bf16.msra.mxu0 0
    %11578 = vmatprep.subr.bf16.mxu0 0
    %11579 = vmatpush2.bf16.msra.mxu0 0
    %11580 = vmatprep.subr.bf16.mxu0 0
    %11581 = vmatpush2.bf16.msra.mxu0 0
    %11582 = vmatprep.subr.bf16.mxu0 0
    %11583 = vmatpush2.bf16.msra.mxu0 0
    %11584 = vmatprep.subr.bf16.mxu0 0
    %11585 = vmatpush2.bf16.msra.mxu0 0
    %11586 = vmatprep.subr.bf16.mxu0 0
    %11587 = vmatpush2.bf16.msra.mxu0 0
    %11588 = vmatprep.mubr.bf16.mxu0 0
    %11589 = vmatmul.mubr.bf16.gmra.mxu0 %v11424
    %v11590 = vpop.f32.mrf.mxu0
    %v11591 = vadd.f32 %v11421, %v11590
    %v11592 = vpop.f32.mrf.mxu0
    %v11593 = vadd.f32 %v11421, %v11592
    %v11594 = vpop.f32.mrf.mxu0
    %v11595 = vpop.f32.mrf.mxu0
    %11596 = vdwg.mxu0
    %11597 = vmatprep.subr.bf16.mxu0 0
    %11598 = vmatpush1.bf16.msra.mxu0 0
    %11599 = vmatprep.subr.bf16.mxu0 0
    %11600 = vmatpush1.bf16.msra.mxu0 0
    %11601 = vmatprep.subr.bf16.mxu0 0
    %11602 = vmatpush1.bf16.msra.mxu0 0
    %11603 = vmatprep.subr.bf16.mxu0 %v11448
    %11604 = vmatpush1.bf16.msra.mxu0 %v11445
    %11605 = vmatprep.subr.bf16.mxu0 %v11389
    %11606 = vmatpush1.bf16.msra.mxu0 %v11388
    %11607 = vmatprep.subr.bf16.mxu0 %v11373
    %11608 = vmatpush1.bf16.msra.mxu0 %v11372
    %11609 = vmatprep.subr.bf16.mxu0 %v11357
    %11610 = vmatpush1.bf16.msra.mxu0 %v11356
    %11611 = vmatprep.subr.bf16.mxu0 %v11341
    %11612 = vmatpush1.bf16.msra.mxu0 %v11340
    %11613 = vmatprep.subr.bf16.mxu0 0
    %11614 = vmatpush2.bf16.msra.mxu0 0
    %11615 = vmatprep.subr.bf16.mxu0 0
    %11616 = vmatpush2.bf16.msra.mxu0 0
    %11617 = vmatprep.subr.bf16.mxu0 0
    %11618 = vmatpush2.bf16.msra.mxu0 0
    %11619 = vmatprep.subr.bf16.mxu0 0
    %11620 = vmatpush2.bf16.msra.mxu0 0
    %11621 = vmatprep.subr.bf16.mxu0 0
    %11622 = vmatpush2.bf16.msra.mxu0 0
    %11623 = vmatprep.subr.bf16.mxu0 0
    %11624 = vmatpush2.bf16.msra.mxu0 0
    %11625 = vmatprep.subr.bf16.mxu0 0
    %11626 = vmatpush2.bf16.msra.mxu0 0
    %11627 = vmatprep.subr.bf16.mxu0 0
    %11628 = vmatpush2.bf16.msra.mxu0 0
    %11629 = vmatprep.mubr.bf16.mxu0 0
    %11630 = vmatmul.mubr.bf16.gmra.mxu0 %v11424
    %v11631 = vpop.f32.mrf.mxu0
    %v11632 = vadd.f32 %v11421, %v11631
    %v11633 = vpop.f32.mrf.mxu0
    %v11634 = vadd.f32 %v11421, %v11633
    %v11635 = vpop.f32.mrf.mxu0
    %v11636 = vpop.f32.mrf.mxu0
    %11637 = vdwg.mxu0
    %11638 = vmatprep.subr.bf16.mxu0 0
    %11639 = vmatpush1.bf16.msra.mxu0 0
    %11640 = vmatprep.subr.bf16.mxu0 0
    %11641 = vmatpush1.bf16.msra.mxu0 0
    %11642 = vmatprep.subr.bf16.mxu0 0
    %11643 = vmatpush1.bf16.msra.mxu0 0
    %11644 = vmatprep.subr.bf16.mxu0 %v11454
    %11645 = vmatpush1.bf16.msra.mxu0 %v11451
    %11646 = vmatprep.subr.bf16.mxu0 %v11391
    %11647 = vmatpush1.bf16.msra.mxu0 %v11390
    %11648 = vmatprep.subr.bf16.mxu0 %v11375
    %11649 = vmatpush1.bf16.msra.mxu0 %v11374
    %11650 = vmatprep.subr.bf16.mxu0 %v11359
    %11651 = vmatpush1.bf16.msra.mxu0 %v11358
    %11652 = vmatprep.subr.bf16.mxu0 %v11343
    %11653 = vmatpush1.bf16.msra.mxu0 %v11342
    %11654 = vmatprep.subr.bf16.mxu0 0
    %11655 = vmatpush2.bf16.msra.mxu0 0
    %11656 = vmatprep.subr.bf16.mxu0 0
    %11657 = vmatpush2.bf16.msra.mxu0 0
    %11658 = vmatprep.subr.bf16.mxu0 0
    %11659 = vmatpush2.bf16.msra.mxu0 0
    %11660 = vmatprep.subr.bf16.mxu0 0
    %11661 = vmatpush2.bf16.msra.mxu0 0
    %11662 = vmatprep.subr.bf16.mxu0 0
    %11663 = vmatpush2.bf16.msra.mxu0 0
    %11664 = vmatprep.subr.bf16.mxu0 0
    %11665 = vmatpush2.bf16.msra.mxu0 0
    %11666 = vmatprep.subr.bf16.mxu0 0
    %11667 = vmatpush2.bf16.msra.mxu0 0
    %11668 = vmatprep.subr.bf16.mxu0 0
    %11669 = vmatpush2.bf16.msra.mxu0 0
    %11670 = vmatprep.mubr.bf16.mxu0 0
    %11671 = vmatmul.mubr.bf16.gmra.mxu0 %v11424
    %v11672 = vpop.f32.mrf.mxu0
    %v11673 = vadd.f32 %v11421, %v11672
    %v11674 = vpop.f32.mrf.mxu0
    %v11675 = vadd.f32 %v11421, %v11674
    %v11676 = vpop.f32.mrf.mxu0
    %v11677 = vpop.f32.mrf.mxu0
    %11678 = vdwg.mxu0
    %11679 = vmatprep.subr.bf16.mxu0 0
    %11680 = vmatpush1.bf16.msra.mxu0 0
    %11681 = vmatprep.subr.bf16.mxu0 0
    %11682 = vmatpush1.bf16.msra.mxu0 0
    %11683 = vmatprep.subr.bf16.mxu0 0
    %11684 = vmatpush1.bf16.msra.mxu0 0
    %11685 = vmatprep.subr.bf16.mxu0 %v11460
    %11686 = vmatpush1.bf16.msra.mxu0 %v11457
    %11687 = vmatprep.subr.bf16.mxu0 %v11393
    %11688 = vmatpush1.bf16.msra.mxu0 %v11392
    %11689 = vmatprep.subr.bf16.mxu0 %v11377
    %11690 = vmatpush1.bf16.msra.mxu0 %v11376
    %11691 = vmatprep.subr.bf16.mxu0 %v11361
    %11692 = vmatpush1.bf16.msra.mxu0 %v11360
    %11693 = vmatprep.subr.bf16.mxu0 %v11345
    %11694 = vmatpush1.bf16.msra.mxu0 %v11344
    %11695 = vmatprep.subr.bf16.mxu0 0
    %11696 = vmatpush2.bf16.msra.mxu0 0
    %11697 = vmatprep.subr.bf16.mxu0 0
    %11698 = vmatpush2.bf16.msra.mxu0 0
    %11699 = vmatprep.subr.bf16.mxu0 0
    %11700 = vmatpush2.bf16.msra.mxu0 0
    %11701 = vmatprep.subr.bf16.mxu0 0
    %11702 = vmatpush2.bf16.msra.mxu0 0
    %11703 = vmatprep.subr.bf16.mxu0 0
    %11704 = vmatpush2.bf16.msra.mxu0 0
    %11705 = vmatprep.subr.bf16.mxu0 0
    %11706 = vmatpush2.bf16.msra.mxu0 0
    %11707 = vmatprep.subr.bf16.mxu0 0
    %11708 = vmatpush2.bf16.msra.mxu0 0
    %11709 = vmatprep.subr.bf16.mxu0 0
    %11710 = vmatpush2.bf16.msra.mxu0 0
    %11711 = vmatprep.mubr.bf16.mxu0 0
    %11712 = vmatmul.mubr.bf16.gmra.mxu0 %v11424
    %v11713 = vpop.f32.mrf.mxu0
    %v11714 = vadd.f32 %v11421, %v11713
    %v11715 = vpop.f32.mrf.mxu0
    %v11716 = vadd.f32 %v11421, %v11715
    %v11717 = vpop.f32.mrf.mxu0
    %v11718 = vpop.f32.mrf.mxu0
    %11719 = vdwg.mxu0
    %11720 = vmatprep.subr.bf16.mxu0 0
    %11721 = vmatpush1.bf16.msra.mxu0 0
    %11722 = vmatprep.subr.bf16.mxu0 0
    %11723 = vmatpush1.bf16.msra.mxu0 0
    %11724 = vmatprep.subr.bf16.mxu0 0
    %11725 = vmatpush1.bf16.msra.mxu0 0
    %11726 = vmatprep.subr.bf16.mxu0 %v11466
    %11727 = vmatpush1.bf16.msra.mxu0 %v11463
    %11728 = vmatprep.subr.bf16.mxu0 %v11395
    %11729 = vmatpush1.bf16.msra.mxu0 %v11394
    %11730 = vmatprep.subr.bf16.mxu0 %v11379
    %11731 = vmatpush1.bf16.msra.mxu0 %v11378
    %11732 = vmatprep.subr.bf16.mxu0 %v11363
    %11733 = vmatpush1.bf16.msra.mxu0 %v11362
    %11734 = vmatprep.subr.bf16.mxu0 %v11347
    %11735 = vmatpush1.bf16.msra.mxu0 %v11346
    %11736 = vmatprep.subr.bf16.mxu0 0
    %11737 = vmatpush2.bf16.msra.mxu0 0
    %11738 = vmatprep.subr.bf16.mxu0 0
    %11739 = vmatpush2.bf16.msra.mxu0 0
    %11740 = vmatprep.subr.bf16.mxu0 0
    %11741 = vmatpush2.bf16.msra.mxu0 0
    %11742 = vmatprep.subr.bf16.mxu0 0
    %11743 = vmatpush2.bf16.msra.mxu0 0
    %11744 = vmatprep.subr.bf16.mxu0 0
    %11745 = vmatpush2.bf16.msra.mxu0 0
    %11746 = vmatprep.subr.bf16.mxu0 0
    %11747 = vmatpush2.bf16.msra.mxu0 0
    %11748 = vmatprep.subr.bf16.mxu0 0
    %11749 = vmatpush2.bf16.msra.mxu0 0
    %11750 = vmatprep.subr.bf16.mxu0 0
    %11751 = vmatpush2.bf16.msra.mxu0 0
    %11752 = vmatprep.mubr.bf16.mxu0 0
    %11753 = vmatmul.mubr.bf16.gmra.mxu0 %v11424
    %v11754 = vpop.f32.mrf.mxu0
    %v11755 = vadd.f32 %v11421, %v11754
    %v11756 = vpop.f32.mrf.mxu0
    %v11757 = vadd.f32 %v11421, %v11756
    %v11758 = vpop.f32.mrf.mxu0
    %v11759 = vpop.f32.mrf.mxu0
    %11760 = vdwg.mxu0
    %11761 = vmatprep.subr.bf16.mxu0 0
    %11762 = vmatpush1.bf16.msra.mxu0 0
    %11763 = vmatprep.subr.bf16.mxu0 0
    %11764 = vmatpush1.bf16.msra.mxu0 0
    %11765 = vmatprep.subr.bf16.mxu0 0
    %11766 = vmatpush1.bf16.msra.mxu0 0
    %11767 = vmatprep.subr.bf16.mxu0 %v11472
    %11768 = vmatpush1.bf16.msra.mxu0 %v11469
    %11769 = vmatprep.subr.bf16.mxu0 %v11397
    %11770 = vmatpush1.bf16.msra.mxu0 %v11396
    %11771 = vmatprep.subr.bf16.mxu0 %v11381
    %11772 = vmatpush1.bf16.msra.mxu0 %v11380
    %11773 = vmatprep.subr.bf16.mxu0 %v11365
    %11774 = vmatpush1.bf16.msra.mxu0 %v11364
    %11775 = vmatprep.subr.bf16.mxu0 %v11349
    %11776 = vmatpush1.bf16.msra.mxu0 %v11348
    %11777 = vmatprep.subr.bf16.mxu0 0
    %11778 = vmatpush2.bf16.msra.mxu0 0
    %11779 = vmatprep.subr.bf16.mxu0 0
    %11780 = vmatpush2.bf16.msra.mxu0 0
    %11781 = vmatprep.subr.bf16.mxu0 0
    %11782 = vmatpush2.bf16.msra.mxu0 0
    %11783 = vmatprep.subr.bf16.mxu0 0
    %11784 = vmatpush2.bf16.msra.mxu0 0
    %11785 = vmatprep.subr.bf16.mxu0 0
    %11786 = vmatpush2.bf16.msra.mxu0 0
    %11787 = vmatprep.subr.bf16.mxu0 0
    %11788 = vmatpush2.bf16.msra.mxu0 0
    %11789 = vmatprep.subr.bf16.mxu0 0
    %11790 = vmatpush2.bf16.msra.mxu0 0
    %11791 = vmatprep.subr.bf16.mxu0 0
    %11792 = vmatpush2.bf16.msra.mxu0 0
    %11793 = vmatprep.mubr.bf16.mxu0 0
    %11794 = vmatmul.mubr.bf16.gmra.mxu0 %v11424
    %v11795 = vpop.f32.mrf.mxu0
    %v11796 = vadd.f32 %v11421, %v11795
    %v11797 = vpop.f32.mrf.mxu0
    %v11798 = vadd.f32 %v11421, %v11797
    %v11799 = vpop.f32.mrf.mxu0
    %v11800 = vpop.f32.mrf.mxu0
    %11801 = vdwg.mxu0
    %11802 = vst [vmem:[#allocation14] sm:$0xff] %v11509
    %11803 = vst [vmem:[#allocation14 + $0x8] sm:$0xff] %v11511
    %11804 = vst [vmem:[#allocation14 + $0x10] sm:$0xff] %v11550
    %11805 = vst [vmem:[#allocation14 + $0x18] sm:$0xff] %v11552
    %11806 = vst [vmem:[#allocation14 + $0x20] sm:$0xff] %v11591
    %11807 = vst [vmem:[#allocation14 + $0x28] sm:$0xff] %v11593
    %11808 = vst [vmem:[#allocation14 + $0x30] sm:$0xff] %v11632
    %11809 = vst [vmem:[#allocation14 + $0x38] sm:$0xff] %v11634
    %11810 = vst [vmem:[#allocation14 + $0x40] sm:$0xff] %v11673
    %11811 = vst [vmem:[#allocation14 + $0x48] sm:$0xff] %v11675
    %11812 = vst [vmem:[#allocation14 + $0x50] sm:$0xff] %v11714
    %11813 = vst [vmem:[#allocation14 + $0x58] sm:$0xff] %v11716
    %11814 = vst [vmem:[#allocation14 + $0x60] sm:$0xff] %v11755
    %11815 = vst [vmem:[#allocation14 + $0x68] sm:$0xff] %v11757
    %11816 = vst [vmem:[#allocation14 + $0x70] sm:$0xff] %v11796
    %11817 = vst [vmem:[#allocation14 + $0x78] sm:$0xff] %v11798
    // Predicated region
    $region70: #{tpu_custom_call.1} parent=1 // pred_check
      _
    $region71: #{tpu_custom_call.1} parent=1 // pred_check_branch
      %11819 = sbr.rel (0) target = $region73
    $region72: #{tpu_custom_call.1} parent=1 // pred_region
      %s11821 = ssub.s32 2048, 2048
      %11822 = vsyncadd [#allocation4], %s11821
      %s11824 = sshll.u32 [#allocation14], 4
      %s11825 = int_to_ptr.vmem [resolvable:$true] %s11824
      %11827 = dma.vmem_to_hbm [thread:$0]  %s11825, 2048, %s10, [#allocation4]
    $region73: #{tpu_custom_call.1} parent=1 // pred_fallthru
      _
    // Predicated region
    $region74: #{tpu_custom_call.1} parent=1 // pred_check
      _
    $region75: #{tpu_custom_call.1} parent=1 // pred_check_branch
      %11829 = sbr.rel (0) target = $region77
    $region76: #{tpu_custom_call.1} parent=1 // pred_region
      %11830 = dma.done [#allocation4], 2048
    $region77: #{tpu_custom_call.1} parent=1 // pred_fallthru
      _
    %11831 = vsyncpa [#allocation3], 1
    %11832 = vsyncpa [#allocation6], 1
    %11833 = vsyncpa [#allocation9], 1
    %11834 = vsyncpa [#allocation12], 1
    %11835 = vsyncpa [#allocation4], 1

</llo_original>
